<compile_context>
chip_gen: v5e
topology: v5e:2x2
jax: 0.10.0
libtpu: 0.0.40
codegen_flags: <defaults>
</compile_context>

<pallas_src>
import jax
import jax.numpy as jnp
from jax.experimental import pallas as pl
from jax.experimental.pallas import tpu as pltpu

_VMEM_LIMIT = 32 * 1024 * 1024  # safe on v5e/v6e (128 MiB) and v7x (64 MiB physical)


# ---------------------------------------------------------------------------
# Reference math helpers (PyTorch semantics, NHWC, f32)
# ---------------------------------------------------------------------------
def _instance_norm(y, eps=1e-5):
    """InstanceNorm2d(affine=False) on (B, P, C): biased var over spatial axis."""
    mean = jnp.mean(y, axis=1, keepdims=True)
    var = jnp.mean(jnp.square(y - mean), axis=1, keepdims=True)
    return (y - mean) * jax.lax.rsqrt(var + eps)


def _prelu(y, alpha):
    # NOTE: torch's default PReLU() has a single shared slope; here it is stored as a
    # per-channel (1, c) vector filled with the same value (identical at init 0.25;
    # a trained single-parameter checkpoint would be broadcast into this table).
    return jnp.where(y >= 0.0, y, alpha * y)


def _im2col(x, k, stride):
    """x: (B, H, W, C) -> (patches (B, Ho*Wo, k*k*C), Ho, Wo), 'same' padding."""
    B, H, W, C = x.shape
    pad = (k - 1) // 2
    Ho = (H + 2 * pad - k) // stride + 1
    Wo = (W + 2 * pad - k) // stride + 1
    xp = jnp.pad(x, ((0, 0), (pad, pad), (pad, pad), (0, 0)))
    taps = []
    for dy in range(k):
        for dx in range(k):
            taps.append(xp[:, dy:dy + stride * Ho:stride,
                           dx:dx + stride * Wo:stride, :])
    patches = jnp.concatenate(taps, axis=-1)            # (B, Ho, Wo, k*k*C)
    return patches.reshape(B, Ho * Wo, k * k * C), Ho, Wo


# ---------------------------------------------------------------------------
# Host-side, one-time parameter packing (outside the forward / jit)
# ---------------------------------------------------------------------------
def _conv_unroll_matrix(w2d, in_shape, k, stride):
    """Unrolled conv ("im2col of the identity basis") matrix.

    w2d: (k*k*cin, cout), row order (dy, dx, cin)
         (== torch_weight.permute(2, 3, 1, 0).reshape(-1, cout)).
    Returns M (Hin*Win*cin, Ho*Wo*cout) such that, for NHWC-flattened x,
      conv2d(x, w, stride, 'same').reshape(B, -1) == x.reshape(B, -1) @ M.
    Each entry of M is an exact copy of a conv weight (or 0), so the construction
    loses no precision.
    """
    Hin, Win, cin = in_shape
    fin = Hin * Win * cin
    cout = w2d.shape[1]
    basis = jnp.eye(fin, dtype=jnp.float32).reshape(fin, Hin, Win, cin)
    pat, Ho, Wo = _im2col(basis, k, stride)              # (fin, P, k*k*cin)
    m = pat.reshape(fin * Ho * Wo, k * k * cin) @ w2d    # (fin*P, cout)
    return m.reshape(fin, Ho * Wo * cout), Ho, Wo


def pack_classifier_params(params, in_shape, classes, channels, strides, k=3,
                           mm_dtype=jnp.bfloat16):
    """Prepares per-layer kernel operands (called once, eagerly, before jit)."""
    del classes  # shapes come from params["wl"]
    H, W, cin = in_shape
    n = len(channels)
    packed = []
    with jax.default_matmul_precision("highest"):
        ech, h, w = cin, H, W
        for i, (c, s) in enumerate(zip(channels, strides)):
            p = params["layers"][i]
            has_res = (s != 1) or (ech != c)
            m0, Ho, Wo = _conv_unroll_matrix(p["w0"], (h, w, ech), k, s)
            m1, _, _ = _conv_unroll_matrix(p["w1"], (Ho, Wo, c), k, 1)
            if has_res:
                rk = k if s != 1 else 1                  # 1x1 residual when stride == 1
                mr, _, _ = _conv_unroll_matrix(p["wr"], (h, w, ech), rk, s)
                mr = mr.astype(mm_dtype)
                br = p["br"]
            else:
                assert h * w * ech == Ho * Wo * c, "identity residual shape mismatch"
                mr = None
                br = jnp.zeros((1, c), jnp.float32)
            P = Ho * Wo
            # channel-selection matrices for flat-layout InstanceNorm stats
            sm = jnp.tile(jnp.eye(c, dtype=jnp.float32), (P, 1))   # (P*c, c)
            sb = jnp.transpose(sm)                                  # (c, P*c)

            def _flat(v):                                           # (1, c) -> (1, P*c)
                return jnp.tile(v, (1, P))

            scal = jnp.concatenate(                                 # (5, P*c), f32
                [_flat(p["b0"]), _flat(br), _flat(p["a0"]),
                 _flat(p["b1"]), _flat(p["a1"])], axis=0)

            layer = {"m0": m0.astype(mm_dtype), "mr": mr,
                     "m1": m1.astype(mm_dtype),
                     "sm": sm, "sb": sb, "scal": scal,
                     "wl": None, "bl": None}
            if i == n - 1:
                # NOTE: flatten order here is NHWC (h, w, c); a torch state_dict Linear
                # weight (NCHW flatten) would need a row permutation before use.
                layer["wl"] = params["wl"].astype(mm_dtype)
                layer["bl"] = params["bl"]
            packed.append(layer)
            ech, h, w = c, Ho, Wo
    return {"layers": packed}


# ---------------------------------------------------------------------------
# Fused per-layer Pallas kernel
# ---------------------------------------------------------------------------
def _instance_norm_prelu_flat(y, sm, sb, alpha, inv_p, eps=1e-5):
    """InstanceNorm2d(affine=False) + PReLU on a flattened (tb, P*c) slab.

    Per-(sample, channel) spatial stats are computed with tiny channel-selection
    matmuls (sm: (P*c, c) one-hot, sb = sm.T), so the lane-dense slab never needs an
    in-kernel reshape/relayout.  All math stays f32."""
    f32 = jnp.float32
    mean = jnp.dot(jnp.dot(y, sm, preferred_element_type=f32) * inv_p, sb,
                   preferred_element_type=f32)
    d = y - mean
    var = jnp.dot(jnp.dot(d * d, sm, preferred_element_type=f32) * inv_p, sb,
                  preferred_element_type=f32)
    yn = d * jax.lax.rsqrt(var + eps)
    return jnp.where(yn >= 0.0, yn, alpha * yn)


def _make_layer_kernel(has_res, is_last):
    """One fused kernel = full ResidualUnit2D (+ final Linear when is_last)."""
    f32 = jnp.float32

    def kernel(*refs):
        it = iter(refs)
        x_ref, m0_ref = next(it), next(it)
        mr_ref = next(it) if has_res else None
        m1_ref, sm_ref, sb_ref, scal_ref = next(it), next(it), next(it), next(it)
        wl_ref, bl_ref = (next(it), next(it)) if is_last else (None, None)
        out_ref = next(it)

        mm_dtype = m0_ref.dtype
        sm, sb, scal = sm_ref[...], sb_ref[...], scal_ref[...]
        inv_p = 1.0 / float(scal.shape[1] // sm.shape[1])   # 1 / (Ho*Wo)

        x = x_ref[...]                                       # (tb, Fin) f32
        xm = x.astype(mm_dtype)

        # -- unit0: 3x3/stride-s conv (one unrolled matmul) + InstanceNorm + PReLU ----
        y0 = jnp.dot(xm, m0_ref[...], preferred_element_type=f32) + scal[0:1, :]
        y0 = _instance_norm_prelu_flat(y0, sm, sb, scal[2:3, :], inv_p)

        # -- residual: 3x3/stride-s (or 1x1) conv sharing the same input read, or id --
        if has_res:
            res = jnp.dot(xm, mr_ref[...], preferred_element_type=f32) + scal[1:2, :]
        else:
            res = x

        # -- unit1: 3x3/stride-1 conv on VMEM-resident y0 (never leaves the chip) -----
        y1 = (jnp.dot(y0.astype(mm_dtype), m1_ref[...], preferred_element_type=f32)
              + scal[3:4, :])
        if not is_last:                                      # last subunit of last layer
            y1 = _instance_norm_prelu_flat(y1, sm, sb, scal[4:5, :], inv_p)  # is convOnly

        out = y1 + res                                       # (tb, P*cout), lane-dense
        if is_last:
            # fused final Linear: flatten is already the slab layout
            out_ref[...] = (jnp.dot(out.astype(mm_dtype), wl_ref[...],
                                    preferred_element_type=f32) + bl_ref[...])
        else:
            out_ref[...] = out

    return kernel


def _layer_call(x, layer, tb):
    B, Fin = x.shape
    m0, mr, m1 = layer["m0"], layer["mr"], layer["m1"]
    sm, sb, scal = layer["sm"], layer["sb"], layer["scal"]
    wl, bl = layer["wl"], layer["bl"]
    F0 = m1.shape[0]
    cout = sm.shape[1]
    has_res = mr is not None
    is_last = wl is not None

    def const(shape):  # weights / tables: constant index_map -> VMEM-resident
        return pl.BlockSpec(shape, lambda i: (0,) * len(shape))

    args = [x, m0]
    in_specs = [pl.BlockSpec((tb, Fin), lambda i: (i, 0)), const(m0.shape)]
    if has_res:
        args.append(mr)
        in_specs.append(const(mr.shape))
    args += [m1, sm, sb, scal]
    in_specs += [const(m1.shape), const(sm.shape), const(sb.shape), const(scal.shape)]
    if is_last:
        args += [wl, bl]
        in_specs += [const(wl.shape), const(bl.shape)]
        out_dim = wl.shape[1]
    else:
        out_dim = F0

    # advisory cost estimate
    n_norm = 1 if is_last else 2
    flops = 2 * B * Fin * F0 * (2 if has_res else 1) + 2 * B * F0 * F0
    flops += n_norm * 8 * B * F0 * cout
    if is_last:
        flops += 2 * B * F0 * out_dim
    transcendentals = n_norm * B * F0
    bytes_accessed = (4 * B * (Fin + out_dim)
                      + sum(int(a.size) * a.dtype.itemsize for a in args[1:]))

    return pl.pallas_call(
        _make_layer_kernel(has_res, is_last),
        out_shape=jax.ShapeDtypeStruct((B, out_dim), jnp.float32),
        grid=(B // tb,),
        in_specs=in_specs,
        out_specs=pl.BlockSpec((tb, out_dim), lambda i: (i, 0)),
        compiler_params=pltpu.CompilerParams(
            dimension_semantics=("parallel",),
            vmem_limit_bytes=_VMEM_LIMIT),
        cost_estimate=pl.CostEstimate(flops=int(flops),
                                      transcendentals=int(transcendentals),
                                      bytes_accessed=int(bytes_accessed)),
    )(*args)


def _pick_batch_tile(B):
    """One grid step per TensorCore (v5e/v6e: 1 TC -> grid=(1,); dual-TC chips: 2
    'parallel' steps), keeping tiles sublane-aligned (multiple of 8) or full-batch."""
    kind = ""
    try:
        kind = jax.devices()[0].device_kind.lower()
    except Exception:
        pass
    n_tc = 2 if any(t in kind for t in ("v7", "7x", "v4")) else 1
    if n_tc > 1 and B % (8 * n_tc) == 0:
        return B // n_tc
    return B


def classifier_forward_pallas(x, packed, *, batch_tile=None):
    """x: (B, H, W, Cin) NHWC.  Returns (logits,) like the torch module."""
    B = x.shape[0]
    h = x.reshape(B, -1)                     # lane-dense NHWC-flat slab
    tb = batch_tile if batch_tile is not None else _pick_batch_tile(B)
    assert B % tb == 0, "batch must be divisible by the batch tile"
    for layer in packed["layers"]:
        h = _layer_call(h, layer, tb)        # last layer returns logits (fused Linear)
    return (h,)


# ---------------------------------------------------------------------------
# Pure-jnp f32 reference (independent formulation: direct im2col convs, NHWC)
# ---------------------------------------------------------------------------
def classifier_forward_reference(x, params, channels, strides, k=3):
    B = x.shape[0]
    h = x
    ech = x.shape[-1]
    n = len(channels)
    for i, (c, s) in enumerate(zip(channels, strides)):
        p = params["layers"][i]
        is_last = i == n - 1
        has_res = (s != 1) or (ech != c)
        pat0, Ho, Wo = _im2col(h, k, s)
        y0 = _prelu(_instance_norm(pat0 @ p["w0"] + p["b0"]), p["a0"])
        pat1, _, _ = _im2col(y0.reshape(B, Ho, Wo, c), k, 1)
        y1 = pat1 @ p["w1"] + p["b1"]
        if not is_last:
            y1 = _prelu(_instance_norm(y1), p["a1"])
        if has_res:
            rk = k if s != 1 else 1
            patr, _, _ = _im2col(h, rk, s)
            res = patr @ p["wr"] + p["br"]
        else:
            res = h.reshape(B, Ho * Wo, c)
        h = (y1 + res).reshape(B, Ho, Wo, c)
        ech = c
    return h.reshape(B, -1) @ params["wl"] + params["bl"]


# ---------------------------------------------------------------------------
# Deterministic parameter init (shapes follow Classifier.__init__ defaults)
# ---------------------------------------------------------------------------
def init_classifier_params(key, in_shape, classes, channels, strides, k=3):
    """Conv weights stored as (k*k*cin, cout), row order (dy, dx, cin)."""
    H, W, cin = in_shape
    keys = iter(jax.random.split(key, 6 * len(channels) + 2))

    def _w(shape, fan_in):
        return (jax.random.normal(next(keys), shape, jnp.float32)
                / jnp.sqrt(jnp.float32(fan_in)))

    def _b(c):
        return jax.random.normal(next(keys), (1, c), jnp.float32) * 0.01

    pad = (k - 1) // 2
    layers = []
    h, w, ech = H, W, cin
    for c, s in zip(channels, strides):
        has_res = (s != 1) or (ech != c)
        layer = {"w0": _w((k * k * ech, c), k * k * ech), "b0": _b(c),
                 "a0": jnp.full((1, c), 0.25, jnp.float32),       # PReLU default slope
                 "w1": _w((k * k * c, c), k * k * c), "b1": _b(c),
                 "a1": jnp.full((1, c), 0.25, jnp.float32)}
        if has_res:
            rk = k if s != 1 else 1
            layer["wr"] = _w((rk * rk * ech, c), rk * rk * ech)
            layer["br"] = _b(c)
        else:
            layer["wr"] = None
            layer["br"] = jnp.zeros((1, c), jnp.float32)
        layers.append(layer)
        h = (h + 2 * pad - k) // s + 1
        w = (w + 2 * pad - k) // s + 1
        ech = c
    feat = h * w * ech
    return {"layers": layers,
            "wl": _w((feat, classes), feat),
            "bl": _b(classes)}


if __name__ == "__main__":
    # Classifier(inShape=(16, 16, 4), classes=4, channels=(8, 8, 16), strides=(2, 1, 2))
    # The stride-1 / equal-channel middle layer exercises the identity-residual path.
    in_shape = (16, 16, 4)                  # (H, W, Cin)
    classes = 4
    channels = (8, 8, 16)
    strides = (2, 1, 2)
    B = 16

    key = jax.random.PRNGKey(0)
    k_x, k_p = jax.random.split(key)
    # The torch module takes NCHW; TPU side keeps channels minor (NHWC flat slabs).
    x_nchw = jax.random.normal(k_x, (B, in_shape[2], in_shape[0], in_shape[1]),
                               jnp.float32)
    x = jnp.transpose(x_nchw, (0, 2, 3, 1))

    params = init_classifier_params(k_p, in_shape, classes, channels, strides)
    packed = pack_classifier_params(params, in_shape, classes, channels, strides)
    tb = _pick_batch_tile(B)

    fwd = jax.jit(lambda xx, pp: classifier_forward_pallas(xx, pp, batch_tile=tb))
    (logits,) = fwd(x, packed)
    jax.block_until_ready(logits)

    with jax.default_matmul_precision("highest"):
        ref = classifier_forward_reference(x, params, channels, strides)

    assert logits.shape == (B, classes)
    assert bool(jnp.all(jnp.isfinite(logits)))
    max_err = float(jnp.max(jnp.abs(logits - ref)))
    assert bool(jnp.allclose(logits, ref, atol=5e-2, rtol=5e-2)), max_err
    print("KERNEL_OK")
</pallas_src>

<mosaic_0001>
module attributes {stable_mosaic.version = 11 : i64} {
  func.func @kernel(%arg0: i32, %arg1: memref<16x1024xf32, #tpu.memory_space<vmem>>, %arg2: memref<1024x512xbf16, #tpu.memory_space<vmem>>, %arg3: memref<1024x512xbf16, #tpu.memory_space<vmem>>, %arg4: memref<512x512xbf16, #tpu.memory_space<vmem>>, %arg5: memref<512x8xf32, #tpu.memory_space<vmem>>, %arg6: memref<8x512xf32, #tpu.memory_space<vmem>>, %arg7: memref<5x512xf32, #tpu.memory_space<vmem>>, %arg8: memref<16x512xf32, #tpu.memory_space<vmem>>) attributes {dimension_semantics = [#tpu.dimension_semantics<parallel>], iteration_bounds = array<i64: 1>, scalar_prefetch = 0 : i64, scratch_operands = 0 : i64, tpu.core_type = #tpu.core_type<tc>, window_params = [{transform_indices = @transform_0, window_bounds = array<i64: 16, 1024>}, {pipeline_mode = #tpu.pipeline_mode<synchronous>, transform_indices = @transform_1, window_bounds = array<i64: 1024, 512>}, {pipeline_mode = #tpu.pipeline_mode<synchronous>, transform_indices = @transform_2, window_bounds = array<i64: 1024, 512>}, {pipeline_mode = #tpu.pipeline_mode<synchronous>, transform_indices = @transform_3, window_bounds = array<i64: 512, 512>}, {pipeline_mode = #tpu.pipeline_mode<synchronous>, transform_indices = @transform_4, window_bounds = array<i64: 512, 8>}, {pipeline_mode = #tpu.pipeline_mode<synchronous>, transform_indices = @transform_5, window_bounds = array<i64: 8, 512>}, {pipeline_mode = #tpu.pipeline_mode<synchronous>, transform_indices = @transform_6, window_bounds = array<i64: 5, 512>}, {transform_indices = @transform_7, window_bounds = array<i64: 16, 512>}]} {
    %c0 = arith.constant 0 : index
    %c0_0 = arith.constant 0 : index
    %0 = vector.load %arg5[%c0, %c0_0] : memref<512x8xf32, #tpu.memory_space<vmem>>, vector<512x8xf32>
    %c0_1 = arith.constant 0 : index
    %c0_2 = arith.constant 0 : index
    %1 = vector.load %arg6[%c0_1, %c0_2] : memref<8x512xf32, #tpu.memory_space<vmem>>, vector<8x512xf32>
    %c0_3 = arith.constant 0 : index
    %c0_4 = arith.constant 0 : index
    %2 = vector.load %arg7[%c0_3, %c0_4] : memref<5x512xf32, #tpu.memory_space<vmem>>, vector<5x512xf32>
    %c0_5 = arith.constant 0 : index
    %c0_6 = arith.constant 0 : index
    %3 = vector.load %arg1[%c0_5, %c0_6] : memref<16x1024xf32, #tpu.memory_space<vmem>>, vector<16x1024xf32>
    %4 = arith.truncf %3 : vector<16x1024xf32> to vector<16x1024xbf16>
    %c0_7 = arith.constant 0 : index
    %c0_8 = arith.constant 0 : index
    %5 = vector.load %arg2[%c0_7, %c0_8] : memref<1024x512xbf16, #tpu.memory_space<vmem>>, vector<1024x512xbf16>
    %cst = arith.constant dense<0.000000e+00> : vector<16x512xf32>
    %6 = tpu.matmul %4, %5, %cst {dimension_numbers = #tpu.dot_dimension_numbers<[1], [0], [0], [1], [0, 0, 1, 1], [], []>} : vector<16x1024xbf16>, vector<1024x512xbf16>, vector<16x512xf32> -> vector<16x512xf32>
    %7 = vector.extract_strided_slice %2 {offsets = [0, 0], sizes = [1, 512], strides = [1, 1]} : vector<5x512xf32> to vector<1x512xf32>
    %8 = vector.broadcast %7 : vector<1x512xf32> to vector<16x512xf32>
    %9 = arith.addf %6, %8 : vector<16x512xf32>
    %10 = vector.extract_strided_slice %2 {offsets = [2, 0], sizes = [1, 512], strides = [1, 1]} : vector<5x512xf32> to vector<1x512xf32>
    %cst_9 = arith.constant dense<0.000000e+00> : vector<16x8xf32>
    %11 = tpu.matmul %9, %0, %cst_9 {dimension_numbers = #tpu.dot_dimension_numbers<[1], [0], [0], [1], [0, 0, 1, 1], [], []>} : vector<16x512xf32>, vector<512x8xf32>, vector<16x8xf32> -> vector<16x8xf32>
    %cst_10 = arith.constant 1.562500e-02 : f32
    %12 = vector.broadcast %cst_10 : f32 to vector<16x8xf32>
    %13 = arith.mulf %11, %12 : vector<16x8xf32>
    %cst_11 = arith.constant dense<0.000000e+00> : vector<16x512xf32>
    %14 = tpu.matmul %13, %1, %cst_11 {dimension_numbers = #tpu.dot_dimension_numbers<[1], [0], [0], [1], [0, 0, 1, 1], [], []>} : vector<16x8xf32>, vector<8x512xf32>, vector<16x512xf32> -> vector<16x512xf32>
    %15 = arith.subf %9, %14 : vector<16x512xf32>
    %16 = arith.mulf %15, %15 : vector<16x512xf32>
    %cst_12 = arith.constant dense<0.000000e+00> : vector<16x8xf32>
    %17 = tpu.matmul %16, %0, %cst_12 {dimension_numbers = #tpu.dot_dimension_numbers<[1], [0], [0], [1], [0, 0, 1, 1], [], []>} : vector<16x512xf32>, vector<512x8xf32>, vector<16x8xf32> -> vector<16x8xf32>
    %cst_13 = arith.constant 1.562500e-02 : f32
    %18 = vector.broadcast %cst_13 : f32 to vector<16x8xf32>
    %19 = arith.mulf %17, %18 : vector<16x8xf32>
    %cst_14 = arith.constant dense<0.000000e+00> : vector<16x512xf32>
    %20 = tpu.matmul %19, %1, %cst_14 {dimension_numbers = #tpu.dot_dimension_numbers<[1], [0], [0], [1], [0, 0, 1, 1], [], []>} : vector<16x8xf32>, vector<8x512xf32>, vector<16x512xf32> -> vector<16x512xf32>
    %cst_15 = arith.constant 9.99999974E-6 : f32
    %21 = vector.broadcast %cst_15 : f32 to vector<16x512xf32>
    %22 = arith.addf %20, %21 : vector<16x512xf32>
    %23 = math.rsqrt %22 : vector<16x512xf32>
    %24 = arith.mulf %15, %23 : vector<16x512xf32>
    %cst_16 = arith.constant 0.000000e+00 : f32
    %25 = vector.broadcast %cst_16 : f32 to vector<16x512xf32>
    %26 = arith.cmpf oge, %24, %25 : vector<16x512xf32>
    %27 = vector.broadcast %10 : vector<1x512xf32> to vector<16x512xf32>
    %28 = arith.mulf %27, %24 : vector<16x512xf32>
    %29 = arith.select %26, %24, %28 : vector<16x512xi1>, vector<16x512xf32>
    %c0_17 = arith.constant 0 : index
    %c0_18 = arith.constant 0 : index
    %30 = vector.load %arg3[%c0_17, %c0_18] : memref<1024x512xbf16, #tpu.memory_space<vmem>>, vector<1024x512xbf16>
    %cst_19 = arith.constant dense<0.000000e+00> : vector<16x512xf32>
    %31 = tpu.matmul %4, %30, %cst_19 {dimension_numbers = #tpu.dot_dimension_numbers<[1], [0], [0], [1], [0, 0, 1, 1], [], []>} : vector<16x1024xbf16>, vector<1024x512xbf16>, vector<16x512xf32> -> vector<16x512xf32>
    %32 = vector.extract_strided_slice %2 {offsets = [1, 0], sizes = [1, 512], strides = [1, 1]} : vector<5x512xf32> to vector<1x512xf32>
    %33 = vector.broadcast %32 : vector<1x512xf32> to vector<16x512xf32>
    %34 = arith.addf %31, %33 : vector<16x512xf32>
    %35 = arith.truncf %29 : vector<16x512xf32> to vector<16x512xbf16>
    %c0_20 = arith.constant 0 : index
    %c0_21 = arith.constant 0 : index
    %36 = vector.load %arg4[%c0_20, %c0_21] : memref<512x512xbf16, #tpu.memory_space<vmem>>, vector<512x512xbf16>
    %cst_22 = arith.constant dense<0.000000e+00> : vector<16x512xf32>
    %37 = tpu.matmul %35, %36, %cst_22 {dimension_numbers = #tpu.dot_dimension_numbers<[1], [0], [0], [1], [0, 0, 1, 1], [], []>} : vector<16x512xbf16>, vector<512x512xbf16>, vector<16x512xf32> -> vector<16x512xf32>
    %38 = vector.extract_strided_slice %2 {offsets = [3, 0], sizes = [1, 512], strides = [1, 1]} : vector<5x512xf32> to vector<1x512xf32>
    %39 = vector.broadcast %38 : vector<1x512xf32> to vector<16x512xf32>
    %40 = arith.addf %37, %39 : vector<16x512xf32>
    %41 = vector.extract_strided_slice %2 {offsets = [4, 0], sizes = [1, 512], strides = [1, 1]} : vector<5x512xf32> to vector<1x512xf32>
    %cst_23 = arith.constant dense<0.000000e+00> : vector<16x8xf32>
    %42 = tpu.matmul %40, %0, %cst_23 {dimension_numbers = #tpu.dot_dimension_numbers<[1], [0], [0], [1], [0, 0, 1, 1], [], []>} : vector<16x512xf32>, vector<512x8xf32>, vector<16x8xf32> -> vector<16x8xf32>
    %cst_24 = arith.constant 1.562500e-02 : f32
    %43 = vector.broadcast %cst_24 : f32 to vector<16x8xf32>
    %44 = arith.mulf %42, %43 : vector<16x8xf32>
    %cst_25 = arith.constant dense<0.000000e+00> : vector<16x512xf32>
    %45 = tpu.matmul %44, %1, %cst_25 {dimension_numbers = #tpu.dot_dimension_numbers<[1], [0], [0], [1], [0, 0, 1, 1], [], []>} : vector<16x8xf32>, vector<8x512xf32>, vector<16x512xf32> -> vector<16x512xf32>
    %46 = arith.subf %40, %45 : vector<16x512xf32>
    %47 = arith.mulf %46, %46 : vector<16x512xf32>
    %cst_26 = arith.constant dense<0.000000e+00> : vector<16x8xf32>
    %48 = tpu.matmul %47, %0, %cst_26 {dimension_numbers = #tpu.dot_dimension_numbers<[1], [0], [0], [1], [0, 0, 1, 1], [], []>} : vector<16x512xf32>, vector<512x8xf32>, vector<16x8xf32> -> vector<16x8xf32>
    %cst_27 = arith.constant 1.562500e-02 : f32
    %49 = vector.broadcast %cst_27 : f32 to vector<16x8xf32>
    %50 = arith.mulf %48, %49 : vector<16x8xf32>
    %cst_28 = arith.constant dense<0.000000e+00> : vector<16x512xf32>
    %51 = tpu.matmul %50, %1, %cst_28 {dimension_numbers = #tpu.dot_dimension_numbers<[1], [0], [0], [1], [0, 0, 1, 1], [], []>} : vector<16x8xf32>, vector<8x512xf32>, vector<16x512xf32> -> vector<16x512xf32>
    %cst_29 = arith.constant 9.99999974E-6 : f32
    %52 = vector.broadcast %cst_29 : f32 to vector<16x512xf32>
    %53 = arith.addf %51, %52 : vector<16x512xf32>
    %54 = math.rsqrt %53 : vector<16x512xf32>
    %55 = arith.mulf %46, %54 : vector<16x512xf32>
    %cst_30 = arith.constant 0.000000e+00 : f32
    %56 = vector.broadcast %cst_30 : f32 to vector<16x512xf32>
    %57 = arith.cmpf oge, %55, %56 : vector<16x512xf32>
    %58 = vector.broadcast %41 : vector<1x512xf32> to vector<16x512xf32>
    %59 = arith.mulf %58, %55 : vector<16x512xf32>
    %60 = arith.select %57, %55, %59 : vector<16x512xi1>, vector<16x512xf32>
    %61 = arith.addf %60, %34 : vector<16x512xf32>
    %c0_31 = arith.constant 0 : index
    %c0_32 = arith.constant 0 : index
    %62 = vector.load %arg8[%c0_31, %c0_32] : memref<16x512xf32, #tpu.memory_space<vmem>>, vector<16x512xf32>
    tpu.vector_store %arg8[%c0_31, %c0_32], %61 {strides = array<i32>} : memref<16x512xf32, #tpu.memory_space<vmem>>, vector<16x512xf32>,
    return
  }
  func.func @transform_0(%arg0: i32) -> (i32, i32) {
    %c0_i32 = arith.constant 0 : i32
    %c0_i32_0 = arith.constant 0 : i32
    return %arg0, %c0_i32 : i32, i32
  }
  func.func @transform_1(%arg0: i32) -> (i32, i32) {
    %c0_i32 = arith.constant 0 : i32
    %c0_i32_0 = arith.constant 0 : i32
    %c0_i32_1 = arith.constant 0 : i32
    return %c0_i32, %c0_i32_0 : i32, i32
  }
  func.func @transform_2(%arg0: i32) -> (i32, i32) {
    %c0_i32 = arith.constant 0 : i32
    %c0_i32_0 = arith.constant 0 : i32
    %c0_i32_1 = arith.constant 0 : i32
    return %c0_i32, %c0_i32_0 : i32, i32
  }
  func.func @transform_3(%arg0: i32) -> (i32, i32) {
    %c0_i32 = arith.constant 0 : i32
    %c0_i32_0 = arith.constant 0 : i32
    %c0_i32_1 = arith.constant 0 : i32
    return %c0_i32, %c0_i32_0 : i32, i32
  }
  func.func @transform_4(%arg0: i32) -> (i32, i32) {
    %c0_i32 = arith.constant 0 : i32
    %c0_i32_0 = arith.constant 0 : i32
    %c0_i32_1 = arith.constant 0 : i32
    return %c0_i32, %c0_i32_0 : i32, i32
  }
  func.func @transform_5(%arg0: i32) -> (i32, i32) {
    %c0_i32 = arith.constant 0 : i32
    %c0_i32_0 = arith.constant 0 : i32
    %c0_i32_1 = arith.constant 0 : i32
    return %c0_i32, %c0_i32_0 : i32, i32
  }
  func.func @transform_6(%arg0: i32) -> (i32, i32) {
    %c0_i32 = arith.constant 0 : i32
    %c0_i32_0 = arith.constant 0 : i32
    %c0_i32_1 = arith.constant 0 : i32
    return %c0_i32, %c0_i32_0 : i32, i32
  }
  func.func @transform_7(%arg0: i32) -> (i32, i32) {
    %c0_i32 = arith.constant 0 : i32
    %c0_i32_0 = arith.constant 0 : i32
    return %arg0, %c0_i32 : i32, i32
  }
}

module attributes {stable_mosaic.version = 11 : i64} {
  func.func @kernel(%arg0: i32, %arg1: memref<16x512xf32, #tpu.memory_space<vmem>>, %arg2: memref<512x512xbf16, #tpu.memory_space<vmem>>, %arg3: memref<512x512xbf16, #tpu.memory_space<vmem>>, %arg4: memref<512x8xf32, #tpu.memory_space<vmem>>, %arg5: memref<8x512xf32, #tpu.memory_space<vmem>>, %arg6: memref<5x512xf32, #tpu.memory_space<vmem>>, %arg7: memref<16x512xf32, #tpu.memory_space<vmem>>) attributes {dimension_semantics = [#tpu.dimension_semantics<parallel>], iteration_bounds = array<i64: 1>, scalar_prefetch = 0 : i64, scratch_operands = 0 : i64, tpu.core_type = #tpu.core_type<tc>, window_params = [{transform_indices = @transform_0, window_bounds = array<i64: 16, 512>}, {pipeline_mode = #tpu.pipeline_mode<synchronous>, transform_indices = @transform_1, window_bounds = array<i64: 512, 512>}, {pipeline_mode = #tpu.pipeline_mode<synchronous>, transform_indices = @transform_2, window_bounds = array<i64: 512, 512>}, {pipeline_mode = #tpu.pipeline_mode<synchronous>, transform_indices = @transform_3, window_bounds = array<i64: 512, 8>}, {pipeline_mode = #tpu.pipeline_mode<synchronous>, transform_indices = @transform_4, window_bounds = array<i64: 8, 512>}, {pipeline_mode = #tpu.pipeline_mode<synchronous>, transform_indices = @transform_5, window_bounds = array<i64: 5, 512>}, {transform_indices = @transform_6, window_bounds = array<i64: 16, 512>}]} {
    %c0 = arith.constant 0 : index
    %c0_0 = arith.constant 0 : index
    %0 = vector.load %arg4[%c0, %c0_0] : memref<512x8xf32, #tpu.memory_space<vmem>>, vector<512x8xf32>
    %c0_1 = arith.constant 0 : index
    %c0_2 = arith.constant 0 : index
    %1 = vector.load %arg5[%c0_1, %c0_2] : memref<8x512xf32, #tpu.memory_space<vmem>>, vector<8x512xf32>
    %c0_3 = arith.constant 0 : index
    %c0_4 = arith.constant 0 : index
    %2 = vector.load %arg6[%c0_3, %c0_4] : memref<5x512xf32, #tpu.memory_space<vmem>>, vector<5x512xf32>
    %c0_5 = arith.constant 0 : index
    %c0_6 = arith.constant 0 : index
    %3 = vector.load %arg1[%c0_5, %c0_6] : memref<16x512xf32, #tpu.memory_space<vmem>>, vector<16x512xf32>
    %4 = arith.truncf %3 : vector<16x512xf32> to vector<16x512xbf16>
    %c0_7 = arith.constant 0 : index
    %c0_8 = arith.constant 0 : index
    %5 = vector.load %arg2[%c0_7, %c0_8] : memref<512x512xbf16, #tpu.memory_space<vmem>>, vector<512x512xbf16>
    %cst = arith.constant dense<0.000000e+00> : vector<16x512xf32>
    %6 = tpu.matmul %4, %5, %cst {dimension_numbers = #tpu.dot_dimension_numbers<[1], [0], [0], [1], [0, 0, 1, 1], [], []>} : vector<16x512xbf16>, vector<512x512xbf16>, vector<16x512xf32> -> vector<16x512xf32>
    %7 = vector.extract_strided_slice %2 {offsets = [0, 0], sizes = [1, 512], strides = [1, 1]} : vector<5x512xf32> to vector<1x512xf32>
    %8 = vector.broadcast %7 : vector<1x512xf32> to vector<16x512xf32>
    %9 = arith.addf %6, %8 : vector<16x512xf32>
    %10 = vector.extract_strided_slice %2 {offsets = [2, 0], sizes = [1, 512], strides = [1, 1]} : vector<5x512xf32> to vector<1x512xf32>
    %cst_9 = arith.constant dense<0.000000e+00> : vector<16x8xf32>
    %11 = tpu.matmul %9, %0, %cst_9 {dimension_numbers = #tpu.dot_dimension_numbers<[1], [0], [0], [1], [0, 0, 1, 1], [], []>} : vector<16x512xf32>, vector<512x8xf32>, vector<16x8xf32> -> vector<16x8xf32>
    %cst_10 = arith.constant 1.562500e-02 : f32
    %12 = vector.broadcast %cst_10 : f32 to vector<16x8xf32>
    %13 = arith.mulf %11, %12 : vector<16x8xf32>
    %cst_11 = arith.constant dense<0.000000e+00> : vector<16x512xf32>
    %14 = tpu.matmul %13, %1, %cst_11 {dimension_numbers = #tpu.dot_dimension_numbers<[1], [0], [0], [1], [0, 0, 1, 1], [], []>} : vector<16x8xf32>, vector<8x512xf32>, vector<16x512xf32> -> vector<16x512xf32>
    %15 = arith.subf %9, %14 : vector<16x512xf32>
    %16 = arith.mulf %15, %15 : vector<16x512xf32>
    %cst_12 = arith.constant dense<0.000000e+00> : vector<16x8xf32>
    %17 = tpu.matmul %16, %0, %cst_12 {dimension_numbers = #tpu.dot_dimension_numbers<[1], [0], [0], [1], [0, 0, 1, 1], [], []>} : vector<16x512xf32>, vector<512x8xf32>, vector<16x8xf32> -> vector<16x8xf32>
    %cst_13 = arith.constant 1.562500e-02 : f32
    %18 = vector.broadcast %cst_13 : f32 to vector<16x8xf32>
    %19 = arith.mulf %17, %18 : vector<16x8xf32>
    %cst_14 = arith.constant dense<0.000000e+00> : vector<16x512xf32>
    %20 = tpu.matmul %19, %1, %cst_14 {dimension_numbers = #tpu.dot_dimension_numbers<[1], [0], [0], [1], [0, 0, 1, 1], [], []>} : vector<16x8xf32>, vector<8x512xf32>, vector<16x512xf32> -> vector<16x512xf32>
    %cst_15 = arith.constant 9.99999974E-6 : f32
    %21 = vector.broadcast %cst_15 : f32 to vector<16x512xf32>
    %22 = arith.addf %20, %21 : vector<16x512xf32>
    %23 = math.rsqrt %22 : vector<16x512xf32>
    %24 = arith.mulf %15, %23 : vector<16x512xf32>
    %cst_16 = arith.constant 0.000000e+00 : f32
    %25 = vector.broadcast %cst_16 : f32 to vector<16x512xf32>
    %26 = arith.cmpf oge, %24, %25 : vector<16x512xf32>
    %27 = vector.broadcast %10 : vector<1x512xf32> to vector<16x512xf32>
    %28 = arith.mulf %27, %24 : vector<16x512xf32>
    %29 = arith.select %26, %24, %28 : vector<16x512xi1>, vector<16x512xf32>
    %30 = arith.truncf %29 : vector<16x512xf32> to vector<16x512xbf16>
    %c0_17 = arith.constant 0 : index
    %c0_18 = arith.constant 0 : index
    %31 = vector.load %arg3[%c0_17, %c0_18] : memref<512x512xbf16, #tpu.memory_space<vmem>>, vector<512x512xbf16>
    %cst_19 = arith.constant dense<0.000000e+00> : vector<16x512xf32>
    %32 = tpu.matmul %30, %31, %cst_19 {dimension_numbers = #tpu.dot_dimension_numbers<[1], [0], [0], [1], [0, 0, 1, 1], [], []>} : vector<16x512xbf16>, vector<512x512xbf16>, vector<16x512xf32> -> vector<16x512xf32>
    %33 = vector.extract_strided_slice %2 {offsets = [3, 0], sizes = [1, 512], strides = [1, 1]} : vector<5x512xf32> to vector<1x512xf32>
    %34 = vector.broadcast %33 : vector<1x512xf32> to vector<16x512xf32>
    %35 = arith.addf %32, %34 : vector<16x512xf32>
    %36 = vector.extract_strided_slice %2 {offsets = [4, 0], sizes = [1, 512], strides = [1, 1]} : vector<5x512xf32> to vector<1x512xf32>
    %cst_20 = arith.constant dense<0.000000e+00> : vector<16x8xf32>
    %37 = tpu.matmul %35, %0, %cst_20 {dimension_numbers = #tpu.dot_dimension_numbers<[1], [0], [0], [1], [0, 0, 1, 1], [], []>} : vector<16x512xf32>, vector<512x8xf32>, vector<16x8xf32> -> vector<16x8xf32>
    %cst_21 = arith.constant 1.562500e-02 : f32
    %38 = vector.broadcast %cst_21 : f32 to vector<16x8xf32>
    %39 = arith.mulf %37, %38 : vector<16x8xf32>
    %cst_22 = arith.constant dense<0.000000e+00> : vector<16x512xf32>
    %40 = tpu.matmul %39, %1, %cst_22 {dimension_numbers = #tpu.dot_dimension_numbers<[1], [0], [0], [1], [0, 0, 1, 1], [], []>} : vector<16x8xf32>, vector<8x512xf32>, vector<16x512xf32> -> vector<16x512xf32>
    %41 = arith.subf %35, %40 : vector<16x512xf32>
    %42 = arith.mulf %41, %41 : vector<16x512xf32>
    %cst_23 = arith.constant dense<0.000000e+00> : vector<16x8xf32>
    %43 = tpu.matmul %42, %0, %cst_23 {dimension_numbers = #tpu.dot_dimension_numbers<[1], [0], [0], [1], [0, 0, 1, 1], [], []>} : vector<16x512xf32>, vector<512x8xf32>, vector<16x8xf32> -> vector<16x8xf32>
    %cst_24 = arith.constant 1.562500e-02 : f32
    %44 = vector.broadcast %cst_24 : f32 to vector<16x8xf32>
    %45 = arith.mulf %43, %44 : vector<16x8xf32>
    %cst_25 = arith.constant dense<0.000000e+00> : vector<16x512xf32>
    %46 = tpu.matmul %45, %1, %cst_25 {dimension_numbers = #tpu.dot_dimension_numbers<[1], [0], [0], [1], [0, 0, 1, 1], [], []>} : vector<16x8xf32>, vector<8x512xf32>, vector<16x512xf32> -> vector<16x512xf32>
    %cst_26 = arith.constant 9.99999974E-6 : f32
    %47 = vector.broadcast %cst_26 : f32 to vector<16x512xf32>
    %48 = arith.addf %46, %47 : vector<16x512xf32>
    %49 = math.rsqrt %48 : vector<16x512xf32>
    %50 = arith.mulf %41, %49 : vector<16x512xf32>
    %cst_27 = arith.constant 0.000000e+00 : f32
    %51 = vector.broadcast %cst_27 : f32 to vector<16x512xf32>
    %52 = arith.cmpf oge, %50, %51 : vector<16x512xf32>
    %53 = vector.broadcast %36 : vector<1x512xf32> to vector<16x512xf32>
    %54 = arith.mulf %53, %50 : vector<16x512xf32>
    %55 = arith.select %52, %50, %54 : vector<16x512xi1>, vector<16x512xf32>
    %56 = arith.addf %55, %3 : vector<16x512xf32>
    %c0_28 = arith.constant 0 : index
    %c0_29 = arith.constant 0 : index
    %57 = vector.load %arg7[%c0_28, %c0_29] : memref<16x512xf32, #tpu.memory_space<vmem>>, vector<16x512xf32>
    tpu.vector_store %arg7[%c0_28, %c0_29], %56 {strides = array<i32>} : memref<16x512xf32, #tpu.memory_space<vmem>>, vector<16x512xf32>,
    return
  }
  func.func @transform_0(%arg0: i32) -> (i32, i32) {
    %c0_i32 = arith.constant 0 : i32
    %c0_i32_0 = arith.constant 0 : i32
    return %arg0, %c0_i32 : i32, i32
  }
  func.func @transform_1(%arg0: i32) -> (i32, i32) {
    %c0_i32 = arith.constant 0 : i32
    %c0_i32_0 = arith.constant 0 : i32
    %c0_i32_1 = arith.constant 0 : i32
    return %c0_i32, %c0_i32_0 : i32, i32
  }
  func.func @transform_2(%arg0: i32) -> (i32, i32) {
    %c0_i32 = arith.constant 0 : i32
    %c0_i32_0 = arith.constant 0 : i32
    %c0_i32_1 = arith.constant 0 : i32
    return %c0_i32, %c0_i32_0 : i32, i32
  }
  func.func @transform_3(%arg0: i32) -> (i32, i32) {
    %c0_i32 = arith.constant 0 : i32
    %c0_i32_0 = arith.constant 0 : i32
    %c0_i32_1 = arith.constant 0 : i32
    return %c0_i32, %c0_i32_0 : i32, i32
  }
  func.func @transform_4(%arg0: i32) -> (i32, i32) {
    %c0_i32 = arith.constant 0 : i32
    %c0_i32_0 = arith.constant 0 : i32
    %c0_i32_1 = arith.constant 0 : i32
    return %c0_i32, %c0_i32_0 : i32, i32
  }
  func.func @transform_5(%arg0: i32) -> (i32, i32) {
    %c0_i32 = arith.constant 0 : i32
    %c0_i32_0 = arith.constant 0 : i32
    %c0_i32_1 = arith.constant 0 : i32
    return %c0_i32, %c0_i32_0 : i32, i32
  }
  func.func @transform_6(%arg0: i32) -> (i32, i32) {
    %c0_i32 = arith.constant 0 : i32
    %c0_i32_0 = arith.constant 0 : i32
    return %arg0, %c0_i32 : i32, i32
  }
}

module attributes {stable_mosaic.version = 11 : i64} {
  func.func @kernel(%arg0: i32, %arg1: memref<16x512xf32, #tpu.memory_space<vmem>>, %arg2: memref<512x256xbf16, #tpu.memory_space<vmem>>, %arg3: memref<512x256xbf16, #tpu.memory_space<vmem>>, %arg4: memref<256x256xbf16, #tpu.memory_space<vmem>>, %arg5: memref<256x16xf32, #tpu.memory_space<vmem>>, %arg6: memref<16x256xf32, #tpu.memory_space<vmem>>, %arg7: memref<5x256xf32, #tpu.memory_space<vmem>>, %arg8: memref<256x4xbf16, #tpu.memory_space<vmem>>, %arg9: memref<1x4xf32, #tpu.memory_space<vmem>>, %arg10: memref<16x4xf32, #tpu.memory_space<vmem>>) attributes {dimension_semantics = [#tpu.dimension_semantics<parallel>], iteration_bounds = array<i64: 1>, scalar_prefetch = 0 : i64, scratch_operands = 0 : i64, tpu.core_type = #tpu.core_type<tc>, window_params = [{transform_indices = @transform_0, window_bounds = array<i64: 16, 512>}, {pipeline_mode = #tpu.pipeline_mode<synchronous>, transform_indices = @transform_1, window_bounds = array<i64: 512, 256>}, {pipeline_mode = #tpu.pipeline_mode<synchronous>, transform_indices = @transform_2, window_bounds = array<i64: 512, 256>}, {pipeline_mode = #tpu.pipeline_mode<synchronous>, transform_indices = @transform_3, window_bounds = array<i64: 256, 256>}, {pipeline_mode = #tpu.pipeline_mode<synchronous>, transform_indices = @transform_4, window_bounds = array<i64: 256, 16>}, {pipeline_mode = #tpu.pipeline_mode<synchronous>, transform_indices = @transform_5, window_bounds = array<i64: 16, 256>}, {pipeline_mode = #tpu.pipeline_mode<synchronous>, transform_indices = @transform_6, window_bounds = array<i64: 5, 256>}, {pipeline_mode = #tpu.pipeline_mode<synchronous>, transform_indices = @transform_7, window_bounds = array<i64: 256, 4>}, {pipeline_mode = #tpu.pipeline_mode<synchronous>, transform_indices = @transform_8, window_bounds = array<i64: 1, 4>}, {transform_indices = @transform_9, window_bounds = array<i64: 16, 4>}]} {
    %c0 = arith.constant 0 : index
    %c0_0 = arith.constant 0 : index
    %0 = vector.load %arg5[%c0, %c0_0] : memref<256x16xf32, #tpu.memory_space<vmem>>, vector<256x16xf32>
    %c0_1 = arith.constant 0 : index
    %c0_2 = arith.constant 0 : index
    %1 = vector.load %arg6[%c0_1, %c0_2] : memref<16x256xf32, #tpu.memory_space<vmem>>, vector<16x256xf32>
    %c0_3 = arith.constant 0 : index
    %c0_4 = arith.constant 0 : index
    %2 = vector.load %arg7[%c0_3, %c0_4] : memref<5x256xf32, #tpu.memory_space<vmem>>, vector<5x256xf32>
    %c0_5 = arith.constant 0 : index
    %c0_6 = arith.constant 0 : index
    %3 = vector.load %arg1[%c0_5, %c0_6] : memref<16x512xf32, #tpu.memory_space<vmem>>, vector<16x512xf32>
    %4 = arith.truncf %3 : vector<16x512xf32> to vector<16x512xbf16>
    %c0_7 = arith.constant 0 : index
    %c0_8 = arith.constant 0 : index
    %5 = vector.load %arg2[%c0_7, %c0_8] : memref<512x256xbf16, #tpu.memory_space<vmem>>, vector<512x256xbf16>
    %cst = arith.constant dense<0.000000e+00> : vector<16x256xf32>
    %6 = tpu.matmul %4, %5, %cst {dimension_numbers = #tpu.dot_dimension_numbers<[1], [0], [0], [1], [0, 0, 1, 1], [], []>} : vector<16x512xbf16>, vector<512x256xbf16>, vector<16x256xf32> -> vector<16x256xf32>
    %7 = vector.extract_strided_slice %2 {offsets = [0, 0], sizes = [1, 256], strides = [1, 1]} : vector<5x256xf32> to vector<1x256xf32>
    %8 = vector.broadcast %7 : vector<1x256xf32> to vector<16x256xf32>
    %9 = arith.addf %6, %8 : vector<16x256xf32>
    %10 = vector.extract_strided_slice %2 {offsets = [2, 0], sizes = [1, 256], strides = [1, 1]} : vector<5x256xf32> to vector<1x256xf32>
    %cst_9 = arith.constant dense<0.000000e+00> : vector<16x16xf32>
    %11 = tpu.matmul %9, %0, %cst_9 {dimension_numbers = #tpu.dot_dimension_numbers<[1], [0], [0], [1], [0, 0, 1, 1], [], []>} : vector<16x256xf32>, vector<256x16xf32>, vector<16x16xf32> -> vector<16x16xf32>
    %cst_10 = arith.constant 6.250000e-02 : f32
    %12 = vector.broadcast %cst_10 : f32 to vector<16x16xf32>
    %13 = arith.mulf %11, %12 : vector<16x16xf32>
    %cst_11 = arith.constant dense<0.000000e+00> : vector<16x256xf32>
    %14 = tpu.matmul %13, %1, %cst_11 {dimension_numbers = #tpu.dot_dimension_numbers<[1], [0], [0], [1], [0, 0, 1, 1], [], []>} : vector<16x16xf32>, vector<16x256xf32>, vector<16x256xf32> -> vector<16x256xf32>
    %15 = arith.subf %9, %14 : vector<16x256xf32>
    %16 = arith.mulf %15, %15 : vector<16x256xf32>
    %cst_12 = arith.constant dense<0.000000e+00> : vector<16x16xf32>
    %17 = tpu.matmul %16, %0, %cst_12 {dimension_numbers = #tpu.dot_dimension_numbers<[1], [0], [0], [1], [0, 0, 1, 1], [], []>} : vector<16x256xf32>, vector<256x16xf32>, vector<16x16xf32> -> vector<16x16xf32>
    %cst_13 = arith.constant 6.250000e-02 : f32
    %18 = vector.broadcast %cst_13 : f32 to vector<16x16xf32>
    %19 = arith.mulf %17, %18 : vector<16x16xf32>
    %cst_14 = arith.constant dense<0.000000e+00> : vector<16x256xf32>
    %20 = tpu.matmul %19, %1, %cst_14 {dimension_numbers = #tpu.dot_dimension_numbers<[1], [0], [0], [1], [0, 0, 1, 1], [], []>} : vector<16x16xf32>, vector<16x256xf32>, vector<16x256xf32> -> vector<16x256xf32>
    %cst_15 = arith.constant 9.99999974E-6 : f32
    %21 = vector.broadcast %cst_15 : f32 to vector<16x256xf32>
    %22 = arith.addf %20, %21 : vector<16x256xf32>
    %23 = math.rsqrt %22 : vector<16x256xf32>
    %24 = arith.mulf %15, %23 : vector<16x256xf32>
    %cst_16 = arith.constant 0.000000e+00 : f32
    %25 = vector.broadcast %cst_16 : f32 to vector<16x256xf32>
    %26 = arith.cmpf oge, %24, %25 : vector<16x256xf32>
    %27 = vector.broadcast %10 : vector<1x256xf32> to vector<16x256xf32>
    %28 = arith.mulf %27, %24 : vector<16x256xf32>
    %29 = arith.select %26, %24, %28 : vector<16x256xi1>, vector<16x256xf32>
    %c0_17 = arith.constant 0 : index
    %c0_18 = arith.constant 0 : index
    %30 = vector.load %arg3[%c0_17, %c0_18] : memref<512x256xbf16, #tpu.memory_space<vmem>>, vector<512x256xbf16>
    %cst_19 = arith.constant dense<0.000000e+00> : vector<16x256xf32>
    %31 = tpu.matmul %4, %30, %cst_19 {dimension_numbers = #tpu.dot_dimension_numbers<[1], [0], [0], [1], [0, 0, 1, 1], [], []>} : vector<16x512xbf16>, vector<512x256xbf16>, vector<16x256xf32> -> vector<16x256xf32>
    %32 = vector.extract_strided_slice %2 {offsets = [1, 0], sizes = [1, 256], strides = [1, 1]} : vector<5x256xf32> to vector<1x256xf32>
    %33 = vector.broadcast %32 : vector<1x256xf32> to vector<16x256xf32>
    %34 = arith.addf %31, %33 : vector<16x256xf32>
    %35 = arith.truncf %29 : vector<16x256xf32> to vector<16x256xbf16>
    %c0_20 = arith.constant 0 : index
    %c0_21 = arith.constant 0 : index
    %36 = vector.load %arg4[%c0_20, %c0_21] : memref<256x256xbf16, #tpu.memory_space<vmem>>, vector<256x256xbf16>
    %cst_22 = arith.constant dense<0.000000e+00> : vector<16x256xf32>
    %37 = tpu.matmul %35, %36, %cst_22 {dimension_numbers = #tpu.dot_dimension_numbers<[1], [0], [0], [1], [0, 0, 1, 1], [], []>} : vector<16x256xbf16>, vector<256x256xbf16>, vector<16x256xf32> -> vector<16x256xf32>
    %38 = vector.extract_strided_slice %2 {offsets = [3, 0], sizes = [1, 256], strides = [1, 1]} : vector<5x256xf32> to vector<1x256xf32>
    %39 = vector.broadcast %38 : vector<1x256xf32> to vector<16x256xf32>
    %40 = arith.addf %37, %39 : vector<16x256xf32>
    %41 = arith.addf %40, %34 : vector<16x256xf32>
    %42 = arith.truncf %41 : vector<16x256xf32> to vector<16x256xbf16>
    %c0_23 = arith.constant 0 : index
    %c0_24 = arith.constant 0 : index
    %43 = vector.load %arg8[%c0_23, %c0_24] : memref<256x4xbf16, #tpu.memory_space<vmem>>, vector<256x4xbf16>
    %cst_25 = arith.constant dense<0.000000e+00> : vector<16x4xf32>
    %44 = tpu.matmul %42, %43, %cst_25 {dimension_numbers = #tpu.dot_dimension_numbers<[1], [0], [0], [1], [0, 0, 1, 1], [], []>} : vector<16x256xbf16>, vector<256x4xbf16>, vector<16x4xf32> -> vector<16x4xf32>
    %c0_26 = arith.constant 0 : index
    %c0_27 = arith.constant 0 : index
    %45 = vector.load %arg9[%c0_26, %c0_27] : memref<1x4xf32, #tpu.memory_space<vmem>>, vector<1x4xf32>
    %46 = vector.broadcast %45 : vector<1x4xf32> to vector<16x4xf32>
    %47 = arith.addf %44, %46 : vector<16x4xf32>
    %c0_28 = arith.constant 0 : index
    %c0_29 = arith.constant 0 : index
    %48 = vector.load %arg10[%c0_28, %c0_29] : memref<16x4xf32, #tpu.memory_space<vmem>>, vector<16x4xf32>
    tpu.vector_store %arg10[%c0_28, %c0_29], %47 {strides = array<i32>} : memref<16x4xf32, #tpu.memory_space<vmem>>, vector<16x4xf32>,
    return
  }
  func.func @transform_0(%arg0: i32) -> (i32, i32) {
    %c0_i32 = arith.constant 0 : i32
    %c0_i32_0 = arith.constant 0 : i32
    return %arg0, %c0_i32 : i32, i32
  }
  func.func @transform_1(%arg0: i32) -> (i32, i32) {
    %c0_i32 = arith.constant 0 : i32
    %c0_i32_0 = arith.constant 0 : i32
    %c0_i32_1 = arith.constant 0 : i32
    return %c0_i32, %c0_i32_0 : i32, i32
  }
  func.func @transform_2(%arg0: i32) -> (i32, i32) {
    %c0_i32 = arith.constant 0 : i32
    %c0_i32_0 = arith.constant 0 : i32
    %c0_i32_1 = arith.constant 0 : i32
    return %c0_i32, %c0_i32_0 : i32, i32
  }
  func.func @transform_3(%arg0: i32) -> (i32, i32) {
    %c0_i32 = arith.constant 0 : i32
    %c0_i32_0 = arith.constant 0 : i32
    %c0_i32_1 = arith.constant 0 : i32
    return %c0_i32, %c0_i32_0 : i32, i32
  }
  func.func @transform_4(%arg0: i32) -> (i32, i32) {
    %c0_i32 = arith.constant 0 : i32
    %c0_i32_0 = arith.constant 0 : i32
    %c0_i32_1 = arith.constant 0 : i32
    return %c0_i32, %c0_i32_0 : i32, i32
  }
  func.func @transform_5(%arg0: i32) -> (i32, i32) {
    %c0_i32 = arith.constant 0 : i32
    %c0_i32_0 = arith.constant 0 : i32
    %c0_i32_1 = arith.constant 0 : i32
    return %c0_i32, %c0_i32_0 : i32, i32
  }
  func.func @transform_6(%arg0: i32) -> (i32, i32) {
    %c0_i32 = arith.constant 0 : i32
    %c0_i32_0 = arith.constant 0 : i32
    %c0_i32_1 = arith.constant 0 : i32
    return %c0_i32, %c0_i32_0 : i32, i32
  }
  func.func @transform_7(%arg0: i32) -> (i32, i32) {
    %c0_i32 = arith.constant 0 : i32
    %c0_i32_0 = arith.constant 0 : i32
    %c0_i32_1 = arith.constant 0 : i32
    return %c0_i32, %c0_i32_0 : i32, i32
  }
  func.func @transform_8(%arg0: i32) -> (i32, i32) {
    %c0_i32 = arith.constant 0 : i32
    %c0_i32_0 = arith.constant 0 : i32
    %c0_i32_1 = arith.constant 0 : i32
    return %c0_i32, %c0_i32_0 : i32, i32
  }
  func.func @transform_9(%arg0: i32) -> (i32, i32) {
    %c0_i32 = arith.constant 0 : i32
    %c0_i32_0 = arith.constant 0 : i32
    return %arg0, %c0_i32 : i32, i32
  }
}

</mosaic_0001>

<llo_original>
// kernel: _lambda_.5
$region0: #{_lambda_.5}
  #allocation0 [shape = 'u32[]', space=smem, size = 0x4, offset = 0x4, fixed_abs, tag = 'smem constant byte address 0x4 - core index']
  #allocation1 [shape = 'u32[72,128]{1,0:T(1,128)}', space=vmem, size = 0x9000, scoped, tag = 'internal scratch']
  %s0 = inlined_call_operand.vmem [shape: f32[16,512], index: 0, kind: input, shape index: {}]
  %s1 = inlined_call_operand.vmem [shape: bf16[512,256], index: 1, kind: input, shape index: {}]
  %s2 = inlined_call_operand.vmem [shape: bf16[512,256], index: 2, kind: input, shape index: {}]
  %s3 = inlined_call_operand.vmem [shape: bf16[256,256], index: 3, kind: input, shape index: {}]
  %s4 = inlined_call_operand.vmem [shape: f32[256,16], index: 4, kind: input, shape index: {}]
  %s5 = inlined_call_operand.vmem [shape: f32[16,256], index: 5, kind: input, shape index: {}]
  %s6 = inlined_call_operand.vmem [shape: f32[5,256], index: 6, kind: input, shape index: {}]
  %s7 = inlined_call_operand.vmem [shape: bf16[256,4], index: 7, kind: input, shape index: {}]
  %s8 = inlined_call_operand.vmem [shape: f32[1,4], index: 8, kind: input, shape index: {}]
  %s9 = inlined_call_operand.vmem [shape: f32[16,4], index: 9, kind: output, shape index: {}]
  %s10 = sld [smem:[#allocation0]]
  $region46: #{_lambda_.5} parent=0
    _
  %s12 = ssub.s32 1, %s10
  %s13 = scalar_select 0, %s12, %s10
  // Predicated region
  $region2: #{_lambda_.5} parent=0 // pred_check
    _
  $region3: #{_lambda_.5} parent=0 // pred_check_branch
    %15 = sbr.rel (0) target = $region5
  $region4: #{_lambda_.5} parent=0 // pred_region
    _
  $region5: #{_lambda_.5} parent=0 // pred_fallthru
    _
  // Predicated region
  $region6: #{_lambda_.5} parent=0 // pred_check
    _
  $region7: #{_lambda_.5} parent=0 // pred_check_branch
    %17 = sbr.rel (0) target = $region9
  $region8: #{_lambda_.5} parent=0 // pred_region
    _
  $region9: #{_lambda_.5} parent=0 // pred_fallthru
    _
  // Predicated region
  $region10: #{_lambda_.5} parent=0 // pred_check
    _
  $region11: #{_lambda_.5} parent=0 // pred_check_branch
    %19 = sbr.rel (0) target = $region13
  $region12: #{_lambda_.5} parent=0 // pred_region
    _
  $region13: #{_lambda_.5} parent=0 // pred_fallthru
    _
  // Predicated region
  $region14: #{_lambda_.5} parent=0 // pred_check
    _
  $region15: #{_lambda_.5} parent=0 // pred_check_branch
    %21 = sbr.rel (0) target = $region17
  $region16: #{_lambda_.5} parent=0 // pred_region
    _
  $region17: #{_lambda_.5} parent=0 // pred_fallthru
    _
  // Predicated region
  $region18: #{_lambda_.5} parent=0 // pred_check
    _
  $region19: #{_lambda_.5} parent=0 // pred_check_branch
    %23 = sbr.rel (0) target = $region21
  $region20: #{_lambda_.5} parent=0 // pred_region
    _
  $region21: #{_lambda_.5} parent=0 // pred_fallthru
    _
  // Predicated region
  $region22: #{_lambda_.5} parent=0 // pred_check
    _
  $region23: #{_lambda_.5} parent=0 // pred_check_branch
    %25 = sbr.rel (0) target = $region25
  $region24: #{_lambda_.5} parent=0 // pred_region
    _
  $region25: #{_lambda_.5} parent=0 // pred_fallthru
    _
  // Predicated region
  $region26: #{_lambda_.5} parent=0 // pred_check
    _
  $region27: #{_lambda_.5} parent=0 // pred_check_branch
    %27 = sbr.rel (0) target = $region29
  $region28: #{_lambda_.5} parent=0 // pred_region
    _
  $region29: #{_lambda_.5} parent=0 // pred_fallthru
    _
  // Predicated region
  $region30: #{_lambda_.5} parent=0 // pred_check
    _
  $region31: #{_lambda_.5} parent=0 // pred_check_branch
    %29 = sbr.rel (0) target = $region33
  $region32: #{_lambda_.5} parent=0 // pred_region
    _
  $region33: #{_lambda_.5} parent=0 // pred_fallthru
    _
  // Predicated region
  $region34: #{_lambda_.5} parent=0 // pred_check
    _
  $region35: #{_lambda_.5} parent=0 // pred_check_branch
    %31 = sbr.rel (0) target = $region37
  $region36: #{_lambda_.5} parent=0 // pred_region
    _
  $region37: #{_lambda_.5} parent=0 // pred_fallthru
    _
  %v32 = vld [vmem:[%s4] sm:$0xff]
  %v33 = vld [vmem:[%s4 + $0x8] sm:$0xff]
  %v34 = vld [vmem:[%s4 + $0x10] sm:$0xff]
  %v35 = vld [vmem:[%s4 + $0x18] sm:$0xff]
  %v36 = vld [vmem:[%s4 + $0x20] sm:$0xff]
  %v37 = vld [vmem:[%s4 + $0x28] sm:$0xff]
  %v38 = vld [vmem:[%s4 + $0x30] sm:$0xff]
  %v39 = vld [vmem:[%s4 + $0x38] sm:$0xff]
  %v40 = vld [vmem:[%s4 + $0x40] sm:$0xff]
  %v41 = vld [vmem:[%s4 + $0x48] sm:$0xff]
  %v42 = vld [vmem:[%s4 + $0x50] sm:$0xff]
  %v43 = vld [vmem:[%s4 + $0x58] sm:$0xff]
  %v44 = vld [vmem:[%s4 + $0x60] sm:$0xff]
  %v45 = vld [vmem:[%s4 + $0x68] sm:$0xff]
  %v46 = vld [vmem:[%s4 + $0x70] sm:$0xff]
  %v47 = vld [vmem:[%s4 + $0x78] sm:$0xff]
  %v48 = vld [vmem:[%s4 + $0x80] sm:$0xff]
  %v49 = vld [vmem:[%s4 + $0x88] sm:$0xff]
  %v50 = vld [vmem:[%s4 + $0x90] sm:$0xff]
  %v51 = vld [vmem:[%s4 + $0x98] sm:$0xff]
  %v52 = vld [vmem:[%s4 + $0xa0] sm:$0xff]
  %v53 = vld [vmem:[%s4 + $0xa8] sm:$0xff]
  %v54 = vld [vmem:[%s4 + $0xb0] sm:$0xff]
  %v55 = vld [vmem:[%s4 + $0xb8] sm:$0xff]
  %v56 = vld [vmem:[%s4 + $0xc0] sm:$0xff]
  %v57 = vld [vmem:[%s4 + $0xc8] sm:$0xff]
  %v58 = vld [vmem:[%s4 + $0xd0] sm:$0xff]
  %v59 = vld [vmem:[%s4 + $0xd8] sm:$0xff]
  %v60 = vld [vmem:[%s4 + $0xe0] sm:$0xff]
  %v61 = vld [vmem:[%s4 + $0xe8] sm:$0xff]
  %v62 = vld [vmem:[%s4 + $0xf0] sm:$0xff]
  %v63 = vld [vmem:[%s4 + $0xf8] sm:$0xff]
  %v64 = vld [vmem:[%s5] sm:$0xff]
  %v65 = vld [vmem:[%s5 + $0x8] sm:$0xff]
  %v66 = vld [vmem:[%s5 + $0x10] sm:$0xff]
  %v67 = vld [vmem:[%s5 + $0x18] sm:$0xff]
  %v68 = vld [vmem:[%s6] sm:$0x1f]
  %v69 = vld [vmem:[%s6 + $0x8] sm:$0x1f]
  %v70 = vld [vmem:[%s0] sm:$0xff]
  %v71 = vld [vmem:[%s0 + $0x8] sm:$0xff]
  %v72 = vld [vmem:[%s0 + $0x10] sm:$0xff]
  %v73 = vld [vmem:[%s0 + $0x18] sm:$0xff]
  %v74 = vld [vmem:[%s0 + $0x20] sm:$0xff]
  %v75 = vld [vmem:[%s0 + $0x28] sm:$0xff]
  %v76 = vld [vmem:[%s0 + $0x30] sm:$0xff]
  %v77 = vld [vmem:[%s0 + $0x38] sm:$0xff]
  %v78 = vpack.c.bf16 %v74, %v70
  %v79 = vpack.c.bf16 %v75, %v71
  %v80 = vpack.c.bf16 %v76, %v72
  %v81 = vpack.c.bf16 %v77, %v73
  %v82 = vld [vmem:[%s1] sm:$0xff]
  %v83 = vld [vmem:[%s1 + $0x8] sm:$0xff]
  %v84 = vld [vmem:[%s1 + $0x10] sm:$0xff]
  %v85 = vld [vmem:[%s1 + $0x18] sm:$0xff]
  %v86 = vld [vmem:[%s1 + $0x20] sm:$0xff]
  %v87 = vld [vmem:[%s1 + $0x28] sm:$0xff]
  %v88 = vld [vmem:[%s1 + $0x30] sm:$0xff]
  %v89 = vld [vmem:[%s1 + $0x38] sm:$0xff]
  %v90 = vld [vmem:[%s1 + $0x40] sm:$0xff]
  %v91 = vld [vmem:[%s1 + $0x48] sm:$0xff]
  %v92 = vld [vmem:[%s1 + $0x50] sm:$0xff]
  %v93 = vld [vmem:[%s1 + $0x58] sm:$0xff]
  %v94 = vld [vmem:[%s1 + $0x60] sm:$0xff]
  %v95 = vld [vmem:[%s1 + $0x68] sm:$0xff]
  %v96 = vld [vmem:[%s1 + $0x70] sm:$0xff]
  %v97 = vld [vmem:[%s1 + $0x78] sm:$0xff]
  %v98 = vld [vmem:[%s1 + $0x80] sm:$0xff]
  %v99 = vld [vmem:[%s1 + $0x88] sm:$0xff]
  %v100 = vld [vmem:[%s1 + $0x90] sm:$0xff]
  %v101 = vld [vmem:[%s1 + $0x98] sm:$0xff]
  %v102 = vld [vmem:[%s1 + $0xa0] sm:$0xff]
  %v103 = vld [vmem:[%s1 + $0xa8] sm:$0xff]
  %v104 = vld [vmem:[%s1 + $0xb0] sm:$0xff]
  %v105 = vld [vmem:[%s1 + $0xb8] sm:$0xff]
  %v106 = vld [vmem:[%s1 + $0xc0] sm:$0xff]
  %v107 = vld [vmem:[%s1 + $0xc8] sm:$0xff]
  %v108 = vld [vmem:[%s1 + $0xd0] sm:$0xff]
  %v109 = vld [vmem:[%s1 + $0xd8] sm:$0xff]
  %v110 = vld [vmem:[%s1 + $0xe0] sm:$0xff]
  %v111 = vld [vmem:[%s1 + $0xe8] sm:$0xff]
  %v112 = vld [vmem:[%s1 + $0xf0] sm:$0xff]
  %v113 = vld [vmem:[%s1 + $0xf8] sm:$0xff]
  %v114 = vld [vmem:[%s1 + $0x100] sm:$0xff]
  %v115 = vld [vmem:[%s1 + $0x108] sm:$0xff]
  %v116 = vld [vmem:[%s1 + $0x110] sm:$0xff]
  %v117 = vld [vmem:[%s1 + $0x118] sm:$0xff]
  %v118 = vld [vmem:[%s1 + $0x120] sm:$0xff]
  %v119 = vld [vmem:[%s1 + $0x128] sm:$0xff]
  %v120 = vld [vmem:[%s1 + $0x130] sm:$0xff]
  %v121 = vld [vmem:[%s1 + $0x138] sm:$0xff]
  %v122 = vld [vmem:[%s1 + $0x140] sm:$0xff]
  %v123 = vld [vmem:[%s1 + $0x148] sm:$0xff]
  %v124 = vld [vmem:[%s1 + $0x150] sm:$0xff]
  %v125 = vld [vmem:[%s1 + $0x158] sm:$0xff]
  %v126 = vld [vmem:[%s1 + $0x160] sm:$0xff]
  %v127 = vld [vmem:[%s1 + $0x168] sm:$0xff]
  %v128 = vld [vmem:[%s1 + $0x170] sm:$0xff]
  %v129 = vld [vmem:[%s1 + $0x178] sm:$0xff]
  %v130 = vld [vmem:[%s1 + $0x180] sm:$0xff]
  %v131 = vld [vmem:[%s1 + $0x188] sm:$0xff]
  %v132 = vld [vmem:[%s1 + $0x190] sm:$0xff]
  %v133 = vld [vmem:[%s1 + $0x198] sm:$0xff]
  %v134 = vld [vmem:[%s1 + $0x1a0] sm:$0xff]
  %v135 = vld [vmem:[%s1 + $0x1a8] sm:$0xff]
  %v136 = vld [vmem:[%s1 + $0x1b0] sm:$0xff]
  %v137 = vld [vmem:[%s1 + $0x1b8] sm:$0xff]
  %v138 = vld [vmem:[%s1 + $0x1c0] sm:$0xff]
  %v139 = vld [vmem:[%s1 + $0x1c8] sm:$0xff]
  %v140 = vld [vmem:[%s1 + $0x1d0] sm:$0xff]
  %v141 = vld [vmem:[%s1 + $0x1d8] sm:$0xff]
  %v142 = vld [vmem:[%s1 + $0x1e0] sm:$0xff]
  %v143 = vld [vmem:[%s1 + $0x1e8] sm:$0xff]
  %v144 = vld [vmem:[%s1 + $0x1f0] sm:$0xff]
  %v145 = vld [vmem:[%s1 + $0x1f8] sm:$0xff]
  %v146 = vperm.slane %v68, 0
  %v147 = vperm.slane %v69, 0
  %v212 = vunpack.c.l.b16 %v82
  %v213 = vunpack.c.h.b16 %v82
  %v214 = vunpack.c.l.b16 %v83
  %v215 = vunpack.c.h.b16 %v83
  %v216 = vunpack.c.l.b16 %v84
  %v217 = vunpack.c.h.b16 %v84
  %v218 = vunpack.c.l.b16 %v85
  %v219 = vunpack.c.h.b16 %v85
  %v220 = vunpack.c.l.b16 %v86
  %v221 = vunpack.c.h.b16 %v86
  %v222 = vunpack.c.l.b16 %v87
  %v223 = vunpack.c.h.b16 %v87
  %v224 = vunpack.c.l.b16 %v88
  %v225 = vunpack.c.h.b16 %v88
  %v226 = vunpack.c.l.b16 %v89
  %v227 = vunpack.c.h.b16 %v89
  %v228 = vunpack.c.l.b16 %v90
  %v229 = vunpack.c.h.b16 %v90
  %v230 = vunpack.c.l.b16 %v91
  %v231 = vunpack.c.h.b16 %v91
  %v232 = vunpack.c.l.b16 %v92
  %v233 = vunpack.c.h.b16 %v92
  %v234 = vunpack.c.l.b16 %v93
  %v235 = vunpack.c.h.b16 %v93
  %v236 = vunpack.c.l.b16 %v94
  %v237 = vunpack.c.h.b16 %v94
  %v238 = vunpack.c.l.b16 %v95
  %v239 = vunpack.c.h.b16 %v95
  %v240 = vunpack.c.l.b16 %v96
  %v241 = vunpack.c.h.b16 %v96
  %v242 = vunpack.c.l.b16 %v97
  %v243 = vunpack.c.h.b16 %v97
  %v244 = vunpack.c.l.b16 %v98
  %v245 = vunpack.c.h.b16 %v98
  %v246 = vunpack.c.l.b16 %v99
  %v247 = vunpack.c.h.b16 %v99
  %v248 = vunpack.c.l.b16 %v100
  %v249 = vunpack.c.h.b16 %v100
  %v250 = vunpack.c.l.b16 %v101
  %v251 = vunpack.c.h.b16 %v101
  %v252 = vunpack.c.l.b16 %v102
  %v253 = vunpack.c.h.b16 %v102
  %v254 = vunpack.c.l.b16 %v103
  %v255 = vunpack.c.h.b16 %v103
  %v256 = vunpack.c.l.b16 %v104
  %v257 = vunpack.c.h.b16 %v104
  %v258 = vunpack.c.l.b16 %v105
  %v259 = vunpack.c.h.b16 %v105
  %v260 = vunpack.c.l.b16 %v106
  %v261 = vunpack.c.h.b16 %v106
  %v262 = vunpack.c.l.b16 %v107
  %v263 = vunpack.c.h.b16 %v107
  %v264 = vunpack.c.l.b16 %v108
  %v265 = vunpack.c.h.b16 %v108
  %v266 = vunpack.c.l.b16 %v109
  %v267 = vunpack.c.h.b16 %v109
  %v268 = vunpack.c.l.b16 %v110
  %v269 = vunpack.c.h.b16 %v110
  %v270 = vunpack.c.l.b16 %v111
  %v271 = vunpack.c.h.b16 %v111
  %v272 = vunpack.c.l.b16 %v112
  %v273 = vunpack.c.h.b16 %v112
  %v274 = vunpack.c.l.b16 %v113
  %v275 = vunpack.c.h.b16 %v113
  %v276 = vunpack.c.l.b16 %v114
  %v277 = vunpack.c.h.b16 %v114
  %v278 = vunpack.c.l.b16 %v115
  %v279 = vunpack.c.h.b16 %v115
  %v280 = vunpack.c.l.b16 %v116
  %v281 = vunpack.c.h.b16 %v116
  %v282 = vunpack.c.l.b16 %v117
  %v283 = vunpack.c.h.b16 %v117
  %v284 = vunpack.c.l.b16 %v118
  %v285 = vunpack.c.h.b16 %v118
  %v286 = vunpack.c.l.b16 %v119
  %v287 = vunpack.c.h.b16 %v119
  %v288 = vunpack.c.l.b16 %v120
  %v289 = vunpack.c.h.b16 %v120
  %v290 = vunpack.c.l.b16 %v121
  %v291 = vunpack.c.h.b16 %v121
  %v292 = vunpack.c.l.b16 %v122
  %v293 = vunpack.c.h.b16 %v122
  %v294 = vunpack.c.l.b16 %v123
  %v295 = vunpack.c.h.b16 %v123
  %v296 = vunpack.c.l.b16 %v124
  %v297 = vunpack.c.h.b16 %v124
  %v298 = vunpack.c.l.b16 %v125
  %v299 = vunpack.c.h.b16 %v125
  %v300 = vunpack.c.l.b16 %v126
  %v301 = vunpack.c.h.b16 %v126
  %v302 = vunpack.c.l.b16 %v127
  %v303 = vunpack.c.h.b16 %v127
  %v304 = vunpack.c.l.b16 %v128
  %v305 = vunpack.c.h.b16 %v128
  %v306 = vunpack.c.l.b16 %v129
  %v307 = vunpack.c.h.b16 %v129
  %v308 = vunpack.c.l.b16 %v130
  %v309 = vunpack.c.h.b16 %v130
  %v310 = vunpack.c.l.b16 %v131
  %v311 = vunpack.c.h.b16 %v131
  %v312 = vunpack.c.l.b16 %v132
  %v313 = vunpack.c.h.b16 %v132
  %v314 = vunpack.c.l.b16 %v133
  %v315 = vunpack.c.h.b16 %v133
  %v316 = vunpack.c.l.b16 %v134
  %v317 = vunpack.c.h.b16 %v134
  %v318 = vunpack.c.l.b16 %v135
  %v319 = vunpack.c.h.b16 %v135
  %v320 = vunpack.c.l.b16 %v136
  %v321 = vunpack.c.h.b16 %v136
  %v322 = vunpack.c.l.b16 %v137
  %v323 = vunpack.c.h.b16 %v137
  %v324 = vunpack.c.l.b16 %v138
  %v325 = vunpack.c.h.b16 %v138
  %v326 = vunpack.c.l.b16 %v139
  %v327 = vunpack.c.h.b16 %v139
  %v328 = vunpack.c.l.b16 %v140
  %v329 = vunpack.c.h.b16 %v140
  %v330 = vunpack.c.l.b16 %v141
  %v331 = vunpack.c.h.b16 %v141
  %v332 = vunpack.c.l.b16 %v142
  %v333 = vunpack.c.h.b16 %v142
  %v334 = vunpack.c.l.b16 %v143
  %v335 = vunpack.c.h.b16 %v143
  %v336 = vunpack.c.l.b16 %v144
  %v337 = vunpack.c.h.b16 %v144
  %v338 = vunpack.c.l.b16 %v145
  %v339 = vunpack.c.h.b16 %v145
  %v340 = vpack.c.b16 %v214, %v212
  %v341 = vpack.c.b16 %v215, %v213
  %v342 = vpack.c.b16 %v218, %v216
  %v343 = vpack.c.b16 %v219, %v217
  %v344 = vpack.c.b16 %v222, %v220
  %v345 = vpack.c.b16 %v223, %v221
  %v346 = vpack.c.b16 %v226, %v224
  %v347 = vpack.c.b16 %v227, %v225
  %v348 = vpack.c.b16 %v230, %v228
  %v349 = vpack.c.b16 %v231, %v229
  %v350 = vpack.c.b16 %v234, %v232
  %v351 = vpack.c.b16 %v235, %v233
  %v352 = vpack.c.b16 %v238, %v236
  %v353 = vpack.c.b16 %v239, %v237
  %v354 = vpack.c.b16 %v242, %v240
  %v355 = vpack.c.b16 %v243, %v241
  %v356 = vpack.c.b16 %v246, %v244
  %v357 = vpack.c.b16 %v247, %v245
  %v358 = vpack.c.b16 %v250, %v248
  %v359 = vpack.c.b16 %v251, %v249
  %v360 = vpack.c.b16 %v254, %v252
  %v361 = vpack.c.b16 %v255, %v253
  %v362 = vpack.c.b16 %v258, %v256
  %v363 = vpack.c.b16 %v259, %v257
  %v364 = vpack.c.b16 %v262, %v260
  %v365 = vpack.c.b16 %v263, %v261
  %v366 = vpack.c.b16 %v266, %v264
  %v367 = vpack.c.b16 %v267, %v265
  %v368 = vpack.c.b16 %v270, %v268
  %v369 = vpack.c.b16 %v271, %v269
  %v370 = vpack.c.b16 %v274, %v272
  %v371 = vpack.c.b16 %v275, %v273
  %v372 = vpack.c.b16 %v278, %v276
  %v373 = vpack.c.b16 %v279, %v277
  %v374 = vpack.c.b16 %v282, %v280
  %v375 = vpack.c.b16 %v283, %v281
  %v376 = vpack.c.b16 %v286, %v284
  %v377 = vpack.c.b16 %v287, %v285
  %v378 = vpack.c.b16 %v290, %v288
  %v379 = vpack.c.b16 %v291, %v289
  %v380 = vpack.c.b16 %v294, %v292
  %v381 = vpack.c.b16 %v295, %v293
  %v382 = vpack.c.b16 %v298, %v296
  %v383 = vpack.c.b16 %v299, %v297
  %v384 = vpack.c.b16 %v302, %v300
  %v385 = vpack.c.b16 %v303, %v301
  %v386 = vpack.c.b16 %v306, %v304
  %v387 = vpack.c.b16 %v307, %v305
  %v388 = vpack.c.b16 %v310, %v308
  %v389 = vpack.c.b16 %v311, %v309
  %v390 = vpack.c.b16 %v314, %v312
  %v391 = vpack.c.b16 %v315, %v313
  %v392 = vpack.c.b16 %v318, %v316
  %v393 = vpack.c.b16 %v319, %v317
  %v394 = vpack.c.b16 %v322, %v320
  %v395 = vpack.c.b16 %v323, %v321
  %v396 = vpack.c.b16 %v326, %v324
  %v397 = vpack.c.b16 %v327, %v325
  %v398 = vpack.c.b16 %v330, %v328
  %v399 = vpack.c.b16 %v331, %v329
  %v400 = vpack.c.b16 %v334, %v332
  %v401 = vpack.c.b16 %v335, %v333
  %v402 = vpack.c.b16 %v338, %v336
  %v403 = vpack.c.b16 %v339, %v337
  %468 = vmatpush.bf16.msra.mxu0 %v354
  %469 = vmatpush.bf16.msra.mxu0 %v352
  %470 = vmatpush.bf16.msra.mxu0 %v350
  %471 = vmatpush.bf16.msra.mxu0 %v348
  %472 = vmatpush.bf16.msra.mxu0 %v346
  %473 = vmatpush.bf16.msra.mxu0 %v344
  %474 = vmatpush.bf16.msra.mxu0 %v342
  %475 = vmatpush.bf16.msra.mxu0 %v340
  %476 = vmatmul.bf16.gmra.mxu0 %v78
  %v477 = vpop.f32.mrf.mxu0
  %v478 = vadd.f32 %v146, %v477
  %v479 = vpop.f32.mrf.mxu0
  %v480 = vadd.f32 %v146, %v479
  %481 = vdwg.mxu0
  %482 = vmatpush.bf16.msra.mxu0 %v370
  %483 = vmatpush.bf16.msra.mxu0 %v368
  %484 = vmatpush.bf16.msra.mxu0 %v366
  %485 = vmatpush.bf16.msra.mxu0 %v364
  %486 = vmatpush.bf16.msra.mxu0 %v362
  %487 = vmatpush.bf16.msra.mxu0 %v360
  %488 = vmatpush.bf16.msra.mxu0 %v358
  %489 = vmatpush.bf16.msra.mxu0 %v356
  %490 = vmatmul.bf16.gmra.mxu0 %v79
  %v491 = vpop.f32.mrf.mxu0
  %v492 = vadd.f32 %v478, %v491
  %v493 = vpop.f32.mrf.mxu0
  %v494 = vadd.f32 %v480, %v493
  %495 = vdwg.mxu0
  %496 = vmatpush.bf16.msra.mxu0 %v386
  %497 = vmatpush.bf16.msra.mxu0 %v384
  %498 = vmatpush.bf16.msra.mxu0 %v382
  %499 = vmatpush.bf16.msra.mxu0 %v380
  %500 = vmatpush.bf16.msra.mxu0 %v378
  %501 = vmatpush.bf16.msra.mxu0 %v376
  %502 = vmatpush.bf16.msra.mxu0 %v374
  %503 = vmatpush.bf16.msra.mxu0 %v372
  %504 = vmatmul.bf16.gmra.mxu0 %v80
  %v505 = vpop.f32.mrf.mxu0
  %v506 = vadd.f32 %v492, %v505
  %v507 = vpop.f32.mrf.mxu0
  %v508 = vadd.f32 %v494, %v507
  %509 = vdwg.mxu0
  %510 = vmatpush.bf16.msra.mxu0 %v402
  %511 = vmatpush.bf16.msra.mxu0 %v400
  %512 = vmatpush.bf16.msra.mxu0 %v398
  %513 = vmatpush.bf16.msra.mxu0 %v396
  %514 = vmatpush.bf16.msra.mxu0 %v394
  %515 = vmatpush.bf16.msra.mxu0 %v392
  %516 = vmatpush.bf16.msra.mxu0 %v390
  %517 = vmatpush.bf16.msra.mxu0 %v388
  %518 = vmatmul.bf16.gmra.mxu0 %v81
  %v519 = vpop.f32.mrf.mxu0
  %v520 = vadd.f32 %v506, %v519
  %v521 = vpop.f32.mrf.mxu0
  %v522 = vadd.f32 %v508, %v521
  %523 = vdwg.mxu0
  %524 = vmatpush.bf16.msra.mxu0 %v355
  %525 = vmatpush.bf16.msra.mxu0 %v353
  %526 = vmatpush.bf16.msra.mxu0 %v351
  %527 = vmatpush.bf16.msra.mxu0 %v349
  %528 = vmatpush.bf16.msra.mxu0 %v347
  %529 = vmatpush.bf16.msra.mxu0 %v345
  %530 = vmatpush.bf16.msra.mxu0 %v343
  %531 = vmatpush.bf16.msra.mxu0 %v341
  %532 = vmatmul.bf16.gmra.mxu0 %v78
  %v533 = vpop.f32.mrf.mxu0
  %v534 = vadd.f32 %v147, %v533
  %v535 = vpop.f32.mrf.mxu0
  %v536 = vadd.f32 %v147, %v535
  %537 = vdwg.mxu0
  %538 = vmatpush.bf16.msra.mxu0 %v371
  %539 = vmatpush.bf16.msra.mxu0 %v369
  %540 = vmatpush.bf16.msra.mxu0 %v367
  %541 = vmatpush.bf16.msra.mxu0 %v365
  %542 = vmatpush.bf16.msra.mxu0 %v363
  %543 = vmatpush.bf16.msra.mxu0 %v361
  %544 = vmatpush.bf16.msra.mxu0 %v359
  %545 = vmatpush.bf16.msra.mxu0 %v357
  %546 = vmatmul.bf16.gmra.mxu0 %v79
  %v547 = vpop.f32.mrf.mxu0
  %v548 = vadd.f32 %v534, %v547
  %v549 = vpop.f32.mrf.mxu0
  %v550 = vadd.f32 %v536, %v549
  %551 = vdwg.mxu0
  %552 = vmatpush.bf16.msra.mxu0 %v387
  %553 = vmatpush.bf16.msra.mxu0 %v385
  %554 = vmatpush.bf16.msra.mxu0 %v383
  %555 = vmatpush.bf16.msra.mxu0 %v381
  %556 = vmatpush.bf16.msra.mxu0 %v379
  %557 = vmatpush.bf16.msra.mxu0 %v377
  %558 = vmatpush.bf16.msra.mxu0 %v375
  %559 = vmatpush.bf16.msra.mxu0 %v373
  %560 = vmatmul.bf16.gmra.mxu0 %v80
  %v561 = vpop.f32.mrf.mxu0
  %v562 = vadd.f32 %v548, %v561
  %v563 = vpop.f32.mrf.mxu0
  %v564 = vadd.f32 %v550, %v563
  %565 = vdwg.mxu0
  %566 = vmatpush.bf16.msra.mxu0 %v403
  %567 = vmatpush.bf16.msra.mxu0 %v401
  %568 = vmatpush.bf16.msra.mxu0 %v399
  %569 = vmatpush.bf16.msra.mxu0 %v397
  %570 = vmatpush.bf16.msra.mxu0 %v395
  %571 = vmatpush.bf16.msra.mxu0 %v393
  %572 = vmatpush.bf16.msra.mxu0 %v391
  %573 = vmatpush.bf16.msra.mxu0 %v389
  %574 = vmatmul.bf16.gmra.mxu0 %v81
  %v575 = vpop.f32.mrf.mxu0
  %v576 = vadd.f32 %v562, %v575
  %v577 = vpop.f32.mrf.mxu0
  %v578 = vadd.f32 %v564, %v577
  %579 = vdwg.mxu0
  %580 = vmatpush.msra.mxu0 %v47
  %581 = vmatpush.msra.mxu0 %v46
  %582 = vmatpush.msra.mxu0 %v45
  %583 = vmatpush.msra.mxu0 %v44
  %584 = vmatpush.msra.mxu0 %v43
  %585 = vmatpush.msra.mxu0 %v42
  %586 = vmatpush.msra.mxu0 %v41
  %587 = vmatpush.msra.mxu0 %v40
  %588 = vmatpush.msra.mxu0 %v39
  %589 = vmatpush.msra.mxu0 %v38
  %590 = vmatpush.msra.mxu0 %v37
  %591 = vmatpush.msra.mxu0 %v36
  %592 = vmatpush.msra.mxu0 %v35
  %593 = vmatpush.msra.mxu0 %v34
  %594 = vmatpush.msra.mxu0 %v33
  %595 = vmatpush.msra.mxu0 %v32
  %596 = vmatmul.f32.gmra.mxu0 %v520
  %v597 = vpop.f32.mrf.mxu0
  %v598 = vadd.f32 0.0, %v597
  %599 = vmatmul.f32.gmra.mxu0 %v522
  %v600 = vpop.f32.mrf.mxu0
  %v601 = vadd.f32 0.0, %v600
  %602 = vdwg.mxu0
  %603 = vmatpush.msra.mxu0 %v63
  %604 = vmatpush.msra.mxu0 %v62
  %605 = vmatpush.msra.mxu0 %v61
  %606 = vmatpush.msra.mxu0 %v60
  %607 = vmatpush.msra.mxu0 %v59
  %608 = vmatpush.msra.mxu0 %v58
  %609 = vmatpush.msra.mxu0 %v57
  %610 = vmatpush.msra.mxu0 %v56
  %611 = vmatpush.msra.mxu0 %v55
  %612 = vmatpush.msra.mxu0 %v54
  %613 = vmatpush.msra.mxu0 %v53
  %614 = vmatpush.msra.mxu0 %v52
  %615 = vmatpush.msra.mxu0 %v51
  %616 = vmatpush.msra.mxu0 %v50
  %617 = vmatpush.msra.mxu0 %v49
  %618 = vmatpush.msra.mxu0 %v48
  %619 = vmatmul.f32.gmra.mxu0 %v576
  %v620 = vpop.f32.mrf.mxu0
  %v621 = vadd.f32 %v598, %v620
  %622 = vmatmul.f32.gmra.mxu0 %v578
  %v623 = vpop.f32.mrf.mxu0
  %v624 = vadd.f32 %v601, %v623
  %625 = vdwg.mxu0
  %v626 = vmul.f32 %v621, 0.0625
  %v627 = vmul.f32 %v624, 0.0625
  %vm628 = vcmask 130048
  %v630 = vsel %vm628, %v626, 0
  %v633 = vsel %vm628, %v627, 0
  %635 = vmatpush.msra.mxu0 0.0
  %636 = vmatpush.msra.mxu0 0.0
  %637 = vmatpush.msra.mxu0 0.0
  %638 = vmatpush.msra.mxu0 0.0
  %639 = vmatpush.msra.mxu0 0.0
  %640 = vmatpush.msra.mxu0 0.0
  %641 = vmatpush.msra.mxu0 0.0
  %642 = vmatpush.msra.mxu0 0.0
  %643 = vmatpush.msra.mxu0 0.0
  %644 = vmatpush.msra.mxu0 0.0
  %645 = vmatpush.msra.mxu0 0.0
  %646 = vmatpush.msra.mxu0 0.0
  %647 = vmatpush.msra.mxu0 0.0
  %648 = vmatpush.msra.mxu0 0.0
  %649 = vmatpush.msra.mxu0 %v66
  %650 = vmatpush.msra.mxu0 %v64
  %651 = vmatmul.f32.gmra.mxu0 %v630
  %v652 = vpop.f32.mrf.mxu0
  %v653 = vadd.f32 0.0, %v652
  %654 = vmatmul.f32.gmra.mxu0 %v633
  %v655 = vpop.f32.mrf.mxu0
  %v656 = vadd.f32 0.0, %v655
  %657 = vdwg.mxu0
  %658 = vmatpush.msra.mxu0 0.0
  %659 = vmatpush.msra.mxu0 0.0
  %660 = vmatpush.msra.mxu0 0.0
  %661 = vmatpush.msra.mxu0 0.0
  %662 = vmatpush.msra.mxu0 0.0
  %663 = vmatpush.msra.mxu0 0.0
  %664 = vmatpush.msra.mxu0 0.0
  %665 = vmatpush.msra.mxu0 0.0
  %666 = vmatpush.msra.mxu0 0.0
  %667 = vmatpush.msra.mxu0 0.0
  %668 = vmatpush.msra.mxu0 0.0
  %669 = vmatpush.msra.mxu0 0.0
  %670 = vmatpush.msra.mxu0 0.0
  %671 = vmatpush.msra.mxu0 0.0
  %672 = vmatpush.msra.mxu0 %v67
  %673 = vmatpush.msra.mxu0 %v65
  %674 = vmatmul.f32.gmra.mxu0 %v630
  %v675 = vpop.f32.mrf.mxu0
  %v676 = vadd.f32 0.0, %v675
  %677 = vmatmul.f32.gmra.mxu0 %v633
  %v678 = vpop.f32.mrf.mxu0
  %v679 = vadd.f32 0.0, %v678
  %680 = vdwg.mxu0
  %v681 = vsub.f32 %v520, %v653
  %v682 = vsub.f32 %v576, %v676
  %v683 = vsub.f32 %v522, %v656
  %v684 = vsub.f32 %v578, %v679
  %v685 = vmul.f32 %v681, %v681
  %v686 = vmul.f32 %v682, %v682
  %v687 = vmul.f32 %v683, %v683
  %v688 = vmul.f32 %v684, %v684
  %689 = vmatpush.msra.mxu0 %v47
  %690 = vmatpush.msra.mxu0 %v46
  %691 = vmatpush.msra.mxu0 %v45
  %692 = vmatpush.msra.mxu0 %v44
  %693 = vmatpush.msra.mxu0 %v43
  %694 = vmatpush.msra.mxu0 %v42
  %695 = vmatpush.msra.mxu0 %v41
  %696 = vmatpush.msra.mxu0 %v40
  %697 = vmatpush.msra.mxu0 %v39
  %698 = vmatpush.msra.mxu0 %v38
  %699 = vmatpush.msra.mxu0 %v37
  %700 = vmatpush.msra.mxu0 %v36
  %701 = vmatpush.msra.mxu0 %v35
  %702 = vmatpush.msra.mxu0 %v34
  %703 = vmatpush.msra.mxu0 %v33
  %704 = vmatpush.msra.mxu0 %v32
  %705 = vmatmul.f32.gmra.mxu0 %v685
  %v706 = vpop.f32.mrf.mxu0
  %v707 = vadd.f32 0.0, %v706
  %708 = vmatmul.f32.gmra.mxu0 %v687
  %v709 = vpop.f32.mrf.mxu0
  %v710 = vadd.f32 0.0, %v709
  %711 = vdwg.mxu0
  %712 = vmatpush.msra.mxu0 %v63
  %713 = vmatpush.msra.mxu0 %v62
  %714 = vmatpush.msra.mxu0 %v61
  %715 = vmatpush.msra.mxu0 %v60
  %716 = vmatpush.msra.mxu0 %v59
  %717 = vmatpush.msra.mxu0 %v58
  %718 = vmatpush.msra.mxu0 %v57
  %719 = vmatpush.msra.mxu0 %v56
  %720 = vmatpush.msra.mxu0 %v55
  %721 = vmatpush.msra.mxu0 %v54
  %722 = vmatpush.msra.mxu0 %v53
  %723 = vmatpush.msra.mxu0 %v52
  %724 = vmatpush.msra.mxu0 %v51
  %725 = vmatpush.msra.mxu0 %v50
  %726 = vmatpush.msra.mxu0 %v49
  %727 = vmatpush.msra.mxu0 %v48
  %728 = vmatmul.f32.gmra.mxu0 %v686
  %v729 = vpop.f32.mrf.mxu0
  %v730 = vadd.f32 %v707, %v729
  %731 = vmatmul.f32.gmra.mxu0 %v688
  %v732 = vpop.f32.mrf.mxu0
  %v733 = vadd.f32 %v710, %v732
  %734 = vdwg.mxu0
  %v735 = vmul.f32 %v730, 0.0625
  %v736 = vmul.f32 %v733, 0.0625
  %v738 = vsel %vm628, %v735, 0
  %v741 = vsel %vm628, %v736, 0
  %743 = vmatpush.msra.mxu0 0.0
  %744 = vmatpush.msra.mxu0 0.0
  %745 = vmatpush.msra.mxu0 0.0
  %746 = vmatpush.msra.mxu0 0.0
  %747 = vmatpush.msra.mxu0 0.0
  %748 = vmatpush.msra.mxu0 0.0
  %749 = vmatpush.msra.mxu0 0.0
  %750 = vmatpush.msra.mxu0 0.0
  %751 = vmatpush.msra.mxu0 0.0
  %752 = vmatpush.msra.mxu0 0.0
  %753 = vmatpush.msra.mxu0 0.0
  %754 = vmatpush.msra.mxu0 0.0
  %755 = vmatpush.msra.mxu0 0.0
  %756 = vmatpush.msra.mxu0 0.0
  %757 = vmatpush.msra.mxu0 %v66
  %758 = vmatpush.msra.mxu0 %v64
  %759 = vmatmul.f32.gmra.mxu0 %v738
  %v760 = vpop.f32.mrf.mxu0
  %v761 = vadd.f32 1e-05, %v760
  %762 = vmatmul.f32.gmra.mxu0 %v741
  %v763 = vpop.f32.mrf.mxu0
  %v764 = vadd.f32 1e-05, %v763
  %765 = vdwg.mxu0
  %766 = vmatpush.msra.mxu0 0.0
  %767 = vmatpush.msra.mxu0 0.0
  %768 = vmatpush.msra.mxu0 0.0
  %769 = vmatpush.msra.mxu0 0.0
  %770 = vmatpush.msra.mxu0 0.0
  %771 = vmatpush.msra.mxu0 0.0
  %772 = vmatpush.msra.mxu0 0.0
  %773 = vmatpush.msra.mxu0 0.0
  %774 = vmatpush.msra.mxu0 0.0
  %775 = vmatpush.msra.mxu0 0.0
  %776 = vmatpush.msra.mxu0 0.0
  %777 = vmatpush.msra.mxu0 0.0
  %778 = vmatpush.msra.mxu0 0.0
  %779 = vmatpush.msra.mxu0 0.0
  %780 = vmatpush.msra.mxu0 %v67
  %781 = vmatpush.msra.mxu0 %v65
  %782 = vmatmul.f32.gmra.mxu0 %v738
  %v783 = vpop.f32.mrf.mxu0
  %v784 = vadd.f32 1e-05, %v783
  %785 = vmatmul.f32.gmra.mxu0 %v741
  %v786 = vpop.f32.mrf.mxu0
  %v787 = vadd.f32 1e-05, %v786
  %788 = vdwg.mxu0
  %v789 = vrsqrt.pop %v761
  %v790 = vmul.f32 %v789, %v761
  %v791 = vmul.f32 %v790, %v789
  %v792 = vmul.f32 0.5, %v791
  %v793 = vsub.f32 1.5, %v792
  %v794 = vmul.f32 %v789, %v793
  %vm795 = vweird.f32 %v761
  %vm796 = vweird.f32 %v789
  %vm797 = vmor %vm795, %vm796
  %v798 = vsel %vm797, %v789, %v794
  %v799 = vrsqrt.pop %v784
  %v800 = vmul.f32 %v799, %v784
  %v801 = vmul.f32 %v800, %v799
  %v802 = vmul.f32 0.5, %v801
  %v803 = vsub.f32 1.5, %v802
  %v804 = vmul.f32 %v799, %v803
  %vm805 = vweird.f32 %v784
  %vm806 = vweird.f32 %v799
  %vm807 = vmor %vm805, %vm806
  %v808 = vsel %vm807, %v799, %v804
  %v809 = vrsqrt.pop %v764
  %v810 = vmul.f32 %v809, %v764
  %v811 = vmul.f32 %v810, %v809
  %v812 = vmul.f32 0.5, %v811
  %v813 = vsub.f32 1.5, %v812
  %v814 = vmul.f32 %v809, %v813
  %vm815 = vweird.f32 %v764
  %vm816 = vweird.f32 %v809
  %vm817 = vmor %vm815, %vm816
  %v818 = vsel %vm817, %v809, %v814
  %v819 = vrsqrt.pop %v787
  %v820 = vmul.f32 %v819, %v787
  %v821 = vmul.f32 %v820, %v819
  %v822 = vmul.f32 0.5, %v821
  %v823 = vsub.f32 1.5, %v822
  %v824 = vmul.f32 %v819, %v823
  %vm825 = vweird.f32 %v787
  %vm826 = vweird.f32 %v819
  %vm827 = vmor %vm825, %vm826
  %v828 = vsel %vm827, %v819, %v824
  %v829 = vmul.f32 %v681, %v798
  %v830 = vmul.f32 %v682, %v808
  %v831 = vmul.f32 %v683, %v818
  %v832 = vmul.f32 %v684, %v828
  %vm833 = vcmp.ge.f32.partialorder %v829, 0.0
  %vm834 = vcmp.ge.f32.partialorder %v830, 0.0
  %vm835 = vcmp.ge.f32.partialorder %v831, 0.0
  %vm836 = vcmp.ge.f32.partialorder %v832, 0.0
  %v837 = vperm.slane %v68, 2
  %v838 = vperm.slane %v69, 2
  %v839 = vmul.f32 %v837, %v829
  %v840 = vmul.f32 %v838, %v830
  %v841 = vmul.f32 %v837, %v831
  %v842 = vmul.f32 %v838, %v832
  %v843 = vsel %vm833, %v829, %v839
  %v844 = vsel %vm834, %v830, %v840
  %v845 = vsel %vm835, %v831, %v841
  %v846 = vsel %vm836, %v832, %v842
  %v847 = vld [vmem:[%s2] sm:$0xff]
  %v848 = vld [vmem:[%s2 + $0x8] sm:$0xff]
  %v849 = vld [vmem:[%s2 + $0x10] sm:$0xff]
  %v850 = vld [vmem:[%s2 + $0x18] sm:$0xff]
  %v851 = vld [vmem:[%s2 + $0x20] sm:$0xff]
  %v852 = vld [vmem:[%s2 + $0x28] sm:$0xff]
  %v853 = vld [vmem:[%s2 + $0x30] sm:$0xff]
  %v854 = vld [vmem:[%s2 + $0x38] sm:$0xff]
  %v855 = vld [vmem:[%s2 + $0x40] sm:$0xff]
  %v856 = vld [vmem:[%s2 + $0x48] sm:$0xff]
  %v857 = vld [vmem:[%s2 + $0x50] sm:$0xff]
  %v858 = vld [vmem:[%s2 + $0x58] sm:$0xff]
  %v859 = vld [vmem:[%s2 + $0x60] sm:$0xff]
  %v860 = vld [vmem:[%s2 + $0x68] sm:$0xff]
  %v861 = vld [vmem:[%s2 + $0x70] sm:$0xff]
  %v862 = vld [vmem:[%s2 + $0x78] sm:$0xff]
  %v863 = vld [vmem:[%s2 + $0x80] sm:$0xff]
  %v864 = vld [vmem:[%s2 + $0x88] sm:$0xff]
  %v865 = vld [vmem:[%s2 + $0x90] sm:$0xff]
  %v866 = vld [vmem:[%s2 + $0x98] sm:$0xff]
  %v867 = vld [vmem:[%s2 + $0xa0] sm:$0xff]
  %v868 = vld [vmem:[%s2 + $0xa8] sm:$0xff]
  %v869 = vld [vmem:[%s2 + $0xb0] sm:$0xff]
  %v870 = vld [vmem:[%s2 + $0xb8] sm:$0xff]
  %v871 = vld [vmem:[%s2 + $0xc0] sm:$0xff]
  %v872 = vld [vmem:[%s2 + $0xc8] sm:$0xff]
  %v873 = vld [vmem:[%s2 + $0xd0] sm:$0xff]
  %v874 = vld [vmem:[%s2 + $0xd8] sm:$0xff]
  %v875 = vld [vmem:[%s2 + $0xe0] sm:$0xff]
  %v876 = vld [vmem:[%s2 + $0xe8] sm:$0xff]
  %v877 = vld [vmem:[%s2 + $0xf0] sm:$0xff]
  %v878 = vld [vmem:[%s2 + $0xf8] sm:$0xff]
  %v879 = vld [vmem:[%s2 + $0x100] sm:$0xff]
  %v880 = vld [vmem:[%s2 + $0x108] sm:$0xff]
  %v881 = vld [vmem:[%s2 + $0x110] sm:$0xff]
  %v882 = vld [vmem:[%s2 + $0x118] sm:$0xff]
  %v883 = vld [vmem:[%s2 + $0x120] sm:$0xff]
  %v884 = vld [vmem:[%s2 + $0x128] sm:$0xff]
  %v885 = vld [vmem:[%s2 + $0x130] sm:$0xff]
  %v886 = vld [vmem:[%s2 + $0x138] sm:$0xff]
  %v887 = vld [vmem:[%s2 + $0x140] sm:$0xff]
  %v888 = vld [vmem:[%s2 + $0x148] sm:$0xff]
  %v889 = vld [vmem:[%s2 + $0x150] sm:$0xff]
  %v890 = vld [vmem:[%s2 + $0x158] sm:$0xff]
  %v891 = vld [vmem:[%s2 + $0x160] sm:$0xff]
  %v892 = vld [vmem:[%s2 + $0x168] sm:$0xff]
  %v893 = vld [vmem:[%s2 + $0x170] sm:$0xff]
  %v894 = vld [vmem:[%s2 + $0x178] sm:$0xff]
  %v895 = vld [vmem:[%s2 + $0x180] sm:$0xff]
  %v896 = vld [vmem:[%s2 + $0x188] sm:$0xff]
  %v897 = vld [vmem:[%s2 + $0x190] sm:$0xff]
  %v898 = vld [vmem:[%s2 + $0x198] sm:$0xff]
  %v899 = vld [vmem:[%s2 + $0x1a0] sm:$0xff]
  %v900 = vld [vmem:[%s2 + $0x1a8] sm:$0xff]
  %v901 = vld [vmem:[%s2 + $0x1b0] sm:$0xff]
  %v902 = vld [vmem:[%s2 + $0x1b8] sm:$0xff]
  %v903 = vld [vmem:[%s2 + $0x1c0] sm:$0xff]
  %v904 = vld [vmem:[%s2 + $0x1c8] sm:$0xff]
  %v905 = vld [vmem:[%s2 + $0x1d0] sm:$0xff]
  %v906 = vld [vmem:[%s2 + $0x1d8] sm:$0xff]
  %v907 = vld [vmem:[%s2 + $0x1e0] sm:$0xff]
  %v908 = vld [vmem:[%s2 + $0x1e8] sm:$0xff]
  %v909 = vld [vmem:[%s2 + $0x1f0] sm:$0xff]
  %v910 = vld [vmem:[%s2 + $0x1f8] sm:$0xff]
  %v911 = vperm.slane %v68, 1
  %v912 = vperm.slane %v69, 1
  %v977 = vunpack.c.l.b16 %v847
  %v978 = vunpack.c.h.b16 %v847
  %v979 = vunpack.c.l.b16 %v848
  %v980 = vunpack.c.h.b16 %v848
  %v981 = vunpack.c.l.b16 %v849
  %v982 = vunpack.c.h.b16 %v849
  %v983 = vunpack.c.l.b16 %v850
  %v984 = vunpack.c.h.b16 %v850
  %v985 = vunpack.c.l.b16 %v851
  %v986 = vunpack.c.h.b16 %v851
  %v987 = vunpack.c.l.b16 %v852
  %v988 = vunpack.c.h.b16 %v852
  %v989 = vunpack.c.l.b16 %v853
  %v990 = vunpack.c.h.b16 %v853
  %v991 = vunpack.c.l.b16 %v854
  %v992 = vunpack.c.h.b16 %v854
  %v993 = vunpack.c.l.b16 %v855
  %v994 = vunpack.c.h.b16 %v855
  %v995 = vunpack.c.l.b16 %v856
  %v996 = vunpack.c.h.b16 %v856
  %v997 = vunpack.c.l.b16 %v857
  %v998 = vunpack.c.h.b16 %v857
  %v999 = vunpack.c.l.b16 %v858
  %v1000 = vunpack.c.h.b16 %v858
  %v1001 = vunpack.c.l.b16 %v859
  %v1002 = vunpack.c.h.b16 %v859
  %v1003 = vunpack.c.l.b16 %v860
  %v1004 = vunpack.c.h.b16 %v860
  %v1005 = vunpack.c.l.b16 %v861
  %v1006 = vunpack.c.h.b16 %v861
  %v1007 = vunpack.c.l.b16 %v862
  %v1008 = vunpack.c.h.b16 %v862
  %v1009 = vunpack.c.l.b16 %v863
  %v1010 = vunpack.c.h.b16 %v863
  %v1011 = vunpack.c.l.b16 %v864
  %v1012 = vunpack.c.h.b16 %v864
  %v1013 = vunpack.c.l.b16 %v865
  %v1014 = vunpack.c.h.b16 %v865
  %v1015 = vunpack.c.l.b16 %v866
  %v1016 = vunpack.c.h.b16 %v866
  %v1017 = vunpack.c.l.b16 %v867
  %v1018 = vunpack.c.h.b16 %v867
  %v1019 = vunpack.c.l.b16 %v868
  %v1020 = vunpack.c.h.b16 %v868
  %v1021 = vunpack.c.l.b16 %v869
  %v1022 = vunpack.c.h.b16 %v869
  %v1023 = vunpack.c.l.b16 %v870
  %v1024 = vunpack.c.h.b16 %v870
  %v1025 = vunpack.c.l.b16 %v871
  %v1026 = vunpack.c.h.b16 %v871
  %v1027 = vunpack.c.l.b16 %v872
  %v1028 = vunpack.c.h.b16 %v872
  %v1029 = vunpack.c.l.b16 %v873
  %v1030 = vunpack.c.h.b16 %v873
  %v1031 = vunpack.c.l.b16 %v874
  %v1032 = vunpack.c.h.b16 %v874
  %v1033 = vunpack.c.l.b16 %v875
  %v1034 = vunpack.c.h.b16 %v875
  %v1035 = vunpack.c.l.b16 %v876
  %v1036 = vunpack.c.h.b16 %v876
  %v1037 = vunpack.c.l.b16 %v877
  %v1038 = vunpack.c.h.b16 %v877
  %v1039 = vunpack.c.l.b16 %v878
  %v1040 = vunpack.c.h.b16 %v878
  %v1041 = vunpack.c.l.b16 %v879
  %v1042 = vunpack.c.h.b16 %v879
  %v1043 = vunpack.c.l.b16 %v880
  %v1044 = vunpack.c.h.b16 %v880
  %v1045 = vunpack.c.l.b16 %v881
  %v1046 = vunpack.c.h.b16 %v881
  %v1047 = vunpack.c.l.b16 %v882
  %v1048 = vunpack.c.h.b16 %v882
  %v1049 = vunpack.c.l.b16 %v883
  %v1050 = vunpack.c.h.b16 %v883
  %v1051 = vunpack.c.l.b16 %v884
  %v1052 = vunpack.c.h.b16 %v884
  %v1053 = vunpack.c.l.b16 %v885
  %v1054 = vunpack.c.h.b16 %v885
  %v1055 = vunpack.c.l.b16 %v886
  %v1056 = vunpack.c.h.b16 %v886
  %v1057 = vunpack.c.l.b16 %v887
  %v1058 = vunpack.c.h.b16 %v887
  %v1059 = vunpack.c.l.b16 %v888
  %v1060 = vunpack.c.h.b16 %v888
  %v1061 = vunpack.c.l.b16 %v889
  %v1062 = vunpack.c.h.b16 %v889
  %v1063 = vunpack.c.l.b16 %v890
  %v1064 = vunpack.c.h.b16 %v890
  %v1065 = vunpack.c.l.b16 %v891
  %v1066 = vunpack.c.h.b16 %v891
  %v1067 = vunpack.c.l.b16 %v892
  %v1068 = vunpack.c.h.b16 %v892
  %v1069 = vunpack.c.l.b16 %v893
  %v1070 = vunpack.c.h.b16 %v893
  %v1071 = vunpack.c.l.b16 %v894
  %v1072 = vunpack.c.h.b16 %v894
  %v1073 = vunpack.c.l.b16 %v895
  %v1074 = vunpack.c.h.b16 %v895
  %v1075 = vunpack.c.l.b16 %v896
  %v1076 = vunpack.c.h.b16 %v896
  %v1077 = vunpack.c.l.b16 %v897
  %v1078 = vunpack.c.h.b16 %v897
  %v1079 = vunpack.c.l.b16 %v898
  %v1080 = vunpack.c.h.b16 %v898
  %v1081 = vunpack.c.l.b16 %v899
  %v1082 = vunpack.c.h.b16 %v899
  %v1083 = vunpack.c.l.b16 %v900
  %v1084 = vunpack.c.h.b16 %v900
  %v1085 = vunpack.c.l.b16 %v901
  %v1086 = vunpack.c.h.b16 %v901
  %v1087 = vunpack.c.l.b16 %v902
  %v1088 = vunpack.c.h.b16 %v902
  %v1089 = vunpack.c.l.b16 %v903
  %v1090 = vunpack.c.h.b16 %v903
  %v1091 = vunpack.c.l.b16 %v904
  %v1092 = vunpack.c.h.b16 %v904
  %v1093 = vunpack.c.l.b16 %v905
  %v1094 = vunpack.c.h.b16 %v905
  %v1095 = vunpack.c.l.b16 %v906
  %v1096 = vunpack.c.h.b16 %v906
  %v1097 = vunpack.c.l.b16 %v907
  %v1098 = vunpack.c.h.b16 %v907
  %v1099 = vunpack.c.l.b16 %v908
  %v1100 = vunpack.c.h.b16 %v908
  %v1101 = vunpack.c.l.b16 %v909
  %v1102 = vunpack.c.h.b16 %v909
  %v1103 = vunpack.c.l.b16 %v910
  %v1104 = vunpack.c.h.b16 %v910
  %v1105 = vpack.c.b16 %v979, %v977
  %v1106 = vpack.c.b16 %v980, %v978
  %v1107 = vpack.c.b16 %v983, %v981
  %v1108 = vpack.c.b16 %v984, %v982
  %v1109 = vpack.c.b16 %v987, %v985
  %v1110 = vpack.c.b16 %v988, %v986
  %v1111 = vpack.c.b16 %v991, %v989
  %v1112 = vpack.c.b16 %v992, %v990
  %v1113 = vpack.c.b16 %v995, %v993
  %v1114 = vpack.c.b16 %v996, %v994
  %v1115 = vpack.c.b16 %v999, %v997
  %v1116 = vpack.c.b16 %v1000, %v998
  %v1117 = vpack.c.b16 %v1003, %v1001
  %v1118 = vpack.c.b16 %v1004, %v1002
  %v1119 = vpack.c.b16 %v1007, %v1005
  %v1120 = vpack.c.b16 %v1008, %v1006
  %v1121 = vpack.c.b16 %v1011, %v1009
  %v1122 = vpack.c.b16 %v1012, %v1010
  %v1123 = vpack.c.b16 %v1015, %v1013
  %v1124 = vpack.c.b16 %v1016, %v1014
  %v1125 = vpack.c.b16 %v1019, %v1017
  %v1126 = vpack.c.b16 %v1020, %v1018
  %v1127 = vpack.c.b16 %v1023, %v1021
  %v1128 = vpack.c.b16 %v1024, %v1022
  %v1129 = vpack.c.b16 %v1027, %v1025
  %v1130 = vpack.c.b16 %v1028, %v1026
  %v1131 = vpack.c.b16 %v1031, %v1029
  %v1132 = vpack.c.b16 %v1032, %v1030
  %v1133 = vpack.c.b16 %v1035, %v1033
  %v1134 = vpack.c.b16 %v1036, %v1034
  %v1135 = vpack.c.b16 %v1039, %v1037
  %v1136 = vpack.c.b16 %v1040, %v1038
  %v1137 = vpack.c.b16 %v1043, %v1041
  %v1138 = vpack.c.b16 %v1044, %v1042
  %v1139 = vpack.c.b16 %v1047, %v1045
  %v1140 = vpack.c.b16 %v1048, %v1046
  %v1141 = vpack.c.b16 %v1051, %v1049
  %v1142 = vpack.c.b16 %v1052, %v1050
  %v1143 = vpack.c.b16 %v1055, %v1053
  %v1144 = vpack.c.b16 %v1056, %v1054
  %v1145 = vpack.c.b16 %v1059, %v1057
  %v1146 = vpack.c.b16 %v1060, %v1058
  %v1147 = vpack.c.b16 %v1063, %v1061
  %v1148 = vpack.c.b16 %v1064, %v1062
  %v1149 = vpack.c.b16 %v1067, %v1065
  %v1150 = vpack.c.b16 %v1068, %v1066
  %v1151 = vpack.c.b16 %v1071, %v1069
  %v1152 = vpack.c.b16 %v1072, %v1070
  %v1153 = vpack.c.b16 %v1075, %v1073
  %v1154 = vpack.c.b16 %v1076, %v1074
  %v1155 = vpack.c.b16 %v1079, %v1077
  %v1156 = vpack.c.b16 %v1080, %v1078
  %v1157 = vpack.c.b16 %v1083, %v1081
  %v1158 = vpack.c.b16 %v1084, %v1082
  %v1159 = vpack.c.b16 %v1087, %v1085
  %v1160 = vpack.c.b16 %v1088, %v1086
  %v1161 = vpack.c.b16 %v1091, %v1089
  %v1162 = vpack.c.b16 %v1092, %v1090
  %v1163 = vpack.c.b16 %v1095, %v1093
  %v1164 = vpack.c.b16 %v1096, %v1094
  %v1165 = vpack.c.b16 %v1099, %v1097
  %v1166 = vpack.c.b16 %v1100, %v1098
  %v1167 = vpack.c.b16 %v1103, %v1101
  %v1168 = vpack.c.b16 %v1104, %v1102
  %1233 = vmatpush.bf16.msra.mxu0 %v1119
  %1234 = vmatpush.bf16.msra.mxu0 %v1117
  %1235 = vmatpush.bf16.msra.mxu0 %v1115
  %1236 = vmatpush.bf16.msra.mxu0 %v1113
  %1237 = vmatpush.bf16.msra.mxu0 %v1111
  %1238 = vmatpush.bf16.msra.mxu0 %v1109
  %1239 = vmatpush.bf16.msra.mxu0 %v1107
  %1240 = vmatpush.bf16.msra.mxu0 %v1105
  %1241 = vmatmul.bf16.gmra.mxu0 %v78
  %v1242 = vpop.f32.mrf.mxu0
  %v1243 = vadd.f32 %v911, %v1242
  %v1244 = vpop.f32.mrf.mxu0
  %v1245 = vadd.f32 %v911, %v1244
  %1246 = vdwg.mxu0
  %1247 = vmatpush.bf16.msra.mxu0 %v1135
  %1248 = vmatpush.bf16.msra.mxu0 %v1133
  %1249 = vmatpush.bf16.msra.mxu0 %v1131
  %1250 = vmatpush.bf16.msra.mxu0 %v1129
  %1251 = vmatpush.bf16.msra.mxu0 %v1127
  %1252 = vmatpush.bf16.msra.mxu0 %v1125
  %1253 = vmatpush.bf16.msra.mxu0 %v1123
  %1254 = vmatpush.bf16.msra.mxu0 %v1121
  %1255 = vmatmul.bf16.gmra.mxu0 %v79
  %v1256 = vpop.f32.mrf.mxu0
  %v1257 = vadd.f32 %v1243, %v1256
  %v1258 = vpop.f32.mrf.mxu0
  %v1259 = vadd.f32 %v1245, %v1258
  %1260 = vdwg.mxu0
  %1261 = vmatpush.bf16.msra.mxu0 %v1151
  %1262 = vmatpush.bf16.msra.mxu0 %v1149
  %1263 = vmatpush.bf16.msra.mxu0 %v1147
  %1264 = vmatpush.bf16.msra.mxu0 %v1145
  %1265 = vmatpush.bf16.msra.mxu0 %v1143
  %1266 = vmatpush.bf16.msra.mxu0 %v1141
  %1267 = vmatpush.bf16.msra.mxu0 %v1139
  %1268 = vmatpush.bf16.msra.mxu0 %v1137
  %1269 = vmatmul.bf16.gmra.mxu0 %v80
  %v1270 = vpop.f32.mrf.mxu0
  %v1271 = vadd.f32 %v1257, %v1270
  %v1272 = vpop.f32.mrf.mxu0
  %v1273 = vadd.f32 %v1259, %v1272
  %1274 = vdwg.mxu0
  %1275 = vmatpush.bf16.msra.mxu0 %v1167
  %1276 = vmatpush.bf16.msra.mxu0 %v1165
  %1277 = vmatpush.bf16.msra.mxu0 %v1163
  %1278 = vmatpush.bf16.msra.mxu0 %v1161
  %1279 = vmatpush.bf16.msra.mxu0 %v1159
  %1280 = vmatpush.bf16.msra.mxu0 %v1157
  %1281 = vmatpush.bf16.msra.mxu0 %v1155
  %1282 = vmatpush.bf16.msra.mxu0 %v1153
  %1283 = vmatmul.bf16.gmra.mxu0 %v81
  %v1284 = vpop.f32.mrf.mxu0
  %v1285 = vadd.f32 %v1271, %v1284
  %v1286 = vpop.f32.mrf.mxu0
  %v1287 = vadd.f32 %v1273, %v1286
  %1288 = vdwg.mxu0
  %1289 = vmatpush.bf16.msra.mxu0 %v1120
  %1290 = vmatpush.bf16.msra.mxu0 %v1118
  %1291 = vmatpush.bf16.msra.mxu0 %v1116
  %1292 = vmatpush.bf16.msra.mxu0 %v1114
  %1293 = vmatpush.bf16.msra.mxu0 %v1112
  %1294 = vmatpush.bf16.msra.mxu0 %v1110
  %1295 = vmatpush.bf16.msra.mxu0 %v1108
  %1296 = vmatpush.bf16.msra.mxu0 %v1106
  %1297 = vmatmul.bf16.gmra.mxu0 %v78
  %v1298 = vpop.f32.mrf.mxu0
  %v1299 = vadd.f32 %v912, %v1298
  %v1300 = vpop.f32.mrf.mxu0
  %v1301 = vadd.f32 %v912, %v1300
  %1302 = vdwg.mxu0
  %1303 = vmatpush.bf16.msra.mxu0 %v1136
  %1304 = vmatpush.bf16.msra.mxu0 %v1134
  %1305 = vmatpush.bf16.msra.mxu0 %v1132
  %1306 = vmatpush.bf16.msra.mxu0 %v1130
  %1307 = vmatpush.bf16.msra.mxu0 %v1128
  %1308 = vmatpush.bf16.msra.mxu0 %v1126
  %1309 = vmatpush.bf16.msra.mxu0 %v1124
  %1310 = vmatpush.bf16.msra.mxu0 %v1122
  %1311 = vmatmul.bf16.gmra.mxu0 %v79
  %v1312 = vpop.f32.mrf.mxu0
  %v1313 = vadd.f32 %v1299, %v1312
  %v1314 = vpop.f32.mrf.mxu0
  %v1315 = vadd.f32 %v1301, %v1314
  %1316 = vdwg.mxu0
  %1317 = vmatpush.bf16.msra.mxu0 %v1152
  %1318 = vmatpush.bf16.msra.mxu0 %v1150
  %1319 = vmatpush.bf16.msra.mxu0 %v1148
  %1320 = vmatpush.bf16.msra.mxu0 %v1146
  %1321 = vmatpush.bf16.msra.mxu0 %v1144
  %1322 = vmatpush.bf16.msra.mxu0 %v1142
  %1323 = vmatpush.bf16.msra.mxu0 %v1140
  %1324 = vmatpush.bf16.msra.mxu0 %v1138
  %1325 = vmatmul.bf16.gmra.mxu0 %v80
  %v1326 = vpop.f32.mrf.mxu0
  %v1327 = vadd.f32 %v1313, %v1326
  %v1328 = vpop.f32.mrf.mxu0
  %v1329 = vadd.f32 %v1315, %v1328
  %1330 = vdwg.mxu0
  %1331 = vmatpush.bf16.msra.mxu0 %v1168
  %1332 = vmatpush.bf16.msra.mxu0 %v1166
  %1333 = vmatpush.bf16.msra.mxu0 %v1164
  %1334 = vmatpush.bf16.msra.mxu0 %v1162
  %1335 = vmatpush.bf16.msra.mxu0 %v1160
  %1336 = vmatpush.bf16.msra.mxu0 %v1158
  %1337 = vmatpush.bf16.msra.mxu0 %v1156
  %1338 = vmatpush.bf16.msra.mxu0 %v1154
  %1339 = vmatmul.bf16.gmra.mxu0 %v81
  %v1340 = vpop.f32.mrf.mxu0
  %v1341 = vadd.f32 %v1327, %v1340
  %v1342 = vpop.f32.mrf.mxu0
  %v1343 = vadd.f32 %v1329, %v1342
  %1344 = vdwg.mxu0
  %v1345 = vpack.c.bf16 %v845, %v843
  %v1346 = vpack.c.bf16 %v846, %v844
  %v1347 = vld [vmem:[%s3] sm:$0xff]
  %v1348 = vld [vmem:[%s3 + $0x8] sm:$0xff]
  %v1349 = vld [vmem:[%s3 + $0x10] sm:$0xff]
  %v1350 = vld [vmem:[%s3 + $0x18] sm:$0xff]
  %v1351 = vld [vmem:[%s3 + $0x20] sm:$0xff]
  %v1352 = vld [vmem:[%s3 + $0x28] sm:$0xff]
  %v1353 = vld [vmem:[%s3 + $0x30] sm:$0xff]
  %v1354 = vld [vmem:[%s3 + $0x38] sm:$0xff]
  %v1355 = vld [vmem:[%s3 + $0x40] sm:$0xff]
  %v1356 = vld [vmem:[%s3 + $0x48] sm:$0xff]
  %v1357 = vld [vmem:[%s3 + $0x50] sm:$0xff]
  %v1358 = vld [vmem:[%s3 + $0x58] sm:$0xff]
  %v1359 = vld [vmem:[%s3 + $0x60] sm:$0xff]
  %v1360 = vld [vmem:[%s3 + $0x68] sm:$0xff]
  %v1361 = vld [vmem:[%s3 + $0x70] sm:$0xff]
  %v1362 = vld [vmem:[%s3 + $0x78] sm:$0xff]
  %v1363 = vld [vmem:[%s3 + $0x80] sm:$0xff]
  %v1364 = vld [vmem:[%s3 + $0x88] sm:$0xff]
  %v1365 = vld [vmem:[%s3 + $0x90] sm:$0xff]
  %v1366 = vld [vmem:[%s3 + $0x98] sm:$0xff]
  %v1367 = vld [vmem:[%s3 + $0xa0] sm:$0xff]
  %v1368 = vld [vmem:[%s3 + $0xa8] sm:$0xff]
  %v1369 = vld [vmem:[%s3 + $0xb0] sm:$0xff]
  %v1370 = vld [vmem:[%s3 + $0xb8] sm:$0xff]
  %v1371 = vld [vmem:[%s3 + $0xc0] sm:$0xff]
  %v1372 = vld [vmem:[%s3 + $0xc8] sm:$0xff]
  %v1373 = vld [vmem:[%s3 + $0xd0] sm:$0xff]
  %v1374 = vld [vmem:[%s3 + $0xd8] sm:$0xff]
  %v1375 = vld [vmem:[%s3 + $0xe0] sm:$0xff]
  %v1376 = vld [vmem:[%s3 + $0xe8] sm:$0xff]
  %v1377 = vld [vmem:[%s3 + $0xf0] sm:$0xff]
  %v1378 = vld [vmem:[%s3 + $0xf8] sm:$0xff]
  %v1379 = vperm.slane %v68, 3
  %v1380 = vperm.slane %v69, 3
  %v1413 = vunpack.c.l.b16 %v1347
  %v1414 = vunpack.c.h.b16 %v1347
  %v1415 = vunpack.c.l.b16 %v1348
  %v1416 = vunpack.c.h.b16 %v1348
  %v1417 = vunpack.c.l.b16 %v1349
  %v1418 = vunpack.c.h.b16 %v1349
  %v1419 = vunpack.c.l.b16 %v1350
  %v1420 = vunpack.c.h.b16 %v1350
  %v1421 = vunpack.c.l.b16 %v1351
  %v1422 = vunpack.c.h.b16 %v1351
  %v1423 = vunpack.c.l.b16 %v1352
  %v1424 = vunpack.c.h.b16 %v1352
  %v1425 = vunpack.c.l.b16 %v1353
  %v1426 = vunpack.c.h.b16 %v1353
  %v1427 = vunpack.c.l.b16 %v1354
  %v1428 = vunpack.c.h.b16 %v1354
  %v1429 = vunpack.c.l.b16 %v1355
  %v1430 = vunpack.c.h.b16 %v1355
  %v1431 = vunpack.c.l.b16 %v1356
  %v1432 = vunpack.c.h.b16 %v1356
  %v1433 = vunpack.c.l.b16 %v1357
  %v1434 = vunpack.c.h.b16 %v1357
  %v1435 = vunpack.c.l.b16 %v1358
  %v1436 = vunpack.c.h.b16 %v1358
  %v1437 = vunpack.c.l.b16 %v1359
  %v1438 = vunpack.c.h.b16 %v1359
  %v1439 = vunpack.c.l.b16 %v1360
  %v1440 = vunpack.c.h.b16 %v1360
  %v1441 = vunpack.c.l.b16 %v1361
  %v1442 = vunpack.c.h.b16 %v1361
  %v1443 = vunpack.c.l.b16 %v1362
  %v1444 = vunpack.c.h.b16 %v1362
  %v1445 = vunpack.c.l.b16 %v1363
  %v1446 = vunpack.c.h.b16 %v1363
  %v1447 = vunpack.c.l.b16 %v1364
  %v1448 = vunpack.c.h.b16 %v1364
  %v1449 = vunpack.c.l.b16 %v1365
  %v1450 = vunpack.c.h.b16 %v1365
  %v1451 = vunpack.c.l.b16 %v1366
  %v1452 = vunpack.c.h.b16 %v1366
  %v1453 = vunpack.c.l.b16 %v1367
  %v1454 = vunpack.c.h.b16 %v1367
  %v1455 = vunpack.c.l.b16 %v1368
  %v1456 = vunpack.c.h.b16 %v1368
  %v1457 = vunpack.c.l.b16 %v1369
  %v1458 = vunpack.c.h.b16 %v1369
  %v1459 = vunpack.c.l.b16 %v1370
  %v1460 = vunpack.c.h.b16 %v1370
  %v1461 = vunpack.c.l.b16 %v1371
  %v1462 = vunpack.c.h.b16 %v1371
  %v1463 = vunpack.c.l.b16 %v1372
  %v1464 = vunpack.c.h.b16 %v1372
  %v1465 = vunpack.c.l.b16 %v1373
  %v1466 = vunpack.c.h.b16 %v1373
  %v1467 = vunpack.c.l.b16 %v1374
  %v1468 = vunpack.c.h.b16 %v1374
  %v1469 = vunpack.c.l.b16 %v1375
  %v1470 = vunpack.c.h.b16 %v1375
  %v1471 = vunpack.c.l.b16 %v1376
  %v1472 = vunpack.c.h.b16 %v1376
  %v1473 = vunpack.c.l.b16 %v1377
  %v1474 = vunpack.c.h.b16 %v1377
  %v1475 = vunpack.c.l.b16 %v1378
  %v1476 = vunpack.c.h.b16 %v1378
  %v1477 = vpack.c.b16 %v1415, %v1413
  %v1478 = vpack.c.b16 %v1416, %v1414
  %v1479 = vpack.c.b16 %v1419, %v1417
  %v1480 = vpack.c.b16 %v1420, %v1418
  %v1481 = vpack.c.b16 %v1423, %v1421
  %v1482 = vpack.c.b16 %v1424, %v1422
  %v1483 = vpack.c.b16 %v1427, %v1425
  %v1484 = vpack.c.b16 %v1428, %v1426
  %v1485 = vpack.c.b16 %v1431, %v1429
  %v1486 = vpack.c.b16 %v1432, %v1430
  %v1487 = vpack.c.b16 %v1435, %v1433
  %v1488 = vpack.c.b16 %v1436, %v1434
  %v1489 = vpack.c.b16 %v1439, %v1437
  %v1490 = vpack.c.b16 %v1440, %v1438
  %v1491 = vpack.c.b16 %v1443, %v1441
  %v1492 = vpack.c.b16 %v1444, %v1442
  %v1493 = vpack.c.b16 %v1447, %v1445
  %v1494 = vpack.c.b16 %v1448, %v1446
  %v1495 = vpack.c.b16 %v1451, %v1449
  %v1496 = vpack.c.b16 %v1452, %v1450
  %v1497 = vpack.c.b16 %v1455, %v1453
  %v1498 = vpack.c.b16 %v1456, %v1454
  %v1499 = vpack.c.b16 %v1459, %v1457
  %v1500 = vpack.c.b16 %v1460, %v1458
  %v1501 = vpack.c.b16 %v1463, %v1461
  %v1502 = vpack.c.b16 %v1464, %v1462
  %v1503 = vpack.c.b16 %v1467, %v1465
  %v1504 = vpack.c.b16 %v1468, %v1466
  %v1505 = vpack.c.b16 %v1471, %v1469
  %v1506 = vpack.c.b16 %v1472, %v1470
  %v1507 = vpack.c.b16 %v1475, %v1473
  %v1508 = vpack.c.b16 %v1476, %v1474
  %1541 = vmatpush.bf16.msra.mxu0 %v1491
  %1542 = vmatpush.bf16.msra.mxu0 %v1489
  %1543 = vmatpush.bf16.msra.mxu0 %v1487
  %1544 = vmatpush.bf16.msra.mxu0 %v1485
  %1545 = vmatpush.bf16.msra.mxu0 %v1483
  %1546 = vmatpush.bf16.msra.mxu0 %v1481
  %1547 = vmatpush.bf16.msra.mxu0 %v1479
  %1548 = vmatpush.bf16.msra.mxu0 %v1477
  %1549 = vmatmul.bf16.gmra.mxu0 %v1345
  %v1550 = vpop.f32.mrf.mxu0
  %v1551 = vadd.f32 %v1379, %v1550
  %v1552 = vpop.f32.mrf.mxu0
  %v1553 = vadd.f32 %v1379, %v1552
  %1554 = vdwg.mxu0
  %1555 = vmatpush.bf16.msra.mxu0 %v1507
  %1556 = vmatpush.bf16.msra.mxu0 %v1505
  %1557 = vmatpush.bf16.msra.mxu0 %v1503
  %1558 = vmatpush.bf16.msra.mxu0 %v1501
  %1559 = vmatpush.bf16.msra.mxu0 %v1499
  %1560 = vmatpush.bf16.msra.mxu0 %v1497
  %1561 = vmatpush.bf16.msra.mxu0 %v1495
  %1562 = vmatpush.bf16.msra.mxu0 %v1493
  %1563 = vmatmul.bf16.gmra.mxu0 %v1346
  %v1564 = vpop.f32.mrf.mxu0
  %v1565 = vadd.f32 %v1551, %v1564
  %v1566 = vpop.f32.mrf.mxu0
  %v1567 = vadd.f32 %v1553, %v1566
  %1568 = vdwg.mxu0
  %1569 = vmatpush.bf16.msra.mxu0 %v1492
  %1570 = vmatpush.bf16.msra.mxu0 %v1490
  %1571 = vmatpush.bf16.msra.mxu0 %v1488
  %1572 = vmatpush.bf16.msra.mxu0 %v1486
  %1573 = vmatpush.bf16.msra.mxu0 %v1484
  %1574 = vmatpush.bf16.msra.mxu0 %v1482
  %1575 = vmatpush.bf16.msra.mxu0 %v1480
  %1576 = vmatpush.bf16.msra.mxu0 %v1478
  %1577 = vmatmul.bf16.gmra.mxu0 %v1345
  %v1578 = vpop.f32.mrf.mxu0
  %v1579 = vadd.f32 %v1380, %v1578
  %v1580 = vpop.f32.mrf.mxu0
  %v1581 = vadd.f32 %v1380, %v1580
  %1582 = vdwg.mxu0
  %1583 = vmatpush.bf16.msra.mxu0 %v1508
  %1584 = vmatpush.bf16.msra.mxu0 %v1506
  %1585 = vmatpush.bf16.msra.mxu0 %v1504
  %1586 = vmatpush.bf16.msra.mxu0 %v1502
  %1587 = vmatpush.bf16.msra.mxu0 %v1500
  %1588 = vmatpush.bf16.msra.mxu0 %v1498
  %1589 = vmatpush.bf16.msra.mxu0 %v1496
  %1590 = vmatpush.bf16.msra.mxu0 %v1494
  %1591 = vmatmul.bf16.gmra.mxu0 %v1346
  %v1592 = vpop.f32.mrf.mxu0
  %v1593 = vadd.f32 %v1579, %v1592
  %v1594 = vpop.f32.mrf.mxu0
  %v1595 = vadd.f32 %v1581, %v1594
  %1596 = vdwg.mxu0
  %v1597 = vadd.f32 %v1565, %v1285
  %v1598 = vadd.f32 %v1593, %v1341
  %v1599 = vadd.f32 %v1567, %v1287
  %v1600 = vadd.f32 %v1595, %v1343
  %v1601 = vpack.c.bf16 %v1599, %v1597
  %v1602 = vpack.c.bf16 %v1600, %v1598
  %v1603 = vld [vmem:[%s7] sm:$0xf]
  %v1604 = vld [vmem:[%s7 + $0x4] sm:$0xf]
  %v1605 = vld [vmem:[%s7 + $0x8] sm:$0xf]
  %v1606 = vld [vmem:[%s7 + $0xc] sm:$0xf]
  %v1607 = vld [vmem:[%s7 + $0x10] sm:$0xf]
  %v1608 = vld [vmem:[%s7 + $0x14] sm:$0xf]
  %v1609 = vld [vmem:[%s7 + $0x18] sm:$0xf]
  %v1610 = vld [vmem:[%s7 + $0x1c] sm:$0xf]
  %v1611 = vld [vmem:[%s7 + $0x20] sm:$0xf]
  %v1612 = vld [vmem:[%s7 + $0x24] sm:$0xf]
  %v1613 = vld [vmem:[%s7 + $0x28] sm:$0xf]
  %v1614 = vld [vmem:[%s7 + $0x2c] sm:$0xf]
  %v1615 = vld [vmem:[%s7 + $0x30] sm:$0xf]
  %v1616 = vld [vmem:[%s7 + $0x34] sm:$0xf]
  %v1617 = vld [vmem:[%s7 + $0x38] sm:$0xf]
  %v1618 = vld [vmem:[%s7 + $0x3c] sm:$0xf]
  %v1619 = vld [vmem:[%s7 + $0x40] sm:$0xf]
  %v1620 = vld [vmem:[%s7 + $0x44] sm:$0xf]
  %v1621 = vld [vmem:[%s7 + $0x48] sm:$0xf]
  %v1622 = vld [vmem:[%s7 + $0x4c] sm:$0xf]
  %v1623 = vld [vmem:[%s7 + $0x50] sm:$0xf]
  %v1624 = vld [vmem:[%s7 + $0x54] sm:$0xf]
  %v1625 = vld [vmem:[%s7 + $0x58] sm:$0xf]
  %v1626 = vld [vmem:[%s7 + $0x5c] sm:$0xf]
  %v1627 = vld [vmem:[%s7 + $0x60] sm:$0xf]
  %v1628 = vld [vmem:[%s7 + $0x64] sm:$0xf]
  %v1629 = vld [vmem:[%s7 + $0x68] sm:$0xf]
  %v1630 = vld [vmem:[%s7 + $0x6c] sm:$0xf]
  %v1631 = vld [vmem:[%s7 + $0x70] sm:$0xf]
  %v1632 = vld [vmem:[%s7 + $0x74] sm:$0xf]
  %v1633 = vld [vmem:[%s7 + $0x78] sm:$0xf]
  %v1634 = vld [vmem:[%s7 + $0x7c] sm:$0xf]
  %v1635 = vld [vmem:[%s8] sm:$0x1]
  %v1637 = vperm.slane %v1635, 0
  %v1671 = vunpack.c.l.b16 %v1603
  %v1672 = vunpack.c.l.b16 %v1604
  %v1673 = vunpack.c.l.b16 %v1605
  %v1674 = vunpack.c.l.b16 %v1606
  %v1675 = vunpack.c.l.b16 %v1607
  %v1676 = vunpack.c.l.b16 %v1608
  %v1677 = vunpack.c.l.b16 %v1609
  %v1678 = vunpack.c.l.b16 %v1610
  %v1679 = vunpack.c.l.b16 %v1611
  %v1680 = vunpack.c.l.b16 %v1612
  %v1681 = vunpack.c.l.b16 %v1613
  %v1682 = vunpack.c.l.b16 %v1614
  %v1683 = vunpack.c.l.b16 %v1615
  %v1684 = vunpack.c.l.b16 %v1616
  %v1685 = vunpack.c.l.b16 %v1617
  %v1686 = vunpack.c.l.b16 %v1618
  %v1687 = vunpack.c.l.b16 %v1619
  %v1688 = vunpack.c.l.b16 %v1620
  %v1689 = vunpack.c.l.b16 %v1621
  %v1690 = vunpack.c.l.b16 %v1622
  %v1691 = vunpack.c.l.b16 %v1623
  %v1692 = vunpack.c.l.b16 %v1624
  %v1693 = vunpack.c.l.b16 %v1625
  %v1694 = vunpack.c.l.b16 %v1626
  %v1695 = vunpack.c.l.b16 %v1627
  %v1696 = vunpack.c.l.b16 %v1628
  %v1697 = vunpack.c.l.b16 %v1629
  %v1698 = vunpack.c.l.b16 %v1630
  %v1699 = vunpack.c.l.b16 %v1631
  %v1700 = vunpack.c.l.b16 %v1632
  %v1701 = vunpack.c.l.b16 %v1633
  %v1702 = vunpack.c.l.b16 %v1634
  %v1703 = vpack.c.b16 %v1672, %v1671
  %v1704 = vpack.c.b16 %v1674, %v1673
  %v1705 = vpack.c.b16 %v1676, %v1675
  %v1706 = vpack.c.b16 %v1678, %v1677
  %v1707 = vpack.c.b16 %v1680, %v1679
  %v1708 = vpack.c.b16 %v1682, %v1681
  %v1709 = vpack.c.b16 %v1684, %v1683
  %v1710 = vpack.c.b16 %v1686, %v1685
  %v1711 = vpack.c.b16 %v1688, %v1687
  %v1712 = vpack.c.b16 %v1690, %v1689
  %v1713 = vpack.c.b16 %v1692, %v1691
  %v1714 = vpack.c.b16 %v1694, %v1693
  %v1715 = vpack.c.b16 %v1696, %v1695
  %v1716 = vpack.c.b16 %v1698, %v1697
  %v1717 = vpack.c.b16 %v1700, %v1699
  %v1718 = vpack.c.b16 %v1702, %v1701
  %1735 = vmatpush.bf16.msra.mxu0 %v1710
  %1736 = vmatpush.bf16.msra.mxu0 %v1709
  %1737 = vmatpush.bf16.msra.mxu0 %v1708
  %1738 = vmatpush.bf16.msra.mxu0 %v1707
  %1739 = vmatpush.bf16.msra.mxu0 %v1706
  %1740 = vmatpush.bf16.msra.mxu0 %v1705
  %1741 = vmatpush.bf16.msra.mxu0 %v1704
  %1742 = vmatpush.bf16.msra.mxu0 %v1703
  %1743 = vmatmul.bf16.gmra.mxu0 %v1601
  %v1744 = vpop.f32.mrf.mxu0
  %v1745 = vadd.f32 %v1637, %v1744
  %v1746 = vpop.f32.mrf.mxu0
  %v1747 = vadd.f32 %v1637, %v1746
  %1748 = vdwg.mxu0
  %1749 = vmatpush.bf16.msra.mxu0 %v1718
  %1750 = vmatpush.bf16.msra.mxu0 %v1717
  %1751 = vmatpush.bf16.msra.mxu0 %v1716
  %1752 = vmatpush.bf16.msra.mxu0 %v1715
  %1753 = vmatpush.bf16.msra.mxu0 %v1714
  %1754 = vmatpush.bf16.msra.mxu0 %v1713
  %1755 = vmatpush.bf16.msra.mxu0 %v1712
  %1756 = vmatpush.bf16.msra.mxu0 %v1711
  %1757 = vmatmul.bf16.gmra.mxu0 %v1602
  %v1758 = vpop.f32.mrf.mxu0
  %v1759 = vadd.f32 %v1745, %v1758
  %v1760 = vpop.f32.mrf.mxu0
  %v1761 = vadd.f32 %v1747, %v1760
  %1762 = vdwg.mxu0
  %vm1763 = vcmask 31744
  %1764 = vst.msk [vmem:[%s9] sm:$0xff] %vm1763, %v1759
  %1765 = vst.msk [vmem:[%s9 + $0x8] sm:$0xff] %vm1763, %v1761
  // Predicated region
  $region38: #{_lambda_.5} parent=0 // pred_check
    _
  $region39: #{_lambda_.5} parent=0 // pred_check_branch
    %1767 = sbr.rel (0) target = $region41
  $region40: #{_lambda_.5} parent=0 // pred_region
    _
  $region41: #{_lambda_.5} parent=0 // pred_fallthru
    _
  // Predicated region
  $region42: #{_lambda_.5} parent=0 // pred_check
    _
  $region43: #{_lambda_.5} parent=0 // pred_check_branch
    %1769 = sbr.rel (0) target = $region45
  $region44: #{_lambda_.5} parent=0 // pred_region
    _
  $region45: #{_lambda_.5} parent=0 // pred_fallthru
    _

// kernel: _lambda_.4
$region0: #{_lambda_.4}
  #allocation0 [shape = 'u32[]', space=smem, size = 0x4, offset = 0x4, fixed_abs, tag = 'smem constant byte address 0x4 - core index']
  #allocation1 [shape = 'u32[72,128]{1,0:T(1,128)}', space=vmem, size = 0x9000, scoped, tag = 'internal scratch']
  %s0 = inlined_call_operand.vmem [shape: f32[16,512], index: 0, kind: input, shape index: {}]
  %s1 = inlined_call_operand.vmem [shape: bf16[512,512], index: 1, kind: input, shape index: {}]
  %s2 = inlined_call_operand.vmem [shape: bf16[512,512], index: 2, kind: input, shape index: {}]
  %s3 = inlined_call_operand.vmem [shape: f32[512,8], index: 3, kind: input, shape index: {}]
  %s4 = inlined_call_operand.vmem [shape: f32[8,512], index: 4, kind: input, shape index: {}]
  %s5 = inlined_call_operand.vmem [shape: f32[5,512], index: 5, kind: input, shape index: {}]
  %s6 = inlined_call_operand.vmem [shape: f32[16,512], index: 6, kind: output, shape index: {}]
  %s7 = sld [smem:[#allocation0]]
  $region34: #{_lambda_.4} parent=0
    _
  %s9 = ssub.s32 1, %s7
  %s10 = scalar_select 0, %s9, %s7
  // Predicated region
  $region2: #{_lambda_.4} parent=0 // pred_check
    _
  $region3: #{_lambda_.4} parent=0 // pred_check_branch
    %12 = sbr.rel (0) target = $region5
  $region4: #{_lambda_.4} parent=0 // pred_region
    _
  $region5: #{_lambda_.4} parent=0 // pred_fallthru
    _
  // Predicated region
  $region6: #{_lambda_.4} parent=0 // pred_check
    _
  $region7: #{_lambda_.4} parent=0 // pred_check_branch
    %14 = sbr.rel (0) target = $region9
  $region8: #{_lambda_.4} parent=0 // pred_region
    _
  $region9: #{_lambda_.4} parent=0 // pred_fallthru
    _
  // Predicated region
  $region10: #{_lambda_.4} parent=0 // pred_check
    _
  $region11: #{_lambda_.4} parent=0 // pred_check_branch
    %16 = sbr.rel (0) target = $region13
  $region12: #{_lambda_.4} parent=0 // pred_region
    _
  $region13: #{_lambda_.4} parent=0 // pred_fallthru
    _
  // Predicated region
  $region14: #{_lambda_.4} parent=0 // pred_check
    _
  $region15: #{_lambda_.4} parent=0 // pred_check_branch
    %18 = sbr.rel (0) target = $region17
  $region16: #{_lambda_.4} parent=0 // pred_region
    _
  $region17: #{_lambda_.4} parent=0 // pred_fallthru
    _
  // Predicated region
  $region18: #{_lambda_.4} parent=0 // pred_check
    _
  $region19: #{_lambda_.4} parent=0 // pred_check_branch
    %20 = sbr.rel (0) target = $region21
  $region20: #{_lambda_.4} parent=0 // pred_region
    _
  $region21: #{_lambda_.4} parent=0 // pred_fallthru
    _
  // Predicated region
  $region22: #{_lambda_.4} parent=0 // pred_check
    _
  $region23: #{_lambda_.4} parent=0 // pred_check_branch
    %22 = sbr.rel (0) target = $region25
  $region24: #{_lambda_.4} parent=0 // pred_region
    _
  $region25: #{_lambda_.4} parent=0 // pred_fallthru
    _
  %v23 = vld [vmem:[%s3] sm:$0xff]
  %v24 = vld [vmem:[%s3 + $0x8] sm:$0xff]
  %v25 = vld [vmem:[%s3 + $0x10] sm:$0xff]
  %v26 = vld [vmem:[%s3 + $0x18] sm:$0xff]
  %v27 = vld [vmem:[%s3 + $0x20] sm:$0xff]
  %v28 = vld [vmem:[%s3 + $0x28] sm:$0xff]
  %v29 = vld [vmem:[%s3 + $0x30] sm:$0xff]
  %v30 = vld [vmem:[%s3 + $0x38] sm:$0xff]
  %v31 = vld [vmem:[%s3 + $0x40] sm:$0xff]
  %v32 = vld [vmem:[%s3 + $0x48] sm:$0xff]
  %v33 = vld [vmem:[%s3 + $0x50] sm:$0xff]
  %v34 = vld [vmem:[%s3 + $0x58] sm:$0xff]
  %v35 = vld [vmem:[%s3 + $0x60] sm:$0xff]
  %v36 = vld [vmem:[%s3 + $0x68] sm:$0xff]
  %v37 = vld [vmem:[%s3 + $0x70] sm:$0xff]
  %v38 = vld [vmem:[%s3 + $0x78] sm:$0xff]
  %v39 = vld [vmem:[%s3 + $0x80] sm:$0xff]
  %v40 = vld [vmem:[%s3 + $0x88] sm:$0xff]
  %v41 = vld [vmem:[%s3 + $0x90] sm:$0xff]
  %v42 = vld [vmem:[%s3 + $0x98] sm:$0xff]
  %v43 = vld [vmem:[%s3 + $0xa0] sm:$0xff]
  %v44 = vld [vmem:[%s3 + $0xa8] sm:$0xff]
  %v45 = vld [vmem:[%s3 + $0xb0] sm:$0xff]
  %v46 = vld [vmem:[%s3 + $0xb8] sm:$0xff]
  %v47 = vld [vmem:[%s3 + $0xc0] sm:$0xff]
  %v48 = vld [vmem:[%s3 + $0xc8] sm:$0xff]
  %v49 = vld [vmem:[%s3 + $0xd0] sm:$0xff]
  %v50 = vld [vmem:[%s3 + $0xd8] sm:$0xff]
  %v51 = vld [vmem:[%s3 + $0xe0] sm:$0xff]
  %v52 = vld [vmem:[%s3 + $0xe8] sm:$0xff]
  %v53 = vld [vmem:[%s3 + $0xf0] sm:$0xff]
  %v54 = vld [vmem:[%s3 + $0xf8] sm:$0xff]
  %v55 = vld [vmem:[%s3 + $0x100] sm:$0xff]
  %v56 = vld [vmem:[%s3 + $0x108] sm:$0xff]
  %v57 = vld [vmem:[%s3 + $0x110] sm:$0xff]
  %v58 = vld [vmem:[%s3 + $0x118] sm:$0xff]
  %v59 = vld [vmem:[%s3 + $0x120] sm:$0xff]
  %v60 = vld [vmem:[%s3 + $0x128] sm:$0xff]
  %v61 = vld [vmem:[%s3 + $0x130] sm:$0xff]
  %v62 = vld [vmem:[%s3 + $0x138] sm:$0xff]
  %v63 = vld [vmem:[%s3 + $0x140] sm:$0xff]
  %v64 = vld [vmem:[%s3 + $0x148] sm:$0xff]
  %v65 = vld [vmem:[%s3 + $0x150] sm:$0xff]
  %v66 = vld [vmem:[%s3 + $0x158] sm:$0xff]
  %v67 = vld [vmem:[%s3 + $0x160] sm:$0xff]
  %v68 = vld [vmem:[%s3 + $0x168] sm:$0xff]
  %v69 = vld [vmem:[%s3 + $0x170] sm:$0xff]
  %v70 = vld [vmem:[%s3 + $0x178] sm:$0xff]
  %v71 = vld [vmem:[%s3 + $0x180] sm:$0xff]
  %v72 = vld [vmem:[%s3 + $0x188] sm:$0xff]
  %v73 = vld [vmem:[%s3 + $0x190] sm:$0xff]
  %v74 = vld [vmem:[%s3 + $0x198] sm:$0xff]
  %v75 = vld [vmem:[%s3 + $0x1a0] sm:$0xff]
  %v76 = vld [vmem:[%s3 + $0x1a8] sm:$0xff]
  %v77 = vld [vmem:[%s3 + $0x1b0] sm:$0xff]
  %v78 = vld [vmem:[%s3 + $0x1b8] sm:$0xff]
  %v79 = vld [vmem:[%s3 + $0x1c0] sm:$0xff]
  %v80 = vld [vmem:[%s3 + $0x1c8] sm:$0xff]
  %v81 = vld [vmem:[%s3 + $0x1d0] sm:$0xff]
  %v82 = vld [vmem:[%s3 + $0x1d8] sm:$0xff]
  %v83 = vld [vmem:[%s3 + $0x1e0] sm:$0xff]
  %v84 = vld [vmem:[%s3 + $0x1e8] sm:$0xff]
  %v85 = vld [vmem:[%s3 + $0x1f0] sm:$0xff]
  %v86 = vld [vmem:[%s3 + $0x1f8] sm:$0xff]
  %v87 = vld [vmem:[%s4] sm:$0xff]
  %v88 = vld [vmem:[%s4 + $0x8] sm:$0xff]
  %v89 = vld [vmem:[%s4 + $0x10] sm:$0xff]
  %v90 = vld [vmem:[%s4 + $0x18] sm:$0xff]
  %v91 = vld [vmem:[%s5] sm:$0x1f]
  %v92 = vld [vmem:[%s5 + $0x8] sm:$0x1f]
  %v93 = vld [vmem:[%s5 + $0x10] sm:$0x1f]
  %v94 = vld [vmem:[%s5 + $0x18] sm:$0x1f]
  %v95 = vld [vmem:[%s0] sm:$0xff]
  %v96 = vld [vmem:[%s0 + $0x8] sm:$0xff]
  %v97 = vld [vmem:[%s0 + $0x10] sm:$0xff]
  %v98 = vld [vmem:[%s0 + $0x18] sm:$0xff]
  %v99 = vld [vmem:[%s0 + $0x20] sm:$0xff]
  %v100 = vld [vmem:[%s0 + $0x28] sm:$0xff]
  %v101 = vld [vmem:[%s0 + $0x30] sm:$0xff]
  %v102 = vld [vmem:[%s0 + $0x38] sm:$0xff]
  %v103 = vpack.c.bf16 %v99, %v95
  %v104 = vpack.c.bf16 %v100, %v96
  %v105 = vpack.c.bf16 %v101, %v97
  %v106 = vpack.c.bf16 %v102, %v98
  %v107 = vld [vmem:[%s1] sm:$0xff]
  %v108 = vld [vmem:[%s1 + $0x8] sm:$0xff]
  %v109 = vld [vmem:[%s1 + $0x10] sm:$0xff]
  %v110 = vld [vmem:[%s1 + $0x18] sm:$0xff]
  %v111 = vld [vmem:[%s1 + $0x20] sm:$0xff]
  %v112 = vld [vmem:[%s1 + $0x28] sm:$0xff]
  %v113 = vld [vmem:[%s1 + $0x30] sm:$0xff]
  %v114 = vld [vmem:[%s1 + $0x38] sm:$0xff]
  %v115 = vld [vmem:[%s1 + $0x40] sm:$0xff]
  %v116 = vld [vmem:[%s1 + $0x48] sm:$0xff]
  %v117 = vld [vmem:[%s1 + $0x50] sm:$0xff]
  %v118 = vld [vmem:[%s1 + $0x58] sm:$0xff]
  %v119 = vld [vmem:[%s1 + $0x60] sm:$0xff]
  %v120 = vld [vmem:[%s1 + $0x68] sm:$0xff]
  %v121 = vld [vmem:[%s1 + $0x70] sm:$0xff]
  %v122 = vld [vmem:[%s1 + $0x78] sm:$0xff]
  %v123 = vld [vmem:[%s1 + $0x80] sm:$0xff]
  %v124 = vld [vmem:[%s1 + $0x88] sm:$0xff]
  %v125 = vld [vmem:[%s1 + $0x90] sm:$0xff]
  %v126 = vld [vmem:[%s1 + $0x98] sm:$0xff]
  %v127 = vld [vmem:[%s1 + $0xa0] sm:$0xff]
  %v128 = vld [vmem:[%s1 + $0xa8] sm:$0xff]
  %v129 = vld [vmem:[%s1 + $0xb0] sm:$0xff]
  %v130 = vld [vmem:[%s1 + $0xb8] sm:$0xff]
  %v131 = vld [vmem:[%s1 + $0xc0] sm:$0xff]
  %v132 = vld [vmem:[%s1 + $0xc8] sm:$0xff]
  %v133 = vld [vmem:[%s1 + $0xd0] sm:$0xff]
  %v134 = vld [vmem:[%s1 + $0xd8] sm:$0xff]
  %v135 = vld [vmem:[%s1 + $0xe0] sm:$0xff]
  %v136 = vld [vmem:[%s1 + $0xe8] sm:$0xff]
  %v137 = vld [vmem:[%s1 + $0xf0] sm:$0xff]
  %v138 = vld [vmem:[%s1 + $0xf8] sm:$0xff]
  %v139 = vld [vmem:[%s1 + $0x100] sm:$0xff]
  %v140 = vld [vmem:[%s1 + $0x108] sm:$0xff]
  %v141 = vld [vmem:[%s1 + $0x110] sm:$0xff]
  %v142 = vld [vmem:[%s1 + $0x118] sm:$0xff]
  %v143 = vld [vmem:[%s1 + $0x120] sm:$0xff]
  %v144 = vld [vmem:[%s1 + $0x128] sm:$0xff]
  %v145 = vld [vmem:[%s1 + $0x130] sm:$0xff]
  %v146 = vld [vmem:[%s1 + $0x138] sm:$0xff]
  %v147 = vld [vmem:[%s1 + $0x140] sm:$0xff]
  %v148 = vld [vmem:[%s1 + $0x148] sm:$0xff]
  %v149 = vld [vmem:[%s1 + $0x150] sm:$0xff]
  %v150 = vld [vmem:[%s1 + $0x158] sm:$0xff]
  %v151 = vld [vmem:[%s1 + $0x160] sm:$0xff]
  %v152 = vld [vmem:[%s1 + $0x168] sm:$0xff]
  %v153 = vld [vmem:[%s1 + $0x170] sm:$0xff]
  %v154 = vld [vmem:[%s1 + $0x178] sm:$0xff]
  %v155 = vld [vmem:[%s1 + $0x180] sm:$0xff]
  %v156 = vld [vmem:[%s1 + $0x188] sm:$0xff]
  %v157 = vld [vmem:[%s1 + $0x190] sm:$0xff]
  %v158 = vld [vmem:[%s1 + $0x198] sm:$0xff]
  %v159 = vld [vmem:[%s1 + $0x1a0] sm:$0xff]
  %v160 = vld [vmem:[%s1 + $0x1a8] sm:$0xff]
  %v161 = vld [vmem:[%s1 + $0x1b0] sm:$0xff]
  %v162 = vld [vmem:[%s1 + $0x1b8] sm:$0xff]
  %v163 = vld [vmem:[%s1 + $0x1c0] sm:$0xff]
  %v164 = vld [vmem:[%s1 + $0x1c8] sm:$0xff]
  %v165 = vld [vmem:[%s1 + $0x1d0] sm:$0xff]
  %v166 = vld [vmem:[%s1 + $0x1d8] sm:$0xff]
  %v167 = vld [vmem:[%s1 + $0x1e0] sm:$0xff]
  %v168 = vld [vmem:[%s1 + $0x1e8] sm:$0xff]
  %v169 = vld [vmem:[%s1 + $0x1f0] sm:$0xff]
  %v170 = vld [vmem:[%s1 + $0x1f8] sm:$0xff]
  %v171 = vld [vmem:[%s1 + $0x200] sm:$0xff]
  %v172 = vld [vmem:[%s1 + $0x208] sm:$0xff]
  %v173 = vld [vmem:[%s1 + $0x210] sm:$0xff]
  %v174 = vld [vmem:[%s1 + $0x218] sm:$0xff]
  %v175 = vld [vmem:[%s1 + $0x220] sm:$0xff]
  %v176 = vld [vmem:[%s1 + $0x228] sm:$0xff]
  %v177 = vld [vmem:[%s1 + $0x230] sm:$0xff]
  %v178 = vld [vmem:[%s1 + $0x238] sm:$0xff]
  %v179 = vld [vmem:[%s1 + $0x240] sm:$0xff]
  %v180 = vld [vmem:[%s1 + $0x248] sm:$0xff]
  %v181 = vld [vmem:[%s1 + $0x250] sm:$0xff]
  %v182 = vld [vmem:[%s1 + $0x258] sm:$0xff]
  %v183 = vld [vmem:[%s1 + $0x260] sm:$0xff]
  %v184 = vld [vmem:[%s1 + $0x268] sm:$0xff]
  %v185 = vld [vmem:[%s1 + $0x270] sm:$0xff]
  %v186 = vld [vmem:[%s1 + $0x278] sm:$0xff]
  %v187 = vld [vmem:[%s1 + $0x280] sm:$0xff]
  %v188 = vld [vmem:[%s1 + $0x288] sm:$0xff]
  %v189 = vld [vmem:[%s1 + $0x290] sm:$0xff]
  %v190 = vld [vmem:[%s1 + $0x298] sm:$0xff]
  %v191 = vld [vmem:[%s1 + $0x2a0] sm:$0xff]
  %v192 = vld [vmem:[%s1 + $0x2a8] sm:$0xff]
  %v193 = vld [vmem:[%s1 + $0x2b0] sm:$0xff]
  %v194 = vld [vmem:[%s1 + $0x2b8] sm:$0xff]
  %v195 = vld [vmem:[%s1 + $0x2c0] sm:$0xff]
  %v196 = vld [vmem:[%s1 + $0x2c8] sm:$0xff]
  %v197 = vld [vmem:[%s1 + $0x2d0] sm:$0xff]
  %v198 = vld [vmem:[%s1 + $0x2d8] sm:$0xff]
  %v199 = vld [vmem:[%s1 + $0x2e0] sm:$0xff]
  %v200 = vld [vmem:[%s1 + $0x2e8] sm:$0xff]
  %v201 = vld [vmem:[%s1 + $0x2f0] sm:$0xff]
  %v202 = vld [vmem:[%s1 + $0x2f8] sm:$0xff]
  %v203 = vld [vmem:[%s1 + $0x300] sm:$0xff]
  %v204 = vld [vmem:[%s1 + $0x308] sm:$0xff]
  %v205 = vld [vmem:[%s1 + $0x310] sm:$0xff]
  %v206 = vld [vmem:[%s1 + $0x318] sm:$0xff]
  %v207 = vld [vmem:[%s1 + $0x320] sm:$0xff]
  %v208 = vld [vmem:[%s1 + $0x328] sm:$0xff]
  %v209 = vld [vmem:[%s1 + $0x330] sm:$0xff]
  %v210 = vld [vmem:[%s1 + $0x338] sm:$0xff]
  %v211 = vld [vmem:[%s1 + $0x340] sm:$0xff]
  %v212 = vld [vmem:[%s1 + $0x348] sm:$0xff]
  %v213 = vld [vmem:[%s1 + $0x350] sm:$0xff]
  %v214 = vld [vmem:[%s1 + $0x358] sm:$0xff]
  %v215 = vld [vmem:[%s1 + $0x360] sm:$0xff]
  %v216 = vld [vmem:[%s1 + $0x368] sm:$0xff]
  %v217 = vld [vmem:[%s1 + $0x370] sm:$0xff]
  %v218 = vld [vmem:[%s1 + $0x378] sm:$0xff]
  %v219 = vld [vmem:[%s1 + $0x380] sm:$0xff]
  %v220 = vld [vmem:[%s1 + $0x388] sm:$0xff]
  %v221 = vld [vmem:[%s1 + $0x390] sm:$0xff]
  %v222 = vld [vmem:[%s1 + $0x398] sm:$0xff]
  %v223 = vld [vmem:[%s1 + $0x3a0] sm:$0xff]
  %v224 = vld [vmem:[%s1 + $0x3a8] sm:$0xff]
  %v225 = vld [vmem:[%s1 + $0x3b0] sm:$0xff]
  %v226 = vld [vmem:[%s1 + $0x3b8] sm:$0xff]
  %v227 = vld [vmem:[%s1 + $0x3c0] sm:$0xff]
  %v228 = vld [vmem:[%s1 + $0x3c8] sm:$0xff]
  %v229 = vld [vmem:[%s1 + $0x3d0] sm:$0xff]
  %v230 = vld [vmem:[%s1 + $0x3d8] sm:$0xff]
  %v231 = vld [vmem:[%s1 + $0x3e0] sm:$0xff]
  %v232 = vld [vmem:[%s1 + $0x3e8] sm:$0xff]
  %v233 = vld [vmem:[%s1 + $0x3f0] sm:$0xff]
  %v234 = vld [vmem:[%s1 + $0x3f8] sm:$0xff]
  %v235 = vperm.slane %v91, 0
  %v236 = vperm.slane %v92, 0
  %v237 = vperm.slane %v93, 0
  %v238 = vperm.slane %v94, 0
  %v367 = vunpack.c.l.b16 %v107
  %v368 = vunpack.c.h.b16 %v107
  %v369 = vunpack.c.l.b16 %v108
  %v370 = vunpack.c.h.b16 %v108
  %v371 = vunpack.c.l.b16 %v109
  %v372 = vunpack.c.h.b16 %v109
  %v373 = vunpack.c.l.b16 %v110
  %v374 = vunpack.c.h.b16 %v110
  %v375 = vunpack.c.l.b16 %v111
  %v376 = vunpack.c.h.b16 %v111
  %v377 = vunpack.c.l.b16 %v112
  %v378 = vunpack.c.h.b16 %v112
  %v379 = vunpack.c.l.b16 %v113
  %v380 = vunpack.c.h.b16 %v113
  %v381 = vunpack.c.l.b16 %v114
  %v382 = vunpack.c.h.b16 %v114
  %v383 = vunpack.c.l.b16 %v115
  %v384 = vunpack.c.h.b16 %v115
  %v385 = vunpack.c.l.b16 %v116
  %v386 = vunpack.c.h.b16 %v116
  %v387 = vunpack.c.l.b16 %v117
  %v388 = vunpack.c.h.b16 %v117
  %v389 = vunpack.c.l.b16 %v118
  %v390 = vunpack.c.h.b16 %v118
  %v391 = vunpack.c.l.b16 %v119
  %v392 = vunpack.c.h.b16 %v119
  %v393 = vunpack.c.l.b16 %v120
  %v394 = vunpack.c.h.b16 %v120
  %v395 = vunpack.c.l.b16 %v121
  %v396 = vunpack.c.h.b16 %v121
  %v397 = vunpack.c.l.b16 %v122
  %v398 = vunpack.c.h.b16 %v122
  %v399 = vunpack.c.l.b16 %v123
  %v400 = vunpack.c.h.b16 %v123
  %v401 = vunpack.c.l.b16 %v124
  %v402 = vunpack.c.h.b16 %v124
  %v403 = vunpack.c.l.b16 %v125
  %v404 = vunpack.c.h.b16 %v125
  %v405 = vunpack.c.l.b16 %v126
  %v406 = vunpack.c.h.b16 %v126
  %v407 = vunpack.c.l.b16 %v127
  %v408 = vunpack.c.h.b16 %v127
  %v409 = vunpack.c.l.b16 %v128
  %v410 = vunpack.c.h.b16 %v128
  %v411 = vunpack.c.l.b16 %v129
  %v412 = vunpack.c.h.b16 %v129
  %v413 = vunpack.c.l.b16 %v130
  %v414 = vunpack.c.h.b16 %v130
  %v415 = vunpack.c.l.b16 %v131
  %v416 = vunpack.c.h.b16 %v131
  %v417 = vunpack.c.l.b16 %v132
  %v418 = vunpack.c.h.b16 %v132
  %v419 = vunpack.c.l.b16 %v133
  %v420 = vunpack.c.h.b16 %v133
  %v421 = vunpack.c.l.b16 %v134
  %v422 = vunpack.c.h.b16 %v134
  %v423 = vunpack.c.l.b16 %v135
  %v424 = vunpack.c.h.b16 %v135
  %v425 = vunpack.c.l.b16 %v136
  %v426 = vunpack.c.h.b16 %v136
  %v427 = vunpack.c.l.b16 %v137
  %v428 = vunpack.c.h.b16 %v137
  %v429 = vunpack.c.l.b16 %v138
  %v430 = vunpack.c.h.b16 %v138
  %v431 = vunpack.c.l.b16 %v139
  %v432 = vunpack.c.h.b16 %v139
  %v433 = vunpack.c.l.b16 %v140
  %v434 = vunpack.c.h.b16 %v140
  %v435 = vunpack.c.l.b16 %v141
  %v436 = vunpack.c.h.b16 %v141
  %v437 = vunpack.c.l.b16 %v142
  %v438 = vunpack.c.h.b16 %v142
  %v439 = vunpack.c.l.b16 %v143
  %v440 = vunpack.c.h.b16 %v143
  %v441 = vunpack.c.l.b16 %v144
  %v442 = vunpack.c.h.b16 %v144
  %v443 = vunpack.c.l.b16 %v145
  %v444 = vunpack.c.h.b16 %v145
  %v445 = vunpack.c.l.b16 %v146
  %v446 = vunpack.c.h.b16 %v146
  %v447 = vunpack.c.l.b16 %v147
  %v448 = vunpack.c.h.b16 %v147
  %v449 = vunpack.c.l.b16 %v148
  %v450 = vunpack.c.h.b16 %v148
  %v451 = vunpack.c.l.b16 %v149
  %v452 = vunpack.c.h.b16 %v149
  %v453 = vunpack.c.l.b16 %v150
  %v454 = vunpack.c.h.b16 %v150
  %v455 = vunpack.c.l.b16 %v151
  %v456 = vunpack.c.h.b16 %v151
  %v457 = vunpack.c.l.b16 %v152
  %v458 = vunpack.c.h.b16 %v152
  %v459 = vunpack.c.l.b16 %v153
  %v460 = vunpack.c.h.b16 %v153
  %v461 = vunpack.c.l.b16 %v154
  %v462 = vunpack.c.h.b16 %v154
  %v463 = vunpack.c.l.b16 %v155
  %v464 = vunpack.c.h.b16 %v155
  %v465 = vunpack.c.l.b16 %v156
  %v466 = vunpack.c.h.b16 %v156
  %v467 = vunpack.c.l.b16 %v157
  %v468 = vunpack.c.h.b16 %v157
  %v469 = vunpack.c.l.b16 %v158
  %v470 = vunpack.c.h.b16 %v158
  %v471 = vunpack.c.l.b16 %v159
  %v472 = vunpack.c.h.b16 %v159
  %v473 = vunpack.c.l.b16 %v160
  %v474 = vunpack.c.h.b16 %v160
  %v475 = vunpack.c.l.b16 %v161
  %v476 = vunpack.c.h.b16 %v161
  %v477 = vunpack.c.l.b16 %v162
  %v478 = vunpack.c.h.b16 %v162
  %v479 = vunpack.c.l.b16 %v163
  %v480 = vunpack.c.h.b16 %v163
  %v481 = vunpack.c.l.b16 %v164
  %v482 = vunpack.c.h.b16 %v164
  %v483 = vunpack.c.l.b16 %v165
  %v484 = vunpack.c.h.b16 %v165
  %v485 = vunpack.c.l.b16 %v166
  %v486 = vunpack.c.h.b16 %v166
  %v487 = vunpack.c.l.b16 %v167
  %v488 = vunpack.c.h.b16 %v167
  %v489 = vunpack.c.l.b16 %v168
  %v490 = vunpack.c.h.b16 %v168
  %v491 = vunpack.c.l.b16 %v169
  %v492 = vunpack.c.h.b16 %v169
  %v493 = vunpack.c.l.b16 %v170
  %v494 = vunpack.c.h.b16 %v170
  %v495 = vunpack.c.l.b16 %v171
  %v496 = vunpack.c.h.b16 %v171
  %v497 = vunpack.c.l.b16 %v172
  %v498 = vunpack.c.h.b16 %v172
  %v499 = vunpack.c.l.b16 %v173
  %v500 = vunpack.c.h.b16 %v173
  %v501 = vunpack.c.l.b16 %v174
  %v502 = vunpack.c.h.b16 %v174
  %v503 = vunpack.c.l.b16 %v175
  %v504 = vunpack.c.h.b16 %v175
  %v505 = vunpack.c.l.b16 %v176
  %v506 = vunpack.c.h.b16 %v176
  %v507 = vunpack.c.l.b16 %v177
  %v508 = vunpack.c.h.b16 %v177
  %v509 = vunpack.c.l.b16 %v178
  %v510 = vunpack.c.h.b16 %v178
  %v511 = vunpack.c.l.b16 %v179
  %v512 = vunpack.c.h.b16 %v179
  %v513 = vunpack.c.l.b16 %v180
  %v514 = vunpack.c.h.b16 %v180
  %v515 = vunpack.c.l.b16 %v181
  %v516 = vunpack.c.h.b16 %v181
  %v517 = vunpack.c.l.b16 %v182
  %v518 = vunpack.c.h.b16 %v182
  %v519 = vunpack.c.l.b16 %v183
  %v520 = vunpack.c.h.b16 %v183
  %v521 = vunpack.c.l.b16 %v184
  %v522 = vunpack.c.h.b16 %v184
  %v523 = vunpack.c.l.b16 %v185
  %v524 = vunpack.c.h.b16 %v185
  %v525 = vunpack.c.l.b16 %v186
  %v526 = vunpack.c.h.b16 %v186
  %v527 = vunpack.c.l.b16 %v187
  %v528 = vunpack.c.h.b16 %v187
  %v529 = vunpack.c.l.b16 %v188
  %v530 = vunpack.c.h.b16 %v188
  %v531 = vunpack.c.l.b16 %v189
  %v532 = vunpack.c.h.b16 %v189
  %v533 = vunpack.c.l.b16 %v190
  %v534 = vunpack.c.h.b16 %v190
  %v535 = vunpack.c.l.b16 %v191
  %v536 = vunpack.c.h.b16 %v191
  %v537 = vunpack.c.l.b16 %v192
  %v538 = vunpack.c.h.b16 %v192
  %v539 = vunpack.c.l.b16 %v193
  %v540 = vunpack.c.h.b16 %v193
  %v541 = vunpack.c.l.b16 %v194
  %v542 = vunpack.c.h.b16 %v194
  %v543 = vunpack.c.l.b16 %v195
  %v544 = vunpack.c.h.b16 %v195
  %v545 = vunpack.c.l.b16 %v196
  %v546 = vunpack.c.h.b16 %v196
  %v547 = vunpack.c.l.b16 %v197
  %v548 = vunpack.c.h.b16 %v197
  %v549 = vunpack.c.l.b16 %v198
  %v550 = vunpack.c.h.b16 %v198
  %v551 = vunpack.c.l.b16 %v199
  %v552 = vunpack.c.h.b16 %v199
  %v553 = vunpack.c.l.b16 %v200
  %v554 = vunpack.c.h.b16 %v200
  %v555 = vunpack.c.l.b16 %v201
  %v556 = vunpack.c.h.b16 %v201
  %v557 = vunpack.c.l.b16 %v202
  %v558 = vunpack.c.h.b16 %v202
  %v559 = vunpack.c.l.b16 %v203
  %v560 = vunpack.c.h.b16 %v203
  %v561 = vunpack.c.l.b16 %v204
  %v562 = vunpack.c.h.b16 %v204
  %v563 = vunpack.c.l.b16 %v205
  %v564 = vunpack.c.h.b16 %v205
  %v565 = vunpack.c.l.b16 %v206
  %v566 = vunpack.c.h.b16 %v206
  %v567 = vunpack.c.l.b16 %v207
  %v568 = vunpack.c.h.b16 %v207
  %v569 = vunpack.c.l.b16 %v208
  %v570 = vunpack.c.h.b16 %v208
  %v571 = vunpack.c.l.b16 %v209
  %v572 = vunpack.c.h.b16 %v209
  %v573 = vunpack.c.l.b16 %v210
  %v574 = vunpack.c.h.b16 %v210
  %v575 = vunpack.c.l.b16 %v211
  %v576 = vunpack.c.h.b16 %v211
  %v577 = vunpack.c.l.b16 %v212
  %v578 = vunpack.c.h.b16 %v212
  %v579 = vunpack.c.l.b16 %v213
  %v580 = vunpack.c.h.b16 %v213
  %v581 = vunpack.c.l.b16 %v214
  %v582 = vunpack.c.h.b16 %v214
  %v583 = vunpack.c.l.b16 %v215
  %v584 = vunpack.c.h.b16 %v215
  %v585 = vunpack.c.l.b16 %v216
  %v586 = vunpack.c.h.b16 %v216
  %v587 = vunpack.c.l.b16 %v217
  %v588 = vunpack.c.h.b16 %v217
  %v589 = vunpack.c.l.b16 %v218
  %v590 = vunpack.c.h.b16 %v218
  %v591 = vunpack.c.l.b16 %v219
  %v592 = vunpack.c.h.b16 %v219
  %v593 = vunpack.c.l.b16 %v220
  %v594 = vunpack.c.h.b16 %v220
  %v595 = vunpack.c.l.b16 %v221
  %v596 = vunpack.c.h.b16 %v221
  %v597 = vunpack.c.l.b16 %v222
  %v598 = vunpack.c.h.b16 %v222
  %v599 = vunpack.c.l.b16 %v223
  %v600 = vunpack.c.h.b16 %v223
  %v601 = vunpack.c.l.b16 %v224
  %v602 = vunpack.c.h.b16 %v224
  %v603 = vunpack.c.l.b16 %v225
  %v604 = vunpack.c.h.b16 %v225
  %v605 = vunpack.c.l.b16 %v226
  %v606 = vunpack.c.h.b16 %v226
  %v607 = vunpack.c.l.b16 %v227
  %v608 = vunpack.c.h.b16 %v227
  %v609 = vunpack.c.l.b16 %v228
  %v610 = vunpack.c.h.b16 %v228
  %v611 = vunpack.c.l.b16 %v229
  %v612 = vunpack.c.h.b16 %v229
  %v613 = vunpack.c.l.b16 %v230
  %v614 = vunpack.c.h.b16 %v230
  %v615 = vunpack.c.l.b16 %v231
  %v616 = vunpack.c.h.b16 %v231
  %v617 = vunpack.c.l.b16 %v232
  %v618 = vunpack.c.h.b16 %v232
  %v619 = vunpack.c.l.b16 %v233
  %v620 = vunpack.c.h.b16 %v233
  %v621 = vunpack.c.l.b16 %v234
  %v622 = vunpack.c.h.b16 %v234
  %v623 = vpack.c.b16 %v371, %v367
  %v624 = vpack.c.b16 %v372, %v368
  %v625 = vpack.c.b16 %v373, %v369
  %v626 = vpack.c.b16 %v374, %v370
  %v627 = vpack.c.b16 %v379, %v375
  %v628 = vpack.c.b16 %v380, %v376
  %v629 = vpack.c.b16 %v381, %v377
  %v630 = vpack.c.b16 %v382, %v378
  %v631 = vpack.c.b16 %v387, %v383
  %v632 = vpack.c.b16 %v388, %v384
  %v633 = vpack.c.b16 %v389, %v385
  %v634 = vpack.c.b16 %v390, %v386
  %v635 = vpack.c.b16 %v395, %v391
  %v636 = vpack.c.b16 %v396, %v392
  %v637 = vpack.c.b16 %v397, %v393
  %v638 = vpack.c.b16 %v398, %v394
  %v639 = vpack.c.b16 %v403, %v399
  %v640 = vpack.c.b16 %v404, %v400
  %v641 = vpack.c.b16 %v405, %v401
  %v642 = vpack.c.b16 %v406, %v402
  %v643 = vpack.c.b16 %v411, %v407
  %v644 = vpack.c.b16 %v412, %v408
  %v645 = vpack.c.b16 %v413, %v409
  %v646 = vpack.c.b16 %v414, %v410
  %v647 = vpack.c.b16 %v419, %v415
  %v648 = vpack.c.b16 %v420, %v416
  %v649 = vpack.c.b16 %v421, %v417
  %v650 = vpack.c.b16 %v422, %v418
  %v651 = vpack.c.b16 %v427, %v423
  %v652 = vpack.c.b16 %v428, %v424
  %v653 = vpack.c.b16 %v429, %v425
  %v654 = vpack.c.b16 %v430, %v426
  %v655 = vpack.c.b16 %v435, %v431
  %v656 = vpack.c.b16 %v436, %v432
  %v657 = vpack.c.b16 %v437, %v433
  %v658 = vpack.c.b16 %v438, %v434
  %v659 = vpack.c.b16 %v443, %v439
  %v660 = vpack.c.b16 %v444, %v440
  %v661 = vpack.c.b16 %v445, %v441
  %v662 = vpack.c.b16 %v446, %v442
  %v663 = vpack.c.b16 %v451, %v447
  %v664 = vpack.c.b16 %v452, %v448
  %v665 = vpack.c.b16 %v453, %v449
  %v666 = vpack.c.b16 %v454, %v450
  %v667 = vpack.c.b16 %v459, %v455
  %v668 = vpack.c.b16 %v460, %v456
  %v669 = vpack.c.b16 %v461, %v457
  %v670 = vpack.c.b16 %v462, %v458
  %v671 = vpack.c.b16 %v467, %v463
  %v672 = vpack.c.b16 %v468, %v464
  %v673 = vpack.c.b16 %v469, %v465
  %v674 = vpack.c.b16 %v470, %v466
  %v675 = vpack.c.b16 %v475, %v471
  %v676 = vpack.c.b16 %v476, %v472
  %v677 = vpack.c.b16 %v477, %v473
  %v678 = vpack.c.b16 %v478, %v474
  %v679 = vpack.c.b16 %v483, %v479
  %v680 = vpack.c.b16 %v484, %v480
  %v681 = vpack.c.b16 %v485, %v481
  %v682 = vpack.c.b16 %v486, %v482
  %v683 = vpack.c.b16 %v491, %v487
  %v684 = vpack.c.b16 %v492, %v488
  %v685 = vpack.c.b16 %v493, %v489
  %v686 = vpack.c.b16 %v494, %v490
  %v687 = vpack.c.b16 %v499, %v495
  %v688 = vpack.c.b16 %v500, %v496
  %v689 = vpack.c.b16 %v501, %v497
  %v690 = vpack.c.b16 %v502, %v498
  %v691 = vpack.c.b16 %v507, %v503
  %v692 = vpack.c.b16 %v508, %v504
  %v693 = vpack.c.b16 %v509, %v505
  %v694 = vpack.c.b16 %v510, %v506
  %v695 = vpack.c.b16 %v515, %v511
  %v696 = vpack.c.b16 %v516, %v512
  %v697 = vpack.c.b16 %v517, %v513
  %v698 = vpack.c.b16 %v518, %v514
  %v699 = vpack.c.b16 %v523, %v519
  %v700 = vpack.c.b16 %v524, %v520
  %v701 = vpack.c.b16 %v525, %v521
  %v702 = vpack.c.b16 %v526, %v522
  %v703 = vpack.c.b16 %v531, %v527
  %v704 = vpack.c.b16 %v532, %v528
  %v705 = vpack.c.b16 %v533, %v529
  %v706 = vpack.c.b16 %v534, %v530
  %v707 = vpack.c.b16 %v539, %v535
  %v708 = vpack.c.b16 %v540, %v536
  %v709 = vpack.c.b16 %v541, %v537
  %v710 = vpack.c.b16 %v542, %v538
  %v711 = vpack.c.b16 %v547, %v543
  %v712 = vpack.c.b16 %v548, %v544
  %v713 = vpack.c.b16 %v549, %v545
  %v714 = vpack.c.b16 %v550, %v546
  %v715 = vpack.c.b16 %v555, %v551
  %v716 = vpack.c.b16 %v556, %v552
  %v717 = vpack.c.b16 %v557, %v553
  %v718 = vpack.c.b16 %v558, %v554
  %v719 = vpack.c.b16 %v563, %v559
  %v720 = vpack.c.b16 %v564, %v560
  %v721 = vpack.c.b16 %v565, %v561
  %v722 = vpack.c.b16 %v566, %v562
  %v723 = vpack.c.b16 %v571, %v567
  %v724 = vpack.c.b16 %v572, %v568
  %v725 = vpack.c.b16 %v573, %v569
  %v726 = vpack.c.b16 %v574, %v570
  %v727 = vpack.c.b16 %v579, %v575
  %v728 = vpack.c.b16 %v580, %v576
  %v729 = vpack.c.b16 %v581, %v577
  %v730 = vpack.c.b16 %v582, %v578
  %v731 = vpack.c.b16 %v587, %v583
  %v732 = vpack.c.b16 %v588, %v584
  %v733 = vpack.c.b16 %v589, %v585
  %v734 = vpack.c.b16 %v590, %v586
  %v735 = vpack.c.b16 %v595, %v591
  %v736 = vpack.c.b16 %v596, %v592
  %v737 = vpack.c.b16 %v597, %v593
  %v738 = vpack.c.b16 %v598, %v594
  %v739 = vpack.c.b16 %v603, %v599
  %v740 = vpack.c.b16 %v604, %v600
  %v741 = vpack.c.b16 %v605, %v601
  %v742 = vpack.c.b16 %v606, %v602
  %v743 = vpack.c.b16 %v611, %v607
  %v744 = vpack.c.b16 %v612, %v608
  %v745 = vpack.c.b16 %v613, %v609
  %v746 = vpack.c.b16 %v614, %v610
  %v747 = vpack.c.b16 %v619, %v615
  %v748 = vpack.c.b16 %v620, %v616
  %v749 = vpack.c.b16 %v621, %v617
  %v750 = vpack.c.b16 %v622, %v618
  %879 = vmatpush.bf16.msra.mxu0 %v651
  %880 = vmatpush.bf16.msra.mxu0 %v647
  %881 = vmatpush.bf16.msra.mxu0 %v643
  %882 = vmatpush.bf16.msra.mxu0 %v639
  %883 = vmatpush.bf16.msra.mxu0 %v635
  %884 = vmatpush.bf16.msra.mxu0 %v631
  %885 = vmatpush.bf16.msra.mxu0 %v627
  %886 = vmatpush.bf16.msra.mxu0 %v623
  %887 = vmatmul.bf16.gmra.mxu0 %v103
  %v888 = vpop.f32.mrf.mxu0
  %v889 = vadd.f32 %v235, %v888
  %v890 = vpop.f32.mrf.mxu0
  %v891 = vadd.f32 %v235, %v890
  %892 = vdwg.mxu0
  %893 = vmatpush.bf16.msra.mxu0 %v683
  %894 = vmatpush.bf16.msra.mxu0 %v679
  %895 = vmatpush.bf16.msra.mxu0 %v675
  %896 = vmatpush.bf16.msra.mxu0 %v671
  %897 = vmatpush.bf16.msra.mxu0 %v667
  %898 = vmatpush.bf16.msra.mxu0 %v663
  %899 = vmatpush.bf16.msra.mxu0 %v659
  %900 = vmatpush.bf16.msra.mxu0 %v655
  %901 = vmatmul.bf16.gmra.mxu0 %v104
  %v902 = vpop.f32.mrf.mxu0
  %v903 = vadd.f32 %v889, %v902
  %v904 = vpop.f32.mrf.mxu0
  %v905 = vadd.f32 %v891, %v904
  %906 = vdwg.mxu0
  %907 = vmatpush.bf16.msra.mxu0 %v715
  %908 = vmatpush.bf16.msra.mxu0 %v711
  %909 = vmatpush.bf16.msra.mxu0 %v707
  %910 = vmatpush.bf16.msra.mxu0 %v703
  %911 = vmatpush.bf16.msra.mxu0 %v699
  %912 = vmatpush.bf16.msra.mxu0 %v695
  %913 = vmatpush.bf16.msra.mxu0 %v691
  %914 = vmatpush.bf16.msra.mxu0 %v687
  %915 = vmatmul.bf16.gmra.mxu0 %v105
  %v916 = vpop.f32.mrf.mxu0
  %v917 = vadd.f32 %v903, %v916
  %v918 = vpop.f32.mrf.mxu0
  %v919 = vadd.f32 %v905, %v918
  %920 = vdwg.mxu0
  %921 = vmatpush.bf16.msra.mxu0 %v747
  %922 = vmatpush.bf16.msra.mxu0 %v743
  %923 = vmatpush.bf16.msra.mxu0 %v739
  %924 = vmatpush.bf16.msra.mxu0 %v735
  %925 = vmatpush.bf16.msra.mxu0 %v731
  %926 = vmatpush.bf16.msra.mxu0 %v727
  %927 = vmatpush.bf16.msra.mxu0 %v723
  %928 = vmatpush.bf16.msra.mxu0 %v719
  %929 = vmatmul.bf16.gmra.mxu0 %v106
  %v930 = vpop.f32.mrf.mxu0
  %v931 = vadd.f32 %v917, %v930
  %v932 = vpop.f32.mrf.mxu0
  %v933 = vadd.f32 %v919, %v932
  %934 = vdwg.mxu0
  %935 = vmatpush.bf16.msra.mxu0 %v652
  %936 = vmatpush.bf16.msra.mxu0 %v648
  %937 = vmatpush.bf16.msra.mxu0 %v644
  %938 = vmatpush.bf16.msra.mxu0 %v640
  %939 = vmatpush.bf16.msra.mxu0 %v636
  %940 = vmatpush.bf16.msra.mxu0 %v632
  %941 = vmatpush.bf16.msra.mxu0 %v628
  %942 = vmatpush.bf16.msra.mxu0 %v624
  %943 = vmatmul.bf16.gmra.mxu0 %v103
  %v944 = vpop.f32.mrf.mxu0
  %v945 = vadd.f32 %v236, %v944
  %v946 = vpop.f32.mrf.mxu0
  %v947 = vadd.f32 %v236, %v946
  %948 = vdwg.mxu0
  %949 = vmatpush.bf16.msra.mxu0 %v684
  %950 = vmatpush.bf16.msra.mxu0 %v680
  %951 = vmatpush.bf16.msra.mxu0 %v676
  %952 = vmatpush.bf16.msra.mxu0 %v672
  %953 = vmatpush.bf16.msra.mxu0 %v668
  %954 = vmatpush.bf16.msra.mxu0 %v664
  %955 = vmatpush.bf16.msra.mxu0 %v660
  %956 = vmatpush.bf16.msra.mxu0 %v656
  %957 = vmatmul.bf16.gmra.mxu0 %v104
  %v958 = vpop.f32.mrf.mxu0
  %v959 = vadd.f32 %v945, %v958
  %v960 = vpop.f32.mrf.mxu0
  %v961 = vadd.f32 %v947, %v960
  %962 = vdwg.mxu0
  %963 = vmatpush.bf16.msra.mxu0 %v716
  %964 = vmatpush.bf16.msra.mxu0 %v712
  %965 = vmatpush.bf16.msra.mxu0 %v708
  %966 = vmatpush.bf16.msra.mxu0 %v704
  %967 = vmatpush.bf16.msra.mxu0 %v700
  %968 = vmatpush.bf16.msra.mxu0 %v696
  %969 = vmatpush.bf16.msra.mxu0 %v692
  %970 = vmatpush.bf16.msra.mxu0 %v688
  %971 = vmatmul.bf16.gmra.mxu0 %v105
  %v972 = vpop.f32.mrf.mxu0
  %v973 = vadd.f32 %v959, %v972
  %v974 = vpop.f32.mrf.mxu0
  %v975 = vadd.f32 %v961, %v974
  %976 = vdwg.mxu0
  %977 = vmatpush.bf16.msra.mxu0 %v748
  %978 = vmatpush.bf16.msra.mxu0 %v744
  %979 = vmatpush.bf16.msra.mxu0 %v740
  %980 = vmatpush.bf16.msra.mxu0 %v736
  %981 = vmatpush.bf16.msra.mxu0 %v732
  %982 = vmatpush.bf16.msra.mxu0 %v728
  %983 = vmatpush.bf16.msra.mxu0 %v724
  %984 = vmatpush.bf16.msra.mxu0 %v720
  %985 = vmatmul.bf16.gmra.mxu0 %v106
  %v986 = vpop.f32.mrf.mxu0
  %v987 = vadd.f32 %v973, %v986
  %v988 = vpop.f32.mrf.mxu0
  %v989 = vadd.f32 %v975, %v988
  %990 = vdwg.mxu0
  %991 = vmatpush.bf16.msra.mxu0 %v653
  %992 = vmatpush.bf16.msra.mxu0 %v649
  %993 = vmatpush.bf16.msra.mxu0 %v645
  %994 = vmatpush.bf16.msra.mxu0 %v641
  %995 = vmatpush.bf16.msra.mxu0 %v637
  %996 = vmatpush.bf16.msra.mxu0 %v633
  %997 = vmatpush.bf16.msra.mxu0 %v629
  %998 = vmatpush.bf16.msra.mxu0 %v625
  %999 = vmatmul.bf16.gmra.mxu0 %v103
  %v1000 = vpop.f32.mrf.mxu0
  %v1001 = vadd.f32 %v237, %v1000
  %v1002 = vpop.f32.mrf.mxu0
  %v1003 = vadd.f32 %v237, %v1002
  %1004 = vdwg.mxu0
  %1005 = vmatpush.bf16.msra.mxu0 %v685
  %1006 = vmatpush.bf16.msra.mxu0 %v681
  %1007 = vmatpush.bf16.msra.mxu0 %v677
  %1008 = vmatpush.bf16.msra.mxu0 %v673
  %1009 = vmatpush.bf16.msra.mxu0 %v669
  %1010 = vmatpush.bf16.msra.mxu0 %v665
  %1011 = vmatpush.bf16.msra.mxu0 %v661
  %1012 = vmatpush.bf16.msra.mxu0 %v657
  %1013 = vmatmul.bf16.gmra.mxu0 %v104
  %v1014 = vpop.f32.mrf.mxu0
  %v1015 = vadd.f32 %v1001, %v1014
  %v1016 = vpop.f32.mrf.mxu0
  %v1017 = vadd.f32 %v1003, %v1016
  %1018 = vdwg.mxu0
  %1019 = vmatpush.bf16.msra.mxu0 %v717
  %1020 = vmatpush.bf16.msra.mxu0 %v713
  %1021 = vmatpush.bf16.msra.mxu0 %v709
  %1022 = vmatpush.bf16.msra.mxu0 %v705
  %1023 = vmatpush.bf16.msra.mxu0 %v701
  %1024 = vmatpush.bf16.msra.mxu0 %v697
  %1025 = vmatpush.bf16.msra.mxu0 %v693
  %1026 = vmatpush.bf16.msra.mxu0 %v689
  %1027 = vmatmul.bf16.gmra.mxu0 %v105
  %v1028 = vpop.f32.mrf.mxu0
  %v1029 = vadd.f32 %v1015, %v1028
  %v1030 = vpop.f32.mrf.mxu0
  %v1031 = vadd.f32 %v1017, %v1030
  %1032 = vdwg.mxu0
  %1033 = vmatpush.bf16.msra.mxu0 %v749
  %1034 = vmatpush.bf16.msra.mxu0 %v745
  %1035 = vmatpush.bf16.msra.mxu0 %v741
  %1036 = vmatpush.bf16.msra.mxu0 %v737
  %1037 = vmatpush.bf16.msra.mxu0 %v733
  %1038 = vmatpush.bf16.msra.mxu0 %v729
  %1039 = vmatpush.bf16.msra.mxu0 %v725
  %1040 = vmatpush.bf16.msra.mxu0 %v721
  %1041 = vmatmul.bf16.gmra.mxu0 %v106
  %v1042 = vpop.f32.mrf.mxu0
  %v1043 = vadd.f32 %v1029, %v1042
  %v1044 = vpop.f32.mrf.mxu0
  %v1045 = vadd.f32 %v1031, %v1044
  %1046 = vdwg.mxu0
  %1047 = vmatpush.bf16.msra.mxu0 %v654
  %1048 = vmatpush.bf16.msra.mxu0 %v650
  %1049 = vmatpush.bf16.msra.mxu0 %v646
  %1050 = vmatpush.bf16.msra.mxu0 %v642
  %1051 = vmatpush.bf16.msra.mxu0 %v638
  %1052 = vmatpush.bf16.msra.mxu0 %v634
  %1053 = vmatpush.bf16.msra.mxu0 %v630
  %1054 = vmatpush.bf16.msra.mxu0 %v626
  %1055 = vmatmul.bf16.gmra.mxu0 %v103
  %v1056 = vpop.f32.mrf.mxu0
  %v1057 = vadd.f32 %v238, %v1056
  %v1058 = vpop.f32.mrf.mxu0
  %v1059 = vadd.f32 %v238, %v1058
  %1060 = vdwg.mxu0
  %1061 = vmatpush.bf16.msra.mxu0 %v686
  %1062 = vmatpush.bf16.msra.mxu0 %v682
  %1063 = vmatpush.bf16.msra.mxu0 %v678
  %1064 = vmatpush.bf16.msra.mxu0 %v674
  %1065 = vmatpush.bf16.msra.mxu0 %v670
  %1066 = vmatpush.bf16.msra.mxu0 %v666
  %1067 = vmatpush.bf16.msra.mxu0 %v662
  %1068 = vmatpush.bf16.msra.mxu0 %v658
  %1069 = vmatmul.bf16.gmra.mxu0 %v104
  %v1070 = vpop.f32.mrf.mxu0
  %v1071 = vadd.f32 %v1057, %v1070
  %v1072 = vpop.f32.mrf.mxu0
  %v1073 = vadd.f32 %v1059, %v1072
  %1074 = vdwg.mxu0
  %1075 = vmatpush.bf16.msra.mxu0 %v718
  %1076 = vmatpush.bf16.msra.mxu0 %v714
  %1077 = vmatpush.bf16.msra.mxu0 %v710
  %1078 = vmatpush.bf16.msra.mxu0 %v706
  %1079 = vmatpush.bf16.msra.mxu0 %v702
  %1080 = vmatpush.bf16.msra.mxu0 %v698
  %1081 = vmatpush.bf16.msra.mxu0 %v694
  %1082 = vmatpush.bf16.msra.mxu0 %v690
  %1083 = vmatmul.bf16.gmra.mxu0 %v105
  %v1084 = vpop.f32.mrf.mxu0
  %v1085 = vadd.f32 %v1071, %v1084
  %v1086 = vpop.f32.mrf.mxu0
  %v1087 = vadd.f32 %v1073, %v1086
  %1088 = vdwg.mxu0
  %1089 = vmatpush.bf16.msra.mxu0 %v750
  %1090 = vmatpush.bf16.msra.mxu0 %v746
  %1091 = vmatpush.bf16.msra.mxu0 %v742
  %1092 = vmatpush.bf16.msra.mxu0 %v738
  %1093 = vmatpush.bf16.msra.mxu0 %v734
  %1094 = vmatpush.bf16.msra.mxu0 %v730
  %1095 = vmatpush.bf16.msra.mxu0 %v726
  %1096 = vmatpush.bf16.msra.mxu0 %v722
  %1097 = vmatmul.bf16.gmra.mxu0 %v106
  %v1098 = vpop.f32.mrf.mxu0
  %v1099 = vadd.f32 %v1085, %v1098
  %v1100 = vpop.f32.mrf.mxu0
  %v1101 = vadd.f32 %v1087, %v1100
  %1102 = vdwg.mxu0
  %1103 = vmatpush.msra.mxu0 %v38
  %1104 = vmatpush.msra.mxu0 %v37
  %1105 = vmatpush.msra.mxu0 %v36
  %1106 = vmatpush.msra.mxu0 %v35
  %1107 = vmatpush.msra.mxu0 %v34
  %1108 = vmatpush.msra.mxu0 %v33
  %1109 = vmatpush.msra.mxu0 %v32
  %1110 = vmatpush.msra.mxu0 %v31
  %1111 = vmatpush.msra.mxu0 %v30
  %1112 = vmatpush.msra.mxu0 %v29
  %1113 = vmatpush.msra.mxu0 %v28
  %1114 = vmatpush.msra.mxu0 %v27
  %1115 = vmatpush.msra.mxu0 %v26
  %1116 = vmatpush.msra.mxu0 %v25
  %1117 = vmatpush.msra.mxu0 %v24
  %1118 = vmatpush.msra.mxu0 %v23
  %1119 = vmatmul.f32.gmra.mxu0 %v931
  %v1120 = vpop.f32.mrf.mxu0
  %v1121 = vadd.f32 0.0, %v1120
  %1122 = vmatmul.f32.gmra.mxu0 %v933
  %v1123 = vpop.f32.mrf.mxu0
  %v1124 = vadd.f32 0.0, %v1123
  %1125 = vdwg.mxu0
  %1126 = vmatpush.msra.mxu0 %v54
  %1127 = vmatpush.msra.mxu0 %v53
  %1128 = vmatpush.msra.mxu0 %v52
  %1129 = vmatpush.msra.mxu0 %v51
  %1130 = vmatpush.msra.mxu0 %v50
  %1131 = vmatpush.msra.mxu0 %v49
  %1132 = vmatpush.msra.mxu0 %v48
  %1133 = vmatpush.msra.mxu0 %v47
  %1134 = vmatpush.msra.mxu0 %v46
  %1135 = vmatpush.msra.mxu0 %v45
  %1136 = vmatpush.msra.mxu0 %v44
  %1137 = vmatpush.msra.mxu0 %v43
  %1138 = vmatpush.msra.mxu0 %v42
  %1139 = vmatpush.msra.mxu0 %v41
  %1140 = vmatpush.msra.mxu0 %v40
  %1141 = vmatpush.msra.mxu0 %v39
  %1142 = vmatmul.f32.gmra.mxu0 %v987
  %v1143 = vpop.f32.mrf.mxu0
  %v1144 = vadd.f32 %v1121, %v1143
  %1145 = vmatmul.f32.gmra.mxu0 %v989
  %v1146 = vpop.f32.mrf.mxu0
  %v1147 = vadd.f32 %v1124, %v1146
  %1148 = vdwg.mxu0
  %1149 = vmatpush.msra.mxu0 %v70
  %1150 = vmatpush.msra.mxu0 %v69
  %1151 = vmatpush.msra.mxu0 %v68
  %1152 = vmatpush.msra.mxu0 %v67
  %1153 = vmatpush.msra.mxu0 %v66
  %1154 = vmatpush.msra.mxu0 %v65
  %1155 = vmatpush.msra.mxu0 %v64
  %1156 = vmatpush.msra.mxu0 %v63
  %1157 = vmatpush.msra.mxu0 %v62
  %1158 = vmatpush.msra.mxu0 %v61
  %1159 = vmatpush.msra.mxu0 %v60
  %1160 = vmatpush.msra.mxu0 %v59
  %1161 = vmatpush.msra.mxu0 %v58
  %1162 = vmatpush.msra.mxu0 %v57
  %1163 = vmatpush.msra.mxu0 %v56
  %1164 = vmatpush.msra.mxu0 %v55
  %1165 = vmatmul.f32.gmra.mxu0 %v1043
  %v1166 = vpop.f32.mrf.mxu0
  %v1167 = vadd.f32 %v1144, %v1166
  %1168 = vmatmul.f32.gmra.mxu0 %v1045
  %v1169 = vpop.f32.mrf.mxu0
  %v1170 = vadd.f32 %v1147, %v1169
  %1171 = vdwg.mxu0
  %1172 = vmatpush.msra.mxu0 %v86
  %1173 = vmatpush.msra.mxu0 %v85
  %1174 = vmatpush.msra.mxu0 %v84
  %1175 = vmatpush.msra.mxu0 %v83
  %1176 = vmatpush.msra.mxu0 %v82
  %1177 = vmatpush.msra.mxu0 %v81
  %1178 = vmatpush.msra.mxu0 %v80
  %1179 = vmatpush.msra.mxu0 %v79
  %1180 = vmatpush.msra.mxu0 %v78
  %1181 = vmatpush.msra.mxu0 %v77
  %1182 = vmatpush.msra.mxu0 %v76
  %1183 = vmatpush.msra.mxu0 %v75
  %1184 = vmatpush.msra.mxu0 %v74
  %1185 = vmatpush.msra.mxu0 %v73
  %1186 = vmatpush.msra.mxu0 %v72
  %1187 = vmatpush.msra.mxu0 %v71
  %1188 = vmatmul.f32.gmra.mxu0 %v1099
  %v1189 = vpop.f32.mrf.mxu0
  %v1190 = vadd.f32 %v1167, %v1189
  %1191 = vmatmul.f32.gmra.mxu0 %v1101
  %v1192 = vpop.f32.mrf.mxu0
  %v1193 = vadd.f32 %v1170, %v1192
  %1194 = vdwg.mxu0
  %v1195 = vmul.f32 %v1190, 0.015625
  %v1196 = vmul.f32 %v1193, 0.015625
  %vm1197 = vcmask 64512
  %v1199 = vsel %vm1197, %v1195, 0
  %v1202 = vsel %vm1197, %v1196, 0
  %1204 = vmatpush.msra.mxu0 0.0
  %1205 = vmatpush.msra.mxu0 0.0
  %1206 = vmatpush.msra.mxu0 0.0
  %1207 = vmatpush.msra.mxu0 0.0
  %1208 = vmatpush.msra.mxu0 0.0
  %1209 = vmatpush.msra.mxu0 0.0
  %1210 = vmatpush.msra.mxu0 0.0
  %1211 = vmatpush.msra.mxu0 0.0
  %1212 = vmatpush.msra.mxu0 0.0
  %1213 = vmatpush.msra.mxu0 0.0
  %1214 = vmatpush.msra.mxu0 0.0
  %1215 = vmatpush.msra.mxu0 0.0
  %1216 = vmatpush.msra.mxu0 0.0
  %1217 = vmatpush.msra.mxu0 0.0
  %1218 = vmatpush.msra.mxu0 0.0
  %1219 = vmatpush.msra.mxu0 %v87
  %1220 = vmatmul.f32.gmra.mxu0 %v1199
  %v1221 = vpop.f32.mrf.mxu0
  %v1222 = vadd.f32 0.0, %v1221
  %1223 = vmatmul.f32.gmra.mxu0 %v1202
  %v1224 = vpop.f32.mrf.mxu0
  %v1225 = vadd.f32 0.0, %v1224
  %1226 = vdwg.mxu0
  %1227 = vmatpush.msra.mxu0 0.0
  %1228 = vmatpush.msra.mxu0 0.0
  %1229 = vmatpush.msra.mxu0 0.0
  %1230 = vmatpush.msra.mxu0 0.0
  %1231 = vmatpush.msra.mxu0 0.0
  %1232 = vmatpush.msra.mxu0 0.0
  %1233 = vmatpush.msra.mxu0 0.0
  %1234 = vmatpush.msra.mxu0 0.0
  %1235 = vmatpush.msra.mxu0 0.0
  %1236 = vmatpush.msra.mxu0 0.0
  %1237 = vmatpush.msra.mxu0 0.0
  %1238 = vmatpush.msra.mxu0 0.0
  %1239 = vmatpush.msra.mxu0 0.0
  %1240 = vmatpush.msra.mxu0 0.0
  %1241 = vmatpush.msra.mxu0 0.0
  %1242 = vmatpush.msra.mxu0 %v88
  %1243 = vmatmul.f32.gmra.mxu0 %v1199
  %v1244 = vpop.f32.mrf.mxu0
  %v1245 = vadd.f32 0.0, %v1244
  %1246 = vmatmul.f32.gmra.mxu0 %v1202
  %v1247 = vpop.f32.mrf.mxu0
  %v1248 = vadd.f32 0.0, %v1247
  %1249 = vdwg.mxu0
  %1250 = vmatpush.msra.mxu0 0.0
  %1251 = vmatpush.msra.mxu0 0.0
  %1252 = vmatpush.msra.mxu0 0.0
  %1253 = vmatpush.msra.mxu0 0.0
  %1254 = vmatpush.msra.mxu0 0.0
  %1255 = vmatpush.msra.mxu0 0.0
  %1256 = vmatpush.msra.mxu0 0.0
  %1257 = vmatpush.msra.mxu0 0.0
  %1258 = vmatpush.msra.mxu0 0.0
  %1259 = vmatpush.msra.mxu0 0.0
  %1260 = vmatpush.msra.mxu0 0.0
  %1261 = vmatpush.msra.mxu0 0.0
  %1262 = vmatpush.msra.mxu0 0.0
  %1263 = vmatpush.msra.mxu0 0.0
  %1264 = vmatpush.msra.mxu0 0.0
  %1265 = vmatpush.msra.mxu0 %v89
  %1266 = vmatmul.f32.gmra.mxu0 %v1199
  %v1267 = vpop.f32.mrf.mxu0
  %v1268 = vadd.f32 0.0, %v1267
  %1269 = vmatmul.f32.gmra.mxu0 %v1202
  %v1270 = vpop.f32.mrf.mxu0
  %v1271 = vadd.f32 0.0, %v1270
  %1272 = vdwg.mxu0
  %1273 = vmatpush.msra.mxu0 0.0
  %1274 = vmatpush.msra.mxu0 0.0
  %1275 = vmatpush.msra.mxu0 0.0
  %1276 = vmatpush.msra.mxu0 0.0
  %1277 = vmatpush.msra.mxu0 0.0
  %1278 = vmatpush.msra.mxu0 0.0
  %1279 = vmatpush.msra.mxu0 0.0
  %1280 = vmatpush.msra.mxu0 0.0
  %1281 = vmatpush.msra.mxu0 0.0
  %1282 = vmatpush.msra.mxu0 0.0
  %1283 = vmatpush.msra.mxu0 0.0
  %1284 = vmatpush.msra.mxu0 0.0
  %1285 = vmatpush.msra.mxu0 0.0
  %1286 = vmatpush.msra.mxu0 0.0
  %1287 = vmatpush.msra.mxu0 0.0
  %1288 = vmatpush.msra.mxu0 %v90
  %1289 = vmatmul.f32.gmra.mxu0 %v1199
  %v1290 = vpop.f32.mrf.mxu0
  %v1291 = vadd.f32 0.0, %v1290
  %1292 = vmatmul.f32.gmra.mxu0 %v1202
  %v1293 = vpop.f32.mrf.mxu0
  %v1294 = vadd.f32 0.0, %v1293
  %1295 = vdwg.mxu0
  %v1296 = vsub.f32 %v931, %v1222
  %v1297 = vsub.f32 %v987, %v1245
  %v1298 = vsub.f32 %v1043, %v1268
  %v1299 = vsub.f32 %v1099, %v1291
  %v1300 = vsub.f32 %v933, %v1225
  %v1301 = vsub.f32 %v989, %v1248
  %v1302 = vsub.f32 %v1045, %v1271
  %v1303 = vsub.f32 %v1101, %v1294
  %v1304 = vmul.f32 %v1296, %v1296
  %v1305 = vmul.f32 %v1297, %v1297
  %v1306 = vmul.f32 %v1298, %v1298
  %v1307 = vmul.f32 %v1299, %v1299
  %v1308 = vmul.f32 %v1300, %v1300
  %v1309 = vmul.f32 %v1301, %v1301
  %v1310 = vmul.f32 %v1302, %v1302
  %v1311 = vmul.f32 %v1303, %v1303
  %1312 = vmatpush.msra.mxu0 %v38
  %1313 = vmatpush.msra.mxu0 %v37
  %1314 = vmatpush.msra.mxu0 %v36
  %1315 = vmatpush.msra.mxu0 %v35
  %1316 = vmatpush.msra.mxu0 %v34
  %1317 = vmatpush.msra.mxu0 %v33
  %1318 = vmatpush.msra.mxu0 %v32
  %1319 = vmatpush.msra.mxu0 %v31
  %1320 = vmatpush.msra.mxu0 %v30
  %1321 = vmatpush.msra.mxu0 %v29
  %1322 = vmatpush.msra.mxu0 %v28
  %1323 = vmatpush.msra.mxu0 %v27
  %1324 = vmatpush.msra.mxu0 %v26
  %1325 = vmatpush.msra.mxu0 %v25
  %1326 = vmatpush.msra.mxu0 %v24
  %1327 = vmatpush.msra.mxu0 %v23
  %1328 = vmatmul.f32.gmra.mxu0 %v1304
  %v1329 = vpop.f32.mrf.mxu0
  %v1330 = vadd.f32 0.0, %v1329
  %1331 = vmatmul.f32.gmra.mxu0 %v1308
  %v1332 = vpop.f32.mrf.mxu0
  %v1333 = vadd.f32 0.0, %v1332
  %1334 = vdwg.mxu0
  %1335 = vmatpush.msra.mxu0 %v54
  %1336 = vmatpush.msra.mxu0 %v53
  %1337 = vmatpush.msra.mxu0 %v52
  %1338 = vmatpush.msra.mxu0 %v51
  %1339 = vmatpush.msra.mxu0 %v50
  %1340 = vmatpush.msra.mxu0 %v49
  %1341 = vmatpush.msra.mxu0 %v48
  %1342 = vmatpush.msra.mxu0 %v47
  %1343 = vmatpush.msra.mxu0 %v46
  %1344 = vmatpush.msra.mxu0 %v45
  %1345 = vmatpush.msra.mxu0 %v44
  %1346 = vmatpush.msra.mxu0 %v43
  %1347 = vmatpush.msra.mxu0 %v42
  %1348 = vmatpush.msra.mxu0 %v41
  %1349 = vmatpush.msra.mxu0 %v40
  %1350 = vmatpush.msra.mxu0 %v39
  %1351 = vmatmul.f32.gmra.mxu0 %v1305
  %v1352 = vpop.f32.mrf.mxu0
  %v1353 = vadd.f32 %v1330, %v1352
  %1354 = vmatmul.f32.gmra.mxu0 %v1309
  %v1355 = vpop.f32.mrf.mxu0
  %v1356 = vadd.f32 %v1333, %v1355
  %1357 = vdwg.mxu0
  %1358 = vmatpush.msra.mxu0 %v70
  %1359 = vmatpush.msra.mxu0 %v69
  %1360 = vmatpush.msra.mxu0 %v68
  %1361 = vmatpush.msra.mxu0 %v67
  %1362 = vmatpush.msra.mxu0 %v66
  %1363 = vmatpush.msra.mxu0 %v65
  %1364 = vmatpush.msra.mxu0 %v64
  %1365 = vmatpush.msra.mxu0 %v63
  %1366 = vmatpush.msra.mxu0 %v62
  %1367 = vmatpush.msra.mxu0 %v61
  %1368 = vmatpush.msra.mxu0 %v60
  %1369 = vmatpush.msra.mxu0 %v59
  %1370 = vmatpush.msra.mxu0 %v58
  %1371 = vmatpush.msra.mxu0 %v57
  %1372 = vmatpush.msra.mxu0 %v56
  %1373 = vmatpush.msra.mxu0 %v55
  %1374 = vmatmul.f32.gmra.mxu0 %v1306
  %v1375 = vpop.f32.mrf.mxu0
  %v1376 = vadd.f32 %v1353, %v1375
  %1377 = vmatmul.f32.gmra.mxu0 %v1310
  %v1378 = vpop.f32.mrf.mxu0
  %v1379 = vadd.f32 %v1356, %v1378
  %1380 = vdwg.mxu0
  %1381 = vmatpush.msra.mxu0 %v86
  %1382 = vmatpush.msra.mxu0 %v85
  %1383 = vmatpush.msra.mxu0 %v84
  %1384 = vmatpush.msra.mxu0 %v83
  %1385 = vmatpush.msra.mxu0 %v82
  %1386 = vmatpush.msra.mxu0 %v81
  %1387 = vmatpush.msra.mxu0 %v80
  %1388 = vmatpush.msra.mxu0 %v79
  %1389 = vmatpush.msra.mxu0 %v78
  %1390 = vmatpush.msra.mxu0 %v77
  %1391 = vmatpush.msra.mxu0 %v76
  %1392 = vmatpush.msra.mxu0 %v75
  %1393 = vmatpush.msra.mxu0 %v74
  %1394 = vmatpush.msra.mxu0 %v73
  %1395 = vmatpush.msra.mxu0 %v72
  %1396 = vmatpush.msra.mxu0 %v71
  %1397 = vmatmul.f32.gmra.mxu0 %v1307
  %v1398 = vpop.f32.mrf.mxu0
  %v1399 = vadd.f32 %v1376, %v1398
  %1400 = vmatmul.f32.gmra.mxu0 %v1311
  %v1401 = vpop.f32.mrf.mxu0
  %v1402 = vadd.f32 %v1379, %v1401
  %1403 = vdwg.mxu0
  %v1404 = vmul.f32 %v1399, 0.015625
  %v1405 = vmul.f32 %v1402, 0.015625
  %v1407 = vsel %vm1197, %v1404, 0
  %v1410 = vsel %vm1197, %v1405, 0
  %1412 = vmatpush.msra.mxu0 0.0
  %1413 = vmatpush.msra.mxu0 0.0
  %1414 = vmatpush.msra.mxu0 0.0
  %1415 = vmatpush.msra.mxu0 0.0
  %1416 = vmatpush.msra.mxu0 0.0
  %1417 = vmatpush.msra.mxu0 0.0
  %1418 = vmatpush.msra.mxu0 0.0
  %1419 = vmatpush.msra.mxu0 0.0
  %1420 = vmatpush.msra.mxu0 0.0
  %1421 = vmatpush.msra.mxu0 0.0
  %1422 = vmatpush.msra.mxu0 0.0
  %1423 = vmatpush.msra.mxu0 0.0
  %1424 = vmatpush.msra.mxu0 0.0
  %1425 = vmatpush.msra.mxu0 0.0
  %1426 = vmatpush.msra.mxu0 0.0
  %1427 = vmatpush.msra.mxu0 %v87
  %1428 = vmatmul.f32.gmra.mxu0 %v1407
  %v1429 = vpop.f32.mrf.mxu0
  %v1430 = vadd.f32 1e-05, %v1429
  %1431 = vmatmul.f32.gmra.mxu0 %v1410
  %v1432 = vpop.f32.mrf.mxu0
  %v1433 = vadd.f32 1e-05, %v1432
  %1434 = vdwg.mxu0
  %1435 = vmatpush.msra.mxu0 0.0
  %1436 = vmatpush.msra.mxu0 0.0
  %1437 = vmatpush.msra.mxu0 0.0
  %1438 = vmatpush.msra.mxu0 0.0
  %1439 = vmatpush.msra.mxu0 0.0
  %1440 = vmatpush.msra.mxu0 0.0
  %1441 = vmatpush.msra.mxu0 0.0
  %1442 = vmatpush.msra.mxu0 0.0
  %1443 = vmatpush.msra.mxu0 0.0
  %1444 = vmatpush.msra.mxu0 0.0
  %1445 = vmatpush.msra.mxu0 0.0
  %1446 = vmatpush.msra.mxu0 0.0
  %1447 = vmatpush.msra.mxu0 0.0
  %1448 = vmatpush.msra.mxu0 0.0
  %1449 = vmatpush.msra.mxu0 0.0
  %1450 = vmatpush.msra.mxu0 %v88
  %1451 = vmatmul.f32.gmra.mxu0 %v1407
  %v1452 = vpop.f32.mrf.mxu0
  %v1453 = vadd.f32 1e-05, %v1452
  %1454 = vmatmul.f32.gmra.mxu0 %v1410
  %v1455 = vpop.f32.mrf.mxu0
  %v1456 = vadd.f32 1e-05, %v1455
  %1457 = vdwg.mxu0
  %1458 = vmatpush.msra.mxu0 0.0
  %1459 = vmatpush.msra.mxu0 0.0
  %1460 = vmatpush.msra.mxu0 0.0
  %1461 = vmatpush.msra.mxu0 0.0
  %1462 = vmatpush.msra.mxu0 0.0
  %1463 = vmatpush.msra.mxu0 0.0
  %1464 = vmatpush.msra.mxu0 0.0
  %1465 = vmatpush.msra.mxu0 0.0
  %1466 = vmatpush.msra.mxu0 0.0
  %1467 = vmatpush.msra.mxu0 0.0
  %1468 = vmatpush.msra.mxu0 0.0
  %1469 = vmatpush.msra.mxu0 0.0
  %1470 = vmatpush.msra.mxu0 0.0
  %1471 = vmatpush.msra.mxu0 0.0
  %1472 = vmatpush.msra.mxu0 0.0
  %1473 = vmatpush.msra.mxu0 %v89
  %1474 = vmatmul.f32.gmra.mxu0 %v1407
  %v1475 = vpop.f32.mrf.mxu0
  %v1476 = vadd.f32 1e-05, %v1475
  %1477 = vmatmul.f32.gmra.mxu0 %v1410
  %v1478 = vpop.f32.mrf.mxu0
  %v1479 = vadd.f32 1e-05, %v1478
  %1480 = vdwg.mxu0
  %1481 = vmatpush.msra.mxu0 0.0
  %1482 = vmatpush.msra.mxu0 0.0
  %1483 = vmatpush.msra.mxu0 0.0
  %1484 = vmatpush.msra.mxu0 0.0
  %1485 = vmatpush.msra.mxu0 0.0
  %1486 = vmatpush.msra.mxu0 0.0
  %1487 = vmatpush.msra.mxu0 0.0
  %1488 = vmatpush.msra.mxu0 0.0
  %1489 = vmatpush.msra.mxu0 0.0
  %1490 = vmatpush.msra.mxu0 0.0
  %1491 = vmatpush.msra.mxu0 0.0
  %1492 = vmatpush.msra.mxu0 0.0
  %1493 = vmatpush.msra.mxu0 0.0
  %1494 = vmatpush.msra.mxu0 0.0
  %1495 = vmatpush.msra.mxu0 0.0
  %1496 = vmatpush.msra.mxu0 %v90
  %1497 = vmatmul.f32.gmra.mxu0 %v1407
  %v1498 = vpop.f32.mrf.mxu0
  %v1499 = vadd.f32 1e-05, %v1498
  %1500 = vmatmul.f32.gmra.mxu0 %v1410
  %v1501 = vpop.f32.mrf.mxu0
  %v1502 = vadd.f32 1e-05, %v1501
  %1503 = vdwg.mxu0
  %v1504 = vrsqrt.pop %v1430
  %v1505 = vmul.f32 %v1504, %v1430
  %v1506 = vmul.f32 %v1505, %v1504
  %v1507 = vmul.f32 0.5, %v1506
  %v1508 = vsub.f32 1.5, %v1507
  %v1509 = vmul.f32 %v1504, %v1508
  %vm1510 = vweird.f32 %v1430
  %vm1511 = vweird.f32 %v1504
  %vm1512 = vmor %vm1510, %vm1511
  %v1513 = vsel %vm1512, %v1504, %v1509
  %v1514 = vrsqrt.pop %v1453
  %v1515 = vmul.f32 %v1514, %v1453
  %v1516 = vmul.f32 %v1515, %v1514
  %v1517 = vmul.f32 0.5, %v1516
  %v1518 = vsub.f32 1.5, %v1517
  %v1519 = vmul.f32 %v1514, %v1518
  %vm1520 = vweird.f32 %v1453
  %vm1521 = vweird.f32 %v1514
  %vm1522 = vmor %vm1520, %vm1521
  %v1523 = vsel %vm1522, %v1514, %v1519
  %v1524 = vrsqrt.pop %v1476
  %v1525 = vmul.f32 %v1524, %v1476
  %v1526 = vmul.f32 %v1525, %v1524
  %v1527 = vmul.f32 0.5, %v1526
  %v1528 = vsub.f32 1.5, %v1527
  %v1529 = vmul.f32 %v1524, %v1528
  %vm1530 = vweird.f32 %v1476
  %vm1531 = vweird.f32 %v1524
  %vm1532 = vmor %vm1530, %vm1531
  %v1533 = vsel %vm1532, %v1524, %v1529
  %v1534 = vrsqrt.pop %v1499
  %v1535 = vmul.f32 %v1534, %v1499
  %v1536 = vmul.f32 %v1535, %v1534
  %v1537 = vmul.f32 0.5, %v1536
  %v1538 = vsub.f32 1.5, %v1537
  %v1539 = vmul.f32 %v1534, %v1538
  %vm1540 = vweird.f32 %v1499
  %vm1541 = vweird.f32 %v1534
  %vm1542 = vmor %vm1540, %vm1541
  %v1543 = vsel %vm1542, %v1534, %v1539
  %v1544 = vrsqrt.pop %v1433
  %v1545 = vmul.f32 %v1544, %v1433
  %v1546 = vmul.f32 %v1545, %v1544
  %v1547 = vmul.f32 0.5, %v1546
  %v1548 = vsub.f32 1.5, %v1547
  %v1549 = vmul.f32 %v1544, %v1548
  %vm1550 = vweird.f32 %v1433
  %vm1551 = vweird.f32 %v1544
  %vm1552 = vmor %vm1550, %vm1551
  %v1553 = vsel %vm1552, %v1544, %v1549
  %v1554 = vrsqrt.pop %v1456
  %v1555 = vmul.f32 %v1554, %v1456
  %v1556 = vmul.f32 %v1555, %v1554
  %v1557 = vmul.f32 0.5, %v1556
  %v1558 = vsub.f32 1.5, %v1557
  %v1559 = vmul.f32 %v1554, %v1558
  %vm1560 = vweird.f32 %v1456
  %vm1561 = vweird.f32 %v1554
  %vm1562 = vmor %vm1560, %vm1561
  %v1563 = vsel %vm1562, %v1554, %v1559
  %v1564 = vrsqrt.pop %v1479
  %v1565 = vmul.f32 %v1564, %v1479
  %v1566 = vmul.f32 %v1565, %v1564
  %v1567 = vmul.f32 0.5, %v1566
  %v1568 = vsub.f32 1.5, %v1567
  %v1569 = vmul.f32 %v1564, %v1568
  %vm1570 = vweird.f32 %v1479
  %vm1571 = vweird.f32 %v1564
  %vm1572 = vmor %vm1570, %vm1571
  %v1573 = vsel %vm1572, %v1564, %v1569
  %v1574 = vrsqrt.pop %v1502
  %v1575 = vmul.f32 %v1574, %v1502
  %v1576 = vmul.f32 %v1575, %v1574
  %v1577 = vmul.f32 0.5, %v1576
  %v1578 = vsub.f32 1.5, %v1577
  %v1579 = vmul.f32 %v1574, %v1578
  %vm1580 = vweird.f32 %v1502
  %vm1581 = vweird.f32 %v1574
  %vm1582 = vmor %vm1580, %vm1581
  %v1583 = vsel %vm1582, %v1574, %v1579
  %v1584 = vmul.f32 %v1296, %v1513
  %v1585 = vmul.f32 %v1297, %v1523
  %v1586 = vmul.f32 %v1298, %v1533
  %v1587 = vmul.f32 %v1299, %v1543
  %v1588 = vmul.f32 %v1300, %v1553
  %v1589 = vmul.f32 %v1301, %v1563
  %v1590 = vmul.f32 %v1302, %v1573
  %v1591 = vmul.f32 %v1303, %v1583
  %vm1592 = vcmp.ge.f32.partialorder %v1584, 0.0
  %vm1593 = vcmp.ge.f32.partialorder %v1585, 0.0
  %vm1594 = vcmp.ge.f32.partialorder %v1586, 0.0
  %vm1595 = vcmp.ge.f32.partialorder %v1587, 0.0
  %vm1596 = vcmp.ge.f32.partialorder %v1588, 0.0
  %vm1597 = vcmp.ge.f32.partialorder %v1589, 0.0
  %vm1598 = vcmp.ge.f32.partialorder %v1590, 0.0
  %vm1599 = vcmp.ge.f32.partialorder %v1591, 0.0
  %v1600 = vperm.slane %v91, 2
  %v1601 = vperm.slane %v92, 2
  %v1602 = vperm.slane %v93, 2
  %v1603 = vperm.slane %v94, 2
  %v1604 = vmul.f32 %v1600, %v1584
  %v1605 = vmul.f32 %v1601, %v1585
  %v1606 = vmul.f32 %v1602, %v1586
  %v1607 = vmul.f32 %v1603, %v1587
  %v1608 = vmul.f32 %v1600, %v1588
  %v1609 = vmul.f32 %v1601, %v1589
  %v1610 = vmul.f32 %v1602, %v1590
  %v1611 = vmul.f32 %v1603, %v1591
  %v1612 = vsel %vm1592, %v1584, %v1604
  %v1613 = vsel %vm1593, %v1585, %v1605
  %v1614 = vsel %vm1594, %v1586, %v1606
  %v1615 = vsel %vm1595, %v1587, %v1607
  %v1616 = vsel %vm1596, %v1588, %v1608
  %v1617 = vsel %vm1597, %v1589, %v1609
  %v1618 = vsel %vm1598, %v1590, %v1610
  %v1619 = vsel %vm1599, %v1591, %v1611
  %v1620 = vpack.c.bf16 %v1616, %v1612
  %v1621 = vpack.c.bf16 %v1617, %v1613
  %v1622 = vpack.c.bf16 %v1618, %v1614
  %v1623 = vpack.c.bf16 %v1619, %v1615
  %v1624 = vld [vmem:[%s2] sm:$0xff]
  %v1625 = vld [vmem:[%s2 + $0x8] sm:$0xff]
  %v1626 = vld [vmem:[%s2 + $0x10] sm:$0xff]
  %v1627 = vld [vmem:[%s2 + $0x18] sm:$0xff]
  %v1628 = vld [vmem:[%s2 + $0x20] sm:$0xff]
  %v1629 = vld [vmem:[%s2 + $0x28] sm:$0xff]
  %v1630 = vld [vmem:[%s2 + $0x30] sm:$0xff]
  %v1631 = vld [vmem:[%s2 + $0x38] sm:$0xff]
  %v1632 = vld [vmem:[%s2 + $0x40] sm:$0xff]
  %v1633 = vld [vmem:[%s2 + $0x48] sm:$0xff]
  %v1634 = vld [vmem:[%s2 + $0x50] sm:$0xff]
  %v1635 = vld [vmem:[%s2 + $0x58] sm:$0xff]
  %v1636 = vld [vmem:[%s2 + $0x60] sm:$0xff]
  %v1637 = vld [vmem:[%s2 + $0x68] sm:$0xff]
  %v1638 = vld [vmem:[%s2 + $0x70] sm:$0xff]
  %v1639 = vld [vmem:[%s2 + $0x78] sm:$0xff]
  %v1640 = vld [vmem:[%s2 + $0x80] sm:$0xff]
  %v1641 = vld [vmem:[%s2 + $0x88] sm:$0xff]
  %v1642 = vld [vmem:[%s2 + $0x90] sm:$0xff]
  %v1643 = vld [vmem:[%s2 + $0x98] sm:$0xff]
  %v1644 = vld [vmem:[%s2 + $0xa0] sm:$0xff]
  %v1645 = vld [vmem:[%s2 + $0xa8] sm:$0xff]
  %v1646 = vld [vmem:[%s2 + $0xb0] sm:$0xff]
  %v1647 = vld [vmem:[%s2 + $0xb8] sm:$0xff]
  %v1648 = vld [vmem:[%s2 + $0xc0] sm:$0xff]
  %v1649 = vld [vmem:[%s2 + $0xc8] sm:$0xff]
  %v1650 = vld [vmem:[%s2 + $0xd0] sm:$0xff]
  %v1651 = vld [vmem:[%s2 + $0xd8] sm:$0xff]
  %v1652 = vld [vmem:[%s2 + $0xe0] sm:$0xff]
  %v1653 = vld [vmem:[%s2 + $0xe8] sm:$0xff]
  %v1654 = vld [vmem:[%s2 + $0xf0] sm:$0xff]
  %v1655 = vld [vmem:[%s2 + $0xf8] sm:$0xff]
  %v1656 = vld [vmem:[%s2 + $0x100] sm:$0xff]
  %v1657 = vld [vmem:[%s2 + $0x108] sm:$0xff]
  %v1658 = vld [vmem:[%s2 + $0x110] sm:$0xff]
  %v1659 = vld [vmem:[%s2 + $0x118] sm:$0xff]
  %v1660 = vld [vmem:[%s2 + $0x120] sm:$0xff]
  %v1661 = vld [vmem:[%s2 + $0x128] sm:$0xff]
  %v1662 = vld [vmem:[%s2 + $0x130] sm:$0xff]
  %v1663 = vld [vmem:[%s2 + $0x138] sm:$0xff]
  %v1664 = vld [vmem:[%s2 + $0x140] sm:$0xff]
  %v1665 = vld [vmem:[%s2 + $0x148] sm:$0xff]
  %v1666 = vld [vmem:[%s2 + $0x150] sm:$0xff]
  %v1667 = vld [vmem:[%s2 + $0x158] sm:$0xff]
  %v1668 = vld [vmem:[%s2 + $0x160] sm:$0xff]
  %v1669 = vld [vmem:[%s2 + $0x168] sm:$0xff]
  %v1670 = vld [vmem:[%s2 + $0x170] sm:$0xff]
  %v1671 = vld [vmem:[%s2 + $0x178] sm:$0xff]
  %v1672 = vld [vmem:[%s2 + $0x180] sm:$0xff]
  %v1673 = vld [vmem:[%s2 + $0x188] sm:$0xff]
  %v1674 = vld [vmem:[%s2 + $0x190] sm:$0xff]
  %v1675 = vld [vmem:[%s2 + $0x198] sm:$0xff]
  %v1676 = vld [vmem:[%s2 + $0x1a0] sm:$0xff]
  %v1677 = vld [vmem:[%s2 + $0x1a8] sm:$0xff]
  %v1678 = vld [vmem:[%s2 + $0x1b0] sm:$0xff]
  %v1679 = vld [vmem:[%s2 + $0x1b8] sm:$0xff]
  %v1680 = vld [vmem:[%s2 + $0x1c0] sm:$0xff]
  %v1681 = vld [vmem:[%s2 + $0x1c8] sm:$0xff]
  %v1682 = vld [vmem:[%s2 + $0x1d0] sm:$0xff]
  %v1683 = vld [vmem:[%s2 + $0x1d8] sm:$0xff]
  %v1684 = vld [vmem:[%s2 + $0x1e0] sm:$0xff]
  %v1685 = vld [vmem:[%s2 + $0x1e8] sm:$0xff]
  %v1686 = vld [vmem:[%s2 + $0x1f0] sm:$0xff]
  %v1687 = vld [vmem:[%s2 + $0x1f8] sm:$0xff]
  %v1688 = vld [vmem:[%s2 + $0x200] sm:$0xff]
  %v1689 = vld [vmem:[%s2 + $0x208] sm:$0xff]
  %v1690 = vld [vmem:[%s2 + $0x210] sm:$0xff]
  %v1691 = vld [vmem:[%s2 + $0x218] sm:$0xff]
  %v1692 = vld [vmem:[%s2 + $0x220] sm:$0xff]
  %v1693 = vld [vmem:[%s2 + $0x228] sm:$0xff]
  %v1694 = vld [vmem:[%s2 + $0x230] sm:$0xff]
  %v1695 = vld [vmem:[%s2 + $0x238] sm:$0xff]
  %v1696 = vld [vmem:[%s2 + $0x240] sm:$0xff]
  %v1697 = vld [vmem:[%s2 + $0x248] sm:$0xff]
  %v1698 = vld [vmem:[%s2 + $0x250] sm:$0xff]
  %v1699 = vld [vmem:[%s2 + $0x258] sm:$0xff]
  %v1700 = vld [vmem:[%s2 + $0x260] sm:$0xff]
  %v1701 = vld [vmem:[%s2 + $0x268] sm:$0xff]
  %v1702 = vld [vmem:[%s2 + $0x270] sm:$0xff]
  %v1703 = vld [vmem:[%s2 + $0x278] sm:$0xff]
  %v1704 = vld [vmem:[%s2 + $0x280] sm:$0xff]
  %v1705 = vld [vmem:[%s2 + $0x288] sm:$0xff]
  %v1706 = vld [vmem:[%s2 + $0x290] sm:$0xff]
  %v1707 = vld [vmem:[%s2 + $0x298] sm:$0xff]
  %v1708 = vld [vmem:[%s2 + $0x2a0] sm:$0xff]
  %v1709 = vld [vmem:[%s2 + $0x2a8] sm:$0xff]
  %v1710 = vld [vmem:[%s2 + $0x2b0] sm:$0xff]
  %v1711 = vld [vmem:[%s2 + $0x2b8] sm:$0xff]
  %v1712 = vld [vmem:[%s2 + $0x2c0] sm:$0xff]
  %v1713 = vld [vmem:[%s2 + $0x2c8] sm:$0xff]
  %v1714 = vld [vmem:[%s2 + $0x2d0] sm:$0xff]
  %v1715 = vld [vmem:[%s2 + $0x2d8] sm:$0xff]
  %v1716 = vld [vmem:[%s2 + $0x2e0] sm:$0xff]
  %v1717 = vld [vmem:[%s2 + $0x2e8] sm:$0xff]
  %v1718 = vld [vmem:[%s2 + $0x2f0] sm:$0xff]
  %v1719 = vld [vmem:[%s2 + $0x2f8] sm:$0xff]
  %v1720 = vld [vmem:[%s2 + $0x300] sm:$0xff]
  %v1721 = vld [vmem:[%s2 + $0x308] sm:$0xff]
  %v1722 = vld [vmem:[%s2 + $0x310] sm:$0xff]
  %v1723 = vld [vmem:[%s2 + $0x318] sm:$0xff]
  %v1724 = vld [vmem:[%s2 + $0x320] sm:$0xff]
  %v1725 = vld [vmem:[%s2 + $0x328] sm:$0xff]
  %v1726 = vld [vmem:[%s2 + $0x330] sm:$0xff]
  %v1727 = vld [vmem:[%s2 + $0x338] sm:$0xff]
  %v1728 = vld [vmem:[%s2 + $0x340] sm:$0xff]
  %v1729 = vld [vmem:[%s2 + $0x348] sm:$0xff]
  %v1730 = vld [vmem:[%s2 + $0x350] sm:$0xff]
  %v1731 = vld [vmem:[%s2 + $0x358] sm:$0xff]
  %v1732 = vld [vmem:[%s2 + $0x360] sm:$0xff]
  %v1733 = vld [vmem:[%s2 + $0x368] sm:$0xff]
  %v1734 = vld [vmem:[%s2 + $0x370] sm:$0xff]
  %v1735 = vld [vmem:[%s2 + $0x378] sm:$0xff]
  %v1736 = vld [vmem:[%s2 + $0x380] sm:$0xff]
  %v1737 = vld [vmem:[%s2 + $0x388] sm:$0xff]
  %v1738 = vld [vmem:[%s2 + $0x390] sm:$0xff]
  %v1739 = vld [vmem:[%s2 + $0x398] sm:$0xff]
  %v1740 = vld [vmem:[%s2 + $0x3a0] sm:$0xff]
  %v1741 = vld [vmem:[%s2 + $0x3a8] sm:$0xff]
  %v1742 = vld [vmem:[%s2 + $0x3b0] sm:$0xff]
  %v1743 = vld [vmem:[%s2 + $0x3b8] sm:$0xff]
  %v1744 = vld [vmem:[%s2 + $0x3c0] sm:$0xff]
  %v1745 = vld [vmem:[%s2 + $0x3c8] sm:$0xff]
  %v1746 = vld [vmem:[%s2 + $0x3d0] sm:$0xff]
  %v1747 = vld [vmem:[%s2 + $0x3d8] sm:$0xff]
  %v1748 = vld [vmem:[%s2 + $0x3e0] sm:$0xff]
  %v1749 = vld [vmem:[%s2 + $0x3e8] sm:$0xff]
  %v1750 = vld [vmem:[%s2 + $0x3f0] sm:$0xff]
  %v1751 = vld [vmem:[%s2 + $0x3f8] sm:$0xff]
  %v1752 = vperm.slane %v91, 3
  %v1753 = vperm.slane %v92, 3
  %v1754 = vperm.slane %v93, 3
  %v1755 = vperm.slane %v94, 3
  %v1884 = vunpack.c.l.b16 %v1624
  %v1885 = vunpack.c.h.b16 %v1624
  %v1886 = vunpack.c.l.b16 %v1625
  %v1887 = vunpack.c.h.b16 %v1625
  %v1888 = vunpack.c.l.b16 %v1626
  %v1889 = vunpack.c.h.b16 %v1626
  %v1890 = vunpack.c.l.b16 %v1627
  %v1891 = vunpack.c.h.b16 %v1627
  %v1892 = vunpack.c.l.b16 %v1628
  %v1893 = vunpack.c.h.b16 %v1628
  %v1894 = vunpack.c.l.b16 %v1629
  %v1895 = vunpack.c.h.b16 %v1629
  %v1896 = vunpack.c.l.b16 %v1630
  %v1897 = vunpack.c.h.b16 %v1630
  %v1898 = vunpack.c.l.b16 %v1631
  %v1899 = vunpack.c.h.b16 %v1631
  %v1900 = vunpack.c.l.b16 %v1632
  %v1901 = vunpack.c.h.b16 %v1632
  %v1902 = vunpack.c.l.b16 %v1633
  %v1903 = vunpack.c.h.b16 %v1633
  %v1904 = vunpack.c.l.b16 %v1634
  %v1905 = vunpack.c.h.b16 %v1634
  %v1906 = vunpack.c.l.b16 %v1635
  %v1907 = vunpack.c.h.b16 %v1635
  %v1908 = vunpack.c.l.b16 %v1636
  %v1909 = vunpack.c.h.b16 %v1636
  %v1910 = vunpack.c.l.b16 %v1637
  %v1911 = vunpack.c.h.b16 %v1637
  %v1912 = vunpack.c.l.b16 %v1638
  %v1913 = vunpack.c.h.b16 %v1638
  %v1914 = vunpack.c.l.b16 %v1639
  %v1915 = vunpack.c.h.b16 %v1639
  %v1916 = vunpack.c.l.b16 %v1640
  %v1917 = vunpack.c.h.b16 %v1640
  %v1918 = vunpack.c.l.b16 %v1641
  %v1919 = vunpack.c.h.b16 %v1641
  %v1920 = vunpack.c.l.b16 %v1642
  %v1921 = vunpack.c.h.b16 %v1642
  %v1922 = vunpack.c.l.b16 %v1643
  %v1923 = vunpack.c.h.b16 %v1643
  %v1924 = vunpack.c.l.b16 %v1644
  %v1925 = vunpack.c.h.b16 %v1644
  %v1926 = vunpack.c.l.b16 %v1645
  %v1927 = vunpack.c.h.b16 %v1645
  %v1928 = vunpack.c.l.b16 %v1646
  %v1929 = vunpack.c.h.b16 %v1646
  %v1930 = vunpack.c.l.b16 %v1647
  %v1931 = vunpack.c.h.b16 %v1647
  %v1932 = vunpack.c.l.b16 %v1648
  %v1933 = vunpack.c.h.b16 %v1648
  %v1934 = vunpack.c.l.b16 %v1649
  %v1935 = vunpack.c.h.b16 %v1649
  %v1936 = vunpack.c.l.b16 %v1650
  %v1937 = vunpack.c.h.b16 %v1650
  %v1938 = vunpack.c.l.b16 %v1651
  %v1939 = vunpack.c.h.b16 %v1651
  %v1940 = vunpack.c.l.b16 %v1652
  %v1941 = vunpack.c.h.b16 %v1652
  %v1942 = vunpack.c.l.b16 %v1653
  %v1943 = vunpack.c.h.b16 %v1653
  %v1944 = vunpack.c.l.b16 %v1654
  %v1945 = vunpack.c.h.b16 %v1654
  %v1946 = vunpack.c.l.b16 %v1655
  %v1947 = vunpack.c.h.b16 %v1655
  %v1948 = vunpack.c.l.b16 %v1656
  %v1949 = vunpack.c.h.b16 %v1656
  %v1950 = vunpack.c.l.b16 %v1657
  %v1951 = vunpack.c.h.b16 %v1657
  %v1952 = vunpack.c.l.b16 %v1658
  %v1953 = vunpack.c.h.b16 %v1658
  %v1954 = vunpack.c.l.b16 %v1659
  %v1955 = vunpack.c.h.b16 %v1659
  %v1956 = vunpack.c.l.b16 %v1660
  %v1957 = vunpack.c.h.b16 %v1660
  %v1958 = vunpack.c.l.b16 %v1661
  %v1959 = vunpack.c.h.b16 %v1661
  %v1960 = vunpack.c.l.b16 %v1662
  %v1961 = vunpack.c.h.b16 %v1662
  %v1962 = vunpack.c.l.b16 %v1663
  %v1963 = vunpack.c.h.b16 %v1663
  %v1964 = vunpack.c.l.b16 %v1664
  %v1965 = vunpack.c.h.b16 %v1664
  %v1966 = vunpack.c.l.b16 %v1665
  %v1967 = vunpack.c.h.b16 %v1665
  %v1968 = vunpack.c.l.b16 %v1666
  %v1969 = vunpack.c.h.b16 %v1666
  %v1970 = vunpack.c.l.b16 %v1667
  %v1971 = vunpack.c.h.b16 %v1667
  %v1972 = vunpack.c.l.b16 %v1668
  %v1973 = vunpack.c.h.b16 %v1668
  %v1974 = vunpack.c.l.b16 %v1669
  %v1975 = vunpack.c.h.b16 %v1669
  %v1976 = vunpack.c.l.b16 %v1670
  %v1977 = vunpack.c.h.b16 %v1670
  %v1978 = vunpack.c.l.b16 %v1671
  %v1979 = vunpack.c.h.b16 %v1671
  %v1980 = vunpack.c.l.b16 %v1672
  %v1981 = vunpack.c.h.b16 %v1672
  %v1982 = vunpack.c.l.b16 %v1673
  %v1983 = vunpack.c.h.b16 %v1673
  %v1984 = vunpack.c.l.b16 %v1674
  %v1985 = vunpack.c.h.b16 %v1674
  %v1986 = vunpack.c.l.b16 %v1675
  %v1987 = vunpack.c.h.b16 %v1675
  %v1988 = vunpack.c.l.b16 %v1676
  %v1989 = vunpack.c.h.b16 %v1676
  %v1990 = vunpack.c.l.b16 %v1677
  %v1991 = vunpack.c.h.b16 %v1677
  %v1992 = vunpack.c.l.b16 %v1678
  %v1993 = vunpack.c.h.b16 %v1678
  %v1994 = vunpack.c.l.b16 %v1679
  %v1995 = vunpack.c.h.b16 %v1679
  %v1996 = vunpack.c.l.b16 %v1680
  %v1997 = vunpack.c.h.b16 %v1680
  %v1998 = vunpack.c.l.b16 %v1681
  %v1999 = vunpack.c.h.b16 %v1681
  %v2000 = vunpack.c.l.b16 %v1682
  %v2001 = vunpack.c.h.b16 %v1682
  %v2002 = vunpack.c.l.b16 %v1683
  %v2003 = vunpack.c.h.b16 %v1683
  %v2004 = vunpack.c.l.b16 %v1684
  %v2005 = vunpack.c.h.b16 %v1684
  %v2006 = vunpack.c.l.b16 %v1685
  %v2007 = vunpack.c.h.b16 %v1685
  %v2008 = vunpack.c.l.b16 %v1686
  %v2009 = vunpack.c.h.b16 %v1686
  %v2010 = vunpack.c.l.b16 %v1687
  %v2011 = vunpack.c.h.b16 %v1687
  %v2012 = vunpack.c.l.b16 %v1688
  %v2013 = vunpack.c.h.b16 %v1688
  %v2014 = vunpack.c.l.b16 %v1689
  %v2015 = vunpack.c.h.b16 %v1689
  %v2016 = vunpack.c.l.b16 %v1690
  %v2017 = vunpack.c.h.b16 %v1690
  %v2018 = vunpack.c.l.b16 %v1691
  %v2019 = vunpack.c.h.b16 %v1691
  %v2020 = vunpack.c.l.b16 %v1692
  %v2021 = vunpack.c.h.b16 %v1692
  %v2022 = vunpack.c.l.b16 %v1693
  %v2023 = vunpack.c.h.b16 %v1693
  %v2024 = vunpack.c.l.b16 %v1694
  %v2025 = vunpack.c.h.b16 %v1694
  %v2026 = vunpack.c.l.b16 %v1695
  %v2027 = vunpack.c.h.b16 %v1695
  %v2028 = vunpack.c.l.b16 %v1696
  %v2029 = vunpack.c.h.b16 %v1696
  %v2030 = vunpack.c.l.b16 %v1697
  %v2031 = vunpack.c.h.b16 %v1697
  %v2032 = vunpack.c.l.b16 %v1698
  %v2033 = vunpack.c.h.b16 %v1698
  %v2034 = vunpack.c.l.b16 %v1699
  %v2035 = vunpack.c.h.b16 %v1699
  %v2036 = vunpack.c.l.b16 %v1700
  %v2037 = vunpack.c.h.b16 %v1700
  %v2038 = vunpack.c.l.b16 %v1701
  %v2039 = vunpack.c.h.b16 %v1701
  %v2040 = vunpack.c.l.b16 %v1702
  %v2041 = vunpack.c.h.b16 %v1702
  %v2042 = vunpack.c.l.b16 %v1703
  %v2043 = vunpack.c.h.b16 %v1703
  %v2044 = vunpack.c.l.b16 %v1704
  %v2045 = vunpack.c.h.b16 %v1704
  %v2046 = vunpack.c.l.b16 %v1705
  %v2047 = vunpack.c.h.b16 %v1705
  %v2048 = vunpack.c.l.b16 %v1706
  %v2049 = vunpack.c.h.b16 %v1706
  %v2050 = vunpack.c.l.b16 %v1707
  %v2051 = vunpack.c.h.b16 %v1707
  %v2052 = vunpack.c.l.b16 %v1708
  %v2053 = vunpack.c.h.b16 %v1708
  %v2054 = vunpack.c.l.b16 %v1709
  %v2055 = vunpack.c.h.b16 %v1709
  %v2056 = vunpack.c.l.b16 %v1710
  %v2057 = vunpack.c.h.b16 %v1710
  %v2058 = vunpack.c.l.b16 %v1711
  %v2059 = vunpack.c.h.b16 %v1711
  %v2060 = vunpack.c.l.b16 %v1712
  %v2061 = vunpack.c.h.b16 %v1712
  %v2062 = vunpack.c.l.b16 %v1713
  %v2063 = vunpack.c.h.b16 %v1713
  %v2064 = vunpack.c.l.b16 %v1714
  %v2065 = vunpack.c.h.b16 %v1714
  %v2066 = vunpack.c.l.b16 %v1715
  %v2067 = vunpack.c.h.b16 %v1715
  %v2068 = vunpack.c.l.b16 %v1716
  %v2069 = vunpack.c.h.b16 %v1716
  %v2070 = vunpack.c.l.b16 %v1717
  %v2071 = vunpack.c.h.b16 %v1717
  %v2072 = vunpack.c.l.b16 %v1718
  %v2073 = vunpack.c.h.b16 %v1718
  %v2074 = vunpack.c.l.b16 %v1719
  %v2075 = vunpack.c.h.b16 %v1719
  %v2076 = vunpack.c.l.b16 %v1720
  %v2077 = vunpack.c.h.b16 %v1720
  %v2078 = vunpack.c.l.b16 %v1721
  %v2079 = vunpack.c.h.b16 %v1721
  %v2080 = vunpack.c.l.b16 %v1722
  %v2081 = vunpack.c.h.b16 %v1722
  %v2082 = vunpack.c.l.b16 %v1723
  %v2083 = vunpack.c.h.b16 %v1723
  %v2084 = vunpack.c.l.b16 %v1724
  %v2085 = vunpack.c.h.b16 %v1724
  %v2086 = vunpack.c.l.b16 %v1725
  %v2087 = vunpack.c.h.b16 %v1725
  %v2088 = vunpack.c.l.b16 %v1726
  %v2089 = vunpack.c.h.b16 %v1726
  %v2090 = vunpack.c.l.b16 %v1727
  %v2091 = vunpack.c.h.b16 %v1727
  %v2092 = vunpack.c.l.b16 %v1728
  %v2093 = vunpack.c.h.b16 %v1728
  %v2094 = vunpack.c.l.b16 %v1729
  %v2095 = vunpack.c.h.b16 %v1729
  %v2096 = vunpack.c.l.b16 %v1730
  %v2097 = vunpack.c.h.b16 %v1730
  %v2098 = vunpack.c.l.b16 %v1731
  %v2099 = vunpack.c.h.b16 %v1731
  %v2100 = vunpack.c.l.b16 %v1732
  %v2101 = vunpack.c.h.b16 %v1732
  %v2102 = vunpack.c.l.b16 %v1733
  %v2103 = vunpack.c.h.b16 %v1733
  %v2104 = vunpack.c.l.b16 %v1734
  %v2105 = vunpack.c.h.b16 %v1734
  %v2106 = vunpack.c.l.b16 %v1735
  %v2107 = vunpack.c.h.b16 %v1735
  %v2108 = vunpack.c.l.b16 %v1736
  %v2109 = vunpack.c.h.b16 %v1736
  %v2110 = vunpack.c.l.b16 %v1737
  %v2111 = vunpack.c.h.b16 %v1737
  %v2112 = vunpack.c.l.b16 %v1738
  %v2113 = vunpack.c.h.b16 %v1738
  %v2114 = vunpack.c.l.b16 %v1739
  %v2115 = vunpack.c.h.b16 %v1739
  %v2116 = vunpack.c.l.b16 %v1740
  %v2117 = vunpack.c.h.b16 %v1740
  %v2118 = vunpack.c.l.b16 %v1741
  %v2119 = vunpack.c.h.b16 %v1741
  %v2120 = vunpack.c.l.b16 %v1742
  %v2121 = vunpack.c.h.b16 %v1742
  %v2122 = vunpack.c.l.b16 %v1743
  %v2123 = vunpack.c.h.b16 %v1743
  %v2124 = vunpack.c.l.b16 %v1744
  %v2125 = vunpack.c.h.b16 %v1744
  %v2126 = vunpack.c.l.b16 %v1745
  %v2127 = vunpack.c.h.b16 %v1745
  %v2128 = vunpack.c.l.b16 %v1746
  %v2129 = vunpack.c.h.b16 %v1746
  %v2130 = vunpack.c.l.b16 %v1747
  %v2131 = vunpack.c.h.b16 %v1747
  %v2132 = vunpack.c.l.b16 %v1748
  %v2133 = vunpack.c.h.b16 %v1748
  %v2134 = vunpack.c.l.b16 %v1749
  %v2135 = vunpack.c.h.b16 %v1749
  %v2136 = vunpack.c.l.b16 %v1750
  %v2137 = vunpack.c.h.b16 %v1750
  %v2138 = vunpack.c.l.b16 %v1751
  %v2139 = vunpack.c.h.b16 %v1751
  %v2140 = vpack.c.b16 %v1888, %v1884
  %v2141 = vpack.c.b16 %v1889, %v1885
  %v2142 = vpack.c.b16 %v1890, %v1886
  %v2143 = vpack.c.b16 %v1891, %v1887
  %v2144 = vpack.c.b16 %v1896, %v1892
  %v2145 = vpack.c.b16 %v1897, %v1893
  %v2146 = vpack.c.b16 %v1898, %v1894
  %v2147 = vpack.c.b16 %v1899, %v1895
  %v2148 = vpack.c.b16 %v1904, %v1900
  %v2149 = vpack.c.b16 %v1905, %v1901
  %v2150 = vpack.c.b16 %v1906, %v1902
  %v2151 = vpack.c.b16 %v1907, %v1903
  %v2152 = vpack.c.b16 %v1912, %v1908
  %v2153 = vpack.c.b16 %v1913, %v1909
  %v2154 = vpack.c.b16 %v1914, %v1910
  %v2155 = vpack.c.b16 %v1915, %v1911
  %v2156 = vpack.c.b16 %v1920, %v1916
  %v2157 = vpack.c.b16 %v1921, %v1917
  %v2158 = vpack.c.b16 %v1922, %v1918
  %v2159 = vpack.c.b16 %v1923, %v1919
  %v2160 = vpack.c.b16 %v1928, %v1924
  %v2161 = vpack.c.b16 %v1929, %v1925
  %v2162 = vpack.c.b16 %v1930, %v1926
  %v2163 = vpack.c.b16 %v1931, %v1927
  %v2164 = vpack.c.b16 %v1936, %v1932
  %v2165 = vpack.c.b16 %v1937, %v1933
  %v2166 = vpack.c.b16 %v1938, %v1934
  %v2167 = vpack.c.b16 %v1939, %v1935
  %v2168 = vpack.c.b16 %v1944, %v1940
  %v2169 = vpack.c.b16 %v1945, %v1941
  %v2170 = vpack.c.b16 %v1946, %v1942
  %v2171 = vpack.c.b16 %v1947, %v1943
  %v2172 = vpack.c.b16 %v1952, %v1948
  %v2173 = vpack.c.b16 %v1953, %v1949
  %v2174 = vpack.c.b16 %v1954, %v1950
  %v2175 = vpack.c.b16 %v1955, %v1951
  %v2176 = vpack.c.b16 %v1960, %v1956
  %v2177 = vpack.c.b16 %v1961, %v1957
  %v2178 = vpack.c.b16 %v1962, %v1958
  %v2179 = vpack.c.b16 %v1963, %v1959
  %v2180 = vpack.c.b16 %v1968, %v1964
  %v2181 = vpack.c.b16 %v1969, %v1965
  %v2182 = vpack.c.b16 %v1970, %v1966
  %v2183 = vpack.c.b16 %v1971, %v1967
  %v2184 = vpack.c.b16 %v1976, %v1972
  %v2185 = vpack.c.b16 %v1977, %v1973
  %v2186 = vpack.c.b16 %v1978, %v1974
  %v2187 = vpack.c.b16 %v1979, %v1975
  %v2188 = vpack.c.b16 %v1984, %v1980
  %v2189 = vpack.c.b16 %v1985, %v1981
  %v2190 = vpack.c.b16 %v1986, %v1982
  %v2191 = vpack.c.b16 %v1987, %v1983
  %v2192 = vpack.c.b16 %v1992, %v1988
  %v2193 = vpack.c.b16 %v1993, %v1989
  %v2194 = vpack.c.b16 %v1994, %v1990
  %v2195 = vpack.c.b16 %v1995, %v1991
  %v2196 = vpack.c.b16 %v2000, %v1996
  %v2197 = vpack.c.b16 %v2001, %v1997
  %v2198 = vpack.c.b16 %v2002, %v1998
  %v2199 = vpack.c.b16 %v2003, %v1999
  %v2200 = vpack.c.b16 %v2008, %v2004
  %v2201 = vpack.c.b16 %v2009, %v2005
  %v2202 = vpack.c.b16 %v2010, %v2006
  %v2203 = vpack.c.b16 %v2011, %v2007
  %v2204 = vpack.c.b16 %v2016, %v2012
  %v2205 = vpack.c.b16 %v2017, %v2013
  %v2206 = vpack.c.b16 %v2018, %v2014
  %v2207 = vpack.c.b16 %v2019, %v2015
  %v2208 = vpack.c.b16 %v2024, %v2020
  %v2209 = vpack.c.b16 %v2025, %v2021
  %v2210 = vpack.c.b16 %v2026, %v2022
  %v2211 = vpack.c.b16 %v2027, %v2023
  %v2212 = vpack.c.b16 %v2032, %v2028
  %v2213 = vpack.c.b16 %v2033, %v2029
  %v2214 = vpack.c.b16 %v2034, %v2030
  %v2215 = vpack.c.b16 %v2035, %v2031
  %v2216 = vpack.c.b16 %v2040, %v2036
  %v2217 = vpack.c.b16 %v2041, %v2037
  %v2218 = vpack.c.b16 %v2042, %v2038
  %v2219 = vpack.c.b16 %v2043, %v2039
  %v2220 = vpack.c.b16 %v2048, %v2044
  %v2221 = vpack.c.b16 %v2049, %v2045
  %v2222 = vpack.c.b16 %v2050, %v2046
  %v2223 = vpack.c.b16 %v2051, %v2047
  %v2224 = vpack.c.b16 %v2056, %v2052
  %v2225 = vpack.c.b16 %v2057, %v2053
  %v2226 = vpack.c.b16 %v2058, %v2054
  %v2227 = vpack.c.b16 %v2059, %v2055
  %v2228 = vpack.c.b16 %v2064, %v2060
  %v2229 = vpack.c.b16 %v2065, %v2061
  %v2230 = vpack.c.b16 %v2066, %v2062
  %v2231 = vpack.c.b16 %v2067, %v2063
  %v2232 = vpack.c.b16 %v2072, %v2068
  %v2233 = vpack.c.b16 %v2073, %v2069
  %v2234 = vpack.c.b16 %v2074, %v2070
  %v2235 = vpack.c.b16 %v2075, %v2071
  %v2236 = vpack.c.b16 %v2080, %v2076
  %v2237 = vpack.c.b16 %v2081, %v2077
  %v2238 = vpack.c.b16 %v2082, %v2078
  %v2239 = vpack.c.b16 %v2083, %v2079
  %v2240 = vpack.c.b16 %v2088, %v2084
  %v2241 = vpack.c.b16 %v2089, %v2085
  %v2242 = vpack.c.b16 %v2090, %v2086
  %v2243 = vpack.c.b16 %v2091, %v2087
  %v2244 = vpack.c.b16 %v2096, %v2092
  %v2245 = vpack.c.b16 %v2097, %v2093
  %v2246 = vpack.c.b16 %v2098, %v2094
  %v2247 = vpack.c.b16 %v2099, %v2095
  %v2248 = vpack.c.b16 %v2104, %v2100
  %v2249 = vpack.c.b16 %v2105, %v2101
  %v2250 = vpack.c.b16 %v2106, %v2102
  %v2251 = vpack.c.b16 %v2107, %v2103
  %v2252 = vpack.c.b16 %v2112, %v2108
  %v2253 = vpack.c.b16 %v2113, %v2109
  %v2254 = vpack.c.b16 %v2114, %v2110
  %v2255 = vpack.c.b16 %v2115, %v2111
  %v2256 = vpack.c.b16 %v2120, %v2116
  %v2257 = vpack.c.b16 %v2121, %v2117
  %v2258 = vpack.c.b16 %v2122, %v2118
  %v2259 = vpack.c.b16 %v2123, %v2119
  %v2260 = vpack.c.b16 %v2128, %v2124
  %v2261 = vpack.c.b16 %v2129, %v2125
  %v2262 = vpack.c.b16 %v2130, %v2126
  %v2263 = vpack.c.b16 %v2131, %v2127
  %v2264 = vpack.c.b16 %v2136, %v2132
  %v2265 = vpack.c.b16 %v2137, %v2133
  %v2266 = vpack.c.b16 %v2138, %v2134
  %v2267 = vpack.c.b16 %v2139, %v2135
  %2396 = vmatpush.bf16.msra.mxu0 %v2168
  %2397 = vmatpush.bf16.msra.mxu0 %v2164
  %2398 = vmatpush.bf16.msra.mxu0 %v2160
  %2399 = vmatpush.bf16.msra.mxu0 %v2156
  %2400 = vmatpush.bf16.msra.mxu0 %v2152
  %2401 = vmatpush.bf16.msra.mxu0 %v2148
  %2402 = vmatpush.bf16.msra.mxu0 %v2144
  %2403 = vmatpush.bf16.msra.mxu0 %v2140
  %2404 = vmatmul.bf16.gmra.mxu0 %v1620
  %v2405 = vpop.f32.mrf.mxu0
  %v2406 = vadd.f32 %v1752, %v2405
  %v2407 = vpop.f32.mrf.mxu0
  %v2408 = vadd.f32 %v1752, %v2407
  %2409 = vdwg.mxu0
  %2410 = vmatpush.bf16.msra.mxu0 %v2200
  %2411 = vmatpush.bf16.msra.mxu0 %v2196
  %2412 = vmatpush.bf16.msra.mxu0 %v2192
  %2413 = vmatpush.bf16.msra.mxu0 %v2188
  %2414 = vmatpush.bf16.msra.mxu0 %v2184
  %2415 = vmatpush.bf16.msra.mxu0 %v2180
  %2416 = vmatpush.bf16.msra.mxu0 %v2176
  %2417 = vmatpush.bf16.msra.mxu0 %v2172
  %2418 = vmatmul.bf16.gmra.mxu0 %v1621
  %v2419 = vpop.f32.mrf.mxu0
  %v2420 = vadd.f32 %v2406, %v2419
  %v2421 = vpop.f32.mrf.mxu0
  %v2422 = vadd.f32 %v2408, %v2421
  %2423 = vdwg.mxu0
  %2424 = vmatpush.bf16.msra.mxu0 %v2232
  %2425 = vmatpush.bf16.msra.mxu0 %v2228
  %2426 = vmatpush.bf16.msra.mxu0 %v2224
  %2427 = vmatpush.bf16.msra.mxu0 %v2220
  %2428 = vmatpush.bf16.msra.mxu0 %v2216
  %2429 = vmatpush.bf16.msra.mxu0 %v2212
  %2430 = vmatpush.bf16.msra.mxu0 %v2208
  %2431 = vmatpush.bf16.msra.mxu0 %v2204
  %2432 = vmatmul.bf16.gmra.mxu0 %v1622
  %v2433 = vpop.f32.mrf.mxu0
  %v2434 = vadd.f32 %v2420, %v2433
  %v2435 = vpop.f32.mrf.mxu0
  %v2436 = vadd.f32 %v2422, %v2435
  %2437 = vdwg.mxu0
  %2438 = vmatpush.bf16.msra.mxu0 %v2264
  %2439 = vmatpush.bf16.msra.mxu0 %v2260
  %2440 = vmatpush.bf16.msra.mxu0 %v2256
  %2441 = vmatpush.bf16.msra.mxu0 %v2252
  %2442 = vmatpush.bf16.msra.mxu0 %v2248
  %2443 = vmatpush.bf16.msra.mxu0 %v2244
  %2444 = vmatpush.bf16.msra.mxu0 %v2240
  %2445 = vmatpush.bf16.msra.mxu0 %v2236
  %2446 = vmatmul.bf16.gmra.mxu0 %v1623
  %v2447 = vpop.f32.mrf.mxu0
  %v2448 = vadd.f32 %v2434, %v2447
  %v2449 = vpop.f32.mrf.mxu0
  %v2450 = vadd.f32 %v2436, %v2449
  %2451 = vdwg.mxu0
  %2452 = vmatpush.bf16.msra.mxu0 %v2169
  %2453 = vmatpush.bf16.msra.mxu0 %v2165
  %2454 = vmatpush.bf16.msra.mxu0 %v2161
  %2455 = vmatpush.bf16.msra.mxu0 %v2157
  %2456 = vmatpush.bf16.msra.mxu0 %v2153
  %2457 = vmatpush.bf16.msra.mxu0 %v2149
  %2458 = vmatpush.bf16.msra.mxu0 %v2145
  %2459 = vmatpush.bf16.msra.mxu0 %v2141
  %2460 = vmatmul.bf16.gmra.mxu0 %v1620
  %v2461 = vpop.f32.mrf.mxu0
  %v2462 = vadd.f32 %v1753, %v2461
  %v2463 = vpop.f32.mrf.mxu0
  %v2464 = vadd.f32 %v1753, %v2463
  %2465 = vdwg.mxu0
  %2466 = vmatpush.bf16.msra.mxu0 %v2201
  %2467 = vmatpush.bf16.msra.mxu0 %v2197
  %2468 = vmatpush.bf16.msra.mxu0 %v2193
  %2469 = vmatpush.bf16.msra.mxu0 %v2189
  %2470 = vmatpush.bf16.msra.mxu0 %v2185
  %2471 = vmatpush.bf16.msra.mxu0 %v2181
  %2472 = vmatpush.bf16.msra.mxu0 %v2177
  %2473 = vmatpush.bf16.msra.mxu0 %v2173
  %2474 = vmatmul.bf16.gmra.mxu0 %v1621
  %v2475 = vpop.f32.mrf.mxu0
  %v2476 = vadd.f32 %v2462, %v2475
  %v2477 = vpop.f32.mrf.mxu0
  %v2478 = vadd.f32 %v2464, %v2477
  %2479 = vdwg.mxu0
  %2480 = vmatpush.bf16.msra.mxu0 %v2233
  %2481 = vmatpush.bf16.msra.mxu0 %v2229
  %2482 = vmatpush.bf16.msra.mxu0 %v2225
  %2483 = vmatpush.bf16.msra.mxu0 %v2221
  %2484 = vmatpush.bf16.msra.mxu0 %v2217
  %2485 = vmatpush.bf16.msra.mxu0 %v2213
  %2486 = vmatpush.bf16.msra.mxu0 %v2209
  %2487 = vmatpush.bf16.msra.mxu0 %v2205
  %2488 = vmatmul.bf16.gmra.mxu0 %v1622
  %v2489 = vpop.f32.mrf.mxu0
  %v2490 = vadd.f32 %v2476, %v2489
  %v2491 = vpop.f32.mrf.mxu0
  %v2492 = vadd.f32 %v2478, %v2491
  %2493 = vdwg.mxu0
  %2494 = vmatpush.bf16.msra.mxu0 %v2265
  %2495 = vmatpush.bf16.msra.mxu0 %v2261
  %2496 = vmatpush.bf16.msra.mxu0 %v2257
  %2497 = vmatpush.bf16.msra.mxu0 %v2253
  %2498 = vmatpush.bf16.msra.mxu0 %v2249
  %2499 = vmatpush.bf16.msra.mxu0 %v2245
  %2500 = vmatpush.bf16.msra.mxu0 %v2241
  %2501 = vmatpush.bf16.msra.mxu0 %v2237
  %2502 = vmatmul.bf16.gmra.mxu0 %v1623
  %v2503 = vpop.f32.mrf.mxu0
  %v2504 = vadd.f32 %v2490, %v2503
  %v2505 = vpop.f32.mrf.mxu0
  %v2506 = vadd.f32 %v2492, %v2505
  %2507 = vdwg.mxu0
  %2508 = vmatpush.bf16.msra.mxu0 %v2170
  %2509 = vmatpush.bf16.msra.mxu0 %v2166
  %2510 = vmatpush.bf16.msra.mxu0 %v2162
  %2511 = vmatpush.bf16.msra.mxu0 %v2158
  %2512 = vmatpush.bf16.msra.mxu0 %v2154
  %2513 = vmatpush.bf16.msra.mxu0 %v2150
  %2514 = vmatpush.bf16.msra.mxu0 %v2146
  %2515 = vmatpush.bf16.msra.mxu0 %v2142
  %2516 = vmatmul.bf16.gmra.mxu0 %v1620
  %v2517 = vpop.f32.mrf.mxu0
  %v2518 = vadd.f32 %v1754, %v2517
  %v2519 = vpop.f32.mrf.mxu0
  %v2520 = vadd.f32 %v1754, %v2519
  %2521 = vdwg.mxu0
  %2522 = vmatpush.bf16.msra.mxu0 %v2202
  %2523 = vmatpush.bf16.msra.mxu0 %v2198
  %2524 = vmatpush.bf16.msra.mxu0 %v2194
  %2525 = vmatpush.bf16.msra.mxu0 %v2190
  %2526 = vmatpush.bf16.msra.mxu0 %v2186
  %2527 = vmatpush.bf16.msra.mxu0 %v2182
  %2528 = vmatpush.bf16.msra.mxu0 %v2178
  %2529 = vmatpush.bf16.msra.mxu0 %v2174
  %2530 = vmatmul.bf16.gmra.mxu0 %v1621
  %v2531 = vpop.f32.mrf.mxu0
  %v2532 = vadd.f32 %v2518, %v2531
  %v2533 = vpop.f32.mrf.mxu0
  %v2534 = vadd.f32 %v2520, %v2533
  %2535 = vdwg.mxu0
  %2536 = vmatpush.bf16.msra.mxu0 %v2234
  %2537 = vmatpush.bf16.msra.mxu0 %v2230
  %2538 = vmatpush.bf16.msra.mxu0 %v2226
  %2539 = vmatpush.bf16.msra.mxu0 %v2222
  %2540 = vmatpush.bf16.msra.mxu0 %v2218
  %2541 = vmatpush.bf16.msra.mxu0 %v2214
  %2542 = vmatpush.bf16.msra.mxu0 %v2210
  %2543 = vmatpush.bf16.msra.mxu0 %v2206
  %2544 = vmatmul.bf16.gmra.mxu0 %v1622
  %v2545 = vpop.f32.mrf.mxu0
  %v2546 = vadd.f32 %v2532, %v2545
  %v2547 = vpop.f32.mrf.mxu0
  %v2548 = vadd.f32 %v2534, %v2547
  %2549 = vdwg.mxu0
  %2550 = vmatpush.bf16.msra.mxu0 %v2266
  %2551 = vmatpush.bf16.msra.mxu0 %v2262
  %2552 = vmatpush.bf16.msra.mxu0 %v2258
  %2553 = vmatpush.bf16.msra.mxu0 %v2254
  %2554 = vmatpush.bf16.msra.mxu0 %v2250
  %2555 = vmatpush.bf16.msra.mxu0 %v2246
  %2556 = vmatpush.bf16.msra.mxu0 %v2242
  %2557 = vmatpush.bf16.msra.mxu0 %v2238
  %2558 = vmatmul.bf16.gmra.mxu0 %v1623
  %v2559 = vpop.f32.mrf.mxu0
  %v2560 = vadd.f32 %v2546, %v2559
  %v2561 = vpop.f32.mrf.mxu0
  %v2562 = vadd.f32 %v2548, %v2561
  %2563 = vdwg.mxu0
  %2564 = vmatpush.bf16.msra.mxu0 %v2171
  %2565 = vmatpush.bf16.msra.mxu0 %v2167
  %2566 = vmatpush.bf16.msra.mxu0 %v2163
  %2567 = vmatpush.bf16.msra.mxu0 %v2159
  %2568 = vmatpush.bf16.msra.mxu0 %v2155
  %2569 = vmatpush.bf16.msra.mxu0 %v2151
  %2570 = vmatpush.bf16.msra.mxu0 %v2147
  %2571 = vmatpush.bf16.msra.mxu0 %v2143
  %2572 = vmatmul.bf16.gmra.mxu0 %v1620
  %v2573 = vpop.f32.mrf.mxu0
  %v2574 = vadd.f32 %v1755, %v2573
  %v2575 = vpop.f32.mrf.mxu0
  %v2576 = vadd.f32 %v1755, %v2575
  %2577 = vdwg.mxu0
  %2578 = vmatpush.bf16.msra.mxu0 %v2203
  %2579 = vmatpush.bf16.msra.mxu0 %v2199
  %2580 = vmatpush.bf16.msra.mxu0 %v2195
  %2581 = vmatpush.bf16.msra.mxu0 %v2191
  %2582 = vmatpush.bf16.msra.mxu0 %v2187
  %2583 = vmatpush.bf16.msra.mxu0 %v2183
  %2584 = vmatpush.bf16.msra.mxu0 %v2179
  %2585 = vmatpush.bf16.msra.mxu0 %v2175
  %2586 = vmatmul.bf16.gmra.mxu0 %v1621
  %v2587 = vpop.f32.mrf.mxu0
  %v2588 = vadd.f32 %v2574, %v2587
  %v2589 = vpop.f32.mrf.mxu0
  %v2590 = vadd.f32 %v2576, %v2589
  %2591 = vdwg.mxu0
  %2592 = vmatpush.bf16.msra.mxu0 %v2235
  %2593 = vmatpush.bf16.msra.mxu0 %v2231
  %2594 = vmatpush.bf16.msra.mxu0 %v2227
  %2595 = vmatpush.bf16.msra.mxu0 %v2223
  %2596 = vmatpush.bf16.msra.mxu0 %v2219
  %2597 = vmatpush.bf16.msra.mxu0 %v2215
  %2598 = vmatpush.bf16.msra.mxu0 %v2211
  %2599 = vmatpush.bf16.msra.mxu0 %v2207
  %2600 = vmatmul.bf16.gmra.mxu0 %v1622
  %v2601 = vpop.f32.mrf.mxu0
  %v2602 = vadd.f32 %v2588, %v2601
  %v2603 = vpop.f32.mrf.mxu0
  %v2604 = vadd.f32 %v2590, %v2603
  %2605 = vdwg.mxu0
  %2606 = vmatpush.bf16.msra.mxu0 %v2267
  %2607 = vmatpush.bf16.msra.mxu0 %v2263
  %2608 = vmatpush.bf16.msra.mxu0 %v2259
  %2609 = vmatpush.bf16.msra.mxu0 %v2255
  %2610 = vmatpush.bf16.msra.mxu0 %v2251
  %2611 = vmatpush.bf16.msra.mxu0 %v2247
  %2612 = vmatpush.bf16.msra.mxu0 %v2243
  %2613 = vmatpush.bf16.msra.mxu0 %v2239
  %2614 = vmatmul.bf16.gmra.mxu0 %v1623
  %v2615 = vpop.f32.mrf.mxu0
  %v2616 = vadd.f32 %v2602, %v2615
  %v2617 = vpop.f32.mrf.mxu0
  %v2618 = vadd.f32 %v2604, %v2617
  %2619 = vdwg.mxu0
  %2620 = vmatpush.msra.mxu0 %v38
  %2621 = vmatpush.msra.mxu0 %v37
  %2622 = vmatpush.msra.mxu0 %v36
  %2623 = vmatpush.msra.mxu0 %v35
  %2624 = vmatpush.msra.mxu0 %v34
  %2625 = vmatpush.msra.mxu0 %v33
  %2626 = vmatpush.msra.mxu0 %v32
  %2627 = vmatpush.msra.mxu0 %v31
  %2628 = vmatpush.msra.mxu0 %v30
  %2629 = vmatpush.msra.mxu0 %v29
  %2630 = vmatpush.msra.mxu0 %v28
  %2631 = vmatpush.msra.mxu0 %v27
  %2632 = vmatpush.msra.mxu0 %v26
  %2633 = vmatpush.msra.mxu0 %v25
  %2634 = vmatpush.msra.mxu0 %v24
  %2635 = vmatpush.msra.mxu0 %v23
  %2636 = vmatmul.f32.gmra.mxu0 %v2448
  %v2637 = vpop.f32.mrf.mxu0
  %v2638 = vadd.f32 0.0, %v2637
  %2639 = vmatmul.f32.gmra.mxu0 %v2450
  %v2640 = vpop.f32.mrf.mxu0
  %v2641 = vadd.f32 0.0, %v2640
  %2642 = vdwg.mxu0
  %2643 = vmatpush.msra.mxu0 %v54
  %2644 = vmatpush.msra.mxu0 %v53
  %2645 = vmatpush.msra.mxu0 %v52
  %2646 = vmatpush.msra.mxu0 %v51
  %2647 = vmatpush.msra.mxu0 %v50
  %2648 = vmatpush.msra.mxu0 %v49
  %2649 = vmatpush.msra.mxu0 %v48
  %2650 = vmatpush.msra.mxu0 %v47
  %2651 = vmatpush.msra.mxu0 %v46
  %2652 = vmatpush.msra.mxu0 %v45
  %2653 = vmatpush.msra.mxu0 %v44
  %2654 = vmatpush.msra.mxu0 %v43
  %2655 = vmatpush.msra.mxu0 %v42
  %2656 = vmatpush.msra.mxu0 %v41
  %2657 = vmatpush.msra.mxu0 %v40
  %2658 = vmatpush.msra.mxu0 %v39
  %2659 = vmatmul.f32.gmra.mxu0 %v2504
  %v2660 = vpop.f32.mrf.mxu0
  %v2661 = vadd.f32 %v2638, %v2660
  %2662 = vmatmul.f32.gmra.mxu0 %v2506
  %v2663 = vpop.f32.mrf.mxu0
  %v2664 = vadd.f32 %v2641, %v2663
  %2665 = vdwg.mxu0
  %2666 = vmatpush.msra.mxu0 %v70
  %2667 = vmatpush.msra.mxu0 %v69
  %2668 = vmatpush.msra.mxu0 %v68
  %2669 = vmatpush.msra.mxu0 %v67
  %2670 = vmatpush.msra.mxu0 %v66
  %2671 = vmatpush.msra.mxu0 %v65
  %2672 = vmatpush.msra.mxu0 %v64
  %2673 = vmatpush.msra.mxu0 %v63
  %2674 = vmatpush.msra.mxu0 %v62
  %2675 = vmatpush.msra.mxu0 %v61
  %2676 = vmatpush.msra.mxu0 %v60
  %2677 = vmatpush.msra.mxu0 %v59
  %2678 = vmatpush.msra.mxu0 %v58
  %2679 = vmatpush.msra.mxu0 %v57
  %2680 = vmatpush.msra.mxu0 %v56
  %2681 = vmatpush.msra.mxu0 %v55
  %2682 = vmatmul.f32.gmra.mxu0 %v2560
  %v2683 = vpop.f32.mrf.mxu0
  %v2684 = vadd.f32 %v2661, %v2683
  %2685 = vmatmul.f32.gmra.mxu0 %v2562
  %v2686 = vpop.f32.mrf.mxu0
  %v2687 = vadd.f32 %v2664, %v2686
  %2688 = vdwg.mxu0
  %2689 = vmatpush.msra.mxu0 %v86
  %2690 = vmatpush.msra.mxu0 %v85
  %2691 = vmatpush.msra.mxu0 %v84
  %2692 = vmatpush.msra.mxu0 %v83
  %2693 = vmatpush.msra.mxu0 %v82
  %2694 = vmatpush.msra.mxu0 %v81
  %2695 = vmatpush.msra.mxu0 %v80
  %2696 = vmatpush.msra.mxu0 %v79
  %2697 = vmatpush.msra.mxu0 %v78
  %2698 = vmatpush.msra.mxu0 %v77
  %2699 = vmatpush.msra.mxu0 %v76
  %2700 = vmatpush.msra.mxu0 %v75
  %2701 = vmatpush.msra.mxu0 %v74
  %2702 = vmatpush.msra.mxu0 %v73
  %2703 = vmatpush.msra.mxu0 %v72
  %2704 = vmatpush.msra.mxu0 %v71
  %2705 = vmatmul.f32.gmra.mxu0 %v2616
  %v2706 = vpop.f32.mrf.mxu0
  %v2707 = vadd.f32 %v2684, %v2706
  %2708 = vmatmul.f32.gmra.mxu0 %v2618
  %v2709 = vpop.f32.mrf.mxu0
  %v2710 = vadd.f32 %v2687, %v2709
  %2711 = vdwg.mxu0
  %v2712 = vmul.f32 %v2707, 0.015625
  %v2713 = vmul.f32 %v2710, 0.015625
  %v2715 = vsel %vm1197, %v2712, 0
  %v2718 = vsel %vm1197, %v2713, 0
  %2720 = vmatpush.msra.mxu0 0.0
  %2721 = vmatpush.msra.mxu0 0.0
  %2722 = vmatpush.msra.mxu0 0.0
  %2723 = vmatpush.msra.mxu0 0.0
  %2724 = vmatpush.msra.mxu0 0.0
  %2725 = vmatpush.msra.mxu0 0.0
  %2726 = vmatpush.msra.mxu0 0.0
  %2727 = vmatpush.msra.mxu0 0.0
  %2728 = vmatpush.msra.mxu0 0.0
  %2729 = vmatpush.msra.mxu0 0.0
  %2730 = vmatpush.msra.mxu0 0.0
  %2731 = vmatpush.msra.mxu0 0.0
  %2732 = vmatpush.msra.mxu0 0.0
  %2733 = vmatpush.msra.mxu0 0.0
  %2734 = vmatpush.msra.mxu0 0.0
  %2735 = vmatpush.msra.mxu0 %v87
  %2736 = vmatmul.f32.gmra.mxu0 %v2715
  %v2737 = vpop.f32.mrf.mxu0
  %v2738 = vadd.f32 0.0, %v2737
  %2739 = vmatmul.f32.gmra.mxu0 %v2718
  %v2740 = vpop.f32.mrf.mxu0
  %v2741 = vadd.f32 0.0, %v2740
  %2742 = vdwg.mxu0
  %2743 = vmatpush.msra.mxu0 0.0
  %2744 = vmatpush.msra.mxu0 0.0
  %2745 = vmatpush.msra.mxu0 0.0
  %2746 = vmatpush.msra.mxu0 0.0
  %2747 = vmatpush.msra.mxu0 0.0
  %2748 = vmatpush.msra.mxu0 0.0
  %2749 = vmatpush.msra.mxu0 0.0
  %2750 = vmatpush.msra.mxu0 0.0
  %2751 = vmatpush.msra.mxu0 0.0
  %2752 = vmatpush.msra.mxu0 0.0
  %2753 = vmatpush.msra.mxu0 0.0
  %2754 = vmatpush.msra.mxu0 0.0
  %2755 = vmatpush.msra.mxu0 0.0
  %2756 = vmatpush.msra.mxu0 0.0
  %2757 = vmatpush.msra.mxu0 0.0
  %2758 = vmatpush.msra.mxu0 %v88
  %2759 = vmatmul.f32.gmra.mxu0 %v2715
  %v2760 = vpop.f32.mrf.mxu0
  %v2761 = vadd.f32 0.0, %v2760
  %2762 = vmatmul.f32.gmra.mxu0 %v2718
  %v2763 = vpop.f32.mrf.mxu0
  %v2764 = vadd.f32 0.0, %v2763
  %2765 = vdwg.mxu0
  %2766 = vmatpush.msra.mxu0 0.0
  %2767 = vmatpush.msra.mxu0 0.0
  %2768 = vmatpush.msra.mxu0 0.0
  %2769 = vmatpush.msra.mxu0 0.0
  %2770 = vmatpush.msra.mxu0 0.0
  %2771 = vmatpush.msra.mxu0 0.0
  %2772 = vmatpush.msra.mxu0 0.0
  %2773 = vmatpush.msra.mxu0 0.0
  %2774 = vmatpush.msra.mxu0 0.0
  %2775 = vmatpush.msra.mxu0 0.0
  %2776 = vmatpush.msra.mxu0 0.0
  %2777 = vmatpush.msra.mxu0 0.0
  %2778 = vmatpush.msra.mxu0 0.0
  %2779 = vmatpush.msra.mxu0 0.0
  %2780 = vmatpush.msra.mxu0 0.0
  %2781 = vmatpush.msra.mxu0 %v89
  %2782 = vmatmul.f32.gmra.mxu0 %v2715
  %v2783 = vpop.f32.mrf.mxu0
  %v2784 = vadd.f32 0.0, %v2783
  %2785 = vmatmul.f32.gmra.mxu0 %v2718
  %v2786 = vpop.f32.mrf.mxu0
  %v2787 = vadd.f32 0.0, %v2786
  %2788 = vdwg.mxu0
  %2789 = vmatpush.msra.mxu0 0.0
  %2790 = vmatpush.msra.mxu0 0.0
  %2791 = vmatpush.msra.mxu0 0.0
  %2792 = vmatpush.msra.mxu0 0.0
  %2793 = vmatpush.msra.mxu0 0.0
  %2794 = vmatpush.msra.mxu0 0.0
  %2795 = vmatpush.msra.mxu0 0.0
  %2796 = vmatpush.msra.mxu0 0.0
  %2797 = vmatpush.msra.mxu0 0.0
  %2798 = vmatpush.msra.mxu0 0.0
  %2799 = vmatpush.msra.mxu0 0.0
  %2800 = vmatpush.msra.mxu0 0.0
  %2801 = vmatpush.msra.mxu0 0.0
  %2802 = vmatpush.msra.mxu0 0.0
  %2803 = vmatpush.msra.mxu0 0.0
  %2804 = vmatpush.msra.mxu0 %v90
  %2805 = vmatmul.f32.gmra.mxu0 %v2715
  %v2806 = vpop.f32.mrf.mxu0
  %v2807 = vadd.f32 0.0, %v2806
  %2808 = vmatmul.f32.gmra.mxu0 %v2718
  %v2809 = vpop.f32.mrf.mxu0
  %v2810 = vadd.f32 0.0, %v2809
  %2811 = vdwg.mxu0
  %v2812 = vsub.f32 %v2448, %v2738
  %v2813 = vsub.f32 %v2504, %v2761
  %v2814 = vsub.f32 %v2560, %v2784
  %v2815 = vsub.f32 %v2616, %v2807
  %v2816 = vsub.f32 %v2450, %v2741
  %v2817 = vsub.f32 %v2506, %v2764
  %v2818 = vsub.f32 %v2562, %v2787
  %v2819 = vsub.f32 %v2618, %v2810
  %v2820 = vmul.f32 %v2812, %v2812
  %v2821 = vmul.f32 %v2813, %v2813
  %v2822 = vmul.f32 %v2814, %v2814
  %v2823 = vmul.f32 %v2815, %v2815
  %v2824 = vmul.f32 %v2816, %v2816
  %v2825 = vmul.f32 %v2817, %v2817
  %v2826 = vmul.f32 %v2818, %v2818
  %v2827 = vmul.f32 %v2819, %v2819
  %2828 = vmatpush.msra.mxu0 %v38
  %2829 = vmatpush.msra.mxu0 %v37
  %2830 = vmatpush.msra.mxu0 %v36
  %2831 = vmatpush.msra.mxu0 %v35
  %2832 = vmatpush.msra.mxu0 %v34
  %2833 = vmatpush.msra.mxu0 %v33
  %2834 = vmatpush.msra.mxu0 %v32
  %2835 = vmatpush.msra.mxu0 %v31
  %2836 = vmatpush.msra.mxu0 %v30
  %2837 = vmatpush.msra.mxu0 %v29
  %2838 = vmatpush.msra.mxu0 %v28
  %2839 = vmatpush.msra.mxu0 %v27
  %2840 = vmatpush.msra.mxu0 %v26
  %2841 = vmatpush.msra.mxu0 %v25
  %2842 = vmatpush.msra.mxu0 %v24
  %2843 = vmatpush.msra.mxu0 %v23
  %2844 = vmatmul.f32.gmra.mxu0 %v2820
  %v2845 = vpop.f32.mrf.mxu0
  %v2846 = vadd.f32 0.0, %v2845
  %2847 = vmatmul.f32.gmra.mxu0 %v2824
  %v2848 = vpop.f32.mrf.mxu0
  %v2849 = vadd.f32 0.0, %v2848
  %2850 = vdwg.mxu0
  %2851 = vmatpush.msra.mxu0 %v54
  %2852 = vmatpush.msra.mxu0 %v53
  %2853 = vmatpush.msra.mxu0 %v52
  %2854 = vmatpush.msra.mxu0 %v51
  %2855 = vmatpush.msra.mxu0 %v50
  %2856 = vmatpush.msra.mxu0 %v49
  %2857 = vmatpush.msra.mxu0 %v48
  %2858 = vmatpush.msra.mxu0 %v47
  %2859 = vmatpush.msra.mxu0 %v46
  %2860 = vmatpush.msra.mxu0 %v45
  %2861 = vmatpush.msra.mxu0 %v44
  %2862 = vmatpush.msra.mxu0 %v43
  %2863 = vmatpush.msra.mxu0 %v42
  %2864 = vmatpush.msra.mxu0 %v41
  %2865 = vmatpush.msra.mxu0 %v40
  %2866 = vmatpush.msra.mxu0 %v39
  %2867 = vmatmul.f32.gmra.mxu0 %v2821
  %v2868 = vpop.f32.mrf.mxu0
  %v2869 = vadd.f32 %v2846, %v2868
  %2870 = vmatmul.f32.gmra.mxu0 %v2825
  %v2871 = vpop.f32.mrf.mxu0
  %v2872 = vadd.f32 %v2849, %v2871
  %2873 = vdwg.mxu0
  %2874 = vmatpush.msra.mxu0 %v70
  %2875 = vmatpush.msra.mxu0 %v69
  %2876 = vmatpush.msra.mxu0 %v68
  %2877 = vmatpush.msra.mxu0 %v67
  %2878 = vmatpush.msra.mxu0 %v66
  %2879 = vmatpush.msra.mxu0 %v65
  %2880 = vmatpush.msra.mxu0 %v64
  %2881 = vmatpush.msra.mxu0 %v63
  %2882 = vmatpush.msra.mxu0 %v62
  %2883 = vmatpush.msra.mxu0 %v61
  %2884 = vmatpush.msra.mxu0 %v60
  %2885 = vmatpush.msra.mxu0 %v59
  %2886 = vmatpush.msra.mxu0 %v58
  %2887 = vmatpush.msra.mxu0 %v57
  %2888 = vmatpush.msra.mxu0 %v56
  %2889 = vmatpush.msra.mxu0 %v55
  %2890 = vmatmul.f32.gmra.mxu0 %v2822
  %v2891 = vpop.f32.mrf.mxu0
  %v2892 = vadd.f32 %v2869, %v2891
  %2893 = vmatmul.f32.gmra.mxu0 %v2826
  %v2894 = vpop.f32.mrf.mxu0
  %v2895 = vadd.f32 %v2872, %v2894
  %2896 = vdwg.mxu0
  %2897 = vmatpush.msra.mxu0 %v86
  %2898 = vmatpush.msra.mxu0 %v85
  %2899 = vmatpush.msra.mxu0 %v84
  %2900 = vmatpush.msra.mxu0 %v83
  %2901 = vmatpush.msra.mxu0 %v82
  %2902 = vmatpush.msra.mxu0 %v81
  %2903 = vmatpush.msra.mxu0 %v80
  %2904 = vmatpush.msra.mxu0 %v79
  %2905 = vmatpush.msra.mxu0 %v78
  %2906 = vmatpush.msra.mxu0 %v77
  %2907 = vmatpush.msra.mxu0 %v76
  %2908 = vmatpush.msra.mxu0 %v75
  %2909 = vmatpush.msra.mxu0 %v74
  %2910 = vmatpush.msra.mxu0 %v73
  %2911 = vmatpush.msra.mxu0 %v72
  %2912 = vmatpush.msra.mxu0 %v71
  %2913 = vmatmul.f32.gmra.mxu0 %v2823
  %v2914 = vpop.f32.mrf.mxu0
  %v2915 = vadd.f32 %v2892, %v2914
  %2916 = vmatmul.f32.gmra.mxu0 %v2827
  %v2917 = vpop.f32.mrf.mxu0
  %v2918 = vadd.f32 %v2895, %v2917
  %2919 = vdwg.mxu0
  %v2920 = vmul.f32 %v2915, 0.015625
  %v2921 = vmul.f32 %v2918, 0.015625
  %v2923 = vsel %vm1197, %v2920, 0
  %v2926 = vsel %vm1197, %v2921, 0
  %2928 = vmatpush.msra.mxu0 0.0
  %2929 = vmatpush.msra.mxu0 0.0
  %2930 = vmatpush.msra.mxu0 0.0
  %2931 = vmatpush.msra.mxu0 0.0
  %2932 = vmatpush.msra.mxu0 0.0
  %2933 = vmatpush.msra.mxu0 0.0
  %2934 = vmatpush.msra.mxu0 0.0
  %2935 = vmatpush.msra.mxu0 0.0
  %2936 = vmatpush.msra.mxu0 0.0
  %2937 = vmatpush.msra.mxu0 0.0
  %2938 = vmatpush.msra.mxu0 0.0
  %2939 = vmatpush.msra.mxu0 0.0
  %2940 = vmatpush.msra.mxu0 0.0
  %2941 = vmatpush.msra.mxu0 0.0
  %2942 = vmatpush.msra.mxu0 0.0
  %2943 = vmatpush.msra.mxu0 %v87
  %2944 = vmatmul.f32.gmra.mxu0 %v2923
  %v2945 = vpop.f32.mrf.mxu0
  %v2946 = vadd.f32 1e-05, %v2945
  %2947 = vmatmul.f32.gmra.mxu0 %v2926
  %v2948 = vpop.f32.mrf.mxu0
  %v2949 = vadd.f32 1e-05, %v2948
  %2950 = vdwg.mxu0
  %2951 = vmatpush.msra.mxu0 0.0
  %2952 = vmatpush.msra.mxu0 0.0
  %2953 = vmatpush.msra.mxu0 0.0
  %2954 = vmatpush.msra.mxu0 0.0
  %2955 = vmatpush.msra.mxu0 0.0
  %2956 = vmatpush.msra.mxu0 0.0
  %2957 = vmatpush.msra.mxu0 0.0
  %2958 = vmatpush.msra.mxu0 0.0
  %2959 = vmatpush.msra.mxu0 0.0
  %2960 = vmatpush.msra.mxu0 0.0
  %2961 = vmatpush.msra.mxu0 0.0
  %2962 = vmatpush.msra.mxu0 0.0
  %2963 = vmatpush.msra.mxu0 0.0
  %2964 = vmatpush.msra.mxu0 0.0
  %2965 = vmatpush.msra.mxu0 0.0
  %2966 = vmatpush.msra.mxu0 %v88
  %2967 = vmatmul.f32.gmra.mxu0 %v2923
  %v2968 = vpop.f32.mrf.mxu0
  %v2969 = vadd.f32 1e-05, %v2968
  %2970 = vmatmul.f32.gmra.mxu0 %v2926
  %v2971 = vpop.f32.mrf.mxu0
  %v2972 = vadd.f32 1e-05, %v2971
  %2973 = vdwg.mxu0
  %2974 = vmatpush.msra.mxu0 0.0
  %2975 = vmatpush.msra.mxu0 0.0
  %2976 = vmatpush.msra.mxu0 0.0
  %2977 = vmatpush.msra.mxu0 0.0
  %2978 = vmatpush.msra.mxu0 0.0
  %2979 = vmatpush.msra.mxu0 0.0
  %2980 = vmatpush.msra.mxu0 0.0
  %2981 = vmatpush.msra.mxu0 0.0
  %2982 = vmatpush.msra.mxu0 0.0
  %2983 = vmatpush.msra.mxu0 0.0
  %2984 = vmatpush.msra.mxu0 0.0
  %2985 = vmatpush.msra.mxu0 0.0
  %2986 = vmatpush.msra.mxu0 0.0
  %2987 = vmatpush.msra.mxu0 0.0
  %2988 = vmatpush.msra.mxu0 0.0
  %2989 = vmatpush.msra.mxu0 %v89
  %2990 = vmatmul.f32.gmra.mxu0 %v2923
  %v2991 = vpop.f32.mrf.mxu0
  %v2992 = vadd.f32 1e-05, %v2991
  %2993 = vmatmul.f32.gmra.mxu0 %v2926
  %v2994 = vpop.f32.mrf.mxu0
  %v2995 = vadd.f32 1e-05, %v2994
  %2996 = vdwg.mxu0
  %2997 = vmatpush.msra.mxu0 0.0
  %2998 = vmatpush.msra.mxu0 0.0
  %2999 = vmatpush.msra.mxu0 0.0
  %3000 = vmatpush.msra.mxu0 0.0
  %3001 = vmatpush.msra.mxu0 0.0
  %3002 = vmatpush.msra.mxu0 0.0
  %3003 = vmatpush.msra.mxu0 0.0
  %3004 = vmatpush.msra.mxu0 0.0
  %3005 = vmatpush.msra.mxu0 0.0
  %3006 = vmatpush.msra.mxu0 0.0
  %3007 = vmatpush.msra.mxu0 0.0
  %3008 = vmatpush.msra.mxu0 0.0
  %3009 = vmatpush.msra.mxu0 0.0
  %3010 = vmatpush.msra.mxu0 0.0
  %3011 = vmatpush.msra.mxu0 0.0
  %3012 = vmatpush.msra.mxu0 %v90
  %3013 = vmatmul.f32.gmra.mxu0 %v2923
  %v3014 = vpop.f32.mrf.mxu0
  %v3015 = vadd.f32 1e-05, %v3014
  %3016 = vmatmul.f32.gmra.mxu0 %v2926
  %v3017 = vpop.f32.mrf.mxu0
  %v3018 = vadd.f32 1e-05, %v3017
  %3019 = vdwg.mxu0
  %v3020 = vrsqrt.pop %v2946
  %v3021 = vmul.f32 %v3020, %v2946
  %v3022 = vmul.f32 %v3021, %v3020
  %v3023 = vmul.f32 0.5, %v3022
  %v3024 = vsub.f32 1.5, %v3023
  %v3025 = vmul.f32 %v3020, %v3024
  %vm3026 = vweird.f32 %v2946
  %vm3027 = vweird.f32 %v3020
  %vm3028 = vmor %vm3026, %vm3027
  %v3029 = vsel %vm3028, %v3020, %v3025
  %v3030 = vrsqrt.pop %v2969
  %v3031 = vmul.f32 %v3030, %v2969
  %v3032 = vmul.f32 %v3031, %v3030
  %v3033 = vmul.f32 0.5, %v3032
  %v3034 = vsub.f32 1.5, %v3033
  %v3035 = vmul.f32 %v3030, %v3034
  %vm3036 = vweird.f32 %v2969
  %vm3037 = vweird.f32 %v3030
  %vm3038 = vmor %vm3036, %vm3037
  %v3039 = vsel %vm3038, %v3030, %v3035
  %v3040 = vrsqrt.pop %v2992
  %v3041 = vmul.f32 %v3040, %v2992
  %v3042 = vmul.f32 %v3041, %v3040
  %v3043 = vmul.f32 0.5, %v3042
  %v3044 = vsub.f32 1.5, %v3043
  %v3045 = vmul.f32 %v3040, %v3044
  %vm3046 = vweird.f32 %v2992
  %vm3047 = vweird.f32 %v3040
  %vm3048 = vmor %vm3046, %vm3047
  %v3049 = vsel %vm3048, %v3040, %v3045
  %v3050 = vrsqrt.pop %v3015
  %v3051 = vmul.f32 %v3050, %v3015
  %v3052 = vmul.f32 %v3051, %v3050
  %v3053 = vmul.f32 0.5, %v3052
  %v3054 = vsub.f32 1.5, %v3053
  %v3055 = vmul.f32 %v3050, %v3054
  %vm3056 = vweird.f32 %v3015
  %vm3057 = vweird.f32 %v3050
  %vm3058 = vmor %vm3056, %vm3057
  %v3059 = vsel %vm3058, %v3050, %v3055
  %v3060 = vrsqrt.pop %v2949
  %v3061 = vmul.f32 %v3060, %v2949
  %v3062 = vmul.f32 %v3061, %v3060
  %v3063 = vmul.f32 0.5, %v3062
  %v3064 = vsub.f32 1.5, %v3063
  %v3065 = vmul.f32 %v3060, %v3064
  %vm3066 = vweird.f32 %v2949
  %vm3067 = vweird.f32 %v3060
  %vm3068 = vmor %vm3066, %vm3067
  %v3069 = vsel %vm3068, %v3060, %v3065
  %v3070 = vrsqrt.pop %v2972
  %v3071 = vmul.f32 %v3070, %v2972
  %v3072 = vmul.f32 %v3071, %v3070
  %v3073 = vmul.f32 0.5, %v3072
  %v3074 = vsub.f32 1.5, %v3073
  %v3075 = vmul.f32 %v3070, %v3074
  %vm3076 = vweird.f32 %v2972
  %vm3077 = vweird.f32 %v3070
  %vm3078 = vmor %vm3076, %vm3077
  %v3079 = vsel %vm3078, %v3070, %v3075
  %v3080 = vrsqrt.pop %v2995
  %v3081 = vmul.f32 %v3080, %v2995
  %v3082 = vmul.f32 %v3081, %v3080
  %v3083 = vmul.f32 0.5, %v3082
  %v3084 = vsub.f32 1.5, %v3083
  %v3085 = vmul.f32 %v3080, %v3084
  %vm3086 = vweird.f32 %v2995
  %vm3087 = vweird.f32 %v3080
  %vm3088 = vmor %vm3086, %vm3087
  %v3089 = vsel %vm3088, %v3080, %v3085
  %v3090 = vrsqrt.pop %v3018
  %v3091 = vmul.f32 %v3090, %v3018
  %v3092 = vmul.f32 %v3091, %v3090
  %v3093 = vmul.f32 0.5, %v3092
  %v3094 = vsub.f32 1.5, %v3093
  %v3095 = vmul.f32 %v3090, %v3094
  %vm3096 = vweird.f32 %v3018
  %vm3097 = vweird.f32 %v3090
  %vm3098 = vmor %vm3096, %vm3097
  %v3099 = vsel %vm3098, %v3090, %v3095
  %v3100 = vmul.f32 %v2812, %v3029
  %v3101 = vmul.f32 %v2813, %v3039
  %v3102 = vmul.f32 %v2814, %v3049
  %v3103 = vmul.f32 %v2815, %v3059
  %v3104 = vmul.f32 %v2816, %v3069
  %v3105 = vmul.f32 %v2817, %v3079
  %v3106 = vmul.f32 %v2818, %v3089
  %v3107 = vmul.f32 %v2819, %v3099
  %vm3108 = vcmp.ge.f32.partialorder %v3100, 0.0
  %vm3109 = vcmp.ge.f32.partialorder %v3101, 0.0
  %vm3110 = vcmp.ge.f32.partialorder %v3102, 0.0
  %vm3111 = vcmp.ge.f32.partialorder %v3103, 0.0
  %vm3112 = vcmp.ge.f32.partialorder %v3104, 0.0
  %vm3113 = vcmp.ge.f32.partialorder %v3105, 0.0
  %vm3114 = vcmp.ge.f32.partialorder %v3106, 0.0
  %vm3115 = vcmp.ge.f32.partialorder %v3107, 0.0
  %v3116 = vperm.slane %v91, 4
  %v3117 = vperm.slane %v92, 4
  %v3118 = vperm.slane %v93, 4
  %v3119 = vperm.slane %v94, 4
  %v3120 = vmul.f32 %v3116, %v3100
  %v3121 = vmul.f32 %v3117, %v3101
  %v3122 = vmul.f32 %v3118, %v3102
  %v3123 = vmul.f32 %v3119, %v3103
  %v3124 = vmul.f32 %v3116, %v3104
  %v3125 = vmul.f32 %v3117, %v3105
  %v3126 = vmul.f32 %v3118, %v3106
  %v3127 = vmul.f32 %v3119, %v3107
  %v3128 = vsel %vm3108, %v3100, %v3120
  %v3129 = vsel %vm3109, %v3101, %v3121
  %v3130 = vsel %vm3110, %v3102, %v3122
  %v3131 = vsel %vm3111, %v3103, %v3123
  %v3132 = vsel %vm3112, %v3104, %v3124
  %v3133 = vsel %vm3113, %v3105, %v3125
  %v3134 = vsel %vm3114, %v3106, %v3126
  %v3135 = vsel %vm3115, %v3107, %v3127
  %v3136 = vadd.f32 %v3128, %v95
  %v3137 = vadd.f32 %v3129, %v96
  %v3138 = vadd.f32 %v3130, %v97
  %v3139 = vadd.f32 %v3131, %v98
  %v3140 = vadd.f32 %v3132, %v99
  %v3141 = vadd.f32 %v3133, %v100
  %v3142 = vadd.f32 %v3134, %v101
  %v3143 = vadd.f32 %v3135, %v102
  %3144 = vst [vmem:[%s6] sm:$0xff] %v3136
  %3145 = vst [vmem:[%s6 + $0x8] sm:$0xff] %v3137
  %3146 = vst [vmem:[%s6 + $0x10] sm:$0xff] %v3138
  %3147 = vst [vmem:[%s6 + $0x18] sm:$0xff] %v3139
  %3148 = vst [vmem:[%s6 + $0x20] sm:$0xff] %v3140
  %3149 = vst [vmem:[%s6 + $0x28] sm:$0xff] %v3141
  %3150 = vst [vmem:[%s6 + $0x30] sm:$0xff] %v3142
  %3151 = vst [vmem:[%s6 + $0x38] sm:$0xff] %v3143
  // Predicated region
  $region26: #{_lambda_.4} parent=0 // pred_check
    _
  $region27: #{_lambda_.4} parent=0 // pred_check_branch
    %3153 = sbr.rel (0) target = $region29
  $region28: #{_lambda_.4} parent=0 // pred_region
    _
  $region29: #{_lambda_.4} parent=0 // pred_fallthru
    _
  // Predicated region
  $region30: #{_lambda_.4} parent=0 // pred_check
    _
  $region31: #{_lambda_.4} parent=0 // pred_check_branch
    %3155 = sbr.rel (0) target = $region33
  $region32: #{_lambda_.4} parent=0 // pred_region
    _
  $region33: #{_lambda_.4} parent=0 // pred_fallthru
    _

// kernel: _lambda_.3
$region0: #{_lambda_.3}
  #allocation0 [shape = 'u32[]', space=smem, size = 0x4, offset = 0x4, fixed_abs, tag = 'smem constant byte address 0x4 - core index']
  #allocation1 [shape = 'u32[72,128]{1,0:T(1,128)}', space=vmem, size = 0x9000, scoped, tag = 'internal scratch']
  %s0 = inlined_call_operand.vmem [shape: f32[16,1024], index: 0, kind: input, shape index: {}]
  %s1 = inlined_call_operand.vmem [shape: bf16[1024,512], index: 1, kind: input, shape index: {}]
  %s2 = inlined_call_operand.hbm [shape: bf16[1024,512], index: 2, kind: input, shape index: {}]
  %s3 = inlined_call_operand.vmem [shape: bf16[512,512], index: 3, kind: input, shape index: {}]
  %s4 = inlined_call_operand.vmem [shape: f32[512,8], index: 4, kind: input, shape index: {}]
  %s5 = inlined_call_operand.vmem [shape: f32[8,512], index: 5, kind: input, shape index: {}]
  %s6 = inlined_call_operand.vmem [shape: f32[5,512], index: 6, kind: input, shape index: {}]
  %s7 = inlined_call_operand.vmem [shape: f32[16,512], index: 7, kind: output, shape index: {}]
  %s8 = sld [smem:[#allocation0]]
  $region42: #{_lambda_.3} parent=0
    _
  %s10 = ssub.s32 1, %s8
  %s11 = scalar_select 0, %s10, %s8
  $region1: #{_lambda_.3} parent=0
    #allocation2 [shape = 'u8[1048576]{0}', space=vmem, size = 0x100000, scoped, tag = 'input window, operand 2, single buffered']
    #allocation3 [shape = 's32[1]{0}', space=sflag, size = 0x4, scoped, tag = 'scoped memory for _lambda_.3']
    %12 = vsyncpa [#allocation3], 0
    // Predicated region
    $region2: #{_lambda_.3} parent=1 // pred_check
      _
    $region3: #{_lambda_.3} parent=1 // pred_check_branch
      %14 = sbr.rel (0) target = $region5
    $region4: #{_lambda_.3} parent=1 // pred_region
      _
    $region5: #{_lambda_.3} parent=1 // pred_fallthru
      _
    // Predicated region
    $region6: #{_lambda_.3} parent=1 // pred_check
      _
    $region7: #{_lambda_.3} parent=1 // pred_check_branch
      %16 = sbr.rel (0) target = $region9
    $region8: #{_lambda_.3} parent=1 // pred_region
      _
    $region9: #{_lambda_.3} parent=1 // pred_fallthru
      _
    // Predicated region
    $region10: #{_lambda_.3} parent=1 // pred_check
      _
    $region11: #{_lambda_.3} parent=1 // pred_check_branch
      %18 = sbr.rel (0) target = $region13
    $region12: #{_lambda_.3} parent=1 // pred_region
      %20 = vsyncadd [#allocation3], 0
      %s21 = sshll.u32 %s2, 4
      %s22 = int_to_ptr.hbm [resolvable:$true] %s21
      %s23 = sshll.u32 [#allocation2], 4
      %s24 = int_to_ptr.vmem [resolvable:$true] %s23
      %29 = dma.hbm_to_vmem [thread:$0]  %s22, 32768, %s24, [#allocation3], 256, 256, 16
    $region13: #{_lambda_.3} parent=1 // pred_fallthru
      _
    // Predicated region
    $region14: #{_lambda_.3} parent=1 // pred_check
      _
    $region15: #{_lambda_.3} parent=1 // pred_check_branch
      %31 = sbr.rel (0) target = $region17
    $region16: #{_lambda_.3} parent=1 // pred_region
      _
    $region17: #{_lambda_.3} parent=1 // pred_fallthru
      _
    // Predicated region
    $region18: #{_lambda_.3} parent=1 // pred_check
      _
    $region19: #{_lambda_.3} parent=1 // pred_check_branch
      %33 = sbr.rel (0) target = $region21
    $region20: #{_lambda_.3} parent=1 // pred_region
      _
    $region21: #{_lambda_.3} parent=1 // pred_fallthru
      _
    // Predicated region
    $region22: #{_lambda_.3} parent=1 // pred_check
      _
    $region23: #{_lambda_.3} parent=1 // pred_check_branch
      %35 = sbr.rel (0) target = $region25
    $region24: #{_lambda_.3} parent=1 // pred_region
      _
    $region25: #{_lambda_.3} parent=1 // pred_fallthru
      _
    // Predicated region
    $region26: #{_lambda_.3} parent=1 // pred_check
      _
    $region27: #{_lambda_.3} parent=1 // pred_check_branch
      %37 = sbr.rel (0) target = $region29
    $region28: #{_lambda_.3} parent=1 // pred_region
      _
    $region29: #{_lambda_.3} parent=1 // pred_fallthru
      _
    // Predicated region
    $region30: #{_lambda_.3} parent=1 // pred_check
      _
    $region31: #{_lambda_.3} parent=1 // pred_check_branch
      %39 = sbr.rel (0) target = $region33
    $region32: #{_lambda_.3} parent=1 // pred_region
      %41 = dma.done [#allocation3], 32768
    $region33: #{_lambda_.3} parent=1 // pred_fallthru
      _
    %v42 = vld [vmem:[%s4] sm:$0xff]
    %v43 = vld [vmem:[%s4 + $0x8] sm:$0xff]
    %v44 = vld [vmem:[%s4 + $0x10] sm:$0xff]
    %v45 = vld [vmem:[%s4 + $0x18] sm:$0xff]
    %v46 = vld [vmem:[%s4 + $0x20] sm:$0xff]
    %v47 = vld [vmem:[%s4 + $0x28] sm:$0xff]
    %v48 = vld [vmem:[%s4 + $0x30] sm:$0xff]
    %v49 = vld [vmem:[%s4 + $0x38] sm:$0xff]
    %v50 = vld [vmem:[%s4 + $0x40] sm:$0xff]
    %v51 = vld [vmem:[%s4 + $0x48] sm:$0xff]
    %v52 = vld [vmem:[%s4 + $0x50] sm:$0xff]
    %v53 = vld [vmem:[%s4 + $0x58] sm:$0xff]
    %v54 = vld [vmem:[%s4 + $0x60] sm:$0xff]
    %v55 = vld [vmem:[%s4 + $0x68] sm:$0xff]
    %v56 = vld [vmem:[%s4 + $0x70] sm:$0xff]
    %v57 = vld [vmem:[%s4 + $0x78] sm:$0xff]
    %v58 = vld [vmem:[%s4 + $0x80] sm:$0xff]
    %v59 = vld [vmem:[%s4 + $0x88] sm:$0xff]
    %v60 = vld [vmem:[%s4 + $0x90] sm:$0xff]
    %v61 = vld [vmem:[%s4 + $0x98] sm:$0xff]
    %v62 = vld [vmem:[%s4 + $0xa0] sm:$0xff]
    %v63 = vld [vmem:[%s4 + $0xa8] sm:$0xff]
    %v64 = vld [vmem:[%s4 + $0xb0] sm:$0xff]
    %v65 = vld [vmem:[%s4 + $0xb8] sm:$0xff]
    %v66 = vld [vmem:[%s4 + $0xc0] sm:$0xff]
    %v67 = vld [vmem:[%s4 + $0xc8] sm:$0xff]
    %v68 = vld [vmem:[%s4 + $0xd0] sm:$0xff]
    %v69 = vld [vmem:[%s4 + $0xd8] sm:$0xff]
    %v70 = vld [vmem:[%s4 + $0xe0] sm:$0xff]
    %v71 = vld [vmem:[%s4 + $0xe8] sm:$0xff]
    %v72 = vld [vmem:[%s4 + $0xf0] sm:$0xff]
    %v73 = vld [vmem:[%s4 + $0xf8] sm:$0xff]
    %v74 = vld [vmem:[%s4 + $0x100] sm:$0xff]
    %v75 = vld [vmem:[%s4 + $0x108] sm:$0xff]
    %v76 = vld [vmem:[%s4 + $0x110] sm:$0xff]
    %v77 = vld [vmem:[%s4 + $0x118] sm:$0xff]
    %v78 = vld [vmem:[%s4 + $0x120] sm:$0xff]
    %v79 = vld [vmem:[%s4 + $0x128] sm:$0xff]
    %v80 = vld [vmem:[%s4 + $0x130] sm:$0xff]
    %v81 = vld [vmem:[%s4 + $0x138] sm:$0xff]
    %v82 = vld [vmem:[%s4 + $0x140] sm:$0xff]
    %v83 = vld [vmem:[%s4 + $0x148] sm:$0xff]
    %v84 = vld [vmem:[%s4 + $0x150] sm:$0xff]
    %v85 = vld [vmem:[%s4 + $0x158] sm:$0xff]
    %v86 = vld [vmem:[%s4 + $0x160] sm:$0xff]
    %v87 = vld [vmem:[%s4 + $0x168] sm:$0xff]
    %v88 = vld [vmem:[%s4 + $0x170] sm:$0xff]
    %v89 = vld [vmem:[%s4 + $0x178] sm:$0xff]
    %v90 = vld [vmem:[%s4 + $0x180] sm:$0xff]
    %v91 = vld [vmem:[%s4 + $0x188] sm:$0xff]
    %v92 = vld [vmem:[%s4 + $0x190] sm:$0xff]
    %v93 = vld [vmem:[%s4 + $0x198] sm:$0xff]
    %v94 = vld [vmem:[%s4 + $0x1a0] sm:$0xff]
    %v95 = vld [vmem:[%s4 + $0x1a8] sm:$0xff]
    %v96 = vld [vmem:[%s4 + $0x1b0] sm:$0xff]
    %v97 = vld [vmem:[%s4 + $0x1b8] sm:$0xff]
    %v98 = vld [vmem:[%s4 + $0x1c0] sm:$0xff]
    %v99 = vld [vmem:[%s4 + $0x1c8] sm:$0xff]
    %v100 = vld [vmem:[%s4 + $0x1d0] sm:$0xff]
    %v101 = vld [vmem:[%s4 + $0x1d8] sm:$0xff]
    %v102 = vld [vmem:[%s4 + $0x1e0] sm:$0xff]
    %v103 = vld [vmem:[%s4 + $0x1e8] sm:$0xff]
    %v104 = vld [vmem:[%s4 + $0x1f0] sm:$0xff]
    %v105 = vld [vmem:[%s4 + $0x1f8] sm:$0xff]
    %v106 = vld [vmem:[%s5] sm:$0xff]
    %v107 = vld [vmem:[%s5 + $0x8] sm:$0xff]
    %v108 = vld [vmem:[%s5 + $0x10] sm:$0xff]
    %v109 = vld [vmem:[%s5 + $0x18] sm:$0xff]
    %v110 = vld [vmem:[%s6] sm:$0x1f]
    %v111 = vld [vmem:[%s6 + $0x8] sm:$0x1f]
    %v112 = vld [vmem:[%s6 + $0x10] sm:$0x1f]
    %v113 = vld [vmem:[%s6 + $0x18] sm:$0x1f]
    %v114 = vld [vmem:[%s0] sm:$0xff]
    %v115 = vld [vmem:[%s0 + $0x8] sm:$0xff]
    %v116 = vld [vmem:[%s0 + $0x10] sm:$0xff]
    %v117 = vld [vmem:[%s0 + $0x18] sm:$0xff]
    %v118 = vld [vmem:[%s0 + $0x20] sm:$0xff]
    %v119 = vld [vmem:[%s0 + $0x28] sm:$0xff]
    %v120 = vld [vmem:[%s0 + $0x30] sm:$0xff]
    %v121 = vld [vmem:[%s0 + $0x38] sm:$0xff]
    %v122 = vld [vmem:[%s0 + $0x40] sm:$0xff]
    %v123 = vld [vmem:[%s0 + $0x48] sm:$0xff]
    %v124 = vld [vmem:[%s0 + $0x50] sm:$0xff]
    %v125 = vld [vmem:[%s0 + $0x58] sm:$0xff]
    %v126 = vld [vmem:[%s0 + $0x60] sm:$0xff]
    %v127 = vld [vmem:[%s0 + $0x68] sm:$0xff]
    %v128 = vld [vmem:[%s0 + $0x70] sm:$0xff]
    %v129 = vld [vmem:[%s0 + $0x78] sm:$0xff]
    %v130 = vpack.c.bf16 %v122, %v114
    %v131 = vpack.c.bf16 %v123, %v115
    %v132 = vpack.c.bf16 %v124, %v116
    %v133 = vpack.c.bf16 %v125, %v117
    %v134 = vpack.c.bf16 %v126, %v118
    %v135 = vpack.c.bf16 %v127, %v119
    %v136 = vpack.c.bf16 %v128, %v120
    %v137 = vpack.c.bf16 %v129, %v121
    %v138 = vld [vmem:[%s1] sm:$0xff]
    %v139 = vld [vmem:[%s1 + $0x8] sm:$0xff]
    %v140 = vld [vmem:[%s1 + $0x10] sm:$0xff]
    %v141 = vld [vmem:[%s1 + $0x18] sm:$0xff]
    %v142 = vld [vmem:[%s1 + $0x20] sm:$0xff]
    %v143 = vld [vmem:[%s1 + $0x28] sm:$0xff]
    %v144 = vld [vmem:[%s1 + $0x30] sm:$0xff]
    %v145 = vld [vmem:[%s1 + $0x38] sm:$0xff]
    %v146 = vld [vmem:[%s1 + $0x40] sm:$0xff]
    %v147 = vld [vmem:[%s1 + $0x48] sm:$0xff]
    %v148 = vld [vmem:[%s1 + $0x50] sm:$0xff]
    %v149 = vld [vmem:[%s1 + $0x58] sm:$0xff]
    %v150 = vld [vmem:[%s1 + $0x60] sm:$0xff]
    %v151 = vld [vmem:[%s1 + $0x68] sm:$0xff]
    %v152 = vld [vmem:[%s1 + $0x70] sm:$0xff]
    %v153 = vld [vmem:[%s1 + $0x78] sm:$0xff]
    %v154 = vld [vmem:[%s1 + $0x80] sm:$0xff]
    %v155 = vld [vmem:[%s1 + $0x88] sm:$0xff]
    %v156 = vld [vmem:[%s1 + $0x90] sm:$0xff]
    %v157 = vld [vmem:[%s1 + $0x98] sm:$0xff]
    %v158 = vld [vmem:[%s1 + $0xa0] sm:$0xff]
    %v159 = vld [vmem:[%s1 + $0xa8] sm:$0xff]
    %v160 = vld [vmem:[%s1 + $0xb0] sm:$0xff]
    %v161 = vld [vmem:[%s1 + $0xb8] sm:$0xff]
    %v162 = vld [vmem:[%s1 + $0xc0] sm:$0xff]
    %v163 = vld [vmem:[%s1 + $0xc8] sm:$0xff]
    %v164 = vld [vmem:[%s1 + $0xd0] sm:$0xff]
    %v165 = vld [vmem:[%s1 + $0xd8] sm:$0xff]
    %v166 = vld [vmem:[%s1 + $0xe0] sm:$0xff]
    %v167 = vld [vmem:[%s1 + $0xe8] sm:$0xff]
    %v168 = vld [vmem:[%s1 + $0xf0] sm:$0xff]
    %v169 = vld [vmem:[%s1 + $0xf8] sm:$0xff]
    %v170 = vld [vmem:[%s1 + $0x100] sm:$0xff]
    %v171 = vld [vmem:[%s1 + $0x108] sm:$0xff]
    %v172 = vld [vmem:[%s1 + $0x110] sm:$0xff]
    %v173 = vld [vmem:[%s1 + $0x118] sm:$0xff]
    %v174 = vld [vmem:[%s1 + $0x120] sm:$0xff]
    %v175 = vld [vmem:[%s1 + $0x128] sm:$0xff]
    %v176 = vld [vmem:[%s1 + $0x130] sm:$0xff]
    %v177 = vld [vmem:[%s1 + $0x138] sm:$0xff]
    %v178 = vld [vmem:[%s1 + $0x140] sm:$0xff]
    %v179 = vld [vmem:[%s1 + $0x148] sm:$0xff]
    %v180 = vld [vmem:[%s1 + $0x150] sm:$0xff]
    %v181 = vld [vmem:[%s1 + $0x158] sm:$0xff]
    %v182 = vld [vmem:[%s1 + $0x160] sm:$0xff]
    %v183 = vld [vmem:[%s1 + $0x168] sm:$0xff]
    %v184 = vld [vmem:[%s1 + $0x170] sm:$0xff]
    %v185 = vld [vmem:[%s1 + $0x178] sm:$0xff]
    %v186 = vld [vmem:[%s1 + $0x180] sm:$0xff]
    %v187 = vld [vmem:[%s1 + $0x188] sm:$0xff]
    %v188 = vld [vmem:[%s1 + $0x190] sm:$0xff]
    %v189 = vld [vmem:[%s1 + $0x198] sm:$0xff]
    %v190 = vld [vmem:[%s1 + $0x1a0] sm:$0xff]
    %v191 = vld [vmem:[%s1 + $0x1a8] sm:$0xff]
    %v192 = vld [vmem:[%s1 + $0x1b0] sm:$0xff]
    %v193 = vld [vmem:[%s1 + $0x1b8] sm:$0xff]
    %v194 = vld [vmem:[%s1 + $0x1c0] sm:$0xff]
    %v195 = vld [vmem:[%s1 + $0x1c8] sm:$0xff]
    %v196 = vld [vmem:[%s1 + $0x1d0] sm:$0xff]
    %v197 = vld [vmem:[%s1 + $0x1d8] sm:$0xff]
    %v198 = vld [vmem:[%s1 + $0x1e0] sm:$0xff]
    %v199 = vld [vmem:[%s1 + $0x1e8] sm:$0xff]
    %v200 = vld [vmem:[%s1 + $0x1f0] sm:$0xff]
    %v201 = vld [vmem:[%s1 + $0x1f8] sm:$0xff]
    %v202 = vld [vmem:[%s1 + $0x200] sm:$0xff]
    %v203 = vld [vmem:[%s1 + $0x208] sm:$0xff]
    %v204 = vld [vmem:[%s1 + $0x210] sm:$0xff]
    %v205 = vld [vmem:[%s1 + $0x218] sm:$0xff]
    %v206 = vld [vmem:[%s1 + $0x220] sm:$0xff]
    %v207 = vld [vmem:[%s1 + $0x228] sm:$0xff]
    %v208 = vld [vmem:[%s1 + $0x230] sm:$0xff]
    %v209 = vld [vmem:[%s1 + $0x238] sm:$0xff]
    %v210 = vld [vmem:[%s1 + $0x240] sm:$0xff]
    %v211 = vld [vmem:[%s1 + $0x248] sm:$0xff]
    %v212 = vld [vmem:[%s1 + $0x250] sm:$0xff]
    %v213 = vld [vmem:[%s1 + $0x258] sm:$0xff]
    %v214 = vld [vmem:[%s1 + $0x260] sm:$0xff]
    %v215 = vld [vmem:[%s1 + $0x268] sm:$0xff]
    %v216 = vld [vmem:[%s1 + $0x270] sm:$0xff]
    %v217 = vld [vmem:[%s1 + $0x278] sm:$0xff]
    %v218 = vld [vmem:[%s1 + $0x280] sm:$0xff]
    %v219 = vld [vmem:[%s1 + $0x288] sm:$0xff]
    %v220 = vld [vmem:[%s1 + $0x290] sm:$0xff]
    %v221 = vld [vmem:[%s1 + $0x298] sm:$0xff]
    %v222 = vld [vmem:[%s1 + $0x2a0] sm:$0xff]
    %v223 = vld [vmem:[%s1 + $0x2a8] sm:$0xff]
    %v224 = vld [vmem:[%s1 + $0x2b0] sm:$0xff]
    %v225 = vld [vmem:[%s1 + $0x2b8] sm:$0xff]
    %v226 = vld [vmem:[%s1 + $0x2c0] sm:$0xff]
    %v227 = vld [vmem:[%s1 + $0x2c8] sm:$0xff]
    %v228 = vld [vmem:[%s1 + $0x2d0] sm:$0xff]
    %v229 = vld [vmem:[%s1 + $0x2d8] sm:$0xff]
    %v230 = vld [vmem:[%s1 + $0x2e0] sm:$0xff]
    %v231 = vld [vmem:[%s1 + $0x2e8] sm:$0xff]
    %v232 = vld [vmem:[%s1 + $0x2f0] sm:$0xff]
    %v233 = vld [vmem:[%s1 + $0x2f8] sm:$0xff]
    %v234 = vld [vmem:[%s1 + $0x300] sm:$0xff]
    %v235 = vld [vmem:[%s1 + $0x308] sm:$0xff]
    %v236 = vld [vmem:[%s1 + $0x310] sm:$0xff]
    %v237 = vld [vmem:[%s1 + $0x318] sm:$0xff]
    %v238 = vld [vmem:[%s1 + $0x320] sm:$0xff]
    %v239 = vld [vmem:[%s1 + $0x328] sm:$0xff]
    %v240 = vld [vmem:[%s1 + $0x330] sm:$0xff]
    %v241 = vld [vmem:[%s1 + $0x338] sm:$0xff]
    %v242 = vld [vmem:[%s1 + $0x340] sm:$0xff]
    %v243 = vld [vmem:[%s1 + $0x348] sm:$0xff]
    %v244 = vld [vmem:[%s1 + $0x350] sm:$0xff]
    %v245 = vld [vmem:[%s1 + $0x358] sm:$0xff]
    %v246 = vld [vmem:[%s1 + $0x360] sm:$0xff]
    %v247 = vld [vmem:[%s1 + $0x368] sm:$0xff]
    %v248 = vld [vmem:[%s1 + $0x370] sm:$0xff]
    %v249 = vld [vmem:[%s1 + $0x378] sm:$0xff]
    %v250 = vld [vmem:[%s1 + $0x380] sm:$0xff]
    %v251 = vld [vmem:[%s1 + $0x388] sm:$0xff]
    %v252 = vld [vmem:[%s1 + $0x390] sm:$0xff]
    %v253 = vld [vmem:[%s1 + $0x398] sm:$0xff]
    %v254 = vld [vmem:[%s1 + $0x3a0] sm:$0xff]
    %v255 = vld [vmem:[%s1 + $0x3a8] sm:$0xff]
    %v256 = vld [vmem:[%s1 + $0x3b0] sm:$0xff]
    %v257 = vld [vmem:[%s1 + $0x3b8] sm:$0xff]
    %v258 = vld [vmem:[%s1 + $0x3c0] sm:$0xff]
    %v259 = vld [vmem:[%s1 + $0x3c8] sm:$0xff]
    %v260 = vld [vmem:[%s1 + $0x3d0] sm:$0xff]
    %v261 = vld [vmem:[%s1 + $0x3d8] sm:$0xff]
    %v262 = vld [vmem:[%s1 + $0x3e0] sm:$0xff]
    %v263 = vld [vmem:[%s1 + $0x3e8] sm:$0xff]
    %v264 = vld [vmem:[%s1 + $0x3f0] sm:$0xff]
    %v265 = vld [vmem:[%s1 + $0x3f8] sm:$0xff]
    %v266 = vld [vmem:[%s1 + $0x400] sm:$0xff]
    %v267 = vld [vmem:[%s1 + $0x408] sm:$0xff]
    %v268 = vld [vmem:[%s1 + $0x410] sm:$0xff]
    %v269 = vld [vmem:[%s1 + $0x418] sm:$0xff]
    %v270 = vld [vmem:[%s1 + $0x420] sm:$0xff]
    %v271 = vld [vmem:[%s1 + $0x428] sm:$0xff]
    %v272 = vld [vmem:[%s1 + $0x430] sm:$0xff]
    %v273 = vld [vmem:[%s1 + $0x438] sm:$0xff]
    %v274 = vld [vmem:[%s1 + $0x440] sm:$0xff]
    %v275 = vld [vmem:[%s1 + $0x448] sm:$0xff]
    %v276 = vld [vmem:[%s1 + $0x450] sm:$0xff]
    %v277 = vld [vmem:[%s1 + $0x458] sm:$0xff]
    %v278 = vld [vmem:[%s1 + $0x460] sm:$0xff]
    %v279 = vld [vmem:[%s1 + $0x468] sm:$0xff]
    %v280 = vld [vmem:[%s1 + $0x470] sm:$0xff]
    %v281 = vld [vmem:[%s1 + $0x478] sm:$0xff]
    %v282 = vld [vmem:[%s1 + $0x480] sm:$0xff]
    %v283 = vld [vmem:[%s1 + $0x488] sm:$0xff]
    %v284 = vld [vmem:[%s1 + $0x490] sm:$0xff]
    %v285 = vld [vmem:[%s1 + $0x498] sm:$0xff]
    %v286 = vld [vmem:[%s1 + $0x4a0] sm:$0xff]
    %v287 = vld [vmem:[%s1 + $0x4a8] sm:$0xff]
    %v288 = vld [vmem:[%s1 + $0x4b0] sm:$0xff]
    %v289 = vld [vmem:[%s1 + $0x4b8] sm:$0xff]
    %v290 = vld [vmem:[%s1 + $0x4c0] sm:$0xff]
    %v291 = vld [vmem:[%s1 + $0x4c8] sm:$0xff]
    %v292 = vld [vmem:[%s1 + $0x4d0] sm:$0xff]
    %v293 = vld [vmem:[%s1 + $0x4d8] sm:$0xff]
    %v294 = vld [vmem:[%s1 + $0x4e0] sm:$0xff]
    %v295 = vld [vmem:[%s1 + $0x4e8] sm:$0xff]
    %v296 = vld [vmem:[%s1 + $0x4f0] sm:$0xff]
    %v297 = vld [vmem:[%s1 + $0x4f8] sm:$0xff]
    %v298 = vld [vmem:[%s1 + $0x500] sm:$0xff]
    %v299 = vld [vmem:[%s1 + $0x508] sm:$0xff]
    %v300 = vld [vmem:[%s1 + $0x510] sm:$0xff]
    %v301 = vld [vmem:[%s1 + $0x518] sm:$0xff]
    %v302 = vld [vmem:[%s1 + $0x520] sm:$0xff]
    %v303 = vld [vmem:[%s1 + $0x528] sm:$0xff]
    %v304 = vld [vmem:[%s1 + $0x530] sm:$0xff]
    %v305 = vld [vmem:[%s1 + $0x538] sm:$0xff]
    %v306 = vld [vmem:[%s1 + $0x540] sm:$0xff]
    %v307 = vld [vmem:[%s1 + $0x548] sm:$0xff]
    %v308 = vld [vmem:[%s1 + $0x550] sm:$0xff]
    %v309 = vld [vmem:[%s1 + $0x558] sm:$0xff]
    %v310 = vld [vmem:[%s1 + $0x560] sm:$0xff]
    %v311 = vld [vmem:[%s1 + $0x568] sm:$0xff]
    %v312 = vld [vmem:[%s1 + $0x570] sm:$0xff]
    %v313 = vld [vmem:[%s1 + $0x578] sm:$0xff]
    %v314 = vld [vmem:[%s1 + $0x580] sm:$0xff]
    %v315 = vld [vmem:[%s1 + $0x588] sm:$0xff]
    %v316 = vld [vmem:[%s1 + $0x590] sm:$0xff]
    %v317 = vld [vmem:[%s1 + $0x598] sm:$0xff]
    %v318 = vld [vmem:[%s1 + $0x5a0] sm:$0xff]
    %v319 = vld [vmem:[%s1 + $0x5a8] sm:$0xff]
    %v320 = vld [vmem:[%s1 + $0x5b0] sm:$0xff]
    %v321 = vld [vmem:[%s1 + $0x5b8] sm:$0xff]
    %v322 = vld [vmem:[%s1 + $0x5c0] sm:$0xff]
    %v323 = vld [vmem:[%s1 + $0x5c8] sm:$0xff]
    %v324 = vld [vmem:[%s1 + $0x5d0] sm:$0xff]
    %v325 = vld [vmem:[%s1 + $0x5d8] sm:$0xff]
    %v326 = vld [vmem:[%s1 + $0x5e0] sm:$0xff]
    %v327 = vld [vmem:[%s1 + $0x5e8] sm:$0xff]
    %v328 = vld [vmem:[%s1 + $0x5f0] sm:$0xff]
    %v329 = vld [vmem:[%s1 + $0x5f8] sm:$0xff]
    %v330 = vld [vmem:[%s1 + $0x600] sm:$0xff]
    %v331 = vld [vmem:[%s1 + $0x608] sm:$0xff]
    %v332 = vld [vmem:[%s1 + $0x610] sm:$0xff]
    %v333 = vld [vmem:[%s1 + $0x618] sm:$0xff]
    %v334 = vld [vmem:[%s1 + $0x620] sm:$0xff]
    %v335 = vld [vmem:[%s1 + $0x628] sm:$0xff]
    %v336 = vld [vmem:[%s1 + $0x630] sm:$0xff]
    %v337 = vld [vmem:[%s1 + $0x638] sm:$0xff]
    %v338 = vld [vmem:[%s1 + $0x640] sm:$0xff]
    %v339 = vld [vmem:[%s1 + $0x648] sm:$0xff]
    %v340 = vld [vmem:[%s1 + $0x650] sm:$0xff]
    %v341 = vld [vmem:[%s1 + $0x658] sm:$0xff]
    %v342 = vld [vmem:[%s1 + $0x660] sm:$0xff]
    %v343 = vld [vmem:[%s1 + $0x668] sm:$0xff]
    %v344 = vld [vmem:[%s1 + $0x670] sm:$0xff]
    %v345 = vld [vmem:[%s1 + $0x678] sm:$0xff]
    %v346 = vld [vmem:[%s1 + $0x680] sm:$0xff]
    %v347 = vld [vmem:[%s1 + $0x688] sm:$0xff]
    %v348 = vld [vmem:[%s1 + $0x690] sm:$0xff]
    %v349 = vld [vmem:[%s1 + $0x698] sm:$0xff]
    %v350 = vld [vmem:[%s1 + $0x6a0] sm:$0xff]
    %v351 = vld [vmem:[%s1 + $0x6a8] sm:$0xff]
    %v352 = vld [vmem:[%s1 + $0x6b0] sm:$0xff]
    %v353 = vld [vmem:[%s1 + $0x6b8] sm:$0xff]
    %v354 = vld [vmem:[%s1 + $0x6c0] sm:$0xff]
    %v355 = vld [vmem:[%s1 + $0x6c8] sm:$0xff]
    %v356 = vld [vmem:[%s1 + $0x6d0] sm:$0xff]
    %v357 = vld [vmem:[%s1 + $0x6d8] sm:$0xff]
    %v358 = vld [vmem:[%s1 + $0x6e0] sm:$0xff]
    %v359 = vld [vmem:[%s1 + $0x6e8] sm:$0xff]
    %v360 = vld [vmem:[%s1 + $0x6f0] sm:$0xff]
    %v361 = vld [vmem:[%s1 + $0x6f8] sm:$0xff]
    %v362 = vld [vmem:[%s1 + $0x700] sm:$0xff]
    %v363 = vld [vmem:[%s1 + $0x708] sm:$0xff]
    %v364 = vld [vmem:[%s1 + $0x710] sm:$0xff]
    %v365 = vld [vmem:[%s1 + $0x718] sm:$0xff]
    %v366 = vld [vmem:[%s1 + $0x720] sm:$0xff]
    %v367 = vld [vmem:[%s1 + $0x728] sm:$0xff]
    %v368 = vld [vmem:[%s1 + $0x730] sm:$0xff]
    %v369 = vld [vmem:[%s1 + $0x738] sm:$0xff]
    %v370 = vld [vmem:[%s1 + $0x740] sm:$0xff]
    %v371 = vld [vmem:[%s1 + $0x748] sm:$0xff]
    %v372 = vld [vmem:[%s1 + $0x750] sm:$0xff]
    %v373 = vld [vmem:[%s1 + $0x758] sm:$0xff]
    %v374 = vld [vmem:[%s1 + $0x760] sm:$0xff]
    %v375 = vld [vmem:[%s1 + $0x768] sm:$0xff]
    %v376 = vld [vmem:[%s1 + $0x770] sm:$0xff]
    %v377 = vld [vmem:[%s1 + $0x778] sm:$0xff]
    %v378 = vld [vmem:[%s1 + $0x780] sm:$0xff]
    %v379 = vld [vmem:[%s1 + $0x788] sm:$0xff]
    %v380 = vld [vmem:[%s1 + $0x790] sm:$0xff]
    %v381 = vld [vmem:[%s1 + $0x798] sm:$0xff]
    %v382 = vld [vmem:[%s1 + $0x7a0] sm:$0xff]
    %v383 = vld [vmem:[%s1 + $0x7a8] sm:$0xff]
    %v384 = vld [vmem:[%s1 + $0x7b0] sm:$0xff]
    %v385 = vld [vmem:[%s1 + $0x7b8] sm:$0xff]
    %v386 = vld [vmem:[%s1 + $0x7c0] sm:$0xff]
    %v387 = vld [vmem:[%s1 + $0x7c8] sm:$0xff]
    %v388 = vld [vmem:[%s1 + $0x7d0] sm:$0xff]
    %v389 = vld [vmem:[%s1 + $0x7d8] sm:$0xff]
    %v390 = vld [vmem:[%s1 + $0x7e0] sm:$0xff]
    %v391 = vld [vmem:[%s1 + $0x7e8] sm:$0xff]
    %v392 = vld [vmem:[%s1 + $0x7f0] sm:$0xff]
    %v393 = vld [vmem:[%s1 + $0x7f8] sm:$0xff]
    %v394 = vperm.slane %v110, 0
    %v395 = vperm.slane %v111, 0
    %v396 = vperm.slane %v112, 0
    %v397 = vperm.slane %v113, 0
    %v654 = vunpack.c.l.b16 %v138
    %v655 = vunpack.c.h.b16 %v138
    %v656 = vunpack.c.l.b16 %v139
    %v657 = vunpack.c.h.b16 %v139
    %v658 = vunpack.c.l.b16 %v140
    %v659 = vunpack.c.h.b16 %v140
    %v660 = vunpack.c.l.b16 %v141
    %v661 = vunpack.c.h.b16 %v141
    %v662 = vunpack.c.l.b16 %v142
    %v663 = vunpack.c.h.b16 %v142
    %v664 = vunpack.c.l.b16 %v143
    %v665 = vunpack.c.h.b16 %v143
    %v666 = vunpack.c.l.b16 %v144
    %v667 = vunpack.c.h.b16 %v144
    %v668 = vunpack.c.l.b16 %v145
    %v669 = vunpack.c.h.b16 %v145
    %v670 = vunpack.c.l.b16 %v146
    %v671 = vunpack.c.h.b16 %v146
    %v672 = vunpack.c.l.b16 %v147
    %v673 = vunpack.c.h.b16 %v147
    %v674 = vunpack.c.l.b16 %v148
    %v675 = vunpack.c.h.b16 %v148
    %v676 = vunpack.c.l.b16 %v149
    %v677 = vunpack.c.h.b16 %v149
    %v678 = vunpack.c.l.b16 %v150
    %v679 = vunpack.c.h.b16 %v150
    %v680 = vunpack.c.l.b16 %v151
    %v681 = vunpack.c.h.b16 %v151
    %v682 = vunpack.c.l.b16 %v152
    %v683 = vunpack.c.h.b16 %v152
    %v684 = vunpack.c.l.b16 %v153
    %v685 = vunpack.c.h.b16 %v153
    %v686 = vunpack.c.l.b16 %v154
    %v687 = vunpack.c.h.b16 %v154
    %v688 = vunpack.c.l.b16 %v155
    %v689 = vunpack.c.h.b16 %v155
    %v690 = vunpack.c.l.b16 %v156
    %v691 = vunpack.c.h.b16 %v156
    %v692 = vunpack.c.l.b16 %v157
    %v693 = vunpack.c.h.b16 %v157
    %v694 = vunpack.c.l.b16 %v158
    %v695 = vunpack.c.h.b16 %v158
    %v696 = vunpack.c.l.b16 %v159
    %v697 = vunpack.c.h.b16 %v159
    %v698 = vunpack.c.l.b16 %v160
    %v699 = vunpack.c.h.b16 %v160
    %v700 = vunpack.c.l.b16 %v161
    %v701 = vunpack.c.h.b16 %v161
    %v702 = vunpack.c.l.b16 %v162
    %v703 = vunpack.c.h.b16 %v162
    %v704 = vunpack.c.l.b16 %v163
    %v705 = vunpack.c.h.b16 %v163
    %v706 = vunpack.c.l.b16 %v164
    %v707 = vunpack.c.h.b16 %v164
    %v708 = vunpack.c.l.b16 %v165
    %v709 = vunpack.c.h.b16 %v165
    %v710 = vunpack.c.l.b16 %v166
    %v711 = vunpack.c.h.b16 %v166
    %v712 = vunpack.c.l.b16 %v167
    %v713 = vunpack.c.h.b16 %v167
    %v714 = vunpack.c.l.b16 %v168
    %v715 = vunpack.c.h.b16 %v168
    %v716 = vunpack.c.l.b16 %v169
    %v717 = vunpack.c.h.b16 %v169
    %v718 = vunpack.c.l.b16 %v170
    %v719 = vunpack.c.h.b16 %v170
    %v720 = vunpack.c.l.b16 %v171
    %v721 = vunpack.c.h.b16 %v171
    %v722 = vunpack.c.l.b16 %v172
    %v723 = vunpack.c.h.b16 %v172
    %v724 = vunpack.c.l.b16 %v173
    %v725 = vunpack.c.h.b16 %v173
    %v726 = vunpack.c.l.b16 %v174
    %v727 = vunpack.c.h.b16 %v174
    %v728 = vunpack.c.l.b16 %v175
    %v729 = vunpack.c.h.b16 %v175
    %v730 = vunpack.c.l.b16 %v176
    %v731 = vunpack.c.h.b16 %v176
    %v732 = vunpack.c.l.b16 %v177
    %v733 = vunpack.c.h.b16 %v177
    %v734 = vunpack.c.l.b16 %v178
    %v735 = vunpack.c.h.b16 %v178
    %v736 = vunpack.c.l.b16 %v179
    %v737 = vunpack.c.h.b16 %v179
    %v738 = vunpack.c.l.b16 %v180
    %v739 = vunpack.c.h.b16 %v180
    %v740 = vunpack.c.l.b16 %v181
    %v741 = vunpack.c.h.b16 %v181
    %v742 = vunpack.c.l.b16 %v182
    %v743 = vunpack.c.h.b16 %v182
    %v744 = vunpack.c.l.b16 %v183
    %v745 = vunpack.c.h.b16 %v183
    %v746 = vunpack.c.l.b16 %v184
    %v747 = vunpack.c.h.b16 %v184
    %v748 = vunpack.c.l.b16 %v185
    %v749 = vunpack.c.h.b16 %v185
    %v750 = vunpack.c.l.b16 %v186
    %v751 = vunpack.c.h.b16 %v186
    %v752 = vunpack.c.l.b16 %v187
    %v753 = vunpack.c.h.b16 %v187
    %v754 = vunpack.c.l.b16 %v188
    %v755 = vunpack.c.h.b16 %v188
    %v756 = vunpack.c.l.b16 %v189
    %v757 = vunpack.c.h.b16 %v189
    %v758 = vunpack.c.l.b16 %v190
    %v759 = vunpack.c.h.b16 %v190
    %v760 = vunpack.c.l.b16 %v191
    %v761 = vunpack.c.h.b16 %v191
    %v762 = vunpack.c.l.b16 %v192
    %v763 = vunpack.c.h.b16 %v192
    %v764 = vunpack.c.l.b16 %v193
    %v765 = vunpack.c.h.b16 %v193
    %v766 = vunpack.c.l.b16 %v194
    %v767 = vunpack.c.h.b16 %v194
    %v768 = vunpack.c.l.b16 %v195
    %v769 = vunpack.c.h.b16 %v195
    %v770 = vunpack.c.l.b16 %v196
    %v771 = vunpack.c.h.b16 %v196
    %v772 = vunpack.c.l.b16 %v197
    %v773 = vunpack.c.h.b16 %v197
    %v774 = vunpack.c.l.b16 %v198
    %v775 = vunpack.c.h.b16 %v198
    %v776 = vunpack.c.l.b16 %v199
    %v777 = vunpack.c.h.b16 %v199
    %v778 = vunpack.c.l.b16 %v200
    %v779 = vunpack.c.h.b16 %v200
    %v780 = vunpack.c.l.b16 %v201
    %v781 = vunpack.c.h.b16 %v201
    %v782 = vunpack.c.l.b16 %v202
    %v783 = vunpack.c.h.b16 %v202
    %v784 = vunpack.c.l.b16 %v203
    %v785 = vunpack.c.h.b16 %v203
    %v786 = vunpack.c.l.b16 %v204
    %v787 = vunpack.c.h.b16 %v204
    %v788 = vunpack.c.l.b16 %v205
    %v789 = vunpack.c.h.b16 %v205
    %v790 = vunpack.c.l.b16 %v206
    %v791 = vunpack.c.h.b16 %v206
    %v792 = vunpack.c.l.b16 %v207
    %v793 = vunpack.c.h.b16 %v207
    %v794 = vunpack.c.l.b16 %v208
    %v795 = vunpack.c.h.b16 %v208
    %v796 = vunpack.c.l.b16 %v209
    %v797 = vunpack.c.h.b16 %v209
    %v798 = vunpack.c.l.b16 %v210
    %v799 = vunpack.c.h.b16 %v210
    %v800 = vunpack.c.l.b16 %v211
    %v801 = vunpack.c.h.b16 %v211
    %v802 = vunpack.c.l.b16 %v212
    %v803 = vunpack.c.h.b16 %v212
    %v804 = vunpack.c.l.b16 %v213
    %v805 = vunpack.c.h.b16 %v213
    %v806 = vunpack.c.l.b16 %v214
    %v807 = vunpack.c.h.b16 %v214
    %v808 = vunpack.c.l.b16 %v215
    %v809 = vunpack.c.h.b16 %v215
    %v810 = vunpack.c.l.b16 %v216
    %v811 = vunpack.c.h.b16 %v216
    %v812 = vunpack.c.l.b16 %v217
    %v813 = vunpack.c.h.b16 %v217
    %v814 = vunpack.c.l.b16 %v218
    %v815 = vunpack.c.h.b16 %v218
    %v816 = vunpack.c.l.b16 %v219
    %v817 = vunpack.c.h.b16 %v219
    %v818 = vunpack.c.l.b16 %v220
    %v819 = vunpack.c.h.b16 %v220
    %v820 = vunpack.c.l.b16 %v221
    %v821 = vunpack.c.h.b16 %v221
    %v822 = vunpack.c.l.b16 %v222
    %v823 = vunpack.c.h.b16 %v222
    %v824 = vunpack.c.l.b16 %v223
    %v825 = vunpack.c.h.b16 %v223
    %v826 = vunpack.c.l.b16 %v224
    %v827 = vunpack.c.h.b16 %v224
    %v828 = vunpack.c.l.b16 %v225
    %v829 = vunpack.c.h.b16 %v225
    %v830 = vunpack.c.l.b16 %v226
    %v831 = vunpack.c.h.b16 %v226
    %v832 = vunpack.c.l.b16 %v227
    %v833 = vunpack.c.h.b16 %v227
    %v834 = vunpack.c.l.b16 %v228
    %v835 = vunpack.c.h.b16 %v228
    %v836 = vunpack.c.l.b16 %v229
    %v837 = vunpack.c.h.b16 %v229
    %v838 = vunpack.c.l.b16 %v230
    %v839 = vunpack.c.h.b16 %v230
    %v840 = vunpack.c.l.b16 %v231
    %v841 = vunpack.c.h.b16 %v231
    %v842 = vunpack.c.l.b16 %v232
    %v843 = vunpack.c.h.b16 %v232
    %v844 = vunpack.c.l.b16 %v233
    %v845 = vunpack.c.h.b16 %v233
    %v846 = vunpack.c.l.b16 %v234
    %v847 = vunpack.c.h.b16 %v234
    %v848 = vunpack.c.l.b16 %v235
    %v849 = vunpack.c.h.b16 %v235
    %v850 = vunpack.c.l.b16 %v236
    %v851 = vunpack.c.h.b16 %v236
    %v852 = vunpack.c.l.b16 %v237
    %v853 = vunpack.c.h.b16 %v237
    %v854 = vunpack.c.l.b16 %v238
    %v855 = vunpack.c.h.b16 %v238
    %v856 = vunpack.c.l.b16 %v239
    %v857 = vunpack.c.h.b16 %v239
    %v858 = vunpack.c.l.b16 %v240
    %v859 = vunpack.c.h.b16 %v240
    %v860 = vunpack.c.l.b16 %v241
    %v861 = vunpack.c.h.b16 %v241
    %v862 = vunpack.c.l.b16 %v242
    %v863 = vunpack.c.h.b16 %v242
    %v864 = vunpack.c.l.b16 %v243
    %v865 = vunpack.c.h.b16 %v243
    %v866 = vunpack.c.l.b16 %v244
    %v867 = vunpack.c.h.b16 %v244
    %v868 = vunpack.c.l.b16 %v245
    %v869 = vunpack.c.h.b16 %v245
    %v870 = vunpack.c.l.b16 %v246
    %v871 = vunpack.c.h.b16 %v246
    %v872 = vunpack.c.l.b16 %v247
    %v873 = vunpack.c.h.b16 %v247
    %v874 = vunpack.c.l.b16 %v248
    %v875 = vunpack.c.h.b16 %v248
    %v876 = vunpack.c.l.b16 %v249
    %v877 = vunpack.c.h.b16 %v249
    %v878 = vunpack.c.l.b16 %v250
    %v879 = vunpack.c.h.b16 %v250
    %v880 = vunpack.c.l.b16 %v251
    %v881 = vunpack.c.h.b16 %v251
    %v882 = vunpack.c.l.b16 %v252
    %v883 = vunpack.c.h.b16 %v252
    %v884 = vunpack.c.l.b16 %v253
    %v885 = vunpack.c.h.b16 %v253
    %v886 = vunpack.c.l.b16 %v254
    %v887 = vunpack.c.h.b16 %v254
    %v888 = vunpack.c.l.b16 %v255
    %v889 = vunpack.c.h.b16 %v255
    %v890 = vunpack.c.l.b16 %v256
    %v891 = vunpack.c.h.b16 %v256
    %v892 = vunpack.c.l.b16 %v257
    %v893 = vunpack.c.h.b16 %v257
    %v894 = vunpack.c.l.b16 %v258
    %v895 = vunpack.c.h.b16 %v258
    %v896 = vunpack.c.l.b16 %v259
    %v897 = vunpack.c.h.b16 %v259
    %v898 = vunpack.c.l.b16 %v260
    %v899 = vunpack.c.h.b16 %v260
    %v900 = vunpack.c.l.b16 %v261
    %v901 = vunpack.c.h.b16 %v261
    %v902 = vunpack.c.l.b16 %v262
    %v903 = vunpack.c.h.b16 %v262
    %v904 = vunpack.c.l.b16 %v263
    %v905 = vunpack.c.h.b16 %v263
    %v906 = vunpack.c.l.b16 %v264
    %v907 = vunpack.c.h.b16 %v264
    %v908 = vunpack.c.l.b16 %v265
    %v909 = vunpack.c.h.b16 %v265
    %v910 = vunpack.c.l.b16 %v266
    %v911 = vunpack.c.h.b16 %v266
    %v912 = vunpack.c.l.b16 %v267
    %v913 = vunpack.c.h.b16 %v267
    %v914 = vunpack.c.l.b16 %v268
    %v915 = vunpack.c.h.b16 %v268
    %v916 = vunpack.c.l.b16 %v269
    %v917 = vunpack.c.h.b16 %v269
    %v918 = vunpack.c.l.b16 %v270
    %v919 = vunpack.c.h.b16 %v270
    %v920 = vunpack.c.l.b16 %v271
    %v921 = vunpack.c.h.b16 %v271
    %v922 = vunpack.c.l.b16 %v272
    %v923 = vunpack.c.h.b16 %v272
    %v924 = vunpack.c.l.b16 %v273
    %v925 = vunpack.c.h.b16 %v273
    %v926 = vunpack.c.l.b16 %v274
    %v927 = vunpack.c.h.b16 %v274
    %v928 = vunpack.c.l.b16 %v275
    %v929 = vunpack.c.h.b16 %v275
    %v930 = vunpack.c.l.b16 %v276
    %v931 = vunpack.c.h.b16 %v276
    %v932 = vunpack.c.l.b16 %v277
    %v933 = vunpack.c.h.b16 %v277
    %v934 = vunpack.c.l.b16 %v278
    %v935 = vunpack.c.h.b16 %v278
    %v936 = vunpack.c.l.b16 %v279
    %v937 = vunpack.c.h.b16 %v279
    %v938 = vunpack.c.l.b16 %v280
    %v939 = vunpack.c.h.b16 %v280
    %v940 = vunpack.c.l.b16 %v281
    %v941 = vunpack.c.h.b16 %v281
    %v942 = vunpack.c.l.b16 %v282
    %v943 = vunpack.c.h.b16 %v282
    %v944 = vunpack.c.l.b16 %v283
    %v945 = vunpack.c.h.b16 %v283
    %v946 = vunpack.c.l.b16 %v284
    %v947 = vunpack.c.h.b16 %v284
    %v948 = vunpack.c.l.b16 %v285
    %v949 = vunpack.c.h.b16 %v285
    %v950 = vunpack.c.l.b16 %v286
    %v951 = vunpack.c.h.b16 %v286
    %v952 = vunpack.c.l.b16 %v287
    %v953 = vunpack.c.h.b16 %v287
    %v954 = vunpack.c.l.b16 %v288
    %v955 = vunpack.c.h.b16 %v288
    %v956 = vunpack.c.l.b16 %v289
    %v957 = vunpack.c.h.b16 %v289
    %v958 = vunpack.c.l.b16 %v290
    %v959 = vunpack.c.h.b16 %v290
    %v960 = vunpack.c.l.b16 %v291
    %v961 = vunpack.c.h.b16 %v291
    %v962 = vunpack.c.l.b16 %v292
    %v963 = vunpack.c.h.b16 %v292
    %v964 = vunpack.c.l.b16 %v293
    %v965 = vunpack.c.h.b16 %v293
    %v966 = vunpack.c.l.b16 %v294
    %v967 = vunpack.c.h.b16 %v294
    %v968 = vunpack.c.l.b16 %v295
    %v969 = vunpack.c.h.b16 %v295
    %v970 = vunpack.c.l.b16 %v296
    %v971 = vunpack.c.h.b16 %v296
    %v972 = vunpack.c.l.b16 %v297
    %v973 = vunpack.c.h.b16 %v297
    %v974 = vunpack.c.l.b16 %v298
    %v975 = vunpack.c.h.b16 %v298
    %v976 = vunpack.c.l.b16 %v299
    %v977 = vunpack.c.h.b16 %v299
    %v978 = vunpack.c.l.b16 %v300
    %v979 = vunpack.c.h.b16 %v300
    %v980 = vunpack.c.l.b16 %v301
    %v981 = vunpack.c.h.b16 %v301
    %v982 = vunpack.c.l.b16 %v302
    %v983 = vunpack.c.h.b16 %v302
    %v984 = vunpack.c.l.b16 %v303
    %v985 = vunpack.c.h.b16 %v303
    %v986 = vunpack.c.l.b16 %v304
    %v987 = vunpack.c.h.b16 %v304
    %v988 = vunpack.c.l.b16 %v305
    %v989 = vunpack.c.h.b16 %v305
    %v990 = vunpack.c.l.b16 %v306
    %v991 = vunpack.c.h.b16 %v306
    %v992 = vunpack.c.l.b16 %v307
    %v993 = vunpack.c.h.b16 %v307
    %v994 = vunpack.c.l.b16 %v308
    %v995 = vunpack.c.h.b16 %v308
    %v996 = vunpack.c.l.b16 %v309
    %v997 = vunpack.c.h.b16 %v309
    %v998 = vunpack.c.l.b16 %v310
    %v999 = vunpack.c.h.b16 %v310
    %v1000 = vunpack.c.l.b16 %v311
    %v1001 = vunpack.c.h.b16 %v311
    %v1002 = vunpack.c.l.b16 %v312
    %v1003 = vunpack.c.h.b16 %v312
    %v1004 = vunpack.c.l.b16 %v313
    %v1005 = vunpack.c.h.b16 %v313
    %v1006 = vunpack.c.l.b16 %v314
    %v1007 = vunpack.c.h.b16 %v314
    %v1008 = vunpack.c.l.b16 %v315
    %v1009 = vunpack.c.h.b16 %v315
    %v1010 = vunpack.c.l.b16 %v316
    %v1011 = vunpack.c.h.b16 %v316
    %v1012 = vunpack.c.l.b16 %v317
    %v1013 = vunpack.c.h.b16 %v317
    %v1014 = vunpack.c.l.b16 %v318
    %v1015 = vunpack.c.h.b16 %v318
    %v1016 = vunpack.c.l.b16 %v319
    %v1017 = vunpack.c.h.b16 %v319
    %v1018 = vunpack.c.l.b16 %v320
    %v1019 = vunpack.c.h.b16 %v320
    %v1020 = vunpack.c.l.b16 %v321
    %v1021 = vunpack.c.h.b16 %v321
    %v1022 = vunpack.c.l.b16 %v322
    %v1023 = vunpack.c.h.b16 %v322
    %v1024 = vunpack.c.l.b16 %v323
    %v1025 = vunpack.c.h.b16 %v323
    %v1026 = vunpack.c.l.b16 %v324
    %v1027 = vunpack.c.h.b16 %v324
    %v1028 = vunpack.c.l.b16 %v325
    %v1029 = vunpack.c.h.b16 %v325
    %v1030 = vunpack.c.l.b16 %v326
    %v1031 = vunpack.c.h.b16 %v326
    %v1032 = vunpack.c.l.b16 %v327
    %v1033 = vunpack.c.h.b16 %v327
    %v1034 = vunpack.c.l.b16 %v328
    %v1035 = vunpack.c.h.b16 %v328
    %v1036 = vunpack.c.l.b16 %v329
    %v1037 = vunpack.c.h.b16 %v329
    %v1038 = vunpack.c.l.b16 %v330
    %v1039 = vunpack.c.h.b16 %v330
    %v1040 = vunpack.c.l.b16 %v331
    %v1041 = vunpack.c.h.b16 %v331
    %v1042 = vunpack.c.l.b16 %v332
    %v1043 = vunpack.c.h.b16 %v332
    %v1044 = vunpack.c.l.b16 %v333
    %v1045 = vunpack.c.h.b16 %v333
    %v1046 = vunpack.c.l.b16 %v334
    %v1047 = vunpack.c.h.b16 %v334
    %v1048 = vunpack.c.l.b16 %v335
    %v1049 = vunpack.c.h.b16 %v335
    %v1050 = vunpack.c.l.b16 %v336
    %v1051 = vunpack.c.h.b16 %v336
    %v1052 = vunpack.c.l.b16 %v337
    %v1053 = vunpack.c.h.b16 %v337
    %v1054 = vunpack.c.l.b16 %v338
    %v1055 = vunpack.c.h.b16 %v338
    %v1056 = vunpack.c.l.b16 %v339
    %v1057 = vunpack.c.h.b16 %v339
    %v1058 = vunpack.c.l.b16 %v340
    %v1059 = vunpack.c.h.b16 %v340
    %v1060 = vunpack.c.l.b16 %v341
    %v1061 = vunpack.c.h.b16 %v341
    %v1062 = vunpack.c.l.b16 %v342
    %v1063 = vunpack.c.h.b16 %v342
    %v1064 = vunpack.c.l.b16 %v343
    %v1065 = vunpack.c.h.b16 %v343
    %v1066 = vunpack.c.l.b16 %v344
    %v1067 = vunpack.c.h.b16 %v344
    %v1068 = vunpack.c.l.b16 %v345
    %v1069 = vunpack.c.h.b16 %v345
    %v1070 = vunpack.c.l.b16 %v346
    %v1071 = vunpack.c.h.b16 %v346
    %v1072 = vunpack.c.l.b16 %v347
    %v1073 = vunpack.c.h.b16 %v347
    %v1074 = vunpack.c.l.b16 %v348
    %v1075 = vunpack.c.h.b16 %v348
    %v1076 = vunpack.c.l.b16 %v349
    %v1077 = vunpack.c.h.b16 %v349
    %v1078 = vunpack.c.l.b16 %v350
    %v1079 = vunpack.c.h.b16 %v350
    %v1080 = vunpack.c.l.b16 %v351
    %v1081 = vunpack.c.h.b16 %v351
    %v1082 = vunpack.c.l.b16 %v352
    %v1083 = vunpack.c.h.b16 %v352
    %v1084 = vunpack.c.l.b16 %v353
    %v1085 = vunpack.c.h.b16 %v353
    %v1086 = vunpack.c.l.b16 %v354
    %v1087 = vunpack.c.h.b16 %v354
    %v1088 = vunpack.c.l.b16 %v355
    %v1089 = vunpack.c.h.b16 %v355
    %v1090 = vunpack.c.l.b16 %v356
    %v1091 = vunpack.c.h.b16 %v356
    %v1092 = vunpack.c.l.b16 %v357
    %v1093 = vunpack.c.h.b16 %v357
    %v1094 = vunpack.c.l.b16 %v358
    %v1095 = vunpack.c.h.b16 %v358
    %v1096 = vunpack.c.l.b16 %v359
    %v1097 = vunpack.c.h.b16 %v359
    %v1098 = vunpack.c.l.b16 %v360
    %v1099 = vunpack.c.h.b16 %v360
    %v1100 = vunpack.c.l.b16 %v361
    %v1101 = vunpack.c.h.b16 %v361
    %v1102 = vunpack.c.l.b16 %v362
    %v1103 = vunpack.c.h.b16 %v362
    %v1104 = vunpack.c.l.b16 %v363
    %v1105 = vunpack.c.h.b16 %v363
    %v1106 = vunpack.c.l.b16 %v364
    %v1107 = vunpack.c.h.b16 %v364
    %v1108 = vunpack.c.l.b16 %v365
    %v1109 = vunpack.c.h.b16 %v365
    %v1110 = vunpack.c.l.b16 %v366
    %v1111 = vunpack.c.h.b16 %v366
    %v1112 = vunpack.c.l.b16 %v367
    %v1113 = vunpack.c.h.b16 %v367
    %v1114 = vunpack.c.l.b16 %v368
    %v1115 = vunpack.c.h.b16 %v368
    %v1116 = vunpack.c.l.b16 %v369
    %v1117 = vunpack.c.h.b16 %v369
    %v1118 = vunpack.c.l.b16 %v370
    %v1119 = vunpack.c.h.b16 %v370
    %v1120 = vunpack.c.l.b16 %v371
    %v1121 = vunpack.c.h.b16 %v371
    %v1122 = vunpack.c.l.b16 %v372
    %v1123 = vunpack.c.h.b16 %v372
    %v1124 = vunpack.c.l.b16 %v373
    %v1125 = vunpack.c.h.b16 %v373
    %v1126 = vunpack.c.l.b16 %v374
    %v1127 = vunpack.c.h.b16 %v374
    %v1128 = vunpack.c.l.b16 %v375
    %v1129 = vunpack.c.h.b16 %v375
    %v1130 = vunpack.c.l.b16 %v376
    %v1131 = vunpack.c.h.b16 %v376
    %v1132 = vunpack.c.l.b16 %v377
    %v1133 = vunpack.c.h.b16 %v377
    %v1134 = vunpack.c.l.b16 %v378
    %v1135 = vunpack.c.h.b16 %v378
    %v1136 = vunpack.c.l.b16 %v379
    %v1137 = vunpack.c.h.b16 %v379
    %v1138 = vunpack.c.l.b16 %v380
    %v1139 = vunpack.c.h.b16 %v380
    %v1140 = vunpack.c.l.b16 %v381
    %v1141 = vunpack.c.h.b16 %v381
    %v1142 = vunpack.c.l.b16 %v382
    %v1143 = vunpack.c.h.b16 %v382
    %v1144 = vunpack.c.l.b16 %v383
    %v1145 = vunpack.c.h.b16 %v383
    %v1146 = vunpack.c.l.b16 %v384
    %v1147 = vunpack.c.h.b16 %v384
    %v1148 = vunpack.c.l.b16 %v385
    %v1149 = vunpack.c.h.b16 %v385
    %v1150 = vunpack.c.l.b16 %v386
    %v1151 = vunpack.c.h.b16 %v386
    %v1152 = vunpack.c.l.b16 %v387
    %v1153 = vunpack.c.h.b16 %v387
    %v1154 = vunpack.c.l.b16 %v388
    %v1155 = vunpack.c.h.b16 %v388
    %v1156 = vunpack.c.l.b16 %v389
    %v1157 = vunpack.c.h.b16 %v389
    %v1158 = vunpack.c.l.b16 %v390
    %v1159 = vunpack.c.h.b16 %v390
    %v1160 = vunpack.c.l.b16 %v391
    %v1161 = vunpack.c.h.b16 %v391
    %v1162 = vunpack.c.l.b16 %v392
    %v1163 = vunpack.c.h.b16 %v392
    %v1164 = vunpack.c.l.b16 %v393
    %v1165 = vunpack.c.h.b16 %v393
    %v1166 = vpack.c.b16 %v658, %v654
    %v1167 = vpack.c.b16 %v659, %v655
    %v1168 = vpack.c.b16 %v660, %v656
    %v1169 = vpack.c.b16 %v661, %v657
    %v1170 = vpack.c.b16 %v666, %v662
    %v1171 = vpack.c.b16 %v667, %v663
    %v1172 = vpack.c.b16 %v668, %v664
    %v1173 = vpack.c.b16 %v669, %v665
    %v1174 = vpack.c.b16 %v674, %v670
    %v1175 = vpack.c.b16 %v675, %v671
    %v1176 = vpack.c.b16 %v676, %v672
    %v1177 = vpack.c.b16 %v677, %v673
    %v1178 = vpack.c.b16 %v682, %v678
    %v1179 = vpack.c.b16 %v683, %v679
    %v1180 = vpack.c.b16 %v684, %v680
    %v1181 = vpack.c.b16 %v685, %v681
    %v1182 = vpack.c.b16 %v690, %v686
    %v1183 = vpack.c.b16 %v691, %v687
    %v1184 = vpack.c.b16 %v692, %v688
    %v1185 = vpack.c.b16 %v693, %v689
    %v1186 = vpack.c.b16 %v698, %v694
    %v1187 = vpack.c.b16 %v699, %v695
    %v1188 = vpack.c.b16 %v700, %v696
    %v1189 = vpack.c.b16 %v701, %v697
    %v1190 = vpack.c.b16 %v706, %v702
    %v1191 = vpack.c.b16 %v707, %v703
    %v1192 = vpack.c.b16 %v708, %v704
    %v1193 = vpack.c.b16 %v709, %v705
    %v1194 = vpack.c.b16 %v714, %v710
    %v1195 = vpack.c.b16 %v715, %v711
    %v1196 = vpack.c.b16 %v716, %v712
    %v1197 = vpack.c.b16 %v717, %v713
    %v1198 = vpack.c.b16 %v722, %v718
    %v1199 = vpack.c.b16 %v723, %v719
    %v1200 = vpack.c.b16 %v724, %v720
    %v1201 = vpack.c.b16 %v725, %v721
    %v1202 = vpack.c.b16 %v730, %v726
    %v1203 = vpack.c.b16 %v731, %v727
    %v1204 = vpack.c.b16 %v732, %v728
    %v1205 = vpack.c.b16 %v733, %v729
    %v1206 = vpack.c.b16 %v738, %v734
    %v1207 = vpack.c.b16 %v739, %v735
    %v1208 = vpack.c.b16 %v740, %v736
    %v1209 = vpack.c.b16 %v741, %v737
    %v1210 = vpack.c.b16 %v746, %v742
    %v1211 = vpack.c.b16 %v747, %v743
    %v1212 = vpack.c.b16 %v748, %v744
    %v1213 = vpack.c.b16 %v749, %v745
    %v1214 = vpack.c.b16 %v754, %v750
    %v1215 = vpack.c.b16 %v755, %v751
    %v1216 = vpack.c.b16 %v756, %v752
    %v1217 = vpack.c.b16 %v757, %v753
    %v1218 = vpack.c.b16 %v762, %v758
    %v1219 = vpack.c.b16 %v763, %v759
    %v1220 = vpack.c.b16 %v764, %v760
    %v1221 = vpack.c.b16 %v765, %v761
    %v1222 = vpack.c.b16 %v770, %v766
    %v1223 = vpack.c.b16 %v771, %v767
    %v1224 = vpack.c.b16 %v772, %v768
    %v1225 = vpack.c.b16 %v773, %v769
    %v1226 = vpack.c.b16 %v778, %v774
    %v1227 = vpack.c.b16 %v779, %v775
    %v1228 = vpack.c.b16 %v780, %v776
    %v1229 = vpack.c.b16 %v781, %v777
    %v1230 = vpack.c.b16 %v786, %v782
    %v1231 = vpack.c.b16 %v787, %v783
    %v1232 = vpack.c.b16 %v788, %v784
    %v1233 = vpack.c.b16 %v789, %v785
    %v1234 = vpack.c.b16 %v794, %v790
    %v1235 = vpack.c.b16 %v795, %v791
    %v1236 = vpack.c.b16 %v796, %v792
    %v1237 = vpack.c.b16 %v797, %v793
    %v1238 = vpack.c.b16 %v802, %v798
    %v1239 = vpack.c.b16 %v803, %v799
    %v1240 = vpack.c.b16 %v804, %v800
    %v1241 = vpack.c.b16 %v805, %v801
    %v1242 = vpack.c.b16 %v810, %v806
    %v1243 = vpack.c.b16 %v811, %v807
    %v1244 = vpack.c.b16 %v812, %v808
    %v1245 = vpack.c.b16 %v813, %v809
    %v1246 = vpack.c.b16 %v818, %v814
    %v1247 = vpack.c.b16 %v819, %v815
    %v1248 = vpack.c.b16 %v820, %v816
    %v1249 = vpack.c.b16 %v821, %v817
    %v1250 = vpack.c.b16 %v826, %v822
    %v1251 = vpack.c.b16 %v827, %v823
    %v1252 = vpack.c.b16 %v828, %v824
    %v1253 = vpack.c.b16 %v829, %v825
    %v1254 = vpack.c.b16 %v834, %v830
    %v1255 = vpack.c.b16 %v835, %v831
    %v1256 = vpack.c.b16 %v836, %v832
    %v1257 = vpack.c.b16 %v837, %v833
    %v1258 = vpack.c.b16 %v842, %v838
    %v1259 = vpack.c.b16 %v843, %v839
    %v1260 = vpack.c.b16 %v844, %v840
    %v1261 = vpack.c.b16 %v845, %v841
    %v1262 = vpack.c.b16 %v850, %v846
    %v1263 = vpack.c.b16 %v851, %v847
    %v1264 = vpack.c.b16 %v852, %v848
    %v1265 = vpack.c.b16 %v853, %v849
    %v1266 = vpack.c.b16 %v858, %v854
    %v1267 = vpack.c.b16 %v859, %v855
    %v1268 = vpack.c.b16 %v860, %v856
    %v1269 = vpack.c.b16 %v861, %v857
    %v1270 = vpack.c.b16 %v866, %v862
    %v1271 = vpack.c.b16 %v867, %v863
    %v1272 = vpack.c.b16 %v868, %v864
    %v1273 = vpack.c.b16 %v869, %v865
    %v1274 = vpack.c.b16 %v874, %v870
    %v1275 = vpack.c.b16 %v875, %v871
    %v1276 = vpack.c.b16 %v876, %v872
    %v1277 = vpack.c.b16 %v877, %v873
    %v1278 = vpack.c.b16 %v882, %v878
    %v1279 = vpack.c.b16 %v883, %v879
    %v1280 = vpack.c.b16 %v884, %v880
    %v1281 = vpack.c.b16 %v885, %v881
    %v1282 = vpack.c.b16 %v890, %v886
    %v1283 = vpack.c.b16 %v891, %v887
    %v1284 = vpack.c.b16 %v892, %v888
    %v1285 = vpack.c.b16 %v893, %v889
    %v1286 = vpack.c.b16 %v898, %v894
    %v1287 = vpack.c.b16 %v899, %v895
    %v1288 = vpack.c.b16 %v900, %v896
    %v1289 = vpack.c.b16 %v901, %v897
    %v1290 = vpack.c.b16 %v906, %v902
    %v1291 = vpack.c.b16 %v907, %v903
    %v1292 = vpack.c.b16 %v908, %v904
    %v1293 = vpack.c.b16 %v909, %v905
    %v1294 = vpack.c.b16 %v914, %v910
    %v1295 = vpack.c.b16 %v915, %v911
    %v1296 = vpack.c.b16 %v916, %v912
    %v1297 = vpack.c.b16 %v917, %v913
    %v1298 = vpack.c.b16 %v922, %v918
    %v1299 = vpack.c.b16 %v923, %v919
    %v1300 = vpack.c.b16 %v924, %v920
    %v1301 = vpack.c.b16 %v925, %v921
    %v1302 = vpack.c.b16 %v930, %v926
    %v1303 = vpack.c.b16 %v931, %v927
    %v1304 = vpack.c.b16 %v932, %v928
    %v1305 = vpack.c.b16 %v933, %v929
    %v1306 = vpack.c.b16 %v938, %v934
    %v1307 = vpack.c.b16 %v939, %v935
    %v1308 = vpack.c.b16 %v940, %v936
    %v1309 = vpack.c.b16 %v941, %v937
    %v1310 = vpack.c.b16 %v946, %v942
    %v1311 = vpack.c.b16 %v947, %v943
    %v1312 = vpack.c.b16 %v948, %v944
    %v1313 = vpack.c.b16 %v949, %v945
    %v1314 = vpack.c.b16 %v954, %v950
    %v1315 = vpack.c.b16 %v955, %v951
    %v1316 = vpack.c.b16 %v956, %v952
    %v1317 = vpack.c.b16 %v957, %v953
    %v1318 = vpack.c.b16 %v962, %v958
    %v1319 = vpack.c.b16 %v963, %v959
    %v1320 = vpack.c.b16 %v964, %v960
    %v1321 = vpack.c.b16 %v965, %v961
    %v1322 = vpack.c.b16 %v970, %v966
    %v1323 = vpack.c.b16 %v971, %v967
    %v1324 = vpack.c.b16 %v972, %v968
    %v1325 = vpack.c.b16 %v973, %v969
    %v1326 = vpack.c.b16 %v978, %v974
    %v1327 = vpack.c.b16 %v979, %v975
    %v1328 = vpack.c.b16 %v980, %v976
    %v1329 = vpack.c.b16 %v981, %v977
    %v1330 = vpack.c.b16 %v986, %v982
    %v1331 = vpack.c.b16 %v987, %v983
    %v1332 = vpack.c.b16 %v988, %v984
    %v1333 = vpack.c.b16 %v989, %v985
    %v1334 = vpack.c.b16 %v994, %v990
    %v1335 = vpack.c.b16 %v995, %v991
    %v1336 = vpack.c.b16 %v996, %v992
    %v1337 = vpack.c.b16 %v997, %v993
    %v1338 = vpack.c.b16 %v1002, %v998
    %v1339 = vpack.c.b16 %v1003, %v999
    %v1340 = vpack.c.b16 %v1004, %v1000
    %v1341 = vpack.c.b16 %v1005, %v1001
    %v1342 = vpack.c.b16 %v1010, %v1006
    %v1343 = vpack.c.b16 %v1011, %v1007
    %v1344 = vpack.c.b16 %v1012, %v1008
    %v1345 = vpack.c.b16 %v1013, %v1009
    %v1346 = vpack.c.b16 %v1018, %v1014
    %v1347 = vpack.c.b16 %v1019, %v1015
    %v1348 = vpack.c.b16 %v1020, %v1016
    %v1349 = vpack.c.b16 %v1021, %v1017
    %v1350 = vpack.c.b16 %v1026, %v1022
    %v1351 = vpack.c.b16 %v1027, %v1023
    %v1352 = vpack.c.b16 %v1028, %v1024
    %v1353 = vpack.c.b16 %v1029, %v1025
    %v1354 = vpack.c.b16 %v1034, %v1030
    %v1355 = vpack.c.b16 %v1035, %v1031
    %v1356 = vpack.c.b16 %v1036, %v1032
    %v1357 = vpack.c.b16 %v1037, %v1033
    %v1358 = vpack.c.b16 %v1042, %v1038
    %v1359 = vpack.c.b16 %v1043, %v1039
    %v1360 = vpack.c.b16 %v1044, %v1040
    %v1361 = vpack.c.b16 %v1045, %v1041
    %v1362 = vpack.c.b16 %v1050, %v1046
    %v1363 = vpack.c.b16 %v1051, %v1047
    %v1364 = vpack.c.b16 %v1052, %v1048
    %v1365 = vpack.c.b16 %v1053, %v1049
    %v1366 = vpack.c.b16 %v1058, %v1054
    %v1367 = vpack.c.b16 %v1059, %v1055
    %v1368 = vpack.c.b16 %v1060, %v1056
    %v1369 = vpack.c.b16 %v1061, %v1057
    %v1370 = vpack.c.b16 %v1066, %v1062
    %v1371 = vpack.c.b16 %v1067, %v1063
    %v1372 = vpack.c.b16 %v1068, %v1064
    %v1373 = vpack.c.b16 %v1069, %v1065
    %v1374 = vpack.c.b16 %v1074, %v1070
    %v1375 = vpack.c.b16 %v1075, %v1071
    %v1376 = vpack.c.b16 %v1076, %v1072
    %v1377 = vpack.c.b16 %v1077, %v1073
    %v1378 = vpack.c.b16 %v1082, %v1078
    %v1379 = vpack.c.b16 %v1083, %v1079
    %v1380 = vpack.c.b16 %v1084, %v1080
    %v1381 = vpack.c.b16 %v1085, %v1081
    %v1382 = vpack.c.b16 %v1090, %v1086
    %v1383 = vpack.c.b16 %v1091, %v1087
    %v1384 = vpack.c.b16 %v1092, %v1088
    %v1385 = vpack.c.b16 %v1093, %v1089
    %v1386 = vpack.c.b16 %v1098, %v1094
    %v1387 = vpack.c.b16 %v1099, %v1095
    %v1388 = vpack.c.b16 %v1100, %v1096
    %v1389 = vpack.c.b16 %v1101, %v1097
    %v1390 = vpack.c.b16 %v1106, %v1102
    %v1391 = vpack.c.b16 %v1107, %v1103
    %v1392 = vpack.c.b16 %v1108, %v1104
    %v1393 = vpack.c.b16 %v1109, %v1105
    %v1394 = vpack.c.b16 %v1114, %v1110
    %v1395 = vpack.c.b16 %v1115, %v1111
    %v1396 = vpack.c.b16 %v1116, %v1112
    %v1397 = vpack.c.b16 %v1117, %v1113
    %v1398 = vpack.c.b16 %v1122, %v1118
    %v1399 = vpack.c.b16 %v1123, %v1119
    %v1400 = vpack.c.b16 %v1124, %v1120
    %v1401 = vpack.c.b16 %v1125, %v1121
    %v1402 = vpack.c.b16 %v1130, %v1126
    %v1403 = vpack.c.b16 %v1131, %v1127
    %v1404 = vpack.c.b16 %v1132, %v1128
    %v1405 = vpack.c.b16 %v1133, %v1129
    %v1406 = vpack.c.b16 %v1138, %v1134
    %v1407 = vpack.c.b16 %v1139, %v1135
    %v1408 = vpack.c.b16 %v1140, %v1136
    %v1409 = vpack.c.b16 %v1141, %v1137
    %v1410 = vpack.c.b16 %v1146, %v1142
    %v1411 = vpack.c.b16 %v1147, %v1143
    %v1412 = vpack.c.b16 %v1148, %v1144
    %v1413 = vpack.c.b16 %v1149, %v1145
    %v1414 = vpack.c.b16 %v1154, %v1150
    %v1415 = vpack.c.b16 %v1155, %v1151
    %v1416 = vpack.c.b16 %v1156, %v1152
    %v1417 = vpack.c.b16 %v1157, %v1153
    %v1418 = vpack.c.b16 %v1162, %v1158
    %v1419 = vpack.c.b16 %v1163, %v1159
    %v1420 = vpack.c.b16 %v1164, %v1160
    %v1421 = vpack.c.b16 %v1165, %v1161
    %1678 = vmatpush.bf16.msra.mxu0 %v1194
    %1679 = vmatpush.bf16.msra.mxu0 %v1190
    %1680 = vmatpush.bf16.msra.mxu0 %v1186
    %1681 = vmatpush.bf16.msra.mxu0 %v1182
    %1682 = vmatpush.bf16.msra.mxu0 %v1178
    %1683 = vmatpush.bf16.msra.mxu0 %v1174
    %1684 = vmatpush.bf16.msra.mxu0 %v1170
    %1685 = vmatpush.bf16.msra.mxu0 %v1166
    %1686 = vmatmul.bf16.gmra.mxu0 %v130
    %v1687 = vpop.f32.mrf.mxu0
    %v1688 = vadd.f32 %v394, %v1687
    %v1689 = vpop.f32.mrf.mxu0
    %v1690 = vadd.f32 %v394, %v1689
    %1691 = vdwg.mxu0
    %1692 = vmatpush.bf16.msra.mxu0 %v1226
    %1693 = vmatpush.bf16.msra.mxu0 %v1222
    %1694 = vmatpush.bf16.msra.mxu0 %v1218
    %1695 = vmatpush.bf16.msra.mxu0 %v1214
    %1696 = vmatpush.bf16.msra.mxu0 %v1210
    %1697 = vmatpush.bf16.msra.mxu0 %v1206
    %1698 = vmatpush.bf16.msra.mxu0 %v1202
    %1699 = vmatpush.bf16.msra.mxu0 %v1198
    %1700 = vmatmul.bf16.gmra.mxu0 %v131
    %v1701 = vpop.f32.mrf.mxu0
    %v1702 = vadd.f32 %v1688, %v1701
    %v1703 = vpop.f32.mrf.mxu0
    %v1704 = vadd.f32 %v1690, %v1703
    %1705 = vdwg.mxu0
    %1706 = vmatpush.bf16.msra.mxu0 %v1258
    %1707 = vmatpush.bf16.msra.mxu0 %v1254
    %1708 = vmatpush.bf16.msra.mxu0 %v1250
    %1709 = vmatpush.bf16.msra.mxu0 %v1246
    %1710 = vmatpush.bf16.msra.mxu0 %v1242
    %1711 = vmatpush.bf16.msra.mxu0 %v1238
    %1712 = vmatpush.bf16.msra.mxu0 %v1234
    %1713 = vmatpush.bf16.msra.mxu0 %v1230
    %1714 = vmatmul.bf16.gmra.mxu0 %v132
    %v1715 = vpop.f32.mrf.mxu0
    %v1716 = vadd.f32 %v1702, %v1715
    %v1717 = vpop.f32.mrf.mxu0
    %v1718 = vadd.f32 %v1704, %v1717
    %1719 = vdwg.mxu0
    %1720 = vmatpush.bf16.msra.mxu0 %v1290
    %1721 = vmatpush.bf16.msra.mxu0 %v1286
    %1722 = vmatpush.bf16.msra.mxu0 %v1282
    %1723 = vmatpush.bf16.msra.mxu0 %v1278
    %1724 = vmatpush.bf16.msra.mxu0 %v1274
    %1725 = vmatpush.bf16.msra.mxu0 %v1270
    %1726 = vmatpush.bf16.msra.mxu0 %v1266
    %1727 = vmatpush.bf16.msra.mxu0 %v1262
    %1728 = vmatmul.bf16.gmra.mxu0 %v133
    %v1729 = vpop.f32.mrf.mxu0
    %v1730 = vadd.f32 %v1716, %v1729
    %v1731 = vpop.f32.mrf.mxu0
    %v1732 = vadd.f32 %v1718, %v1731
    %1733 = vdwg.mxu0
    %1734 = vmatpush.bf16.msra.mxu0 %v1322
    %1735 = vmatpush.bf16.msra.mxu0 %v1318
    %1736 = vmatpush.bf16.msra.mxu0 %v1314
    %1737 = vmatpush.bf16.msra.mxu0 %v1310
    %1738 = vmatpush.bf16.msra.mxu0 %v1306
    %1739 = vmatpush.bf16.msra.mxu0 %v1302
    %1740 = vmatpush.bf16.msra.mxu0 %v1298
    %1741 = vmatpush.bf16.msra.mxu0 %v1294
    %1742 = vmatmul.bf16.gmra.mxu0 %v134
    %v1743 = vpop.f32.mrf.mxu0
    %v1744 = vadd.f32 %v1730, %v1743
    %v1745 = vpop.f32.mrf.mxu0
    %v1746 = vadd.f32 %v1732, %v1745
    %1747 = vdwg.mxu0
    %1748 = vmatpush.bf16.msra.mxu0 %v1354
    %1749 = vmatpush.bf16.msra.mxu0 %v1350
    %1750 = vmatpush.bf16.msra.mxu0 %v1346
    %1751 = vmatpush.bf16.msra.mxu0 %v1342
    %1752 = vmatpush.bf16.msra.mxu0 %v1338
    %1753 = vmatpush.bf16.msra.mxu0 %v1334
    %1754 = vmatpush.bf16.msra.mxu0 %v1330
    %1755 = vmatpush.bf16.msra.mxu0 %v1326
    %1756 = vmatmul.bf16.gmra.mxu0 %v135
    %v1757 = vpop.f32.mrf.mxu0
    %v1758 = vadd.f32 %v1744, %v1757
    %v1759 = vpop.f32.mrf.mxu0
    %v1760 = vadd.f32 %v1746, %v1759
    %1761 = vdwg.mxu0
    %1762 = vmatpush.bf16.msra.mxu0 %v1386
    %1763 = vmatpush.bf16.msra.mxu0 %v1382
    %1764 = vmatpush.bf16.msra.mxu0 %v1378
    %1765 = vmatpush.bf16.msra.mxu0 %v1374
    %1766 = vmatpush.bf16.msra.mxu0 %v1370
    %1767 = vmatpush.bf16.msra.mxu0 %v1366
    %1768 = vmatpush.bf16.msra.mxu0 %v1362
    %1769 = vmatpush.bf16.msra.mxu0 %v1358
    %1770 = vmatmul.bf16.gmra.mxu0 %v136
    %v1771 = vpop.f32.mrf.mxu0
    %v1772 = vadd.f32 %v1758, %v1771
    %v1773 = vpop.f32.mrf.mxu0
    %v1774 = vadd.f32 %v1760, %v1773
    %1775 = vdwg.mxu0
    %1776 = vmatpush.bf16.msra.mxu0 %v1418
    %1777 = vmatpush.bf16.msra.mxu0 %v1414
    %1778 = vmatpush.bf16.msra.mxu0 %v1410
    %1779 = vmatpush.bf16.msra.mxu0 %v1406
    %1780 = vmatpush.bf16.msra.mxu0 %v1402
    %1781 = vmatpush.bf16.msra.mxu0 %v1398
    %1782 = vmatpush.bf16.msra.mxu0 %v1394
    %1783 = vmatpush.bf16.msra.mxu0 %v1390
    %1784 = vmatmul.bf16.gmra.mxu0 %v137
    %v1785 = vpop.f32.mrf.mxu0
    %v1786 = vadd.f32 %v1772, %v1785
    %v1787 = vpop.f32.mrf.mxu0
    %v1788 = vadd.f32 %v1774, %v1787
    %1789 = vdwg.mxu0
    %1790 = vmatpush.bf16.msra.mxu0 %v1195
    %1791 = vmatpush.bf16.msra.mxu0 %v1191
    %1792 = vmatpush.bf16.msra.mxu0 %v1187
    %1793 = vmatpush.bf16.msra.mxu0 %v1183
    %1794 = vmatpush.bf16.msra.mxu0 %v1179
    %1795 = vmatpush.bf16.msra.mxu0 %v1175
    %1796 = vmatpush.bf16.msra.mxu0 %v1171
    %1797 = vmatpush.bf16.msra.mxu0 %v1167
    %1798 = vmatmul.bf16.gmra.mxu0 %v130
    %v1799 = vpop.f32.mrf.mxu0
    %v1800 = vadd.f32 %v395, %v1799
    %v1801 = vpop.f32.mrf.mxu0
    %v1802 = vadd.f32 %v395, %v1801
    %1803 = vdwg.mxu0
    %1804 = vmatpush.bf16.msra.mxu0 %v1227
    %1805 = vmatpush.bf16.msra.mxu0 %v1223
    %1806 = vmatpush.bf16.msra.mxu0 %v1219
    %1807 = vmatpush.bf16.msra.mxu0 %v1215
    %1808 = vmatpush.bf16.msra.mxu0 %v1211
    %1809 = vmatpush.bf16.msra.mxu0 %v1207
    %1810 = vmatpush.bf16.msra.mxu0 %v1203
    %1811 = vmatpush.bf16.msra.mxu0 %v1199
    %1812 = vmatmul.bf16.gmra.mxu0 %v131
    %v1813 = vpop.f32.mrf.mxu0
    %v1814 = vadd.f32 %v1800, %v1813
    %v1815 = vpop.f32.mrf.mxu0
    %v1816 = vadd.f32 %v1802, %v1815
    %1817 = vdwg.mxu0
    %1818 = vmatpush.bf16.msra.mxu0 %v1259
    %1819 = vmatpush.bf16.msra.mxu0 %v1255
    %1820 = vmatpush.bf16.msra.mxu0 %v1251
    %1821 = vmatpush.bf16.msra.mxu0 %v1247
    %1822 = vmatpush.bf16.msra.mxu0 %v1243
    %1823 = vmatpush.bf16.msra.mxu0 %v1239
    %1824 = vmatpush.bf16.msra.mxu0 %v1235
    %1825 = vmatpush.bf16.msra.mxu0 %v1231
    %1826 = vmatmul.bf16.gmra.mxu0 %v132
    %v1827 = vpop.f32.mrf.mxu0
    %v1828 = vadd.f32 %v1814, %v1827
    %v1829 = vpop.f32.mrf.mxu0
    %v1830 = vadd.f32 %v1816, %v1829
    %1831 = vdwg.mxu0
    %1832 = vmatpush.bf16.msra.mxu0 %v1291
    %1833 = vmatpush.bf16.msra.mxu0 %v1287
    %1834 = vmatpush.bf16.msra.mxu0 %v1283
    %1835 = vmatpush.bf16.msra.mxu0 %v1279
    %1836 = vmatpush.bf16.msra.mxu0 %v1275
    %1837 = vmatpush.bf16.msra.mxu0 %v1271
    %1838 = vmatpush.bf16.msra.mxu0 %v1267
    %1839 = vmatpush.bf16.msra.mxu0 %v1263
    %1840 = vmatmul.bf16.gmra.mxu0 %v133
    %v1841 = vpop.f32.mrf.mxu0
    %v1842 = vadd.f32 %v1828, %v1841
    %v1843 = vpop.f32.mrf.mxu0
    %v1844 = vadd.f32 %v1830, %v1843
    %1845 = vdwg.mxu0
    %1846 = vmatpush.bf16.msra.mxu0 %v1323
    %1847 = vmatpush.bf16.msra.mxu0 %v1319
    %1848 = vmatpush.bf16.msra.mxu0 %v1315
    %1849 = vmatpush.bf16.msra.mxu0 %v1311
    %1850 = vmatpush.bf16.msra.mxu0 %v1307
    %1851 = vmatpush.bf16.msra.mxu0 %v1303
    %1852 = vmatpush.bf16.msra.mxu0 %v1299
    %1853 = vmatpush.bf16.msra.mxu0 %v1295
    %1854 = vmatmul.bf16.gmra.mxu0 %v134
    %v1855 = vpop.f32.mrf.mxu0
    %v1856 = vadd.f32 %v1842, %v1855
    %v1857 = vpop.f32.mrf.mxu0
    %v1858 = vadd.f32 %v1844, %v1857
    %1859 = vdwg.mxu0
    %1860 = vmatpush.bf16.msra.mxu0 %v1355
    %1861 = vmatpush.bf16.msra.mxu0 %v1351
    %1862 = vmatpush.bf16.msra.mxu0 %v1347
    %1863 = vmatpush.bf16.msra.mxu0 %v1343
    %1864 = vmatpush.bf16.msra.mxu0 %v1339
    %1865 = vmatpush.bf16.msra.mxu0 %v1335
    %1866 = vmatpush.bf16.msra.mxu0 %v1331
    %1867 = vmatpush.bf16.msra.mxu0 %v1327
    %1868 = vmatmul.bf16.gmra.mxu0 %v135
    %v1869 = vpop.f32.mrf.mxu0
    %v1870 = vadd.f32 %v1856, %v1869
    %v1871 = vpop.f32.mrf.mxu0
    %v1872 = vadd.f32 %v1858, %v1871
    %1873 = vdwg.mxu0
    %1874 = vmatpush.bf16.msra.mxu0 %v1387
    %1875 = vmatpush.bf16.msra.mxu0 %v1383
    %1876 = vmatpush.bf16.msra.mxu0 %v1379
    %1877 = vmatpush.bf16.msra.mxu0 %v1375
    %1878 = vmatpush.bf16.msra.mxu0 %v1371
    %1879 = vmatpush.bf16.msra.mxu0 %v1367
    %1880 = vmatpush.bf16.msra.mxu0 %v1363
    %1881 = vmatpush.bf16.msra.mxu0 %v1359
    %1882 = vmatmul.bf16.gmra.mxu0 %v136
    %v1883 = vpop.f32.mrf.mxu0
    %v1884 = vadd.f32 %v1870, %v1883
    %v1885 = vpop.f32.mrf.mxu0
    %v1886 = vadd.f32 %v1872, %v1885
    %1887 = vdwg.mxu0
    %1888 = vmatpush.bf16.msra.mxu0 %v1419
    %1889 = vmatpush.bf16.msra.mxu0 %v1415
    %1890 = vmatpush.bf16.msra.mxu0 %v1411
    %1891 = vmatpush.bf16.msra.mxu0 %v1407
    %1892 = vmatpush.bf16.msra.mxu0 %v1403
    %1893 = vmatpush.bf16.msra.mxu0 %v1399
    %1894 = vmatpush.bf16.msra.mxu0 %v1395
    %1895 = vmatpush.bf16.msra.mxu0 %v1391
    %1896 = vmatmul.bf16.gmra.mxu0 %v137
    %v1897 = vpop.f32.mrf.mxu0
    %v1898 = vadd.f32 %v1884, %v1897
    %v1899 = vpop.f32.mrf.mxu0
    %v1900 = vadd.f32 %v1886, %v1899
    %1901 = vdwg.mxu0
    %1902 = vmatpush.bf16.msra.mxu0 %v1196
    %1903 = vmatpush.bf16.msra.mxu0 %v1192
    %1904 = vmatpush.bf16.msra.mxu0 %v1188
    %1905 = vmatpush.bf16.msra.mxu0 %v1184
    %1906 = vmatpush.bf16.msra.mxu0 %v1180
    %1907 = vmatpush.bf16.msra.mxu0 %v1176
    %1908 = vmatpush.bf16.msra.mxu0 %v1172
    %1909 = vmatpush.bf16.msra.mxu0 %v1168
    %1910 = vmatmul.bf16.gmra.mxu0 %v130
    %v1911 = vpop.f32.mrf.mxu0
    %v1912 = vadd.f32 %v396, %v1911
    %v1913 = vpop.f32.mrf.mxu0
    %v1914 = vadd.f32 %v396, %v1913
    %1915 = vdwg.mxu0
    %1916 = vmatpush.bf16.msra.mxu0 %v1228
    %1917 = vmatpush.bf16.msra.mxu0 %v1224
    %1918 = vmatpush.bf16.msra.mxu0 %v1220
    %1919 = vmatpush.bf16.msra.mxu0 %v1216
    %1920 = vmatpush.bf16.msra.mxu0 %v1212
    %1921 = vmatpush.bf16.msra.mxu0 %v1208
    %1922 = vmatpush.bf16.msra.mxu0 %v1204
    %1923 = vmatpush.bf16.msra.mxu0 %v1200
    %1924 = vmatmul.bf16.gmra.mxu0 %v131
    %v1925 = vpop.f32.mrf.mxu0
    %v1926 = vadd.f32 %v1912, %v1925
    %v1927 = vpop.f32.mrf.mxu0
    %v1928 = vadd.f32 %v1914, %v1927
    %1929 = vdwg.mxu0
    %1930 = vmatpush.bf16.msra.mxu0 %v1260
    %1931 = vmatpush.bf16.msra.mxu0 %v1256
    %1932 = vmatpush.bf16.msra.mxu0 %v1252
    %1933 = vmatpush.bf16.msra.mxu0 %v1248
    %1934 = vmatpush.bf16.msra.mxu0 %v1244
    %1935 = vmatpush.bf16.msra.mxu0 %v1240
    %1936 = vmatpush.bf16.msra.mxu0 %v1236
    %1937 = vmatpush.bf16.msra.mxu0 %v1232
    %1938 = vmatmul.bf16.gmra.mxu0 %v132
    %v1939 = vpop.f32.mrf.mxu0
    %v1940 = vadd.f32 %v1926, %v1939
    %v1941 = vpop.f32.mrf.mxu0
    %v1942 = vadd.f32 %v1928, %v1941
    %1943 = vdwg.mxu0
    %1944 = vmatpush.bf16.msra.mxu0 %v1292
    %1945 = vmatpush.bf16.msra.mxu0 %v1288
    %1946 = vmatpush.bf16.msra.mxu0 %v1284
    %1947 = vmatpush.bf16.msra.mxu0 %v1280
    %1948 = vmatpush.bf16.msra.mxu0 %v1276
    %1949 = vmatpush.bf16.msra.mxu0 %v1272
    %1950 = vmatpush.bf16.msra.mxu0 %v1268
    %1951 = vmatpush.bf16.msra.mxu0 %v1264
    %1952 = vmatmul.bf16.gmra.mxu0 %v133
    %v1953 = vpop.f32.mrf.mxu0
    %v1954 = vadd.f32 %v1940, %v1953
    %v1955 = vpop.f32.mrf.mxu0
    %v1956 = vadd.f32 %v1942, %v1955
    %1957 = vdwg.mxu0
    %1958 = vmatpush.bf16.msra.mxu0 %v1324
    %1959 = vmatpush.bf16.msra.mxu0 %v1320
    %1960 = vmatpush.bf16.msra.mxu0 %v1316
    %1961 = vmatpush.bf16.msra.mxu0 %v1312
    %1962 = vmatpush.bf16.msra.mxu0 %v1308
    %1963 = vmatpush.bf16.msra.mxu0 %v1304
    %1964 = vmatpush.bf16.msra.mxu0 %v1300
    %1965 = vmatpush.bf16.msra.mxu0 %v1296
    %1966 = vmatmul.bf16.gmra.mxu0 %v134
    %v1967 = vpop.f32.mrf.mxu0
    %v1968 = vadd.f32 %v1954, %v1967
    %v1969 = vpop.f32.mrf.mxu0
    %v1970 = vadd.f32 %v1956, %v1969
    %1971 = vdwg.mxu0
    %1972 = vmatpush.bf16.msra.mxu0 %v1356
    %1973 = vmatpush.bf16.msra.mxu0 %v1352
    %1974 = vmatpush.bf16.msra.mxu0 %v1348
    %1975 = vmatpush.bf16.msra.mxu0 %v1344
    %1976 = vmatpush.bf16.msra.mxu0 %v1340
    %1977 = vmatpush.bf16.msra.mxu0 %v1336
    %1978 = vmatpush.bf16.msra.mxu0 %v1332
    %1979 = vmatpush.bf16.msra.mxu0 %v1328
    %1980 = vmatmul.bf16.gmra.mxu0 %v135
    %v1981 = vpop.f32.mrf.mxu0
    %v1982 = vadd.f32 %v1968, %v1981
    %v1983 = vpop.f32.mrf.mxu0
    %v1984 = vadd.f32 %v1970, %v1983
    %1985 = vdwg.mxu0
    %1986 = vmatpush.bf16.msra.mxu0 %v1388
    %1987 = vmatpush.bf16.msra.mxu0 %v1384
    %1988 = vmatpush.bf16.msra.mxu0 %v1380
    %1989 = vmatpush.bf16.msra.mxu0 %v1376
    %1990 = vmatpush.bf16.msra.mxu0 %v1372
    %1991 = vmatpush.bf16.msra.mxu0 %v1368
    %1992 = vmatpush.bf16.msra.mxu0 %v1364
    %1993 = vmatpush.bf16.msra.mxu0 %v1360
    %1994 = vmatmul.bf16.gmra.mxu0 %v136
    %v1995 = vpop.f32.mrf.mxu0
    %v1996 = vadd.f32 %v1982, %v1995
    %v1997 = vpop.f32.mrf.mxu0
    %v1998 = vadd.f32 %v1984, %v1997
    %1999 = vdwg.mxu0
    %2000 = vmatpush.bf16.msra.mxu0 %v1420
    %2001 = vmatpush.bf16.msra.mxu0 %v1416
    %2002 = vmatpush.bf16.msra.mxu0 %v1412
    %2003 = vmatpush.bf16.msra.mxu0 %v1408
    %2004 = vmatpush.bf16.msra.mxu0 %v1404
    %2005 = vmatpush.bf16.msra.mxu0 %v1400
    %2006 = vmatpush.bf16.msra.mxu0 %v1396
    %2007 = vmatpush.bf16.msra.mxu0 %v1392
    %2008 = vmatmul.bf16.gmra.mxu0 %v137
    %v2009 = vpop.f32.mrf.mxu0
    %v2010 = vadd.f32 %v1996, %v2009
    %v2011 = vpop.f32.mrf.mxu0
    %v2012 = vadd.f32 %v1998, %v2011
    %2013 = vdwg.mxu0
    %2014 = vmatpush.bf16.msra.mxu0 %v1197
    %2015 = vmatpush.bf16.msra.mxu0 %v1193
    %2016 = vmatpush.bf16.msra.mxu0 %v1189
    %2017 = vmatpush.bf16.msra.mxu0 %v1185
    %2018 = vmatpush.bf16.msra.mxu0 %v1181
    %2019 = vmatpush.bf16.msra.mxu0 %v1177
    %2020 = vmatpush.bf16.msra.mxu0 %v1173
    %2021 = vmatpush.bf16.msra.mxu0 %v1169
    %2022 = vmatmul.bf16.gmra.mxu0 %v130
    %v2023 = vpop.f32.mrf.mxu0
    %v2024 = vadd.f32 %v397, %v2023
    %v2025 = vpop.f32.mrf.mxu0
    %v2026 = vadd.f32 %v397, %v2025
    %2027 = vdwg.mxu0
    %2028 = vmatpush.bf16.msra.mxu0 %v1229
    %2029 = vmatpush.bf16.msra.mxu0 %v1225
    %2030 = vmatpush.bf16.msra.mxu0 %v1221
    %2031 = vmatpush.bf16.msra.mxu0 %v1217
    %2032 = vmatpush.bf16.msra.mxu0 %v1213
    %2033 = vmatpush.bf16.msra.mxu0 %v1209
    %2034 = vmatpush.bf16.msra.mxu0 %v1205
    %2035 = vmatpush.bf16.msra.mxu0 %v1201
    %2036 = vmatmul.bf16.gmra.mxu0 %v131
    %v2037 = vpop.f32.mrf.mxu0
    %v2038 = vadd.f32 %v2024, %v2037
    %v2039 = vpop.f32.mrf.mxu0
    %v2040 = vadd.f32 %v2026, %v2039
    %2041 = vdwg.mxu0
    %2042 = vmatpush.bf16.msra.mxu0 %v1261
    %2043 = vmatpush.bf16.msra.mxu0 %v1257
    %2044 = vmatpush.bf16.msra.mxu0 %v1253
    %2045 = vmatpush.bf16.msra.mxu0 %v1249
    %2046 = vmatpush.bf16.msra.mxu0 %v1245
    %2047 = vmatpush.bf16.msra.mxu0 %v1241
    %2048 = vmatpush.bf16.msra.mxu0 %v1237
    %2049 = vmatpush.bf16.msra.mxu0 %v1233
    %2050 = vmatmul.bf16.gmra.mxu0 %v132
    %v2051 = vpop.f32.mrf.mxu0
    %v2052 = vadd.f32 %v2038, %v2051
    %v2053 = vpop.f32.mrf.mxu0
    %v2054 = vadd.f32 %v2040, %v2053
    %2055 = vdwg.mxu0
    %2056 = vmatpush.bf16.msra.mxu0 %v1293
    %2057 = vmatpush.bf16.msra.mxu0 %v1289
    %2058 = vmatpush.bf16.msra.mxu0 %v1285
    %2059 = vmatpush.bf16.msra.mxu0 %v1281
    %2060 = vmatpush.bf16.msra.mxu0 %v1277
    %2061 = vmatpush.bf16.msra.mxu0 %v1273
    %2062 = vmatpush.bf16.msra.mxu0 %v1269
    %2063 = vmatpush.bf16.msra.mxu0 %v1265
    %2064 = vmatmul.bf16.gmra.mxu0 %v133
    %v2065 = vpop.f32.mrf.mxu0
    %v2066 = vadd.f32 %v2052, %v2065
    %v2067 = vpop.f32.mrf.mxu0
    %v2068 = vadd.f32 %v2054, %v2067
    %2069 = vdwg.mxu0
    %2070 = vmatpush.bf16.msra.mxu0 %v1325
    %2071 = vmatpush.bf16.msra.mxu0 %v1321
    %2072 = vmatpush.bf16.msra.mxu0 %v1317
    %2073 = vmatpush.bf16.msra.mxu0 %v1313
    %2074 = vmatpush.bf16.msra.mxu0 %v1309
    %2075 = vmatpush.bf16.msra.mxu0 %v1305
    %2076 = vmatpush.bf16.msra.mxu0 %v1301
    %2077 = vmatpush.bf16.msra.mxu0 %v1297
    %2078 = vmatmul.bf16.gmra.mxu0 %v134
    %v2079 = vpop.f32.mrf.mxu0
    %v2080 = vadd.f32 %v2066, %v2079
    %v2081 = vpop.f32.mrf.mxu0
    %v2082 = vadd.f32 %v2068, %v2081
    %2083 = vdwg.mxu0
    %2084 = vmatpush.bf16.msra.mxu0 %v1357
    %2085 = vmatpush.bf16.msra.mxu0 %v1353
    %2086 = vmatpush.bf16.msra.mxu0 %v1349
    %2087 = vmatpush.bf16.msra.mxu0 %v1345
    %2088 = vmatpush.bf16.msra.mxu0 %v1341
    %2089 = vmatpush.bf16.msra.mxu0 %v1337
    %2090 = vmatpush.bf16.msra.mxu0 %v1333
    %2091 = vmatpush.bf16.msra.mxu0 %v1329
    %2092 = vmatmul.bf16.gmra.mxu0 %v135
    %v2093 = vpop.f32.mrf.mxu0
    %v2094 = vadd.f32 %v2080, %v2093
    %v2095 = vpop.f32.mrf.mxu0
    %v2096 = vadd.f32 %v2082, %v2095
    %2097 = vdwg.mxu0
    %2098 = vmatpush.bf16.msra.mxu0 %v1389
    %2099 = vmatpush.bf16.msra.mxu0 %v1385
    %2100 = vmatpush.bf16.msra.mxu0 %v1381
    %2101 = vmatpush.bf16.msra.mxu0 %v1377
    %2102 = vmatpush.bf16.msra.mxu0 %v1373
    %2103 = vmatpush.bf16.msra.mxu0 %v1369
    %2104 = vmatpush.bf16.msra.mxu0 %v1365
    %2105 = vmatpush.bf16.msra.mxu0 %v1361
    %2106 = vmatmul.bf16.gmra.mxu0 %v136
    %v2107 = vpop.f32.mrf.mxu0
    %v2108 = vadd.f32 %v2094, %v2107
    %v2109 = vpop.f32.mrf.mxu0
    %v2110 = vadd.f32 %v2096, %v2109
    %2111 = vdwg.mxu0
    %2112 = vmatpush.bf16.msra.mxu0 %v1421
    %2113 = vmatpush.bf16.msra.mxu0 %v1417
    %2114 = vmatpush.bf16.msra.mxu0 %v1413
    %2115 = vmatpush.bf16.msra.mxu0 %v1409
    %2116 = vmatpush.bf16.msra.mxu0 %v1405
    %2117 = vmatpush.bf16.msra.mxu0 %v1401
    %2118 = vmatpush.bf16.msra.mxu0 %v1397
    %2119 = vmatpush.bf16.msra.mxu0 %v1393
    %2120 = vmatmul.bf16.gmra.mxu0 %v137
    %v2121 = vpop.f32.mrf.mxu0
    %v2122 = vadd.f32 %v2108, %v2121
    %v2123 = vpop.f32.mrf.mxu0
    %v2124 = vadd.f32 %v2110, %v2123
    %2125 = vdwg.mxu0
    %2126 = vmatpush.msra.mxu0 %v57
    %2127 = vmatpush.msra.mxu0 %v56
    %2128 = vmatpush.msra.mxu0 %v55
    %2129 = vmatpush.msra.mxu0 %v54
    %2130 = vmatpush.msra.mxu0 %v53
    %2131 = vmatpush.msra.mxu0 %v52
    %2132 = vmatpush.msra.mxu0 %v51
    %2133 = vmatpush.msra.mxu0 %v50
    %2134 = vmatpush.msra.mxu0 %v49
    %2135 = vmatpush.msra.mxu0 %v48
    %2136 = vmatpush.msra.mxu0 %v47
    %2137 = vmatpush.msra.mxu0 %v46
    %2138 = vmatpush.msra.mxu0 %v45
    %2139 = vmatpush.msra.mxu0 %v44
    %2140 = vmatpush.msra.mxu0 %v43
    %2141 = vmatpush.msra.mxu0 %v42
    %2142 = vmatmul.f32.gmra.mxu0 %v1786
    %v2143 = vpop.f32.mrf.mxu0
    %v2144 = vadd.f32 0.0, %v2143
    %2145 = vmatmul.f32.gmra.mxu0 %v1788
    %v2146 = vpop.f32.mrf.mxu0
    %v2147 = vadd.f32 0.0, %v2146
    %2148 = vdwg.mxu0
    %2149 = vmatpush.msra.mxu0 %v73
    %2150 = vmatpush.msra.mxu0 %v72
    %2151 = vmatpush.msra.mxu0 %v71
    %2152 = vmatpush.msra.mxu0 %v70
    %2153 = vmatpush.msra.mxu0 %v69
    %2154 = vmatpush.msra.mxu0 %v68
    %2155 = vmatpush.msra.mxu0 %v67
    %2156 = vmatpush.msra.mxu0 %v66
    %2157 = vmatpush.msra.mxu0 %v65
    %2158 = vmatpush.msra.mxu0 %v64
    %2159 = vmatpush.msra.mxu0 %v63
    %2160 = vmatpush.msra.mxu0 %v62
    %2161 = vmatpush.msra.mxu0 %v61
    %2162 = vmatpush.msra.mxu0 %v60
    %2163 = vmatpush.msra.mxu0 %v59
    %2164 = vmatpush.msra.mxu0 %v58
    %2165 = vmatmul.f32.gmra.mxu0 %v1898
    %v2166 = vpop.f32.mrf.mxu0
    %v2167 = vadd.f32 %v2144, %v2166
    %2168 = vmatmul.f32.gmra.mxu0 %v1900
    %v2169 = vpop.f32.mrf.mxu0
    %v2170 = vadd.f32 %v2147, %v2169
    %2171 = vdwg.mxu0
    %2172 = vmatpush.msra.mxu0 %v89
    %2173 = vmatpush.msra.mxu0 %v88
    %2174 = vmatpush.msra.mxu0 %v87
    %2175 = vmatpush.msra.mxu0 %v86
    %2176 = vmatpush.msra.mxu0 %v85
    %2177 = vmatpush.msra.mxu0 %v84
    %2178 = vmatpush.msra.mxu0 %v83
    %2179 = vmatpush.msra.mxu0 %v82
    %2180 = vmatpush.msra.mxu0 %v81
    %2181 = vmatpush.msra.mxu0 %v80
    %2182 = vmatpush.msra.mxu0 %v79
    %2183 = vmatpush.msra.mxu0 %v78
    %2184 = vmatpush.msra.mxu0 %v77
    %2185 = vmatpush.msra.mxu0 %v76
    %2186 = vmatpush.msra.mxu0 %v75
    %2187 = vmatpush.msra.mxu0 %v74
    %2188 = vmatmul.f32.gmra.mxu0 %v2010
    %v2189 = vpop.f32.mrf.mxu0
    %v2190 = vadd.f32 %v2167, %v2189
    %2191 = vmatmul.f32.gmra.mxu0 %v2012
    %v2192 = vpop.f32.mrf.mxu0
    %v2193 = vadd.f32 %v2170, %v2192
    %2194 = vdwg.mxu0
    %2195 = vmatpush.msra.mxu0 %v105
    %2196 = vmatpush.msra.mxu0 %v104
    %2197 = vmatpush.msra.mxu0 %v103
    %2198 = vmatpush.msra.mxu0 %v102
    %2199 = vmatpush.msra.mxu0 %v101
    %2200 = vmatpush.msra.mxu0 %v100
    %2201 = vmatpush.msra.mxu0 %v99
    %2202 = vmatpush.msra.mxu0 %v98
    %2203 = vmatpush.msra.mxu0 %v97
    %2204 = vmatpush.msra.mxu0 %v96
    %2205 = vmatpush.msra.mxu0 %v95
    %2206 = vmatpush.msra.mxu0 %v94
    %2207 = vmatpush.msra.mxu0 %v93
    %2208 = vmatpush.msra.mxu0 %v92
    %2209 = vmatpush.msra.mxu0 %v91
    %2210 = vmatpush.msra.mxu0 %v90
    %2211 = vmatmul.f32.gmra.mxu0 %v2122
    %v2212 = vpop.f32.mrf.mxu0
    %v2213 = vadd.f32 %v2190, %v2212
    %2214 = vmatmul.f32.gmra.mxu0 %v2124
    %v2215 = vpop.f32.mrf.mxu0
    %v2216 = vadd.f32 %v2193, %v2215
    %2217 = vdwg.mxu0
    %v2218 = vmul.f32 %v2213, 0.015625
    %v2219 = vmul.f32 %v2216, 0.015625
    %vm2220 = vcmask 64512
    %v2222 = vsel %vm2220, %v2218, 0
    %v2225 = vsel %vm2220, %v2219, 0
    %2227 = vmatpush.msra.mxu0 0.0
    %2228 = vmatpush.msra.mxu0 0.0
    %2229 = vmatpush.msra.mxu0 0.0
    %2230 = vmatpush.msra.mxu0 0.0
    %2231 = vmatpush.msra.mxu0 0.0
    %2232 = vmatpush.msra.mxu0 0.0
    %2233 = vmatpush.msra.mxu0 0.0
    %2234 = vmatpush.msra.mxu0 0.0
    %2235 = vmatpush.msra.mxu0 0.0
    %2236 = vmatpush.msra.mxu0 0.0
    %2237 = vmatpush.msra.mxu0 0.0
    %2238 = vmatpush.msra.mxu0 0.0
    %2239 = vmatpush.msra.mxu0 0.0
    %2240 = vmatpush.msra.mxu0 0.0
    %2241 = vmatpush.msra.mxu0 0.0
    %2242 = vmatpush.msra.mxu0 %v106
    %2243 = vmatmul.f32.gmra.mxu0 %v2222
    %v2244 = vpop.f32.mrf.mxu0
    %v2245 = vadd.f32 0.0, %v2244
    %2246 = vmatmul.f32.gmra.mxu0 %v2225
    %v2247 = vpop.f32.mrf.mxu0
    %v2248 = vadd.f32 0.0, %v2247
    %2249 = vdwg.mxu0
    %2250 = vmatpush.msra.mxu0 0.0
    %2251 = vmatpush.msra.mxu0 0.0
    %2252 = vmatpush.msra.mxu0 0.0
    %2253 = vmatpush.msra.mxu0 0.0
    %2254 = vmatpush.msra.mxu0 0.0
    %2255 = vmatpush.msra.mxu0 0.0
    %2256 = vmatpush.msra.mxu0 0.0
    %2257 = vmatpush.msra.mxu0 0.0
    %2258 = vmatpush.msra.mxu0 0.0
    %2259 = vmatpush.msra.mxu0 0.0
    %2260 = vmatpush.msra.mxu0 0.0
    %2261 = vmatpush.msra.mxu0 0.0
    %2262 = vmatpush.msra.mxu0 0.0
    %2263 = vmatpush.msra.mxu0 0.0
    %2264 = vmatpush.msra.mxu0 0.0
    %2265 = vmatpush.msra.mxu0 %v107
    %2266 = vmatmul.f32.gmra.mxu0 %v2222
    %v2267 = vpop.f32.mrf.mxu0
    %v2268 = vadd.f32 0.0, %v2267
    %2269 = vmatmul.f32.gmra.mxu0 %v2225
    %v2270 = vpop.f32.mrf.mxu0
    %v2271 = vadd.f32 0.0, %v2270
    %2272 = vdwg.mxu0
    %2273 = vmatpush.msra.mxu0 0.0
    %2274 = vmatpush.msra.mxu0 0.0
    %2275 = vmatpush.msra.mxu0 0.0
    %2276 = vmatpush.msra.mxu0 0.0
    %2277 = vmatpush.msra.mxu0 0.0
    %2278 = vmatpush.msra.mxu0 0.0
    %2279 = vmatpush.msra.mxu0 0.0
    %2280 = vmatpush.msra.mxu0 0.0
    %2281 = vmatpush.msra.mxu0 0.0
    %2282 = vmatpush.msra.mxu0 0.0
    %2283 = vmatpush.msra.mxu0 0.0
    %2284 = vmatpush.msra.mxu0 0.0
    %2285 = vmatpush.msra.mxu0 0.0
    %2286 = vmatpush.msra.mxu0 0.0
    %2287 = vmatpush.msra.mxu0 0.0
    %2288 = vmatpush.msra.mxu0 %v108
    %2289 = vmatmul.f32.gmra.mxu0 %v2222
    %v2290 = vpop.f32.mrf.mxu0
    %v2291 = vadd.f32 0.0, %v2290
    %2292 = vmatmul.f32.gmra.mxu0 %v2225
    %v2293 = vpop.f32.mrf.mxu0
    %v2294 = vadd.f32 0.0, %v2293
    %2295 = vdwg.mxu0
    %2296 = vmatpush.msra.mxu0 0.0
    %2297 = vmatpush.msra.mxu0 0.0
    %2298 = vmatpush.msra.mxu0 0.0
    %2299 = vmatpush.msra.mxu0 0.0
    %2300 = vmatpush.msra.mxu0 0.0
    %2301 = vmatpush.msra.mxu0 0.0
    %2302 = vmatpush.msra.mxu0 0.0
    %2303 = vmatpush.msra.mxu0 0.0
    %2304 = vmatpush.msra.mxu0 0.0
    %2305 = vmatpush.msra.mxu0 0.0
    %2306 = vmatpush.msra.mxu0 0.0
    %2307 = vmatpush.msra.mxu0 0.0
    %2308 = vmatpush.msra.mxu0 0.0
    %2309 = vmatpush.msra.mxu0 0.0
    %2310 = vmatpush.msra.mxu0 0.0
    %2311 = vmatpush.msra.mxu0 %v109
    %2312 = vmatmul.f32.gmra.mxu0 %v2222
    %v2313 = vpop.f32.mrf.mxu0
    %v2314 = vadd.f32 0.0, %v2313
    %2315 = vmatmul.f32.gmra.mxu0 %v2225
    %v2316 = vpop.f32.mrf.mxu0
    %v2317 = vadd.f32 0.0, %v2316
    %2318 = vdwg.mxu0
    %v2319 = vsub.f32 %v1786, %v2245
    %v2320 = vsub.f32 %v1898, %v2268
    %v2321 = vsub.f32 %v2010, %v2291
    %v2322 = vsub.f32 %v2122, %v2314
    %v2323 = vsub.f32 %v1788, %v2248
    %v2324 = vsub.f32 %v1900, %v2271
    %v2325 = vsub.f32 %v2012, %v2294
    %v2326 = vsub.f32 %v2124, %v2317
    %v2327 = vmul.f32 %v2319, %v2319
    %v2328 = vmul.f32 %v2320, %v2320
    %v2329 = vmul.f32 %v2321, %v2321
    %v2330 = vmul.f32 %v2322, %v2322
    %v2331 = vmul.f32 %v2323, %v2323
    %v2332 = vmul.f32 %v2324, %v2324
    %v2333 = vmul.f32 %v2325, %v2325
    %v2334 = vmul.f32 %v2326, %v2326
    %2335 = vmatpush.msra.mxu0 %v57
    %2336 = vmatpush.msra.mxu0 %v56
    %2337 = vmatpush.msra.mxu0 %v55
    %2338 = vmatpush.msra.mxu0 %v54
    %2339 = vmatpush.msra.mxu0 %v53
    %2340 = vmatpush.msra.mxu0 %v52
    %2341 = vmatpush.msra.mxu0 %v51
    %2342 = vmatpush.msra.mxu0 %v50
    %2343 = vmatpush.msra.mxu0 %v49
    %2344 = vmatpush.msra.mxu0 %v48
    %2345 = vmatpush.msra.mxu0 %v47
    %2346 = vmatpush.msra.mxu0 %v46
    %2347 = vmatpush.msra.mxu0 %v45
    %2348 = vmatpush.msra.mxu0 %v44
    %2349 = vmatpush.msra.mxu0 %v43
    %2350 = vmatpush.msra.mxu0 %v42
    %2351 = vmatmul.f32.gmra.mxu0 %v2327
    %v2352 = vpop.f32.mrf.mxu0
    %v2353 = vadd.f32 0.0, %v2352
    %2354 = vmatmul.f32.gmra.mxu0 %v2331
    %v2355 = vpop.f32.mrf.mxu0
    %v2356 = vadd.f32 0.0, %v2355
    %2357 = vdwg.mxu0
    %2358 = vmatpush.msra.mxu0 %v73
    %2359 = vmatpush.msra.mxu0 %v72
    %2360 = vmatpush.msra.mxu0 %v71
    %2361 = vmatpush.msra.mxu0 %v70
    %2362 = vmatpush.msra.mxu0 %v69
    %2363 = vmatpush.msra.mxu0 %v68
    %2364 = vmatpush.msra.mxu0 %v67
    %2365 = vmatpush.msra.mxu0 %v66
    %2366 = vmatpush.msra.mxu0 %v65
    %2367 = vmatpush.msra.mxu0 %v64
    %2368 = vmatpush.msra.mxu0 %v63
    %2369 = vmatpush.msra.mxu0 %v62
    %2370 = vmatpush.msra.mxu0 %v61
    %2371 = vmatpush.msra.mxu0 %v60
    %2372 = vmatpush.msra.mxu0 %v59
    %2373 = vmatpush.msra.mxu0 %v58
    %2374 = vmatmul.f32.gmra.mxu0 %v2328
    %v2375 = vpop.f32.mrf.mxu0
    %v2376 = vadd.f32 %v2353, %v2375
    %2377 = vmatmul.f32.gmra.mxu0 %v2332
    %v2378 = vpop.f32.mrf.mxu0
    %v2379 = vadd.f32 %v2356, %v2378
    %2380 = vdwg.mxu0
    %2381 = vmatpush.msra.mxu0 %v89
    %2382 = vmatpush.msra.mxu0 %v88
    %2383 = vmatpush.msra.mxu0 %v87
    %2384 = vmatpush.msra.mxu0 %v86
    %2385 = vmatpush.msra.mxu0 %v85
    %2386 = vmatpush.msra.mxu0 %v84
    %2387 = vmatpush.msra.mxu0 %v83
    %2388 = vmatpush.msra.mxu0 %v82
    %2389 = vmatpush.msra.mxu0 %v81
    %2390 = vmatpush.msra.mxu0 %v80
    %2391 = vmatpush.msra.mxu0 %v79
    %2392 = vmatpush.msra.mxu0 %v78
    %2393 = vmatpush.msra.mxu0 %v77
    %2394 = vmatpush.msra.mxu0 %v76
    %2395 = vmatpush.msra.mxu0 %v75
    %2396 = vmatpush.msra.mxu0 %v74
    %2397 = vmatmul.f32.gmra.mxu0 %v2329
    %v2398 = vpop.f32.mrf.mxu0
    %v2399 = vadd.f32 %v2376, %v2398
    %2400 = vmatmul.f32.gmra.mxu0 %v2333
    %v2401 = vpop.f32.mrf.mxu0
    %v2402 = vadd.f32 %v2379, %v2401
    %2403 = vdwg.mxu0
    %2404 = vmatpush.msra.mxu0 %v105
    %2405 = vmatpush.msra.mxu0 %v104
    %2406 = vmatpush.msra.mxu0 %v103
    %2407 = vmatpush.msra.mxu0 %v102
    %2408 = vmatpush.msra.mxu0 %v101
    %2409 = vmatpush.msra.mxu0 %v100
    %2410 = vmatpush.msra.mxu0 %v99
    %2411 = vmatpush.msra.mxu0 %v98
    %2412 = vmatpush.msra.mxu0 %v97
    %2413 = vmatpush.msra.mxu0 %v96
    %2414 = vmatpush.msra.mxu0 %v95
    %2415 = vmatpush.msra.mxu0 %v94
    %2416 = vmatpush.msra.mxu0 %v93
    %2417 = vmatpush.msra.mxu0 %v92
    %2418 = vmatpush.msra.mxu0 %v91
    %2419 = vmatpush.msra.mxu0 %v90
    %2420 = vmatmul.f32.gmra.mxu0 %v2330
    %v2421 = vpop.f32.mrf.mxu0
    %v2422 = vadd.f32 %v2399, %v2421
    %2423 = vmatmul.f32.gmra.mxu0 %v2334
    %v2424 = vpop.f32.mrf.mxu0
    %v2425 = vadd.f32 %v2402, %v2424
    %2426 = vdwg.mxu0
    %v2427 = vmul.f32 %v2422, 0.015625
    %v2428 = vmul.f32 %v2425, 0.015625
    %v2430 = vsel %vm2220, %v2427, 0
    %v2433 = vsel %vm2220, %v2428, 0
    %2435 = vmatpush.msra.mxu0 0.0
    %2436 = vmatpush.msra.mxu0 0.0
    %2437 = vmatpush.msra.mxu0 0.0
    %2438 = vmatpush.msra.mxu0 0.0
    %2439 = vmatpush.msra.mxu0 0.0
    %2440 = vmatpush.msra.mxu0 0.0
    %2441 = vmatpush.msra.mxu0 0.0
    %2442 = vmatpush.msra.mxu0 0.0
    %2443 = vmatpush.msra.mxu0 0.0
    %2444 = vmatpush.msra.mxu0 0.0
    %2445 = vmatpush.msra.mxu0 0.0
    %2446 = vmatpush.msra.mxu0 0.0
    %2447 = vmatpush.msra.mxu0 0.0
    %2448 = vmatpush.msra.mxu0 0.0
    %2449 = vmatpush.msra.mxu0 0.0
    %2450 = vmatpush.msra.mxu0 %v106
    %2451 = vmatmul.f32.gmra.mxu0 %v2430
    %v2452 = vpop.f32.mrf.mxu0
    %v2453 = vadd.f32 1e-05, %v2452
    %2454 = vmatmul.f32.gmra.mxu0 %v2433
    %v2455 = vpop.f32.mrf.mxu0
    %v2456 = vadd.f32 1e-05, %v2455
    %2457 = vdwg.mxu0
    %2458 = vmatpush.msra.mxu0 0.0
    %2459 = vmatpush.msra.mxu0 0.0
    %2460 = vmatpush.msra.mxu0 0.0
    %2461 = vmatpush.msra.mxu0 0.0
    %2462 = vmatpush.msra.mxu0 0.0
    %2463 = vmatpush.msra.mxu0 0.0
    %2464 = vmatpush.msra.mxu0 0.0
    %2465 = vmatpush.msra.mxu0 0.0
    %2466 = vmatpush.msra.mxu0 0.0
    %2467 = vmatpush.msra.mxu0 0.0
    %2468 = vmatpush.msra.mxu0 0.0
    %2469 = vmatpush.msra.mxu0 0.0
    %2470 = vmatpush.msra.mxu0 0.0
    %2471 = vmatpush.msra.mxu0 0.0
    %2472 = vmatpush.msra.mxu0 0.0
    %2473 = vmatpush.msra.mxu0 %v107
    %2474 = vmatmul.f32.gmra.mxu0 %v2430
    %v2475 = vpop.f32.mrf.mxu0
    %v2476 = vadd.f32 1e-05, %v2475
    %2477 = vmatmul.f32.gmra.mxu0 %v2433
    %v2478 = vpop.f32.mrf.mxu0
    %v2479 = vadd.f32 1e-05, %v2478
    %2480 = vdwg.mxu0
    %2481 = vmatpush.msra.mxu0 0.0
    %2482 = vmatpush.msra.mxu0 0.0
    %2483 = vmatpush.msra.mxu0 0.0
    %2484 = vmatpush.msra.mxu0 0.0
    %2485 = vmatpush.msra.mxu0 0.0
    %2486 = vmatpush.msra.mxu0 0.0
    %2487 = vmatpush.msra.mxu0 0.0
    %2488 = vmatpush.msra.mxu0 0.0
    %2489 = vmatpush.msra.mxu0 0.0
    %2490 = vmatpush.msra.mxu0 0.0
    %2491 = vmatpush.msra.mxu0 0.0
    %2492 = vmatpush.msra.mxu0 0.0
    %2493 = vmatpush.msra.mxu0 0.0
    %2494 = vmatpush.msra.mxu0 0.0
    %2495 = vmatpush.msra.mxu0 0.0
    %2496 = vmatpush.msra.mxu0 %v108
    %2497 = vmatmul.f32.gmra.mxu0 %v2430
    %v2498 = vpop.f32.mrf.mxu0
    %v2499 = vadd.f32 1e-05, %v2498
    %2500 = vmatmul.f32.gmra.mxu0 %v2433
    %v2501 = vpop.f32.mrf.mxu0
    %v2502 = vadd.f32 1e-05, %v2501
    %2503 = vdwg.mxu0
    %2504 = vmatpush.msra.mxu0 0.0
    %2505 = vmatpush.msra.mxu0 0.0
    %2506 = vmatpush.msra.mxu0 0.0
    %2507 = vmatpush.msra.mxu0 0.0
    %2508 = vmatpush.msra.mxu0 0.0
    %2509 = vmatpush.msra.mxu0 0.0
    %2510 = vmatpush.msra.mxu0 0.0
    %2511 = vmatpush.msra.mxu0 0.0
    %2512 = vmatpush.msra.mxu0 0.0
    %2513 = vmatpush.msra.mxu0 0.0
    %2514 = vmatpush.msra.mxu0 0.0
    %2515 = vmatpush.msra.mxu0 0.0
    %2516 = vmatpush.msra.mxu0 0.0
    %2517 = vmatpush.msra.mxu0 0.0
    %2518 = vmatpush.msra.mxu0 0.0
    %2519 = vmatpush.msra.mxu0 %v109
    %2520 = vmatmul.f32.gmra.mxu0 %v2430
    %v2521 = vpop.f32.mrf.mxu0
    %v2522 = vadd.f32 1e-05, %v2521
    %2523 = vmatmul.f32.gmra.mxu0 %v2433
    %v2524 = vpop.f32.mrf.mxu0
    %v2525 = vadd.f32 1e-05, %v2524
    %2526 = vdwg.mxu0
    %v2527 = vrsqrt.pop %v2453
    %v2528 = vmul.f32 %v2527, %v2453
    %v2529 = vmul.f32 %v2528, %v2527
    %v2530 = vmul.f32 0.5, %v2529
    %v2531 = vsub.f32 1.5, %v2530
    %v2532 = vmul.f32 %v2527, %v2531
    %vm2533 = vweird.f32 %v2453
    %vm2534 = vweird.f32 %v2527
    %vm2535 = vmor %vm2533, %vm2534
    %v2536 = vsel %vm2535, %v2527, %v2532
    %v2537 = vrsqrt.pop %v2476
    %v2538 = vmul.f32 %v2537, %v2476
    %v2539 = vmul.f32 %v2538, %v2537
    %v2540 = vmul.f32 0.5, %v2539
    %v2541 = vsub.f32 1.5, %v2540
    %v2542 = vmul.f32 %v2537, %v2541
    %vm2543 = vweird.f32 %v2476
    %vm2544 = vweird.f32 %v2537
    %vm2545 = vmor %vm2543, %vm2544
    %v2546 = vsel %vm2545, %v2537, %v2542
    %v2547 = vrsqrt.pop %v2499
    %v2548 = vmul.f32 %v2547, %v2499
    %v2549 = vmul.f32 %v2548, %v2547
    %v2550 = vmul.f32 0.5, %v2549
    %v2551 = vsub.f32 1.5, %v2550
    %v2552 = vmul.f32 %v2547, %v2551
    %vm2553 = vweird.f32 %v2499
    %vm2554 = vweird.f32 %v2547
    %vm2555 = vmor %vm2553, %vm2554
    %v2556 = vsel %vm2555, %v2547, %v2552
    %v2557 = vrsqrt.pop %v2522
    %v2558 = vmul.f32 %v2557, %v2522
    %v2559 = vmul.f32 %v2558, %v2557
    %v2560 = vmul.f32 0.5, %v2559
    %v2561 = vsub.f32 1.5, %v2560
    %v2562 = vmul.f32 %v2557, %v2561
    %vm2563 = vweird.f32 %v2522
    %vm2564 = vweird.f32 %v2557
    %vm2565 = vmor %vm2563, %vm2564
    %v2566 = vsel %vm2565, %v2557, %v2562
    %v2567 = vrsqrt.pop %v2456
    %v2568 = vmul.f32 %v2567, %v2456
    %v2569 = vmul.f32 %v2568, %v2567
    %v2570 = vmul.f32 0.5, %v2569
    %v2571 = vsub.f32 1.5, %v2570
    %v2572 = vmul.f32 %v2567, %v2571
    %vm2573 = vweird.f32 %v2456
    %vm2574 = vweird.f32 %v2567
    %vm2575 = vmor %vm2573, %vm2574
    %v2576 = vsel %vm2575, %v2567, %v2572
    %v2577 = vrsqrt.pop %v2479
    %v2578 = vmul.f32 %v2577, %v2479
    %v2579 = vmul.f32 %v2578, %v2577
    %v2580 = vmul.f32 0.5, %v2579
    %v2581 = vsub.f32 1.5, %v2580
    %v2582 = vmul.f32 %v2577, %v2581
    %vm2583 = vweird.f32 %v2479
    %vm2584 = vweird.f32 %v2577
    %vm2585 = vmor %vm2583, %vm2584
    %v2586 = vsel %vm2585, %v2577, %v2582
    %v2587 = vrsqrt.pop %v2502
    %v2588 = vmul.f32 %v2587, %v2502
    %v2589 = vmul.f32 %v2588, %v2587
    %v2590 = vmul.f32 0.5, %v2589
    %v2591 = vsub.f32 1.5, %v2590
    %v2592 = vmul.f32 %v2587, %v2591
    %vm2593 = vweird.f32 %v2502
    %vm2594 = vweird.f32 %v2587
    %vm2595 = vmor %vm2593, %vm2594
    %v2596 = vsel %vm2595, %v2587, %v2592
    %v2597 = vrsqrt.pop %v2525
    %v2598 = vmul.f32 %v2597, %v2525
    %v2599 = vmul.f32 %v2598, %v2597
    %v2600 = vmul.f32 0.5, %v2599
    %v2601 = vsub.f32 1.5, %v2600
    %v2602 = vmul.f32 %v2597, %v2601
    %vm2603 = vweird.f32 %v2525
    %vm2604 = vweird.f32 %v2597
    %vm2605 = vmor %vm2603, %vm2604
    %v2606 = vsel %vm2605, %v2597, %v2602
    %v2607 = vmul.f32 %v2319, %v2536
    %v2608 = vmul.f32 %v2320, %v2546
    %v2609 = vmul.f32 %v2321, %v2556
    %v2610 = vmul.f32 %v2322, %v2566
    %v2611 = vmul.f32 %v2323, %v2576
    %v2612 = vmul.f32 %v2324, %v2586
    %v2613 = vmul.f32 %v2325, %v2596
    %v2614 = vmul.f32 %v2326, %v2606
    %vm2615 = vcmp.ge.f32.partialorder %v2607, 0.0
    %vm2616 = vcmp.ge.f32.partialorder %v2608, 0.0
    %vm2617 = vcmp.ge.f32.partialorder %v2609, 0.0
    %vm2618 = vcmp.ge.f32.partialorder %v2610, 0.0
    %vm2619 = vcmp.ge.f32.partialorder %v2611, 0.0
    %vm2620 = vcmp.ge.f32.partialorder %v2612, 0.0
    %vm2621 = vcmp.ge.f32.partialorder %v2613, 0.0
    %vm2622 = vcmp.ge.f32.partialorder %v2614, 0.0
    %v2623 = vperm.slane %v110, 2
    %v2624 = vperm.slane %v111, 2
    %v2625 = vperm.slane %v112, 2
    %v2626 = vperm.slane %v113, 2
    %v2627 = vmul.f32 %v2623, %v2607
    %v2628 = vmul.f32 %v2624, %v2608
    %v2629 = vmul.f32 %v2625, %v2609
    %v2630 = vmul.f32 %v2626, %v2610
    %v2631 = vmul.f32 %v2623, %v2611
    %v2632 = vmul.f32 %v2624, %v2612
    %v2633 = vmul.f32 %v2625, %v2613
    %v2634 = vmul.f32 %v2626, %v2614
    %v2635 = vsel %vm2615, %v2607, %v2627
    %v2636 = vsel %vm2616, %v2608, %v2628
    %v2637 = vsel %vm2617, %v2609, %v2629
    %v2638 = vsel %vm2618, %v2610, %v2630
    %v2639 = vsel %vm2619, %v2611, %v2631
    %v2640 = vsel %vm2620, %v2612, %v2632
    %v2641 = vsel %vm2621, %v2613, %v2633
    %v2642 = vsel %vm2622, %v2614, %v2634
    %v2643 = vld [vmem:[#allocation2] sm:$0xff]
    %v2644 = vld [vmem:[#allocation2 + $0x8] sm:$0xff]
    %v2645 = vld [vmem:[#allocation2 + $0x10] sm:$0xff]
    %v2646 = vld [vmem:[#allocation2 + $0x18] sm:$0xff]
    %v2647 = vld [vmem:[#allocation2 + $0x20] sm:$0xff]
    %v2648 = vld [vmem:[#allocation2 + $0x28] sm:$0xff]
    %v2649 = vld [vmem:[#allocation2 + $0x30] sm:$0xff]
    %v2650 = vld [vmem:[#allocation2 + $0x38] sm:$0xff]
    %v2651 = vld [vmem:[#allocation2 + $0x40] sm:$0xff]
    %v2652 = vld [vmem:[#allocation2 + $0x48] sm:$0xff]
    %v2653 = vld [vmem:[#allocation2 + $0x50] sm:$0xff]
    %v2654 = vld [vmem:[#allocation2 + $0x58] sm:$0xff]
    %v2655 = vld [vmem:[#allocation2 + $0x60] sm:$0xff]
    %v2656 = vld [vmem:[#allocation2 + $0x68] sm:$0xff]
    %v2657 = vld [vmem:[#allocation2 + $0x70] sm:$0xff]
    %v2658 = vld [vmem:[#allocation2 + $0x78] sm:$0xff]
    %v2659 = vld [vmem:[#allocation2 + $0x80] sm:$0xff]
    %v2660 = vld [vmem:[#allocation2 + $0x88] sm:$0xff]
    %v2661 = vld [vmem:[#allocation2 + $0x90] sm:$0xff]
    %v2662 = vld [vmem:[#allocation2 + $0x98] sm:$0xff]
    %v2663 = vld [vmem:[#allocation2 + $0xa0] sm:$0xff]
    %v2664 = vld [vmem:[#allocation2 + $0xa8] sm:$0xff]
    %v2665 = vld [vmem:[#allocation2 + $0xb0] sm:$0xff]
    %v2666 = vld [vmem:[#allocation2 + $0xb8] sm:$0xff]
    %v2667 = vld [vmem:[#allocation2 + $0xc0] sm:$0xff]
    %v2668 = vld [vmem:[#allocation2 + $0xc8] sm:$0xff]
    %v2669 = vld [vmem:[#allocation2 + $0xd0] sm:$0xff]
    %v2670 = vld [vmem:[#allocation2 + $0xd8] sm:$0xff]
    %v2671 = vld [vmem:[#allocation2 + $0xe0] sm:$0xff]
    %v2672 = vld [vmem:[#allocation2 + $0xe8] sm:$0xff]
    %v2673 = vld [vmem:[#allocation2 + $0xf0] sm:$0xff]
    %v2674 = vld [vmem:[#allocation2 + $0xf8] sm:$0xff]
    %v2675 = vld [vmem:[#allocation2 + $0x100] sm:$0xff]
    %v2676 = vld [vmem:[#allocation2 + $0x108] sm:$0xff]
    %v2677 = vld [vmem:[#allocation2 + $0x110] sm:$0xff]
    %v2678 = vld [vmem:[#allocation2 + $0x118] sm:$0xff]
    %v2679 = vld [vmem:[#allocation2 + $0x120] sm:$0xff]
    %v2680 = vld [vmem:[#allocation2 + $0x128] sm:$0xff]
    %v2681 = vld [vmem:[#allocation2 + $0x130] sm:$0xff]
    %v2682 = vld [vmem:[#allocation2 + $0x138] sm:$0xff]
    %v2683 = vld [vmem:[#allocation2 + $0x140] sm:$0xff]
    %v2684 = vld [vmem:[#allocation2 + $0x148] sm:$0xff]
    %v2685 = vld [vmem:[#allocation2 + $0x150] sm:$0xff]
    %v2686 = vld [vmem:[#allocation2 + $0x158] sm:$0xff]
    %v2687 = vld [vmem:[#allocation2 + $0x160] sm:$0xff]
    %v2688 = vld [vmem:[#allocation2 + $0x168] sm:$0xff]
    %v2689 = vld [vmem:[#allocation2 + $0x170] sm:$0xff]
    %v2690 = vld [vmem:[#allocation2 + $0x178] sm:$0xff]
    %v2691 = vld [vmem:[#allocation2 + $0x180] sm:$0xff]
    %v2692 = vld [vmem:[#allocation2 + $0x188] sm:$0xff]
    %v2693 = vld [vmem:[#allocation2 + $0x190] sm:$0xff]
    %v2694 = vld [vmem:[#allocation2 + $0x198] sm:$0xff]
    %v2695 = vld [vmem:[#allocation2 + $0x1a0] sm:$0xff]
    %v2696 = vld [vmem:[#allocation2 + $0x1a8] sm:$0xff]
    %v2697 = vld [vmem:[#allocation2 + $0x1b0] sm:$0xff]
    %v2698 = vld [vmem:[#allocation2 + $0x1b8] sm:$0xff]
    %v2699 = vld [vmem:[#allocation2 + $0x1c0] sm:$0xff]
    %v2700 = vld [vmem:[#allocation2 + $0x1c8] sm:$0xff]
    %v2701 = vld [vmem:[#allocation2 + $0x1d0] sm:$0xff]
    %v2702 = vld [vmem:[#allocation2 + $0x1d8] sm:$0xff]
    %v2703 = vld [vmem:[#allocation2 + $0x1e0] sm:$0xff]
    %v2704 = vld [vmem:[#allocation2 + $0x1e8] sm:$0xff]
    %v2705 = vld [vmem:[#allocation2 + $0x1f0] sm:$0xff]
    %v2706 = vld [vmem:[#allocation2 + $0x1f8] sm:$0xff]
    %v2707 = vld [vmem:[#allocation2 + $0x200] sm:$0xff]
    %v2708 = vld [vmem:[#allocation2 + $0x208] sm:$0xff]
    %v2709 = vld [vmem:[#allocation2 + $0x210] sm:$0xff]
    %v2710 = vld [vmem:[#allocation2 + $0x218] sm:$0xff]
    %v2711 = vld [vmem:[#allocation2 + $0x220] sm:$0xff]
    %v2712 = vld [vmem:[#allocation2 + $0x228] sm:$0xff]
    %v2713 = vld [vmem:[#allocation2 + $0x230] sm:$0xff]
    %v2714 = vld [vmem:[#allocation2 + $0x238] sm:$0xff]
    %v2715 = vld [vmem:[#allocation2 + $0x240] sm:$0xff]
    %v2716 = vld [vmem:[#allocation2 + $0x248] sm:$0xff]
    %v2717 = vld [vmem:[#allocation2 + $0x250] sm:$0xff]
    %v2718 = vld [vmem:[#allocation2 + $0x258] sm:$0xff]
    %v2719 = vld [vmem:[#allocation2 + $0x260] sm:$0xff]
    %v2720 = vld [vmem:[#allocation2 + $0x268] sm:$0xff]
    %v2721 = vld [vmem:[#allocation2 + $0x270] sm:$0xff]
    %v2722 = vld [vmem:[#allocation2 + $0x278] sm:$0xff]
    %v2723 = vld [vmem:[#allocation2 + $0x280] sm:$0xff]
    %v2724 = vld [vmem:[#allocation2 + $0x288] sm:$0xff]
    %v2725 = vld [vmem:[#allocation2 + $0x290] sm:$0xff]
    %v2726 = vld [vmem:[#allocation2 + $0x298] sm:$0xff]
    %v2727 = vld [vmem:[#allocation2 + $0x2a0] sm:$0xff]
    %v2728 = vld [vmem:[#allocation2 + $0x2a8] sm:$0xff]
    %v2729 = vld [vmem:[#allocation2 + $0x2b0] sm:$0xff]
    %v2730 = vld [vmem:[#allocation2 + $0x2b8] sm:$0xff]
    %v2731 = vld [vmem:[#allocation2 + $0x2c0] sm:$0xff]
    %v2732 = vld [vmem:[#allocation2 + $0x2c8] sm:$0xff]
    %v2733 = vld [vmem:[#allocation2 + $0x2d0] sm:$0xff]
    %v2734 = vld [vmem:[#allocation2 + $0x2d8] sm:$0xff]
    %v2735 = vld [vmem:[#allocation2 + $0x2e0] sm:$0xff]
    %v2736 = vld [vmem:[#allocation2 + $0x2e8] sm:$0xff]
    %v2737 = vld [vmem:[#allocation2 + $0x2f0] sm:$0xff]
    %v2738 = vld [vmem:[#allocation2 + $0x2f8] sm:$0xff]
    %v2739 = vld [vmem:[#allocation2 + $0x300] sm:$0xff]
    %v2740 = vld [vmem:[#allocation2 + $0x308] sm:$0xff]
    %v2741 = vld [vmem:[#allocation2 + $0x310] sm:$0xff]
    %v2742 = vld [vmem:[#allocation2 + $0x318] sm:$0xff]
    %v2743 = vld [vmem:[#allocation2 + $0x320] sm:$0xff]
    %v2744 = vld [vmem:[#allocation2 + $0x328] sm:$0xff]
    %v2745 = vld [vmem:[#allocation2 + $0x330] sm:$0xff]
    %v2746 = vld [vmem:[#allocation2 + $0x338] sm:$0xff]
    %v2747 = vld [vmem:[#allocation2 + $0x340] sm:$0xff]
    %v2748 = vld [vmem:[#allocation2 + $0x348] sm:$0xff]
    %v2749 = vld [vmem:[#allocation2 + $0x350] sm:$0xff]
    %v2750 = vld [vmem:[#allocation2 + $0x358] sm:$0xff]
    %v2751 = vld [vmem:[#allocation2 + $0x360] sm:$0xff]
    %v2752 = vld [vmem:[#allocation2 + $0x368] sm:$0xff]
    %v2753 = vld [vmem:[#allocation2 + $0x370] sm:$0xff]
    %v2754 = vld [vmem:[#allocation2 + $0x378] sm:$0xff]
    %v2755 = vld [vmem:[#allocation2 + $0x380] sm:$0xff]
    %v2756 = vld [vmem:[#allocation2 + $0x388] sm:$0xff]
    %v2757 = vld [vmem:[#allocation2 + $0x390] sm:$0xff]
    %v2758 = vld [vmem:[#allocation2 + $0x398] sm:$0xff]
    %v2759 = vld [vmem:[#allocation2 + $0x3a0] sm:$0xff]
    %v2760 = vld [vmem:[#allocation2 + $0x3a8] sm:$0xff]
    %v2761 = vld [vmem:[#allocation2 + $0x3b0] sm:$0xff]
    %v2762 = vld [vmem:[#allocation2 + $0x3b8] sm:$0xff]
    %v2763 = vld [vmem:[#allocation2 + $0x3c0] sm:$0xff]
    %v2764 = vld [vmem:[#allocation2 + $0x3c8] sm:$0xff]
    %v2765 = vld [vmem:[#allocation2 + $0x3d0] sm:$0xff]
    %v2766 = vld [vmem:[#allocation2 + $0x3d8] sm:$0xff]
    %v2767 = vld [vmem:[#allocation2 + $0x3e0] sm:$0xff]
    %v2768 = vld [vmem:[#allocation2 + $0x3e8] sm:$0xff]
    %v2769 = vld [vmem:[#allocation2 + $0x3f0] sm:$0xff]
    %v2770 = vld [vmem:[#allocation2 + $0x3f8] sm:$0xff]
    %v2771 = vld [vmem:[#allocation2 + $0x400] sm:$0xff]
    %v2772 = vld [vmem:[#allocation2 + $0x408] sm:$0xff]
    %v2773 = vld [vmem:[#allocation2 + $0x410] sm:$0xff]
    %v2774 = vld [vmem:[#allocation2 + $0x418] sm:$0xff]
    %v2775 = vld [vmem:[#allocation2 + $0x420] sm:$0xff]
    %v2776 = vld [vmem:[#allocation2 + $0x428] sm:$0xff]
    %v2777 = vld [vmem:[#allocation2 + $0x430] sm:$0xff]
    %v2778 = vld [vmem:[#allocation2 + $0x438] sm:$0xff]
    %v2779 = vld [vmem:[#allocation2 + $0x440] sm:$0xff]
    %v2780 = vld [vmem:[#allocation2 + $0x448] sm:$0xff]
    %v2781 = vld [vmem:[#allocation2 + $0x450] sm:$0xff]
    %v2782 = vld [vmem:[#allocation2 + $0x458] sm:$0xff]
    %v2783 = vld [vmem:[#allocation2 + $0x460] sm:$0xff]
    %v2784 = vld [vmem:[#allocation2 + $0x468] sm:$0xff]
    %v2785 = vld [vmem:[#allocation2 + $0x470] sm:$0xff]
    %v2786 = vld [vmem:[#allocation2 + $0x478] sm:$0xff]
    %v2787 = vld [vmem:[#allocation2 + $0x480] sm:$0xff]
    %v2788 = vld [vmem:[#allocation2 + $0x488] sm:$0xff]
    %v2789 = vld [vmem:[#allocation2 + $0x490] sm:$0xff]
    %v2790 = vld [vmem:[#allocation2 + $0x498] sm:$0xff]
    %v2791 = vld [vmem:[#allocation2 + $0x4a0] sm:$0xff]
    %v2792 = vld [vmem:[#allocation2 + $0x4a8] sm:$0xff]
    %v2793 = vld [vmem:[#allocation2 + $0x4b0] sm:$0xff]
    %v2794 = vld [vmem:[#allocation2 + $0x4b8] sm:$0xff]
    %v2795 = vld [vmem:[#allocation2 + $0x4c0] sm:$0xff]
    %v2796 = vld [vmem:[#allocation2 + $0x4c8] sm:$0xff]
    %v2797 = vld [vmem:[#allocation2 + $0x4d0] sm:$0xff]
    %v2798 = vld [vmem:[#allocation2 + $0x4d8] sm:$0xff]
    %v2799 = vld [vmem:[#allocation2 + $0x4e0] sm:$0xff]
    %v2800 = vld [vmem:[#allocation2 + $0x4e8] sm:$0xff]
    %v2801 = vld [vmem:[#allocation2 + $0x4f0] sm:$0xff]
    %v2802 = vld [vmem:[#allocation2 + $0x4f8] sm:$0xff]
    %v2803 = vld [vmem:[#allocation2 + $0x500] sm:$0xff]
    %v2804 = vld [vmem:[#allocation2 + $0x508] sm:$0xff]
    %v2805 = vld [vmem:[#allocation2 + $0x510] sm:$0xff]
    %v2806 = vld [vmem:[#allocation2 + $0x518] sm:$0xff]
    %v2807 = vld [vmem:[#allocation2 + $0x520] sm:$0xff]
    %v2808 = vld [vmem:[#allocation2 + $0x528] sm:$0xff]
    %v2809 = vld [vmem:[#allocation2 + $0x530] sm:$0xff]
    %v2810 = vld [vmem:[#allocation2 + $0x538] sm:$0xff]
    %v2811 = vld [vmem:[#allocation2 + $0x540] sm:$0xff]
    %v2812 = vld [vmem:[#allocation2 + $0x548] sm:$0xff]
    %v2813 = vld [vmem:[#allocation2 + $0x550] sm:$0xff]
    %v2814 = vld [vmem:[#allocation2 + $0x558] sm:$0xff]
    %v2815 = vld [vmem:[#allocation2 + $0x560] sm:$0xff]
    %v2816 = vld [vmem:[#allocation2 + $0x568] sm:$0xff]
    %v2817 = vld [vmem:[#allocation2 + $0x570] sm:$0xff]
    %v2818 = vld [vmem:[#allocation2 + $0x578] sm:$0xff]
    %v2819 = vld [vmem:[#allocation2 + $0x580] sm:$0xff]
    %v2820 = vld [vmem:[#allocation2 + $0x588] sm:$0xff]
    %v2821 = vld [vmem:[#allocation2 + $0x590] sm:$0xff]
    %v2822 = vld [vmem:[#allocation2 + $0x598] sm:$0xff]
    %v2823 = vld [vmem:[#allocation2 + $0x5a0] sm:$0xff]
    %v2824 = vld [vmem:[#allocation2 + $0x5a8] sm:$0xff]
    %v2825 = vld [vmem:[#allocation2 + $0x5b0] sm:$0xff]
    %v2826 = vld [vmem:[#allocation2 + $0x5b8] sm:$0xff]
    %v2827 = vld [vmem:[#allocation2 + $0x5c0] sm:$0xff]
    %v2828 = vld [vmem:[#allocation2 + $0x5c8] sm:$0xff]
    %v2829 = vld [vmem:[#allocation2 + $0x5d0] sm:$0xff]
    %v2830 = vld [vmem:[#allocation2 + $0x5d8] sm:$0xff]
    %v2831 = vld [vmem:[#allocation2 + $0x5e0] sm:$0xff]
    %v2832 = vld [vmem:[#allocation2 + $0x5e8] sm:$0xff]
    %v2833 = vld [vmem:[#allocation2 + $0x5f0] sm:$0xff]
    %v2834 = vld [vmem:[#allocation2 + $0x5f8] sm:$0xff]
    %v2835 = vld [vmem:[#allocation2 + $0x600] sm:$0xff]
    %v2836 = vld [vmem:[#allocation2 + $0x608] sm:$0xff]
    %v2837 = vld [vmem:[#allocation2 + $0x610] sm:$0xff]
    %v2838 = vld [vmem:[#allocation2 + $0x618] sm:$0xff]
    %v2839 = vld [vmem:[#allocation2 + $0x620] sm:$0xff]
    %v2840 = vld [vmem:[#allocation2 + $0x628] sm:$0xff]
    %v2841 = vld [vmem:[#allocation2 + $0x630] sm:$0xff]
    %v2842 = vld [vmem:[#allocation2 + $0x638] sm:$0xff]
    %v2843 = vld [vmem:[#allocation2 + $0x640] sm:$0xff]
    %v2844 = vld [vmem:[#allocation2 + $0x648] sm:$0xff]
    %v2845 = vld [vmem:[#allocation2 + $0x650] sm:$0xff]
    %v2846 = vld [vmem:[#allocation2 + $0x658] sm:$0xff]
    %v2847 = vld [vmem:[#allocation2 + $0x660] sm:$0xff]
    %v2848 = vld [vmem:[#allocation2 + $0x668] sm:$0xff]
    %v2849 = vld [vmem:[#allocation2 + $0x670] sm:$0xff]
    %v2850 = vld [vmem:[#allocation2 + $0x678] sm:$0xff]
    %v2851 = vld [vmem:[#allocation2 + $0x680] sm:$0xff]
    %v2852 = vld [vmem:[#allocation2 + $0x688] sm:$0xff]
    %v2853 = vld [vmem:[#allocation2 + $0x690] sm:$0xff]
    %v2854 = vld [vmem:[#allocation2 + $0x698] sm:$0xff]
    %v2855 = vld [vmem:[#allocation2 + $0x6a0] sm:$0xff]
    %v2856 = vld [vmem:[#allocation2 + $0x6a8] sm:$0xff]
    %v2857 = vld [vmem:[#allocation2 + $0x6b0] sm:$0xff]
    %v2858 = vld [vmem:[#allocation2 + $0x6b8] sm:$0xff]
    %v2859 = vld [vmem:[#allocation2 + $0x6c0] sm:$0xff]
    %v2860 = vld [vmem:[#allocation2 + $0x6c8] sm:$0xff]
    %v2861 = vld [vmem:[#allocation2 + $0x6d0] sm:$0xff]
    %v2862 = vld [vmem:[#allocation2 + $0x6d8] sm:$0xff]
    %v2863 = vld [vmem:[#allocation2 + $0x6e0] sm:$0xff]
    %v2864 = vld [vmem:[#allocation2 + $0x6e8] sm:$0xff]
    %v2865 = vld [vmem:[#allocation2 + $0x6f0] sm:$0xff]
    %v2866 = vld [vmem:[#allocation2 + $0x6f8] sm:$0xff]
    %v2867 = vld [vmem:[#allocation2 + $0x700] sm:$0xff]
    %v2868 = vld [vmem:[#allocation2 + $0x708] sm:$0xff]
    %v2869 = vld [vmem:[#allocation2 + $0x710] sm:$0xff]
    %v2870 = vld [vmem:[#allocation2 + $0x718] sm:$0xff]
    %v2871 = vld [vmem:[#allocation2 + $0x720] sm:$0xff]
    %v2872 = vld [vmem:[#allocation2 + $0x728] sm:$0xff]
    %v2873 = vld [vmem:[#allocation2 + $0x730] sm:$0xff]
    %v2874 = vld [vmem:[#allocation2 + $0x738] sm:$0xff]
    %v2875 = vld [vmem:[#allocation2 + $0x740] sm:$0xff]
    %v2876 = vld [vmem:[#allocation2 + $0x748] sm:$0xff]
    %v2877 = vld [vmem:[#allocation2 + $0x750] sm:$0xff]
    %v2878 = vld [vmem:[#allocation2 + $0x758] sm:$0xff]
    %v2879 = vld [vmem:[#allocation2 + $0x760] sm:$0xff]
    %v2880 = vld [vmem:[#allocation2 + $0x768] sm:$0xff]
    %v2881 = vld [vmem:[#allocation2 + $0x770] sm:$0xff]
    %v2882 = vld [vmem:[#allocation2 + $0x778] sm:$0xff]
    %v2883 = vld [vmem:[#allocation2 + $0x780] sm:$0xff]
    %v2884 = vld [vmem:[#allocation2 + $0x788] sm:$0xff]
    %v2885 = vld [vmem:[#allocation2 + $0x790] sm:$0xff]
    %v2886 = vld [vmem:[#allocation2 + $0x798] sm:$0xff]
    %v2887 = vld [vmem:[#allocation2 + $0x7a0] sm:$0xff]
    %v2888 = vld [vmem:[#allocation2 + $0x7a8] sm:$0xff]
    %v2889 = vld [vmem:[#allocation2 + $0x7b0] sm:$0xff]
    %v2890 = vld [vmem:[#allocation2 + $0x7b8] sm:$0xff]
    %v2891 = vld [vmem:[#allocation2 + $0x7c0] sm:$0xff]
    %v2892 = vld [vmem:[#allocation2 + $0x7c8] sm:$0xff]
    %v2893 = vld [vmem:[#allocation2 + $0x7d0] sm:$0xff]
    %v2894 = vld [vmem:[#allocation2 + $0x7d8] sm:$0xff]
    %v2895 = vld [vmem:[#allocation2 + $0x7e0] sm:$0xff]
    %v2896 = vld [vmem:[#allocation2 + $0x7e8] sm:$0xff]
    %v2897 = vld [vmem:[#allocation2 + $0x7f0] sm:$0xff]
    %v2898 = vld [vmem:[#allocation2 + $0x7f8] sm:$0xff]
    %v2899 = vperm.slane %v110, 1
    %v2900 = vperm.slane %v111, 1
    %v2901 = vperm.slane %v112, 1
    %v2902 = vperm.slane %v113, 1
    %v3159 = vunpack.c.l.b16 %v2643
    %v3160 = vunpack.c.h.b16 %v2643
    %v3161 = vunpack.c.l.b16 %v2644
    %v3162 = vunpack.c.h.b16 %v2644
    %v3163 = vunpack.c.l.b16 %v2645
    %v3164 = vunpack.c.h.b16 %v2645
    %v3165 = vunpack.c.l.b16 %v2646
    %v3166 = vunpack.c.h.b16 %v2646
    %v3167 = vunpack.c.l.b16 %v2647
    %v3168 = vunpack.c.h.b16 %v2647
    %v3169 = vunpack.c.l.b16 %v2648
    %v3170 = vunpack.c.h.b16 %v2648
    %v3171 = vunpack.c.l.b16 %v2649
    %v3172 = vunpack.c.h.b16 %v2649
    %v3173 = vunpack.c.l.b16 %v2650
    %v3174 = vunpack.c.h.b16 %v2650
    %v3175 = vunpack.c.l.b16 %v2651
    %v3176 = vunpack.c.h.b16 %v2651
    %v3177 = vunpack.c.l.b16 %v2652
    %v3178 = vunpack.c.h.b16 %v2652
    %v3179 = vunpack.c.l.b16 %v2653
    %v3180 = vunpack.c.h.b16 %v2653
    %v3181 = vunpack.c.l.b16 %v2654
    %v3182 = vunpack.c.h.b16 %v2654
    %v3183 = vunpack.c.l.b16 %v2655
    %v3184 = vunpack.c.h.b16 %v2655
    %v3185 = vunpack.c.l.b16 %v2656
    %v3186 = vunpack.c.h.b16 %v2656
    %v3187 = vunpack.c.l.b16 %v2657
    %v3188 = vunpack.c.h.b16 %v2657
    %v3189 = vunpack.c.l.b16 %v2658
    %v3190 = vunpack.c.h.b16 %v2658
    %v3191 = vunpack.c.l.b16 %v2659
    %v3192 = vunpack.c.h.b16 %v2659
    %v3193 = vunpack.c.l.b16 %v2660
    %v3194 = vunpack.c.h.b16 %v2660
    %v3195 = vunpack.c.l.b16 %v2661
    %v3196 = vunpack.c.h.b16 %v2661
    %v3197 = vunpack.c.l.b16 %v2662
    %v3198 = vunpack.c.h.b16 %v2662
    %v3199 = vunpack.c.l.b16 %v2663
    %v3200 = vunpack.c.h.b16 %v2663
    %v3201 = vunpack.c.l.b16 %v2664
    %v3202 = vunpack.c.h.b16 %v2664
    %v3203 = vunpack.c.l.b16 %v2665
    %v3204 = vunpack.c.h.b16 %v2665
    %v3205 = vunpack.c.l.b16 %v2666
    %v3206 = vunpack.c.h.b16 %v2666
    %v3207 = vunpack.c.l.b16 %v2667
    %v3208 = vunpack.c.h.b16 %v2667
    %v3209 = vunpack.c.l.b16 %v2668
    %v3210 = vunpack.c.h.b16 %v2668
    %v3211 = vunpack.c.l.b16 %v2669
    %v3212 = vunpack.c.h.b16 %v2669
    %v3213 = vunpack.c.l.b16 %v2670
    %v3214 = vunpack.c.h.b16 %v2670
    %v3215 = vunpack.c.l.b16 %v2671
    %v3216 = vunpack.c.h.b16 %v2671
    %v3217 = vunpack.c.l.b16 %v2672
    %v3218 = vunpack.c.h.b16 %v2672
    %v3219 = vunpack.c.l.b16 %v2673
    %v3220 = vunpack.c.h.b16 %v2673
    %v3221 = vunpack.c.l.b16 %v2674
    %v3222 = vunpack.c.h.b16 %v2674
    %v3223 = vunpack.c.l.b16 %v2675
    %v3224 = vunpack.c.h.b16 %v2675
    %v3225 = vunpack.c.l.b16 %v2676
    %v3226 = vunpack.c.h.b16 %v2676
    %v3227 = vunpack.c.l.b16 %v2677
    %v3228 = vunpack.c.h.b16 %v2677
    %v3229 = vunpack.c.l.b16 %v2678
    %v3230 = vunpack.c.h.b16 %v2678
    %v3231 = vunpack.c.l.b16 %v2679
    %v3232 = vunpack.c.h.b16 %v2679
    %v3233 = vunpack.c.l.b16 %v2680
    %v3234 = vunpack.c.h.b16 %v2680
    %v3235 = vunpack.c.l.b16 %v2681
    %v3236 = vunpack.c.h.b16 %v2681
    %v3237 = vunpack.c.l.b16 %v2682
    %v3238 = vunpack.c.h.b16 %v2682
    %v3239 = vunpack.c.l.b16 %v2683
    %v3240 = vunpack.c.h.b16 %v2683
    %v3241 = vunpack.c.l.b16 %v2684
    %v3242 = vunpack.c.h.b16 %v2684
    %v3243 = vunpack.c.l.b16 %v2685
    %v3244 = vunpack.c.h.b16 %v2685
    %v3245 = vunpack.c.l.b16 %v2686
    %v3246 = vunpack.c.h.b16 %v2686
    %v3247 = vunpack.c.l.b16 %v2687
    %v3248 = vunpack.c.h.b16 %v2687
    %v3249 = vunpack.c.l.b16 %v2688
    %v3250 = vunpack.c.h.b16 %v2688
    %v3251 = vunpack.c.l.b16 %v2689
    %v3252 = vunpack.c.h.b16 %v2689
    %v3253 = vunpack.c.l.b16 %v2690
    %v3254 = vunpack.c.h.b16 %v2690
    %v3255 = vunpack.c.l.b16 %v2691
    %v3256 = vunpack.c.h.b16 %v2691
    %v3257 = vunpack.c.l.b16 %v2692
    %v3258 = vunpack.c.h.b16 %v2692
    %v3259 = vunpack.c.l.b16 %v2693
    %v3260 = vunpack.c.h.b16 %v2693
    %v3261 = vunpack.c.l.b16 %v2694
    %v3262 = vunpack.c.h.b16 %v2694
    %v3263 = vunpack.c.l.b16 %v2695
    %v3264 = vunpack.c.h.b16 %v2695
    %v3265 = vunpack.c.l.b16 %v2696
    %v3266 = vunpack.c.h.b16 %v2696
    %v3267 = vunpack.c.l.b16 %v2697
    %v3268 = vunpack.c.h.b16 %v2697
    %v3269 = vunpack.c.l.b16 %v2698
    %v3270 = vunpack.c.h.b16 %v2698
    %v3271 = vunpack.c.l.b16 %v2699
    %v3272 = vunpack.c.h.b16 %v2699
    %v3273 = vunpack.c.l.b16 %v2700
    %v3274 = vunpack.c.h.b16 %v2700
    %v3275 = vunpack.c.l.b16 %v2701
    %v3276 = vunpack.c.h.b16 %v2701
    %v3277 = vunpack.c.l.b16 %v2702
    %v3278 = vunpack.c.h.b16 %v2702
    %v3279 = vunpack.c.l.b16 %v2703
    %v3280 = vunpack.c.h.b16 %v2703
    %v3281 = vunpack.c.l.b16 %v2704
    %v3282 = vunpack.c.h.b16 %v2704
    %v3283 = vunpack.c.l.b16 %v2705
    %v3284 = vunpack.c.h.b16 %v2705
    %v3285 = vunpack.c.l.b16 %v2706
    %v3286 = vunpack.c.h.b16 %v2706
    %v3287 = vunpack.c.l.b16 %v2707
    %v3288 = vunpack.c.h.b16 %v2707
    %v3289 = vunpack.c.l.b16 %v2708
    %v3290 = vunpack.c.h.b16 %v2708
    %v3291 = vunpack.c.l.b16 %v2709
    %v3292 = vunpack.c.h.b16 %v2709
    %v3293 = vunpack.c.l.b16 %v2710
    %v3294 = vunpack.c.h.b16 %v2710
    %v3295 = vunpack.c.l.b16 %v2711
    %v3296 = vunpack.c.h.b16 %v2711
    %v3297 = vunpack.c.l.b16 %v2712
    %v3298 = vunpack.c.h.b16 %v2712
    %v3299 = vunpack.c.l.b16 %v2713
    %v3300 = vunpack.c.h.b16 %v2713
    %v3301 = vunpack.c.l.b16 %v2714
    %v3302 = vunpack.c.h.b16 %v2714
    %v3303 = vunpack.c.l.b16 %v2715
    %v3304 = vunpack.c.h.b16 %v2715
    %v3305 = vunpack.c.l.b16 %v2716
    %v3306 = vunpack.c.h.b16 %v2716
    %v3307 = vunpack.c.l.b16 %v2717
    %v3308 = vunpack.c.h.b16 %v2717
    %v3309 = vunpack.c.l.b16 %v2718
    %v3310 = vunpack.c.h.b16 %v2718
    %v3311 = vunpack.c.l.b16 %v2719
    %v3312 = vunpack.c.h.b16 %v2719
    %v3313 = vunpack.c.l.b16 %v2720
    %v3314 = vunpack.c.h.b16 %v2720
    %v3315 = vunpack.c.l.b16 %v2721
    %v3316 = vunpack.c.h.b16 %v2721
    %v3317 = vunpack.c.l.b16 %v2722
    %v3318 = vunpack.c.h.b16 %v2722
    %v3319 = vunpack.c.l.b16 %v2723
    %v3320 = vunpack.c.h.b16 %v2723
    %v3321 = vunpack.c.l.b16 %v2724
    %v3322 = vunpack.c.h.b16 %v2724
    %v3323 = vunpack.c.l.b16 %v2725
    %v3324 = vunpack.c.h.b16 %v2725
    %v3325 = vunpack.c.l.b16 %v2726
    %v3326 = vunpack.c.h.b16 %v2726
    %v3327 = vunpack.c.l.b16 %v2727
    %v3328 = vunpack.c.h.b16 %v2727
    %v3329 = vunpack.c.l.b16 %v2728
    %v3330 = vunpack.c.h.b16 %v2728
    %v3331 = vunpack.c.l.b16 %v2729
    %v3332 = vunpack.c.h.b16 %v2729
    %v3333 = vunpack.c.l.b16 %v2730
    %v3334 = vunpack.c.h.b16 %v2730
    %v3335 = vunpack.c.l.b16 %v2731
    %v3336 = vunpack.c.h.b16 %v2731
    %v3337 = vunpack.c.l.b16 %v2732
    %v3338 = vunpack.c.h.b16 %v2732
    %v3339 = vunpack.c.l.b16 %v2733
    %v3340 = vunpack.c.h.b16 %v2733
    %v3341 = vunpack.c.l.b16 %v2734
    %v3342 = vunpack.c.h.b16 %v2734
    %v3343 = vunpack.c.l.b16 %v2735
    %v3344 = vunpack.c.h.b16 %v2735
    %v3345 = vunpack.c.l.b16 %v2736
    %v3346 = vunpack.c.h.b16 %v2736
    %v3347 = vunpack.c.l.b16 %v2737
    %v3348 = vunpack.c.h.b16 %v2737
    %v3349 = vunpack.c.l.b16 %v2738
    %v3350 = vunpack.c.h.b16 %v2738
    %v3351 = vunpack.c.l.b16 %v2739
    %v3352 = vunpack.c.h.b16 %v2739
    %v3353 = vunpack.c.l.b16 %v2740
    %v3354 = vunpack.c.h.b16 %v2740
    %v3355 = vunpack.c.l.b16 %v2741
    %v3356 = vunpack.c.h.b16 %v2741
    %v3357 = vunpack.c.l.b16 %v2742
    %v3358 = vunpack.c.h.b16 %v2742
    %v3359 = vunpack.c.l.b16 %v2743
    %v3360 = vunpack.c.h.b16 %v2743
    %v3361 = vunpack.c.l.b16 %v2744
    %v3362 = vunpack.c.h.b16 %v2744
    %v3363 = vunpack.c.l.b16 %v2745
    %v3364 = vunpack.c.h.b16 %v2745
    %v3365 = vunpack.c.l.b16 %v2746
    %v3366 = vunpack.c.h.b16 %v2746
    %v3367 = vunpack.c.l.b16 %v2747
    %v3368 = vunpack.c.h.b16 %v2747
    %v3369 = vunpack.c.l.b16 %v2748
    %v3370 = vunpack.c.h.b16 %v2748
    %v3371 = vunpack.c.l.b16 %v2749
    %v3372 = vunpack.c.h.b16 %v2749
    %v3373 = vunpack.c.l.b16 %v2750
    %v3374 = vunpack.c.h.b16 %v2750
    %v3375 = vunpack.c.l.b16 %v2751
    %v3376 = vunpack.c.h.b16 %v2751
    %v3377 = vunpack.c.l.b16 %v2752
    %v3378 = vunpack.c.h.b16 %v2752
    %v3379 = vunpack.c.l.b16 %v2753
    %v3380 = vunpack.c.h.b16 %v2753
    %v3381 = vunpack.c.l.b16 %v2754
    %v3382 = vunpack.c.h.b16 %v2754
    %v3383 = vunpack.c.l.b16 %v2755
    %v3384 = vunpack.c.h.b16 %v2755
    %v3385 = vunpack.c.l.b16 %v2756
    %v3386 = vunpack.c.h.b16 %v2756
    %v3387 = vunpack.c.l.b16 %v2757
    %v3388 = vunpack.c.h.b16 %v2757
    %v3389 = vunpack.c.l.b16 %v2758
    %v3390 = vunpack.c.h.b16 %v2758
    %v3391 = vunpack.c.l.b16 %v2759
    %v3392 = vunpack.c.h.b16 %v2759
    %v3393 = vunpack.c.l.b16 %v2760
    %v3394 = vunpack.c.h.b16 %v2760
    %v3395 = vunpack.c.l.b16 %v2761
    %v3396 = vunpack.c.h.b16 %v2761
    %v3397 = vunpack.c.l.b16 %v2762
    %v3398 = vunpack.c.h.b16 %v2762
    %v3399 = vunpack.c.l.b16 %v2763
    %v3400 = vunpack.c.h.b16 %v2763
    %v3401 = vunpack.c.l.b16 %v2764
    %v3402 = vunpack.c.h.b16 %v2764
    %v3403 = vunpack.c.l.b16 %v2765
    %v3404 = vunpack.c.h.b16 %v2765
    %v3405 = vunpack.c.l.b16 %v2766
    %v3406 = vunpack.c.h.b16 %v2766
    %v3407 = vunpack.c.l.b16 %v2767
    %v3408 = vunpack.c.h.b16 %v2767
    %v3409 = vunpack.c.l.b16 %v2768
    %v3410 = vunpack.c.h.b16 %v2768
    %v3411 = vunpack.c.l.b16 %v2769
    %v3412 = vunpack.c.h.b16 %v2769
    %v3413 = vunpack.c.l.b16 %v2770
    %v3414 = vunpack.c.h.b16 %v2770
    %v3415 = vunpack.c.l.b16 %v2771
    %v3416 = vunpack.c.h.b16 %v2771
    %v3417 = vunpack.c.l.b16 %v2772
    %v3418 = vunpack.c.h.b16 %v2772
    %v3419 = vunpack.c.l.b16 %v2773
    %v3420 = vunpack.c.h.b16 %v2773
    %v3421 = vunpack.c.l.b16 %v2774
    %v3422 = vunpack.c.h.b16 %v2774
    %v3423 = vunpack.c.l.b16 %v2775
    %v3424 = vunpack.c.h.b16 %v2775
    %v3425 = vunpack.c.l.b16 %v2776
    %v3426 = vunpack.c.h.b16 %v2776
    %v3427 = vunpack.c.l.b16 %v2777
    %v3428 = vunpack.c.h.b16 %v2777
    %v3429 = vunpack.c.l.b16 %v2778
    %v3430 = vunpack.c.h.b16 %v2778
    %v3431 = vunpack.c.l.b16 %v2779
    %v3432 = vunpack.c.h.b16 %v2779
    %v3433 = vunpack.c.l.b16 %v2780
    %v3434 = vunpack.c.h.b16 %v2780
    %v3435 = vunpack.c.l.b16 %v2781
    %v3436 = vunpack.c.h.b16 %v2781
    %v3437 = vunpack.c.l.b16 %v2782
    %v3438 = vunpack.c.h.b16 %v2782
    %v3439 = vunpack.c.l.b16 %v2783
    %v3440 = vunpack.c.h.b16 %v2783
    %v3441 = vunpack.c.l.b16 %v2784
    %v3442 = vunpack.c.h.b16 %v2784
    %v3443 = vunpack.c.l.b16 %v2785
    %v3444 = vunpack.c.h.b16 %v2785
    %v3445 = vunpack.c.l.b16 %v2786
    %v3446 = vunpack.c.h.b16 %v2786
    %v3447 = vunpack.c.l.b16 %v2787
    %v3448 = vunpack.c.h.b16 %v2787
    %v3449 = vunpack.c.l.b16 %v2788
    %v3450 = vunpack.c.h.b16 %v2788
    %v3451 = vunpack.c.l.b16 %v2789
    %v3452 = vunpack.c.h.b16 %v2789
    %v3453 = vunpack.c.l.b16 %v2790
    %v3454 = vunpack.c.h.b16 %v2790
    %v3455 = vunpack.c.l.b16 %v2791
    %v3456 = vunpack.c.h.b16 %v2791
    %v3457 = vunpack.c.l.b16 %v2792
    %v3458 = vunpack.c.h.b16 %v2792
    %v3459 = vunpack.c.l.b16 %v2793
    %v3460 = vunpack.c.h.b16 %v2793
    %v3461 = vunpack.c.l.b16 %v2794
    %v3462 = vunpack.c.h.b16 %v2794
    %v3463 = vunpack.c.l.b16 %v2795
    %v3464 = vunpack.c.h.b16 %v2795
    %v3465 = vunpack.c.l.b16 %v2796
    %v3466 = vunpack.c.h.b16 %v2796
    %v3467 = vunpack.c.l.b16 %v2797
    %v3468 = vunpack.c.h.b16 %v2797
    %v3469 = vunpack.c.l.b16 %v2798
    %v3470 = vunpack.c.h.b16 %v2798
    %v3471 = vunpack.c.l.b16 %v2799
    %v3472 = vunpack.c.h.b16 %v2799
    %v3473 = vunpack.c.l.b16 %v2800
    %v3474 = vunpack.c.h.b16 %v2800
    %v3475 = vunpack.c.l.b16 %v2801
    %v3476 = vunpack.c.h.b16 %v2801
    %v3477 = vunpack.c.l.b16 %v2802
    %v3478 = vunpack.c.h.b16 %v2802
    %v3479 = vunpack.c.l.b16 %v2803
    %v3480 = vunpack.c.h.b16 %v2803
    %v3481 = vunpack.c.l.b16 %v2804
    %v3482 = vunpack.c.h.b16 %v2804
    %v3483 = vunpack.c.l.b16 %v2805
    %v3484 = vunpack.c.h.b16 %v2805
    %v3485 = vunpack.c.l.b16 %v2806
    %v3486 = vunpack.c.h.b16 %v2806
    %v3487 = vunpack.c.l.b16 %v2807
    %v3488 = vunpack.c.h.b16 %v2807
    %v3489 = vunpack.c.l.b16 %v2808
    %v3490 = vunpack.c.h.b16 %v2808
    %v3491 = vunpack.c.l.b16 %v2809
    %v3492 = vunpack.c.h.b16 %v2809
    %v3493 = vunpack.c.l.b16 %v2810
    %v3494 = vunpack.c.h.b16 %v2810
    %v3495 = vunpack.c.l.b16 %v2811
    %v3496 = vunpack.c.h.b16 %v2811
    %v3497 = vunpack.c.l.b16 %v2812
    %v3498 = vunpack.c.h.b16 %v2812
    %v3499 = vunpack.c.l.b16 %v2813
    %v3500 = vunpack.c.h.b16 %v2813
    %v3501 = vunpack.c.l.b16 %v2814
    %v3502 = vunpack.c.h.b16 %v2814
    %v3503 = vunpack.c.l.b16 %v2815
    %v3504 = vunpack.c.h.b16 %v2815
    %v3505 = vunpack.c.l.b16 %v2816
    %v3506 = vunpack.c.h.b16 %v2816
    %v3507 = vunpack.c.l.b16 %v2817
    %v3508 = vunpack.c.h.b16 %v2817
    %v3509 = vunpack.c.l.b16 %v2818
    %v3510 = vunpack.c.h.b16 %v2818
    %v3511 = vunpack.c.l.b16 %v2819
    %v3512 = vunpack.c.h.b16 %v2819
    %v3513 = vunpack.c.l.b16 %v2820
    %v3514 = vunpack.c.h.b16 %v2820
    %v3515 = vunpack.c.l.b16 %v2821
    %v3516 = vunpack.c.h.b16 %v2821
    %v3517 = vunpack.c.l.b16 %v2822
    %v3518 = vunpack.c.h.b16 %v2822
    %v3519 = vunpack.c.l.b16 %v2823
    %v3520 = vunpack.c.h.b16 %v2823
    %v3521 = vunpack.c.l.b16 %v2824
    %v3522 = vunpack.c.h.b16 %v2824
    %v3523 = vunpack.c.l.b16 %v2825
    %v3524 = vunpack.c.h.b16 %v2825
    %v3525 = vunpack.c.l.b16 %v2826
    %v3526 = vunpack.c.h.b16 %v2826
    %v3527 = vunpack.c.l.b16 %v2827
    %v3528 = vunpack.c.h.b16 %v2827
    %v3529 = vunpack.c.l.b16 %v2828
    %v3530 = vunpack.c.h.b16 %v2828
    %v3531 = vunpack.c.l.b16 %v2829
    %v3532 = vunpack.c.h.b16 %v2829
    %v3533 = vunpack.c.l.b16 %v2830
    %v3534 = vunpack.c.h.b16 %v2830
    %v3535 = vunpack.c.l.b16 %v2831
    %v3536 = vunpack.c.h.b16 %v2831
    %v3537 = vunpack.c.l.b16 %v2832
    %v3538 = vunpack.c.h.b16 %v2832
    %v3539 = vunpack.c.l.b16 %v2833
    %v3540 = vunpack.c.h.b16 %v2833
    %v3541 = vunpack.c.l.b16 %v2834
    %v3542 = vunpack.c.h.b16 %v2834
    %v3543 = vunpack.c.l.b16 %v2835
    %v3544 = vunpack.c.h.b16 %v2835
    %v3545 = vunpack.c.l.b16 %v2836
    %v3546 = vunpack.c.h.b16 %v2836
    %v3547 = vunpack.c.l.b16 %v2837
    %v3548 = vunpack.c.h.b16 %v2837
    %v3549 = vunpack.c.l.b16 %v2838
    %v3550 = vunpack.c.h.b16 %v2838
    %v3551 = vunpack.c.l.b16 %v2839
    %v3552 = vunpack.c.h.b16 %v2839
    %v3553 = vunpack.c.l.b16 %v2840
    %v3554 = vunpack.c.h.b16 %v2840
    %v3555 = vunpack.c.l.b16 %v2841
    %v3556 = vunpack.c.h.b16 %v2841
    %v3557 = vunpack.c.l.b16 %v2842
    %v3558 = vunpack.c.h.b16 %v2842
    %v3559 = vunpack.c.l.b16 %v2843
    %v3560 = vunpack.c.h.b16 %v2843
    %v3561 = vunpack.c.l.b16 %v2844
    %v3562 = vunpack.c.h.b16 %v2844
    %v3563 = vunpack.c.l.b16 %v2845
    %v3564 = vunpack.c.h.b16 %v2845
    %v3565 = vunpack.c.l.b16 %v2846
    %v3566 = vunpack.c.h.b16 %v2846
    %v3567 = vunpack.c.l.b16 %v2847
    %v3568 = vunpack.c.h.b16 %v2847
    %v3569 = vunpack.c.l.b16 %v2848
    %v3570 = vunpack.c.h.b16 %v2848
    %v3571 = vunpack.c.l.b16 %v2849
    %v3572 = vunpack.c.h.b16 %v2849
    %v3573 = vunpack.c.l.b16 %v2850
    %v3574 = vunpack.c.h.b16 %v2850
    %v3575 = vunpack.c.l.b16 %v2851
    %v3576 = vunpack.c.h.b16 %v2851
    %v3577 = vunpack.c.l.b16 %v2852
    %v3578 = vunpack.c.h.b16 %v2852
    %v3579 = vunpack.c.l.b16 %v2853
    %v3580 = vunpack.c.h.b16 %v2853
    %v3581 = vunpack.c.l.b16 %v2854
    %v3582 = vunpack.c.h.b16 %v2854
    %v3583 = vunpack.c.l.b16 %v2855
    %v3584 = vunpack.c.h.b16 %v2855
    %v3585 = vunpack.c.l.b16 %v2856
    %v3586 = vunpack.c.h.b16 %v2856
    %v3587 = vunpack.c.l.b16 %v2857
    %v3588 = vunpack.c.h.b16 %v2857
    %v3589 = vunpack.c.l.b16 %v2858
    %v3590 = vunpack.c.h.b16 %v2858
    %v3591 = vunpack.c.l.b16 %v2859
    %v3592 = vunpack.c.h.b16 %v2859
    %v3593 = vunpack.c.l.b16 %v2860
    %v3594 = vunpack.c.h.b16 %v2860
    %v3595 = vunpack.c.l.b16 %v2861
    %v3596 = vunpack.c.h.b16 %v2861
    %v3597 = vunpack.c.l.b16 %v2862
    %v3598 = vunpack.c.h.b16 %v2862
    %v3599 = vunpack.c.l.b16 %v2863
    %v3600 = vunpack.c.h.b16 %v2863
    %v3601 = vunpack.c.l.b16 %v2864
    %v3602 = vunpack.c.h.b16 %v2864
    %v3603 = vunpack.c.l.b16 %v2865
    %v3604 = vunpack.c.h.b16 %v2865
    %v3605 = vunpack.c.l.b16 %v2866
    %v3606 = vunpack.c.h.b16 %v2866
    %v3607 = vunpack.c.l.b16 %v2867
    %v3608 = vunpack.c.h.b16 %v2867
    %v3609 = vunpack.c.l.b16 %v2868
    %v3610 = vunpack.c.h.b16 %v2868
    %v3611 = vunpack.c.l.b16 %v2869
    %v3612 = vunpack.c.h.b16 %v2869
    %v3613 = vunpack.c.l.b16 %v2870
    %v3614 = vunpack.c.h.b16 %v2870
    %v3615 = vunpack.c.l.b16 %v2871
    %v3616 = vunpack.c.h.b16 %v2871
    %v3617 = vunpack.c.l.b16 %v2872
    %v3618 = vunpack.c.h.b16 %v2872
    %v3619 = vunpack.c.l.b16 %v2873
    %v3620 = vunpack.c.h.b16 %v2873
    %v3621 = vunpack.c.l.b16 %v2874
    %v3622 = vunpack.c.h.b16 %v2874
    %v3623 = vunpack.c.l.b16 %v2875
    %v3624 = vunpack.c.h.b16 %v2875
    %v3625 = vunpack.c.l.b16 %v2876
    %v3626 = vunpack.c.h.b16 %v2876
    %v3627 = vunpack.c.l.b16 %v2877
    %v3628 = vunpack.c.h.b16 %v2877
    %v3629 = vunpack.c.l.b16 %v2878
    %v3630 = vunpack.c.h.b16 %v2878
    %v3631 = vunpack.c.l.b16 %v2879
    %v3632 = vunpack.c.h.b16 %v2879
    %v3633 = vunpack.c.l.b16 %v2880
    %v3634 = vunpack.c.h.b16 %v2880
    %v3635 = vunpack.c.l.b16 %v2881
    %v3636 = vunpack.c.h.b16 %v2881
    %v3637 = vunpack.c.l.b16 %v2882
    %v3638 = vunpack.c.h.b16 %v2882
    %v3639 = vunpack.c.l.b16 %v2883
    %v3640 = vunpack.c.h.b16 %v2883
    %v3641 = vunpack.c.l.b16 %v2884
    %v3642 = vunpack.c.h.b16 %v2884
    %v3643 = vunpack.c.l.b16 %v2885
    %v3644 = vunpack.c.h.b16 %v2885
    %v3645 = vunpack.c.l.b16 %v2886
    %v3646 = vunpack.c.h.b16 %v2886
    %v3647 = vunpack.c.l.b16 %v2887
    %v3648 = vunpack.c.h.b16 %v2887
    %v3649 = vunpack.c.l.b16 %v2888
    %v3650 = vunpack.c.h.b16 %v2888
    %v3651 = vunpack.c.l.b16 %v2889
    %v3652 = vunpack.c.h.b16 %v2889
    %v3653 = vunpack.c.l.b16 %v2890
    %v3654 = vunpack.c.h.b16 %v2890
    %v3655 = vunpack.c.l.b16 %v2891
    %v3656 = vunpack.c.h.b16 %v2891
    %v3657 = vunpack.c.l.b16 %v2892
    %v3658 = vunpack.c.h.b16 %v2892
    %v3659 = vunpack.c.l.b16 %v2893
    %v3660 = vunpack.c.h.b16 %v2893
    %v3661 = vunpack.c.l.b16 %v2894
    %v3662 = vunpack.c.h.b16 %v2894
    %v3663 = vunpack.c.l.b16 %v2895
    %v3664 = vunpack.c.h.b16 %v2895
    %v3665 = vunpack.c.l.b16 %v2896
    %v3666 = vunpack.c.h.b16 %v2896
    %v3667 = vunpack.c.l.b16 %v2897
    %v3668 = vunpack.c.h.b16 %v2897
    %v3669 = vunpack.c.l.b16 %v2898
    %v3670 = vunpack.c.h.b16 %v2898
    %v3671 = vpack.c.b16 %v3163, %v3159
    %v3672 = vpack.c.b16 %v3164, %v3160
    %v3673 = vpack.c.b16 %v3165, %v3161
    %v3674 = vpack.c.b16 %v3166, %v3162
    %v3675 = vpack.c.b16 %v3171, %v3167
    %v3676 = vpack.c.b16 %v3172, %v3168
    %v3677 = vpack.c.b16 %v3173, %v3169
    %v3678 = vpack.c.b16 %v3174, %v3170
    %v3679 = vpack.c.b16 %v3179, %v3175
    %v3680 = vpack.c.b16 %v3180, %v3176
    %v3681 = vpack.c.b16 %v3181, %v3177
    %v3682 = vpack.c.b16 %v3182, %v3178
    %v3683 = vpack.c.b16 %v3187, %v3183
    %v3684 = vpack.c.b16 %v3188, %v3184
    %v3685 = vpack.c.b16 %v3189, %v3185
    %v3686 = vpack.c.b16 %v3190, %v3186
    %v3687 = vpack.c.b16 %v3195, %v3191
    %v3688 = vpack.c.b16 %v3196, %v3192
    %v3689 = vpack.c.b16 %v3197, %v3193
    %v3690 = vpack.c.b16 %v3198, %v3194
    %v3691 = vpack.c.b16 %v3203, %v3199
    %v3692 = vpack.c.b16 %v3204, %v3200
    %v3693 = vpack.c.b16 %v3205, %v3201
    %v3694 = vpack.c.b16 %v3206, %v3202
    %v3695 = vpack.c.b16 %v3211, %v3207
    %v3696 = vpack.c.b16 %v3212, %v3208
    %v3697 = vpack.c.b16 %v3213, %v3209
    %v3698 = vpack.c.b16 %v3214, %v3210
    %v3699 = vpack.c.b16 %v3219, %v3215
    %v3700 = vpack.c.b16 %v3220, %v3216
    %v3701 = vpack.c.b16 %v3221, %v3217
    %v3702 = vpack.c.b16 %v3222, %v3218
    %v3703 = vpack.c.b16 %v3227, %v3223
    %v3704 = vpack.c.b16 %v3228, %v3224
    %v3705 = vpack.c.b16 %v3229, %v3225
    %v3706 = vpack.c.b16 %v3230, %v3226
    %v3707 = vpack.c.b16 %v3235, %v3231
    %v3708 = vpack.c.b16 %v3236, %v3232
    %v3709 = vpack.c.b16 %v3237, %v3233
    %v3710 = vpack.c.b16 %v3238, %v3234
    %v3711 = vpack.c.b16 %v3243, %v3239
    %v3712 = vpack.c.b16 %v3244, %v3240
    %v3713 = vpack.c.b16 %v3245, %v3241
    %v3714 = vpack.c.b16 %v3246, %v3242
    %v3715 = vpack.c.b16 %v3251, %v3247
    %v3716 = vpack.c.b16 %v3252, %v3248
    %v3717 = vpack.c.b16 %v3253, %v3249
    %v3718 = vpack.c.b16 %v3254, %v3250
    %v3719 = vpack.c.b16 %v3259, %v3255
    %v3720 = vpack.c.b16 %v3260, %v3256
    %v3721 = vpack.c.b16 %v3261, %v3257
    %v3722 = vpack.c.b16 %v3262, %v3258
    %v3723 = vpack.c.b16 %v3267, %v3263
    %v3724 = vpack.c.b16 %v3268, %v3264
    %v3725 = vpack.c.b16 %v3269, %v3265
    %v3726 = vpack.c.b16 %v3270, %v3266
    %v3727 = vpack.c.b16 %v3275, %v3271
    %v3728 = vpack.c.b16 %v3276, %v3272
    %v3729 = vpack.c.b16 %v3277, %v3273
    %v3730 = vpack.c.b16 %v3278, %v3274
    %v3731 = vpack.c.b16 %v3283, %v3279
    %v3732 = vpack.c.b16 %v3284, %v3280
    %v3733 = vpack.c.b16 %v3285, %v3281
    %v3734 = vpack.c.b16 %v3286, %v3282
    %v3735 = vpack.c.b16 %v3291, %v3287
    %v3736 = vpack.c.b16 %v3292, %v3288
    %v3737 = vpack.c.b16 %v3293, %v3289
    %v3738 = vpack.c.b16 %v3294, %v3290
    %v3739 = vpack.c.b16 %v3299, %v3295
    %v3740 = vpack.c.b16 %v3300, %v3296
    %v3741 = vpack.c.b16 %v3301, %v3297
    %v3742 = vpack.c.b16 %v3302, %v3298
    %v3743 = vpack.c.b16 %v3307, %v3303
    %v3744 = vpack.c.b16 %v3308, %v3304
    %v3745 = vpack.c.b16 %v3309, %v3305
    %v3746 = vpack.c.b16 %v3310, %v3306
    %v3747 = vpack.c.b16 %v3315, %v3311
    %v3748 = vpack.c.b16 %v3316, %v3312
    %v3749 = vpack.c.b16 %v3317, %v3313
    %v3750 = vpack.c.b16 %v3318, %v3314
    %v3751 = vpack.c.b16 %v3323, %v3319
    %v3752 = vpack.c.b16 %v3324, %v3320
    %v3753 = vpack.c.b16 %v3325, %v3321
    %v3754 = vpack.c.b16 %v3326, %v3322
    %v3755 = vpack.c.b16 %v3331, %v3327
    %v3756 = vpack.c.b16 %v3332, %v3328
    %v3757 = vpack.c.b16 %v3333, %v3329
    %v3758 = vpack.c.b16 %v3334, %v3330
    %v3759 = vpack.c.b16 %v3339, %v3335
    %v3760 = vpack.c.b16 %v3340, %v3336
    %v3761 = vpack.c.b16 %v3341, %v3337
    %v3762 = vpack.c.b16 %v3342, %v3338
    %v3763 = vpack.c.b16 %v3347, %v3343
    %v3764 = vpack.c.b16 %v3348, %v3344
    %v3765 = vpack.c.b16 %v3349, %v3345
    %v3766 = vpack.c.b16 %v3350, %v3346
    %v3767 = vpack.c.b16 %v3355, %v3351
    %v3768 = vpack.c.b16 %v3356, %v3352
    %v3769 = vpack.c.b16 %v3357, %v3353
    %v3770 = vpack.c.b16 %v3358, %v3354
    %v3771 = vpack.c.b16 %v3363, %v3359
    %v3772 = vpack.c.b16 %v3364, %v3360
    %v3773 = vpack.c.b16 %v3365, %v3361
    %v3774 = vpack.c.b16 %v3366, %v3362
    %v3775 = vpack.c.b16 %v3371, %v3367
    %v3776 = vpack.c.b16 %v3372, %v3368
    %v3777 = vpack.c.b16 %v3373, %v3369
    %v3778 = vpack.c.b16 %v3374, %v3370
    %v3779 = vpack.c.b16 %v3379, %v3375
    %v3780 = vpack.c.b16 %v3380, %v3376
    %v3781 = vpack.c.b16 %v3381, %v3377
    %v3782 = vpack.c.b16 %v3382, %v3378
    %v3783 = vpack.c.b16 %v3387, %v3383
    %v3784 = vpack.c.b16 %v3388, %v3384
    %v3785 = vpack.c.b16 %v3389, %v3385
    %v3786 = vpack.c.b16 %v3390, %v3386
    %v3787 = vpack.c.b16 %v3395, %v3391
    %v3788 = vpack.c.b16 %v3396, %v3392
    %v3789 = vpack.c.b16 %v3397, %v3393
    %v3790 = vpack.c.b16 %v3398, %v3394
    %v3791 = vpack.c.b16 %v3403, %v3399
    %v3792 = vpack.c.b16 %v3404, %v3400
    %v3793 = vpack.c.b16 %v3405, %v3401
    %v3794 = vpack.c.b16 %v3406, %v3402
    %v3795 = vpack.c.b16 %v3411, %v3407
    %v3796 = vpack.c.b16 %v3412, %v3408
    %v3797 = vpack.c.b16 %v3413, %v3409
    %v3798 = vpack.c.b16 %v3414, %v3410
    %v3799 = vpack.c.b16 %v3419, %v3415
    %v3800 = vpack.c.b16 %v3420, %v3416
    %v3801 = vpack.c.b16 %v3421, %v3417
    %v3802 = vpack.c.b16 %v3422, %v3418
    %v3803 = vpack.c.b16 %v3427, %v3423
    %v3804 = vpack.c.b16 %v3428, %v3424
    %v3805 = vpack.c.b16 %v3429, %v3425
    %v3806 = vpack.c.b16 %v3430, %v3426
    %v3807 = vpack.c.b16 %v3435, %v3431
    %v3808 = vpack.c.b16 %v3436, %v3432
    %v3809 = vpack.c.b16 %v3437, %v3433
    %v3810 = vpack.c.b16 %v3438, %v3434
    %v3811 = vpack.c.b16 %v3443, %v3439
    %v3812 = vpack.c.b16 %v3444, %v3440
    %v3813 = vpack.c.b16 %v3445, %v3441
    %v3814 = vpack.c.b16 %v3446, %v3442
    %v3815 = vpack.c.b16 %v3451, %v3447
    %v3816 = vpack.c.b16 %v3452, %v3448
    %v3817 = vpack.c.b16 %v3453, %v3449
    %v3818 = vpack.c.b16 %v3454, %v3450
    %v3819 = vpack.c.b16 %v3459, %v3455
    %v3820 = vpack.c.b16 %v3460, %v3456
    %v3821 = vpack.c.b16 %v3461, %v3457
    %v3822 = vpack.c.b16 %v3462, %v3458
    %v3823 = vpack.c.b16 %v3467, %v3463
    %v3824 = vpack.c.b16 %v3468, %v3464
    %v3825 = vpack.c.b16 %v3469, %v3465
    %v3826 = vpack.c.b16 %v3470, %v3466
    %v3827 = vpack.c.b16 %v3475, %v3471
    %v3828 = vpack.c.b16 %v3476, %v3472
    %v3829 = vpack.c.b16 %v3477, %v3473
    %v3830 = vpack.c.b16 %v3478, %v3474
    %v3831 = vpack.c.b16 %v3483, %v3479
    %v3832 = vpack.c.b16 %v3484, %v3480
    %v3833 = vpack.c.b16 %v3485, %v3481
    %v3834 = vpack.c.b16 %v3486, %v3482
    %v3835 = vpack.c.b16 %v3491, %v3487
    %v3836 = vpack.c.b16 %v3492, %v3488
    %v3837 = vpack.c.b16 %v3493, %v3489
    %v3838 = vpack.c.b16 %v3494, %v3490
    %v3839 = vpack.c.b16 %v3499, %v3495
    %v3840 = vpack.c.b16 %v3500, %v3496
    %v3841 = vpack.c.b16 %v3501, %v3497
    %v3842 = vpack.c.b16 %v3502, %v3498
    %v3843 = vpack.c.b16 %v3507, %v3503
    %v3844 = vpack.c.b16 %v3508, %v3504
    %v3845 = vpack.c.b16 %v3509, %v3505
    %v3846 = vpack.c.b16 %v3510, %v3506
    %v3847 = vpack.c.b16 %v3515, %v3511
    %v3848 = vpack.c.b16 %v3516, %v3512
    %v3849 = vpack.c.b16 %v3517, %v3513
    %v3850 = vpack.c.b16 %v3518, %v3514
    %v3851 = vpack.c.b16 %v3523, %v3519
    %v3852 = vpack.c.b16 %v3524, %v3520
    %v3853 = vpack.c.b16 %v3525, %v3521
    %v3854 = vpack.c.b16 %v3526, %v3522
    %v3855 = vpack.c.b16 %v3531, %v3527
    %v3856 = vpack.c.b16 %v3532, %v3528
    %v3857 = vpack.c.b16 %v3533, %v3529
    %v3858 = vpack.c.b16 %v3534, %v3530
    %v3859 = vpack.c.b16 %v3539, %v3535
    %v3860 = vpack.c.b16 %v3540, %v3536
    %v3861 = vpack.c.b16 %v3541, %v3537
    %v3862 = vpack.c.b16 %v3542, %v3538
    %v3863 = vpack.c.b16 %v3547, %v3543
    %v3864 = vpack.c.b16 %v3548, %v3544
    %v3865 = vpack.c.b16 %v3549, %v3545
    %v3866 = vpack.c.b16 %v3550, %v3546
    %v3867 = vpack.c.b16 %v3555, %v3551
    %v3868 = vpack.c.b16 %v3556, %v3552
    %v3869 = vpack.c.b16 %v3557, %v3553
    %v3870 = vpack.c.b16 %v3558, %v3554
    %v3871 = vpack.c.b16 %v3563, %v3559
    %v3872 = vpack.c.b16 %v3564, %v3560
    %v3873 = vpack.c.b16 %v3565, %v3561
    %v3874 = vpack.c.b16 %v3566, %v3562
    %v3875 = vpack.c.b16 %v3571, %v3567
    %v3876 = vpack.c.b16 %v3572, %v3568
    %v3877 = vpack.c.b16 %v3573, %v3569
    %v3878 = vpack.c.b16 %v3574, %v3570
    %v3879 = vpack.c.b16 %v3579, %v3575
    %v3880 = vpack.c.b16 %v3580, %v3576
    %v3881 = vpack.c.b16 %v3581, %v3577
    %v3882 = vpack.c.b16 %v3582, %v3578
    %v3883 = vpack.c.b16 %v3587, %v3583
    %v3884 = vpack.c.b16 %v3588, %v3584
    %v3885 = vpack.c.b16 %v3589, %v3585
    %v3886 = vpack.c.b16 %v3590, %v3586
    %v3887 = vpack.c.b16 %v3595, %v3591
    %v3888 = vpack.c.b16 %v3596, %v3592
    %v3889 = vpack.c.b16 %v3597, %v3593
    %v3890 = vpack.c.b16 %v3598, %v3594
    %v3891 = vpack.c.b16 %v3603, %v3599
    %v3892 = vpack.c.b16 %v3604, %v3600
    %v3893 = vpack.c.b16 %v3605, %v3601
    %v3894 = vpack.c.b16 %v3606, %v3602
    %v3895 = vpack.c.b16 %v3611, %v3607
    %v3896 = vpack.c.b16 %v3612, %v3608
    %v3897 = vpack.c.b16 %v3613, %v3609
    %v3898 = vpack.c.b16 %v3614, %v3610
    %v3899 = vpack.c.b16 %v3619, %v3615
    %v3900 = vpack.c.b16 %v3620, %v3616
    %v3901 = vpack.c.b16 %v3621, %v3617
    %v3902 = vpack.c.b16 %v3622, %v3618
    %v3903 = vpack.c.b16 %v3627, %v3623
    %v3904 = vpack.c.b16 %v3628, %v3624
    %v3905 = vpack.c.b16 %v3629, %v3625
    %v3906 = vpack.c.b16 %v3630, %v3626
    %v3907 = vpack.c.b16 %v3635, %v3631
    %v3908 = vpack.c.b16 %v3636, %v3632
    %v3909 = vpack.c.b16 %v3637, %v3633
    %v3910 = vpack.c.b16 %v3638, %v3634
    %v3911 = vpack.c.b16 %v3643, %v3639
    %v3912 = vpack.c.b16 %v3644, %v3640
    %v3913 = vpack.c.b16 %v3645, %v3641
    %v3914 = vpack.c.b16 %v3646, %v3642
    %v3915 = vpack.c.b16 %v3651, %v3647
    %v3916 = vpack.c.b16 %v3652, %v3648
    %v3917 = vpack.c.b16 %v3653, %v3649
    %v3918 = vpack.c.b16 %v3654, %v3650
    %v3919 = vpack.c.b16 %v3659, %v3655
    %v3920 = vpack.c.b16 %v3660, %v3656
    %v3921 = vpack.c.b16 %v3661, %v3657
    %v3922 = vpack.c.b16 %v3662, %v3658
    %v3923 = vpack.c.b16 %v3667, %v3663
    %v3924 = vpack.c.b16 %v3668, %v3664
    %v3925 = vpack.c.b16 %v3669, %v3665
    %v3926 = vpack.c.b16 %v3670, %v3666
    %4183 = vmatpush.bf16.msra.mxu0 %v3699
    %4184 = vmatpush.bf16.msra.mxu0 %v3695
    %4185 = vmatpush.bf16.msra.mxu0 %v3691
    %4186 = vmatpush.bf16.msra.mxu0 %v3687
    %4187 = vmatpush.bf16.msra.mxu0 %v3683
    %4188 = vmatpush.bf16.msra.mxu0 %v3679
    %4189 = vmatpush.bf16.msra.mxu0 %v3675
    %4190 = vmatpush.bf16.msra.mxu0 %v3671
    %4191 = vmatmul.bf16.gmra.mxu0 %v130
    %v4192 = vpop.f32.mrf.mxu0
    %v4193 = vadd.f32 %v2899, %v4192
    %v4194 = vpop.f32.mrf.mxu0
    %v4195 = vadd.f32 %v2899, %v4194
    %4196 = vdwg.mxu0
    %4197 = vmatpush.bf16.msra.mxu0 %v3731
    %4198 = vmatpush.bf16.msra.mxu0 %v3727
    %4199 = vmatpush.bf16.msra.mxu0 %v3723
    %4200 = vmatpush.bf16.msra.mxu0 %v3719
    %4201 = vmatpush.bf16.msra.mxu0 %v3715
    %4202 = vmatpush.bf16.msra.mxu0 %v3711
    %4203 = vmatpush.bf16.msra.mxu0 %v3707
    %4204 = vmatpush.bf16.msra.mxu0 %v3703
    %4205 = vmatmul.bf16.gmra.mxu0 %v131
    %v4206 = vpop.f32.mrf.mxu0
    %v4207 = vadd.f32 %v4193, %v4206
    %v4208 = vpop.f32.mrf.mxu0
    %v4209 = vadd.f32 %v4195, %v4208
    %4210 = vdwg.mxu0
    %4211 = vmatpush.bf16.msra.mxu0 %v3763
    %4212 = vmatpush.bf16.msra.mxu0 %v3759
    %4213 = vmatpush.bf16.msra.mxu0 %v3755
    %4214 = vmatpush.bf16.msra.mxu0 %v3751
    %4215 = vmatpush.bf16.msra.mxu0 %v3747
    %4216 = vmatpush.bf16.msra.mxu0 %v3743
    %4217 = vmatpush.bf16.msra.mxu0 %v3739
    %4218 = vmatpush.bf16.msra.mxu0 %v3735
    %4219 = vmatmul.bf16.gmra.mxu0 %v132
    %v4220 = vpop.f32.mrf.mxu0
    %v4221 = vadd.f32 %v4207, %v4220
    %v4222 = vpop.f32.mrf.mxu0
    %v4223 = vadd.f32 %v4209, %v4222
    %4224 = vdwg.mxu0
    %4225 = vmatpush.bf16.msra.mxu0 %v3795
    %4226 = vmatpush.bf16.msra.mxu0 %v3791
    %4227 = vmatpush.bf16.msra.mxu0 %v3787
    %4228 = vmatpush.bf16.msra.mxu0 %v3783
    %4229 = vmatpush.bf16.msra.mxu0 %v3779
    %4230 = vmatpush.bf16.msra.mxu0 %v3775
    %4231 = vmatpush.bf16.msra.mxu0 %v3771
    %4232 = vmatpush.bf16.msra.mxu0 %v3767
    %4233 = vmatmul.bf16.gmra.mxu0 %v133
    %v4234 = vpop.f32.mrf.mxu0
    %v4235 = vadd.f32 %v4221, %v4234
    %v4236 = vpop.f32.mrf.mxu0
    %v4237 = vadd.f32 %v4223, %v4236
    %4238 = vdwg.mxu0
    %4239 = vmatpush.bf16.msra.mxu0 %v3827
    %4240 = vmatpush.bf16.msra.mxu0 %v3823
    %4241 = vmatpush.bf16.msra.mxu0 %v3819
    %4242 = vmatpush.bf16.msra.mxu0 %v3815
    %4243 = vmatpush.bf16.msra.mxu0 %v3811
    %4244 = vmatpush.bf16.msra.mxu0 %v3807
    %4245 = vmatpush.bf16.msra.mxu0 %v3803
    %4246 = vmatpush.bf16.msra.mxu0 %v3799
    %4247 = vmatmul.bf16.gmra.mxu0 %v134
    %v4248 = vpop.f32.mrf.mxu0
    %v4249 = vadd.f32 %v4235, %v4248
    %v4250 = vpop.f32.mrf.mxu0
    %v4251 = vadd.f32 %v4237, %v4250
    %4252 = vdwg.mxu0
    %4253 = vmatpush.bf16.msra.mxu0 %v3859
    %4254 = vmatpush.bf16.msra.mxu0 %v3855
    %4255 = vmatpush.bf16.msra.mxu0 %v3851
    %4256 = vmatpush.bf16.msra.mxu0 %v3847
    %4257 = vmatpush.bf16.msra.mxu0 %v3843
    %4258 = vmatpush.bf16.msra.mxu0 %v3839
    %4259 = vmatpush.bf16.msra.mxu0 %v3835
    %4260 = vmatpush.bf16.msra.mxu0 %v3831
    %4261 = vmatmul.bf16.gmra.mxu0 %v135
    %v4262 = vpop.f32.mrf.mxu0
    %v4263 = vadd.f32 %v4249, %v4262
    %v4264 = vpop.f32.mrf.mxu0
    %v4265 = vadd.f32 %v4251, %v4264
    %4266 = vdwg.mxu0
    %4267 = vmatpush.bf16.msra.mxu0 %v3891
    %4268 = vmatpush.bf16.msra.mxu0 %v3887
    %4269 = vmatpush.bf16.msra.mxu0 %v3883
    %4270 = vmatpush.bf16.msra.mxu0 %v3879
    %4271 = vmatpush.bf16.msra.mxu0 %v3875
    %4272 = vmatpush.bf16.msra.mxu0 %v3871
    %4273 = vmatpush.bf16.msra.mxu0 %v3867
    %4274 = vmatpush.bf16.msra.mxu0 %v3863
    %4275 = vmatmul.bf16.gmra.mxu0 %v136
    %v4276 = vpop.f32.mrf.mxu0
    %v4277 = vadd.f32 %v4263, %v4276
    %v4278 = vpop.f32.mrf.mxu0
    %v4279 = vadd.f32 %v4265, %v4278
    %4280 = vdwg.mxu0
    %4281 = vmatpush.bf16.msra.mxu0 %v3923
    %4282 = vmatpush.bf16.msra.mxu0 %v3919
    %4283 = vmatpush.bf16.msra.mxu0 %v3915
    %4284 = vmatpush.bf16.msra.mxu0 %v3911
    %4285 = vmatpush.bf16.msra.mxu0 %v3907
    %4286 = vmatpush.bf16.msra.mxu0 %v3903
    %4287 = vmatpush.bf16.msra.mxu0 %v3899
    %4288 = vmatpush.bf16.msra.mxu0 %v3895
    %4289 = vmatmul.bf16.gmra.mxu0 %v137
    %v4290 = vpop.f32.mrf.mxu0
    %v4291 = vadd.f32 %v4277, %v4290
    %v4292 = vpop.f32.mrf.mxu0
    %v4293 = vadd.f32 %v4279, %v4292
    %4294 = vdwg.mxu0
    %4295 = vmatpush.bf16.msra.mxu0 %v3700
    %4296 = vmatpush.bf16.msra.mxu0 %v3696
    %4297 = vmatpush.bf16.msra.mxu0 %v3692
    %4298 = vmatpush.bf16.msra.mxu0 %v3688
    %4299 = vmatpush.bf16.msra.mxu0 %v3684
    %4300 = vmatpush.bf16.msra.mxu0 %v3680
    %4301 = vmatpush.bf16.msra.mxu0 %v3676
    %4302 = vmatpush.bf16.msra.mxu0 %v3672
    %4303 = vmatmul.bf16.gmra.mxu0 %v130
    %v4304 = vpop.f32.mrf.mxu0
    %v4305 = vadd.f32 %v2900, %v4304
    %v4306 = vpop.f32.mrf.mxu0
    %v4307 = vadd.f32 %v2900, %v4306
    %4308 = vdwg.mxu0
    %4309 = vmatpush.bf16.msra.mxu0 %v3732
    %4310 = vmatpush.bf16.msra.mxu0 %v3728
    %4311 = vmatpush.bf16.msra.mxu0 %v3724
    %4312 = vmatpush.bf16.msra.mxu0 %v3720
    %4313 = vmatpush.bf16.msra.mxu0 %v3716
    %4314 = vmatpush.bf16.msra.mxu0 %v3712
    %4315 = vmatpush.bf16.msra.mxu0 %v3708
    %4316 = vmatpush.bf16.msra.mxu0 %v3704
    %4317 = vmatmul.bf16.gmra.mxu0 %v131
    %v4318 = vpop.f32.mrf.mxu0
    %v4319 = vadd.f32 %v4305, %v4318
    %v4320 = vpop.f32.mrf.mxu0
    %v4321 = vadd.f32 %v4307, %v4320
    %4322 = vdwg.mxu0
    %4323 = vmatpush.bf16.msra.mxu0 %v3764
    %4324 = vmatpush.bf16.msra.mxu0 %v3760
    %4325 = vmatpush.bf16.msra.mxu0 %v3756
    %4326 = vmatpush.bf16.msra.mxu0 %v3752
    %4327 = vmatpush.bf16.msra.mxu0 %v3748
    %4328 = vmatpush.bf16.msra.mxu0 %v3744
    %4329 = vmatpush.bf16.msra.mxu0 %v3740
    %4330 = vmatpush.bf16.msra.mxu0 %v3736
    %4331 = vmatmul.bf16.gmra.mxu0 %v132
    %v4332 = vpop.f32.mrf.mxu0
    %v4333 = vadd.f32 %v4319, %v4332
    %v4334 = vpop.f32.mrf.mxu0
    %v4335 = vadd.f32 %v4321, %v4334
    %4336 = vdwg.mxu0
    %4337 = vmatpush.bf16.msra.mxu0 %v3796
    %4338 = vmatpush.bf16.msra.mxu0 %v3792
    %4339 = vmatpush.bf16.msra.mxu0 %v3788
    %4340 = vmatpush.bf16.msra.mxu0 %v3784
    %4341 = vmatpush.bf16.msra.mxu0 %v3780
    %4342 = vmatpush.bf16.msra.mxu0 %v3776
    %4343 = vmatpush.bf16.msra.mxu0 %v3772
    %4344 = vmatpush.bf16.msra.mxu0 %v3768
    %4345 = vmatmul.bf16.gmra.mxu0 %v133
    %v4346 = vpop.f32.mrf.mxu0
    %v4347 = vadd.f32 %v4333, %v4346
    %v4348 = vpop.f32.mrf.mxu0
    %v4349 = vadd.f32 %v4335, %v4348
    %4350 = vdwg.mxu0
    %4351 = vmatpush.bf16.msra.mxu0 %v3828
    %4352 = vmatpush.bf16.msra.mxu0 %v3824
    %4353 = vmatpush.bf16.msra.mxu0 %v3820
    %4354 = vmatpush.bf16.msra.mxu0 %v3816
    %4355 = vmatpush.bf16.msra.mxu0 %v3812
    %4356 = vmatpush.bf16.msra.mxu0 %v3808
    %4357 = vmatpush.bf16.msra.mxu0 %v3804
    %4358 = vmatpush.bf16.msra.mxu0 %v3800
    %4359 = vmatmul.bf16.gmra.mxu0 %v134
    %v4360 = vpop.f32.mrf.mxu0
    %v4361 = vadd.f32 %v4347, %v4360
    %v4362 = vpop.f32.mrf.mxu0
    %v4363 = vadd.f32 %v4349, %v4362
    %4364 = vdwg.mxu0
    %4365 = vmatpush.bf16.msra.mxu0 %v3860
    %4366 = vmatpush.bf16.msra.mxu0 %v3856
    %4367 = vmatpush.bf16.msra.mxu0 %v3852
    %4368 = vmatpush.bf16.msra.mxu0 %v3848
    %4369 = vmatpush.bf16.msra.mxu0 %v3844
    %4370 = vmatpush.bf16.msra.mxu0 %v3840
    %4371 = vmatpush.bf16.msra.mxu0 %v3836
    %4372 = vmatpush.bf16.msra.mxu0 %v3832
    %4373 = vmatmul.bf16.gmra.mxu0 %v135
    %v4374 = vpop.f32.mrf.mxu0
    %v4375 = vadd.f32 %v4361, %v4374
    %v4376 = vpop.f32.mrf.mxu0
    %v4377 = vadd.f32 %v4363, %v4376
    %4378 = vdwg.mxu0
    %4379 = vmatpush.bf16.msra.mxu0 %v3892
    %4380 = vmatpush.bf16.msra.mxu0 %v3888
    %4381 = vmatpush.bf16.msra.mxu0 %v3884
    %4382 = vmatpush.bf16.msra.mxu0 %v3880
    %4383 = vmatpush.bf16.msra.mxu0 %v3876
    %4384 = vmatpush.bf16.msra.mxu0 %v3872
    %4385 = vmatpush.bf16.msra.mxu0 %v3868
    %4386 = vmatpush.bf16.msra.mxu0 %v3864
    %4387 = vmatmul.bf16.gmra.mxu0 %v136
    %v4388 = vpop.f32.mrf.mxu0
    %v4389 = vadd.f32 %v4375, %v4388
    %v4390 = vpop.f32.mrf.mxu0
    %v4391 = vadd.f32 %v4377, %v4390
    %4392 = vdwg.mxu0
    %4393 = vmatpush.bf16.msra.mxu0 %v3924
    %4394 = vmatpush.bf16.msra.mxu0 %v3920
    %4395 = vmatpush.bf16.msra.mxu0 %v3916
    %4396 = vmatpush.bf16.msra.mxu0 %v3912
    %4397 = vmatpush.bf16.msra.mxu0 %v3908
    %4398 = vmatpush.bf16.msra.mxu0 %v3904
    %4399 = vmatpush.bf16.msra.mxu0 %v3900
    %4400 = vmatpush.bf16.msra.mxu0 %v3896
    %4401 = vmatmul.bf16.gmra.mxu0 %v137
    %v4402 = vpop.f32.mrf.mxu0
    %v4403 = vadd.f32 %v4389, %v4402
    %v4404 = vpop.f32.mrf.mxu0
    %v4405 = vadd.f32 %v4391, %v4404
    %4406 = vdwg.mxu0
    %4407 = vmatpush.bf16.msra.mxu0 %v3701
    %4408 = vmatpush.bf16.msra.mxu0 %v3697
    %4409 = vmatpush.bf16.msra.mxu0 %v3693
    %4410 = vmatpush.bf16.msra.mxu0 %v3689
    %4411 = vmatpush.bf16.msra.mxu0 %v3685
    %4412 = vmatpush.bf16.msra.mxu0 %v3681
    %4413 = vmatpush.bf16.msra.mxu0 %v3677
    %4414 = vmatpush.bf16.msra.mxu0 %v3673
    %4415 = vmatmul.bf16.gmra.mxu0 %v130
    %v4416 = vpop.f32.mrf.mxu0
    %v4417 = vadd.f32 %v2901, %v4416
    %v4418 = vpop.f32.mrf.mxu0
    %v4419 = vadd.f32 %v2901, %v4418
    %4420 = vdwg.mxu0
    %4421 = vmatpush.bf16.msra.mxu0 %v3733
    %4422 = vmatpush.bf16.msra.mxu0 %v3729
    %4423 = vmatpush.bf16.msra.mxu0 %v3725
    %4424 = vmatpush.bf16.msra.mxu0 %v3721
    %4425 = vmatpush.bf16.msra.mxu0 %v3717
    %4426 = vmatpush.bf16.msra.mxu0 %v3713
    %4427 = vmatpush.bf16.msra.mxu0 %v3709
    %4428 = vmatpush.bf16.msra.mxu0 %v3705
    %4429 = vmatmul.bf16.gmra.mxu0 %v131
    %v4430 = vpop.f32.mrf.mxu0
    %v4431 = vadd.f32 %v4417, %v4430
    %v4432 = vpop.f32.mrf.mxu0
    %v4433 = vadd.f32 %v4419, %v4432
    %4434 = vdwg.mxu0
    %4435 = vmatpush.bf16.msra.mxu0 %v3765
    %4436 = vmatpush.bf16.msra.mxu0 %v3761
    %4437 = vmatpush.bf16.msra.mxu0 %v3757
    %4438 = vmatpush.bf16.msra.mxu0 %v3753
    %4439 = vmatpush.bf16.msra.mxu0 %v3749
    %4440 = vmatpush.bf16.msra.mxu0 %v3745
    %4441 = vmatpush.bf16.msra.mxu0 %v3741
    %4442 = vmatpush.bf16.msra.mxu0 %v3737
    %4443 = vmatmul.bf16.gmra.mxu0 %v132
    %v4444 = vpop.f32.mrf.mxu0
    %v4445 = vadd.f32 %v4431, %v4444
    %v4446 = vpop.f32.mrf.mxu0
    %v4447 = vadd.f32 %v4433, %v4446
    %4448 = vdwg.mxu0
    %4449 = vmatpush.bf16.msra.mxu0 %v3797
    %4450 = vmatpush.bf16.msra.mxu0 %v3793
    %4451 = vmatpush.bf16.msra.mxu0 %v3789
    %4452 = vmatpush.bf16.msra.mxu0 %v3785
    %4453 = vmatpush.bf16.msra.mxu0 %v3781
    %4454 = vmatpush.bf16.msra.mxu0 %v3777
    %4455 = vmatpush.bf16.msra.mxu0 %v3773
    %4456 = vmatpush.bf16.msra.mxu0 %v3769
    %4457 = vmatmul.bf16.gmra.mxu0 %v133
    %v4458 = vpop.f32.mrf.mxu0
    %v4459 = vadd.f32 %v4445, %v4458
    %v4460 = vpop.f32.mrf.mxu0
    %v4461 = vadd.f32 %v4447, %v4460
    %4462 = vdwg.mxu0
    %4463 = vmatpush.bf16.msra.mxu0 %v3829
    %4464 = vmatpush.bf16.msra.mxu0 %v3825
    %4465 = vmatpush.bf16.msra.mxu0 %v3821
    %4466 = vmatpush.bf16.msra.mxu0 %v3817
    %4467 = vmatpush.bf16.msra.mxu0 %v3813
    %4468 = vmatpush.bf16.msra.mxu0 %v3809
    %4469 = vmatpush.bf16.msra.mxu0 %v3805
    %4470 = vmatpush.bf16.msra.mxu0 %v3801
    %4471 = vmatmul.bf16.gmra.mxu0 %v134
    %v4472 = vpop.f32.mrf.mxu0
    %v4473 = vadd.f32 %v4459, %v4472
    %v4474 = vpop.f32.mrf.mxu0
    %v4475 = vadd.f32 %v4461, %v4474
    %4476 = vdwg.mxu0
    %4477 = vmatpush.bf16.msra.mxu0 %v3861
    %4478 = vmatpush.bf16.msra.mxu0 %v3857
    %4479 = vmatpush.bf16.msra.mxu0 %v3853
    %4480 = vmatpush.bf16.msra.mxu0 %v3849
    %4481 = vmatpush.bf16.msra.mxu0 %v3845
    %4482 = vmatpush.bf16.msra.mxu0 %v3841
    %4483 = vmatpush.bf16.msra.mxu0 %v3837
    %4484 = vmatpush.bf16.msra.mxu0 %v3833
    %4485 = vmatmul.bf16.gmra.mxu0 %v135
    %v4486 = vpop.f32.mrf.mxu0
    %v4487 = vadd.f32 %v4473, %v4486
    %v4488 = vpop.f32.mrf.mxu0
    %v4489 = vadd.f32 %v4475, %v4488
    %4490 = vdwg.mxu0
    %4491 = vmatpush.bf16.msra.mxu0 %v3893
    %4492 = vmatpush.bf16.msra.mxu0 %v3889
    %4493 = vmatpush.bf16.msra.mxu0 %v3885
    %4494 = vmatpush.bf16.msra.mxu0 %v3881
    %4495 = vmatpush.bf16.msra.mxu0 %v3877
    %4496 = vmatpush.bf16.msra.mxu0 %v3873
    %4497 = vmatpush.bf16.msra.mxu0 %v3869
    %4498 = vmatpush.bf16.msra.mxu0 %v3865
    %4499 = vmatmul.bf16.gmra.mxu0 %v136
    %v4500 = vpop.f32.mrf.mxu0
    %v4501 = vadd.f32 %v4487, %v4500
    %v4502 = vpop.f32.mrf.mxu0
    %v4503 = vadd.f32 %v4489, %v4502
    %4504 = vdwg.mxu0
    %4505 = vmatpush.bf16.msra.mxu0 %v3925
    %4506 = vmatpush.bf16.msra.mxu0 %v3921
    %4507 = vmatpush.bf16.msra.mxu0 %v3917
    %4508 = vmatpush.bf16.msra.mxu0 %v3913
    %4509 = vmatpush.bf16.msra.mxu0 %v3909
    %4510 = vmatpush.bf16.msra.mxu0 %v3905
    %4511 = vmatpush.bf16.msra.mxu0 %v3901
    %4512 = vmatpush.bf16.msra.mxu0 %v3897
    %4513 = vmatmul.bf16.gmra.mxu0 %v137
    %v4514 = vpop.f32.mrf.mxu0
    %v4515 = vadd.f32 %v4501, %v4514
    %v4516 = vpop.f32.mrf.mxu0
    %v4517 = vadd.f32 %v4503, %v4516
    %4518 = vdwg.mxu0
    %4519 = vmatpush.bf16.msra.mxu0 %v3702
    %4520 = vmatpush.bf16.msra.mxu0 %v3698
    %4521 = vmatpush.bf16.msra.mxu0 %v3694
    %4522 = vmatpush.bf16.msra.mxu0 %v3690
    %4523 = vmatpush.bf16.msra.mxu0 %v3686
    %4524 = vmatpush.bf16.msra.mxu0 %v3682
    %4525 = vmatpush.bf16.msra.mxu0 %v3678
    %4526 = vmatpush.bf16.msra.mxu0 %v3674
    %4527 = vmatmul.bf16.gmra.mxu0 %v130
    %v4528 = vpop.f32.mrf.mxu0
    %v4529 = vadd.f32 %v2902, %v4528
    %v4530 = vpop.f32.mrf.mxu0
    %v4531 = vadd.f32 %v2902, %v4530
    %4532 = vdwg.mxu0
    %4533 = vmatpush.bf16.msra.mxu0 %v3734
    %4534 = vmatpush.bf16.msra.mxu0 %v3730
    %4535 = vmatpush.bf16.msra.mxu0 %v3726
    %4536 = vmatpush.bf16.msra.mxu0 %v3722
    %4537 = vmatpush.bf16.msra.mxu0 %v3718
    %4538 = vmatpush.bf16.msra.mxu0 %v3714
    %4539 = vmatpush.bf16.msra.mxu0 %v3710
    %4540 = vmatpush.bf16.msra.mxu0 %v3706
    %4541 = vmatmul.bf16.gmra.mxu0 %v131
    %v4542 = vpop.f32.mrf.mxu0
    %v4543 = vadd.f32 %v4529, %v4542
    %v4544 = vpop.f32.mrf.mxu0
    %v4545 = vadd.f32 %v4531, %v4544
    %4546 = vdwg.mxu0
    %4547 = vmatpush.bf16.msra.mxu0 %v3766
    %4548 = vmatpush.bf16.msra.mxu0 %v3762
    %4549 = vmatpush.bf16.msra.mxu0 %v3758
    %4550 = vmatpush.bf16.msra.mxu0 %v3754
    %4551 = vmatpush.bf16.msra.mxu0 %v3750
    %4552 = vmatpush.bf16.msra.mxu0 %v3746
    %4553 = vmatpush.bf16.msra.mxu0 %v3742
    %4554 = vmatpush.bf16.msra.mxu0 %v3738
    %4555 = vmatmul.bf16.gmra.mxu0 %v132
    %v4556 = vpop.f32.mrf.mxu0
    %v4557 = vadd.f32 %v4543, %v4556
    %v4558 = vpop.f32.mrf.mxu0
    %v4559 = vadd.f32 %v4545, %v4558
    %4560 = vdwg.mxu0
    %4561 = vmatpush.bf16.msra.mxu0 %v3798
    %4562 = vmatpush.bf16.msra.mxu0 %v3794
    %4563 = vmatpush.bf16.msra.mxu0 %v3790
    %4564 = vmatpush.bf16.msra.mxu0 %v3786
    %4565 = vmatpush.bf16.msra.mxu0 %v3782
    %4566 = vmatpush.bf16.msra.mxu0 %v3778
    %4567 = vmatpush.bf16.msra.mxu0 %v3774
    %4568 = vmatpush.bf16.msra.mxu0 %v3770
    %4569 = vmatmul.bf16.gmra.mxu0 %v133
    %v4570 = vpop.f32.mrf.mxu0
    %v4571 = vadd.f32 %v4557, %v4570
    %v4572 = vpop.f32.mrf.mxu0
    %v4573 = vadd.f32 %v4559, %v4572
    %4574 = vdwg.mxu0
    %4575 = vmatpush.bf16.msra.mxu0 %v3830
    %4576 = vmatpush.bf16.msra.mxu0 %v3826
    %4577 = vmatpush.bf16.msra.mxu0 %v3822
    %4578 = vmatpush.bf16.msra.mxu0 %v3818
    %4579 = vmatpush.bf16.msra.mxu0 %v3814
    %4580 = vmatpush.bf16.msra.mxu0 %v3810
    %4581 = vmatpush.bf16.msra.mxu0 %v3806
    %4582 = vmatpush.bf16.msra.mxu0 %v3802
    %4583 = vmatmul.bf16.gmra.mxu0 %v134
    %v4584 = vpop.f32.mrf.mxu0
    %v4585 = vadd.f32 %v4571, %v4584
    %v4586 = vpop.f32.mrf.mxu0
    %v4587 = vadd.f32 %v4573, %v4586
    %4588 = vdwg.mxu0
    %4589 = vmatpush.bf16.msra.mxu0 %v3862
    %4590 = vmatpush.bf16.msra.mxu0 %v3858
    %4591 = vmatpush.bf16.msra.mxu0 %v3854
    %4592 = vmatpush.bf16.msra.mxu0 %v3850
    %4593 = vmatpush.bf16.msra.mxu0 %v3846
    %4594 = vmatpush.bf16.msra.mxu0 %v3842
    %4595 = vmatpush.bf16.msra.mxu0 %v3838
    %4596 = vmatpush.bf16.msra.mxu0 %v3834
    %4597 = vmatmul.bf16.gmra.mxu0 %v135
    %v4598 = vpop.f32.mrf.mxu0
    %v4599 = vadd.f32 %v4585, %v4598
    %v4600 = vpop.f32.mrf.mxu0
    %v4601 = vadd.f32 %v4587, %v4600
    %4602 = vdwg.mxu0
    %4603 = vmatpush.bf16.msra.mxu0 %v3894
    %4604 = vmatpush.bf16.msra.mxu0 %v3890
    %4605 = vmatpush.bf16.msra.mxu0 %v3886
    %4606 = vmatpush.bf16.msra.mxu0 %v3882
    %4607 = vmatpush.bf16.msra.mxu0 %v3878
    %4608 = vmatpush.bf16.msra.mxu0 %v3874
    %4609 = vmatpush.bf16.msra.mxu0 %v3870
    %4610 = vmatpush.bf16.msra.mxu0 %v3866
    %4611 = vmatmul.bf16.gmra.mxu0 %v136
    %v4612 = vpop.f32.mrf.mxu0
    %v4613 = vadd.f32 %v4599, %v4612
    %v4614 = vpop.f32.mrf.mxu0
    %v4615 = vadd.f32 %v4601, %v4614
    %4616 = vdwg.mxu0
    %4617 = vmatpush.bf16.msra.mxu0 %v3926
    %4618 = vmatpush.bf16.msra.mxu0 %v3922
    %4619 = vmatpush.bf16.msra.mxu0 %v3918
    %4620 = vmatpush.bf16.msra.mxu0 %v3914
    %4621 = vmatpush.bf16.msra.mxu0 %v3910
    %4622 = vmatpush.bf16.msra.mxu0 %v3906
    %4623 = vmatpush.bf16.msra.mxu0 %v3902
    %4624 = vmatpush.bf16.msra.mxu0 %v3898
    %4625 = vmatmul.bf16.gmra.mxu0 %v137
    %v4626 = vpop.f32.mrf.mxu0
    %v4627 = vadd.f32 %v4613, %v4626
    %v4628 = vpop.f32.mrf.mxu0
    %v4629 = vadd.f32 %v4615, %v4628
    %4630 = vdwg.mxu0
    %v4631 = vpack.c.bf16 %v2639, %v2635
    %v4632 = vpack.c.bf16 %v2640, %v2636
    %v4633 = vpack.c.bf16 %v2641, %v2637
    %v4634 = vpack.c.bf16 %v2642, %v2638
    %v4635 = vld [vmem:[%s3] sm:$0xff]
    %v4636 = vld [vmem:[%s3 + $0x8] sm:$0xff]
    %v4637 = vld [vmem:[%s3 + $0x10] sm:$0xff]
    %v4638 = vld [vmem:[%s3 + $0x18] sm:$0xff]
    %v4639 = vld [vmem:[%s3 + $0x20] sm:$0xff]
    %v4640 = vld [vmem:[%s3 + $0x28] sm:$0xff]
    %v4641 = vld [vmem:[%s3 + $0x30] sm:$0xff]
    %v4642 = vld [vmem:[%s3 + $0x38] sm:$0xff]
    %v4643 = vld [vmem:[%s3 + $0x40] sm:$0xff]
    %v4644 = vld [vmem:[%s3 + $0x48] sm:$0xff]
    %v4645 = vld [vmem:[%s3 + $0x50] sm:$0xff]
    %v4646 = vld [vmem:[%s3 + $0x58] sm:$0xff]
    %v4647 = vld [vmem:[%s3 + $0x60] sm:$0xff]
    %v4648 = vld [vmem:[%s3 + $0x68] sm:$0xff]
    %v4649 = vld [vmem:[%s3 + $0x70] sm:$0xff]
    %v4650 = vld [vmem:[%s3 + $0x78] sm:$0xff]
    %v4651 = vld [vmem:[%s3 + $0x80] sm:$0xff]
    %v4652 = vld [vmem:[%s3 + $0x88] sm:$0xff]
    %v4653 = vld [vmem:[%s3 + $0x90] sm:$0xff]
    %v4654 = vld [vmem:[%s3 + $0x98] sm:$0xff]
    %v4655 = vld [vmem:[%s3 + $0xa0] sm:$0xff]
    %v4656 = vld [vmem:[%s3 + $0xa8] sm:$0xff]
    %v4657 = vld [vmem:[%s3 + $0xb0] sm:$0xff]
    %v4658 = vld [vmem:[%s3 + $0xb8] sm:$0xff]
    %v4659 = vld [vmem:[%s3 + $0xc0] sm:$0xff]
    %v4660 = vld [vmem:[%s3 + $0xc8] sm:$0xff]
    %v4661 = vld [vmem:[%s3 + $0xd0] sm:$0xff]
    %v4662 = vld [vmem:[%s3 + $0xd8] sm:$0xff]
    %v4663 = vld [vmem:[%s3 + $0xe0] sm:$0xff]
    %v4664 = vld [vmem:[%s3 + $0xe8] sm:$0xff]
    %v4665 = vld [vmem:[%s3 + $0xf0] sm:$0xff]
    %v4666 = vld [vmem:[%s3 + $0xf8] sm:$0xff]
    %v4667 = vld [vmem:[%s3 + $0x100] sm:$0xff]
    %v4668 = vld [vmem:[%s3 + $0x108] sm:$0xff]
    %v4669 = vld [vmem:[%s3 + $0x110] sm:$0xff]
    %v4670 = vld [vmem:[%s3 + $0x118] sm:$0xff]
    %v4671 = vld [vmem:[%s3 + $0x120] sm:$0xff]
    %v4672 = vld [vmem:[%s3 + $0x128] sm:$0xff]
    %v4673 = vld [vmem:[%s3 + $0x130] sm:$0xff]
    %v4674 = vld [vmem:[%s3 + $0x138] sm:$0xff]
    %v4675 = vld [vmem:[%s3 + $0x140] sm:$0xff]
    %v4676 = vld [vmem:[%s3 + $0x148] sm:$0xff]
    %v4677 = vld [vmem:[%s3 + $0x150] sm:$0xff]
    %v4678 = vld [vmem:[%s3 + $0x158] sm:$0xff]
    %v4679 = vld [vmem:[%s3 + $0x160] sm:$0xff]
    %v4680 = vld [vmem:[%s3 + $0x168] sm:$0xff]
    %v4681 = vld [vmem:[%s3 + $0x170] sm:$0xff]
    %v4682 = vld [vmem:[%s3 + $0x178] sm:$0xff]
    %v4683 = vld [vmem:[%s3 + $0x180] sm:$0xff]
    %v4684 = vld [vmem:[%s3 + $0x188] sm:$0xff]
    %v4685 = vld [vmem:[%s3 + $0x190] sm:$0xff]
    %v4686 = vld [vmem:[%s3 + $0x198] sm:$0xff]
    %v4687 = vld [vmem:[%s3 + $0x1a0] sm:$0xff]
    %v4688 = vld [vmem:[%s3 + $0x1a8] sm:$0xff]
    %v4689 = vld [vmem:[%s3 + $0x1b0] sm:$0xff]
    %v4690 = vld [vmem:[%s3 + $0x1b8] sm:$0xff]
    %v4691 = vld [vmem:[%s3 + $0x1c0] sm:$0xff]
    %v4692 = vld [vmem:[%s3 + $0x1c8] sm:$0xff]
    %v4693 = vld [vmem:[%s3 + $0x1d0] sm:$0xff]
    %v4694 = vld [vmem:[%s3 + $0x1d8] sm:$0xff]
    %v4695 = vld [vmem:[%s3 + $0x1e0] sm:$0xff]
    %v4696 = vld [vmem:[%s3 + $0x1e8] sm:$0xff]
    %v4697 = vld [vmem:[%s3 + $0x1f0] sm:$0xff]
    %v4698 = vld [vmem:[%s3 + $0x1f8] sm:$0xff]
    %v4699 = vld [vmem:[%s3 + $0x200] sm:$0xff]
    %v4700 = vld [vmem:[%s3 + $0x208] sm:$0xff]
    %v4701 = vld [vmem:[%s3 + $0x210] sm:$0xff]
    %v4702 = vld [vmem:[%s3 + $0x218] sm:$0xff]
    %v4703 = vld [vmem:[%s3 + $0x220] sm:$0xff]
    %v4704 = vld [vmem:[%s3 + $0x228] sm:$0xff]
    %v4705 = vld [vmem:[%s3 + $0x230] sm:$0xff]
    %v4706 = vld [vmem:[%s3 + $0x238] sm:$0xff]
    %v4707 = vld [vmem:[%s3 + $0x240] sm:$0xff]
    %v4708 = vld [vmem:[%s3 + $0x248] sm:$0xff]
    %v4709 = vld [vmem:[%s3 + $0x250] sm:$0xff]
    %v4710 = vld [vmem:[%s3 + $0x258] sm:$0xff]
    %v4711 = vld [vmem:[%s3 + $0x260] sm:$0xff]
    %v4712 = vld [vmem:[%s3 + $0x268] sm:$0xff]
    %v4713 = vld [vmem:[%s3 + $0x270] sm:$0xff]
    %v4714 = vld [vmem:[%s3 + $0x278] sm:$0xff]
    %v4715 = vld [vmem:[%s3 + $0x280] sm:$0xff]
    %v4716 = vld [vmem:[%s3 + $0x288] sm:$0xff]
    %v4717 = vld [vmem:[%s3 + $0x290] sm:$0xff]
    %v4718 = vld [vmem:[%s3 + $0x298] sm:$0xff]
    %v4719 = vld [vmem:[%s3 + $0x2a0] sm:$0xff]
    %v4720 = vld [vmem:[%s3 + $0x2a8] sm:$0xff]
    %v4721 = vld [vmem:[%s3 + $0x2b0] sm:$0xff]
    %v4722 = vld [vmem:[%s3 + $0x2b8] sm:$0xff]
    %v4723 = vld [vmem:[%s3 + $0x2c0] sm:$0xff]
    %v4724 = vld [vmem:[%s3 + $0x2c8] sm:$0xff]
    %v4725 = vld [vmem:[%s3 + $0x2d0] sm:$0xff]
    %v4726 = vld [vmem:[%s3 + $0x2d8] sm:$0xff]
    %v4727 = vld [vmem:[%s3 + $0x2e0] sm:$0xff]
    %v4728 = vld [vmem:[%s3 + $0x2e8] sm:$0xff]
    %v4729 = vld [vmem:[%s3 + $0x2f0] sm:$0xff]
    %v4730 = vld [vmem:[%s3 + $0x2f8] sm:$0xff]
    %v4731 = vld [vmem:[%s3 + $0x300] sm:$0xff]
    %v4732 = vld [vmem:[%s3 + $0x308] sm:$0xff]
    %v4733 = vld [vmem:[%s3 + $0x310] sm:$0xff]
    %v4734 = vld [vmem:[%s3 + $0x318] sm:$0xff]
    %v4735 = vld [vmem:[%s3 + $0x320] sm:$0xff]
    %v4736 = vld [vmem:[%s3 + $0x328] sm:$0xff]
    %v4737 = vld [vmem:[%s3 + $0x330] sm:$0xff]
    %v4738 = vld [vmem:[%s3 + $0x338] sm:$0xff]
    %v4739 = vld [vmem:[%s3 + $0x340] sm:$0xff]
    %v4740 = vld [vmem:[%s3 + $0x348] sm:$0xff]
    %v4741 = vld [vmem:[%s3 + $0x350] sm:$0xff]
    %v4742 = vld [vmem:[%s3 + $0x358] sm:$0xff]
    %v4743 = vld [vmem:[%s3 + $0x360] sm:$0xff]
    %v4744 = vld [vmem:[%s3 + $0x368] sm:$0xff]
    %v4745 = vld [vmem:[%s3 + $0x370] sm:$0xff]
    %v4746 = vld [vmem:[%s3 + $0x378] sm:$0xff]
    %v4747 = vld [vmem:[%s3 + $0x380] sm:$0xff]
    %v4748 = vld [vmem:[%s3 + $0x388] sm:$0xff]
    %v4749 = vld [vmem:[%s3 + $0x390] sm:$0xff]
    %v4750 = vld [vmem:[%s3 + $0x398] sm:$0xff]
    %v4751 = vld [vmem:[%s3 + $0x3a0] sm:$0xff]
    %v4752 = vld [vmem:[%s3 + $0x3a8] sm:$0xff]
    %v4753 = vld [vmem:[%s3 + $0x3b0] sm:$0xff]
    %v4754 = vld [vmem:[%s3 + $0x3b8] sm:$0xff]
    %v4755 = vld [vmem:[%s3 + $0x3c0] sm:$0xff]
    %v4756 = vld [vmem:[%s3 + $0x3c8] sm:$0xff]
    %v4757 = vld [vmem:[%s3 + $0x3d0] sm:$0xff]
    %v4758 = vld [vmem:[%s3 + $0x3d8] sm:$0xff]
    %v4759 = vld [vmem:[%s3 + $0x3e0] sm:$0xff]
    %v4760 = vld [vmem:[%s3 + $0x3e8] sm:$0xff]
    %v4761 = vld [vmem:[%s3 + $0x3f0] sm:$0xff]
    %v4762 = vld [vmem:[%s3 + $0x3f8] sm:$0xff]
    %v4763 = vperm.slane %v110, 3
    %v4764 = vperm.slane %v111, 3
    %v4765 = vperm.slane %v112, 3
    %v4766 = vperm.slane %v113, 3
    %v4895 = vunpack.c.l.b16 %v4635
    %v4896 = vunpack.c.h.b16 %v4635
    %v4897 = vunpack.c.l.b16 %v4636
    %v4898 = vunpack.c.h.b16 %v4636
    %v4899 = vunpack.c.l.b16 %v4637
    %v4900 = vunpack.c.h.b16 %v4637
    %v4901 = vunpack.c.l.b16 %v4638
    %v4902 = vunpack.c.h.b16 %v4638
    %v4903 = vunpack.c.l.b16 %v4639
    %v4904 = vunpack.c.h.b16 %v4639
    %v4905 = vunpack.c.l.b16 %v4640
    %v4906 = vunpack.c.h.b16 %v4640
    %v4907 = vunpack.c.l.b16 %v4641
    %v4908 = vunpack.c.h.b16 %v4641
    %v4909 = vunpack.c.l.b16 %v4642
    %v4910 = vunpack.c.h.b16 %v4642
    %v4911 = vunpack.c.l.b16 %v4643
    %v4912 = vunpack.c.h.b16 %v4643
    %v4913 = vunpack.c.l.b16 %v4644
    %v4914 = vunpack.c.h.b16 %v4644
    %v4915 = vunpack.c.l.b16 %v4645
    %v4916 = vunpack.c.h.b16 %v4645
    %v4917 = vunpack.c.l.b16 %v4646
    %v4918 = vunpack.c.h.b16 %v4646
    %v4919 = vunpack.c.l.b16 %v4647
    %v4920 = vunpack.c.h.b16 %v4647
    %v4921 = vunpack.c.l.b16 %v4648
    %v4922 = vunpack.c.h.b16 %v4648
    %v4923 = vunpack.c.l.b16 %v4649
    %v4924 = vunpack.c.h.b16 %v4649
    %v4925 = vunpack.c.l.b16 %v4650
    %v4926 = vunpack.c.h.b16 %v4650
    %v4927 = vunpack.c.l.b16 %v4651
    %v4928 = vunpack.c.h.b16 %v4651
    %v4929 = vunpack.c.l.b16 %v4652
    %v4930 = vunpack.c.h.b16 %v4652
    %v4931 = vunpack.c.l.b16 %v4653
    %v4932 = vunpack.c.h.b16 %v4653
    %v4933 = vunpack.c.l.b16 %v4654
    %v4934 = vunpack.c.h.b16 %v4654
    %v4935 = vunpack.c.l.b16 %v4655
    %v4936 = vunpack.c.h.b16 %v4655
    %v4937 = vunpack.c.l.b16 %v4656
    %v4938 = vunpack.c.h.b16 %v4656
    %v4939 = vunpack.c.l.b16 %v4657
    %v4940 = vunpack.c.h.b16 %v4657
    %v4941 = vunpack.c.l.b16 %v4658
    %v4942 = vunpack.c.h.b16 %v4658
    %v4943 = vunpack.c.l.b16 %v4659
    %v4944 = vunpack.c.h.b16 %v4659
    %v4945 = vunpack.c.l.b16 %v4660
    %v4946 = vunpack.c.h.b16 %v4660
    %v4947 = vunpack.c.l.b16 %v4661
    %v4948 = vunpack.c.h.b16 %v4661
    %v4949 = vunpack.c.l.b16 %v4662
    %v4950 = vunpack.c.h.b16 %v4662
    %v4951 = vunpack.c.l.b16 %v4663
    %v4952 = vunpack.c.h.b16 %v4663
    %v4953 = vunpack.c.l.b16 %v4664
    %v4954 = vunpack.c.h.b16 %v4664
    %v4955 = vunpack.c.l.b16 %v4665
    %v4956 = vunpack.c.h.b16 %v4665
    %v4957 = vunpack.c.l.b16 %v4666
    %v4958 = vunpack.c.h.b16 %v4666
    %v4959 = vunpack.c.l.b16 %v4667
    %v4960 = vunpack.c.h.b16 %v4667
    %v4961 = vunpack.c.l.b16 %v4668
    %v4962 = vunpack.c.h.b16 %v4668
    %v4963 = vunpack.c.l.b16 %v4669
    %v4964 = vunpack.c.h.b16 %v4669
    %v4965 = vunpack.c.l.b16 %v4670
    %v4966 = vunpack.c.h.b16 %v4670
    %v4967 = vunpack.c.l.b16 %v4671
    %v4968 = vunpack.c.h.b16 %v4671
    %v4969 = vunpack.c.l.b16 %v4672
    %v4970 = vunpack.c.h.b16 %v4672
    %v4971 = vunpack.c.l.b16 %v4673
    %v4972 = vunpack.c.h.b16 %v4673
    %v4973 = vunpack.c.l.b16 %v4674
    %v4974 = vunpack.c.h.b16 %v4674
    %v4975 = vunpack.c.l.b16 %v4675
    %v4976 = vunpack.c.h.b16 %v4675
    %v4977 = vunpack.c.l.b16 %v4676
    %v4978 = vunpack.c.h.b16 %v4676
    %v4979 = vunpack.c.l.b16 %v4677
    %v4980 = vunpack.c.h.b16 %v4677
    %v4981 = vunpack.c.l.b16 %v4678
    %v4982 = vunpack.c.h.b16 %v4678
    %v4983 = vunpack.c.l.b16 %v4679
    %v4984 = vunpack.c.h.b16 %v4679
    %v4985 = vunpack.c.l.b16 %v4680
    %v4986 = vunpack.c.h.b16 %v4680
    %v4987 = vunpack.c.l.b16 %v4681
    %v4988 = vunpack.c.h.b16 %v4681
    %v4989 = vunpack.c.l.b16 %v4682
    %v4990 = vunpack.c.h.b16 %v4682
    %v4991 = vunpack.c.l.b16 %v4683
    %v4992 = vunpack.c.h.b16 %v4683
    %v4993 = vunpack.c.l.b16 %v4684
    %v4994 = vunpack.c.h.b16 %v4684
    %v4995 = vunpack.c.l.b16 %v4685
    %v4996 = vunpack.c.h.b16 %v4685
    %v4997 = vunpack.c.l.b16 %v4686
    %v4998 = vunpack.c.h.b16 %v4686
    %v4999 = vunpack.c.l.b16 %v4687
    %v5000 = vunpack.c.h.b16 %v4687
    %v5001 = vunpack.c.l.b16 %v4688
    %v5002 = vunpack.c.h.b16 %v4688
    %v5003 = vunpack.c.l.b16 %v4689
    %v5004 = vunpack.c.h.b16 %v4689
    %v5005 = vunpack.c.l.b16 %v4690
    %v5006 = vunpack.c.h.b16 %v4690
    %v5007 = vunpack.c.l.b16 %v4691
    %v5008 = vunpack.c.h.b16 %v4691
    %v5009 = vunpack.c.l.b16 %v4692
    %v5010 = vunpack.c.h.b16 %v4692
    %v5011 = vunpack.c.l.b16 %v4693
    %v5012 = vunpack.c.h.b16 %v4693
    %v5013 = vunpack.c.l.b16 %v4694
    %v5014 = vunpack.c.h.b16 %v4694
    %v5015 = vunpack.c.l.b16 %v4695
    %v5016 = vunpack.c.h.b16 %v4695
    %v5017 = vunpack.c.l.b16 %v4696
    %v5018 = vunpack.c.h.b16 %v4696
    %v5019 = vunpack.c.l.b16 %v4697
    %v5020 = vunpack.c.h.b16 %v4697
    %v5021 = vunpack.c.l.b16 %v4698
    %v5022 = vunpack.c.h.b16 %v4698
    %v5023 = vunpack.c.l.b16 %v4699
    %v5024 = vunpack.c.h.b16 %v4699
    %v5025 = vunpack.c.l.b16 %v4700
    %v5026 = vunpack.c.h.b16 %v4700
    %v5027 = vunpack.c.l.b16 %v4701
    %v5028 = vunpack.c.h.b16 %v4701
    %v5029 = vunpack.c.l.b16 %v4702
    %v5030 = vunpack.c.h.b16 %v4702
    %v5031 = vunpack.c.l.b16 %v4703
    %v5032 = vunpack.c.h.b16 %v4703
    %v5033 = vunpack.c.l.b16 %v4704
    %v5034 = vunpack.c.h.b16 %v4704
    %v5035 = vunpack.c.l.b16 %v4705
    %v5036 = vunpack.c.h.b16 %v4705
    %v5037 = vunpack.c.l.b16 %v4706
    %v5038 = vunpack.c.h.b16 %v4706
    %v5039 = vunpack.c.l.b16 %v4707
    %v5040 = vunpack.c.h.b16 %v4707
    %v5041 = vunpack.c.l.b16 %v4708
    %v5042 = vunpack.c.h.b16 %v4708
    %v5043 = vunpack.c.l.b16 %v4709
    %v5044 = vunpack.c.h.b16 %v4709
    %v5045 = vunpack.c.l.b16 %v4710
    %v5046 = vunpack.c.h.b16 %v4710
    %v5047 = vunpack.c.l.b16 %v4711
    %v5048 = vunpack.c.h.b16 %v4711
    %v5049 = vunpack.c.l.b16 %v4712
    %v5050 = vunpack.c.h.b16 %v4712
    %v5051 = vunpack.c.l.b16 %v4713
    %v5052 = vunpack.c.h.b16 %v4713
    %v5053 = vunpack.c.l.b16 %v4714
    %v5054 = vunpack.c.h.b16 %v4714
    %v5055 = vunpack.c.l.b16 %v4715
    %v5056 = vunpack.c.h.b16 %v4715
    %v5057 = vunpack.c.l.b16 %v4716
    %v5058 = vunpack.c.h.b16 %v4716
    %v5059 = vunpack.c.l.b16 %v4717
    %v5060 = vunpack.c.h.b16 %v4717
    %v5061 = vunpack.c.l.b16 %v4718
    %v5062 = vunpack.c.h.b16 %v4718
    %v5063 = vunpack.c.l.b16 %v4719
    %v5064 = vunpack.c.h.b16 %v4719
    %v5065 = vunpack.c.l.b16 %v4720
    %v5066 = vunpack.c.h.b16 %v4720
    %v5067 = vunpack.c.l.b16 %v4721
    %v5068 = vunpack.c.h.b16 %v4721
    %v5069 = vunpack.c.l.b16 %v4722
    %v5070 = vunpack.c.h.b16 %v4722
    %v5071 = vunpack.c.l.b16 %v4723
    %v5072 = vunpack.c.h.b16 %v4723
    %v5073 = vunpack.c.l.b16 %v4724
    %v5074 = vunpack.c.h.b16 %v4724
    %v5075 = vunpack.c.l.b16 %v4725
    %v5076 = vunpack.c.h.b16 %v4725
    %v5077 = vunpack.c.l.b16 %v4726
    %v5078 = vunpack.c.h.b16 %v4726
    %v5079 = vunpack.c.l.b16 %v4727
    %v5080 = vunpack.c.h.b16 %v4727
    %v5081 = vunpack.c.l.b16 %v4728
    %v5082 = vunpack.c.h.b16 %v4728
    %v5083 = vunpack.c.l.b16 %v4729
    %v5084 = vunpack.c.h.b16 %v4729
    %v5085 = vunpack.c.l.b16 %v4730
    %v5086 = vunpack.c.h.b16 %v4730
    %v5087 = vunpack.c.l.b16 %v4731
    %v5088 = vunpack.c.h.b16 %v4731
    %v5089 = vunpack.c.l.b16 %v4732
    %v5090 = vunpack.c.h.b16 %v4732
    %v5091 = vunpack.c.l.b16 %v4733
    %v5092 = vunpack.c.h.b16 %v4733
    %v5093 = vunpack.c.l.b16 %v4734
    %v5094 = vunpack.c.h.b16 %v4734
    %v5095 = vunpack.c.l.b16 %v4735
    %v5096 = vunpack.c.h.b16 %v4735
    %v5097 = vunpack.c.l.b16 %v4736
    %v5098 = vunpack.c.h.b16 %v4736
    %v5099 = vunpack.c.l.b16 %v4737
    %v5100 = vunpack.c.h.b16 %v4737
    %v5101 = vunpack.c.l.b16 %v4738
    %v5102 = vunpack.c.h.b16 %v4738
    %v5103 = vunpack.c.l.b16 %v4739
    %v5104 = vunpack.c.h.b16 %v4739
    %v5105 = vunpack.c.l.b16 %v4740
    %v5106 = vunpack.c.h.b16 %v4740
    %v5107 = vunpack.c.l.b16 %v4741
    %v5108 = vunpack.c.h.b16 %v4741
    %v5109 = vunpack.c.l.b16 %v4742
    %v5110 = vunpack.c.h.b16 %v4742
    %v5111 = vunpack.c.l.b16 %v4743
    %v5112 = vunpack.c.h.b16 %v4743
    %v5113 = vunpack.c.l.b16 %v4744
    %v5114 = vunpack.c.h.b16 %v4744
    %v5115 = vunpack.c.l.b16 %v4745
    %v5116 = vunpack.c.h.b16 %v4745
    %v5117 = vunpack.c.l.b16 %v4746
    %v5118 = vunpack.c.h.b16 %v4746
    %v5119 = vunpack.c.l.b16 %v4747
    %v5120 = vunpack.c.h.b16 %v4747
    %v5121 = vunpack.c.l.b16 %v4748
    %v5122 = vunpack.c.h.b16 %v4748
    %v5123 = vunpack.c.l.b16 %v4749
    %v5124 = vunpack.c.h.b16 %v4749
    %v5125 = vunpack.c.l.b16 %v4750
    %v5126 = vunpack.c.h.b16 %v4750
    %v5127 = vunpack.c.l.b16 %v4751
    %v5128 = vunpack.c.h.b16 %v4751
    %v5129 = vunpack.c.l.b16 %v4752
    %v5130 = vunpack.c.h.b16 %v4752
    %v5131 = vunpack.c.l.b16 %v4753
    %v5132 = vunpack.c.h.b16 %v4753
    %v5133 = vunpack.c.l.b16 %v4754
    %v5134 = vunpack.c.h.b16 %v4754
    %v5135 = vunpack.c.l.b16 %v4755
    %v5136 = vunpack.c.h.b16 %v4755
    %v5137 = vunpack.c.l.b16 %v4756
    %v5138 = vunpack.c.h.b16 %v4756
    %v5139 = vunpack.c.l.b16 %v4757
    %v5140 = vunpack.c.h.b16 %v4757
    %v5141 = vunpack.c.l.b16 %v4758
    %v5142 = vunpack.c.h.b16 %v4758
    %v5143 = vunpack.c.l.b16 %v4759
    %v5144 = vunpack.c.h.b16 %v4759
    %v5145 = vunpack.c.l.b16 %v4760
    %v5146 = vunpack.c.h.b16 %v4760
    %v5147 = vunpack.c.l.b16 %v4761
    %v5148 = vunpack.c.h.b16 %v4761
    %v5149 = vunpack.c.l.b16 %v4762
    %v5150 = vunpack.c.h.b16 %v4762
    %v5151 = vpack.c.b16 %v4899, %v4895
    %v5152 = vpack.c.b16 %v4900, %v4896
    %v5153 = vpack.c.b16 %v4901, %v4897
    %v5154 = vpack.c.b16 %v4902, %v4898
    %v5155 = vpack.c.b16 %v4907, %v4903
    %v5156 = vpack.c.b16 %v4908, %v4904
    %v5157 = vpack.c.b16 %v4909, %v4905
    %v5158 = vpack.c.b16 %v4910, %v4906
    %v5159 = vpack.c.b16 %v4915, %v4911
    %v5160 = vpack.c.b16 %v4916, %v4912
    %v5161 = vpack.c.b16 %v4917, %v4913
    %v5162 = vpack.c.b16 %v4918, %v4914
    %v5163 = vpack.c.b16 %v4923, %v4919
    %v5164 = vpack.c.b16 %v4924, %v4920
    %v5165 = vpack.c.b16 %v4925, %v4921
    %v5166 = vpack.c.b16 %v4926, %v4922
    %v5167 = vpack.c.b16 %v4931, %v4927
    %v5168 = vpack.c.b16 %v4932, %v4928
    %v5169 = vpack.c.b16 %v4933, %v4929
    %v5170 = vpack.c.b16 %v4934, %v4930
    %v5171 = vpack.c.b16 %v4939, %v4935
    %v5172 = vpack.c.b16 %v4940, %v4936
    %v5173 = vpack.c.b16 %v4941, %v4937
    %v5174 = vpack.c.b16 %v4942, %v4938
    %v5175 = vpack.c.b16 %v4947, %v4943
    %v5176 = vpack.c.b16 %v4948, %v4944
    %v5177 = vpack.c.b16 %v4949, %v4945
    %v5178 = vpack.c.b16 %v4950, %v4946
    %v5179 = vpack.c.b16 %v4955, %v4951
    %v5180 = vpack.c.b16 %v4956, %v4952
    %v5181 = vpack.c.b16 %v4957, %v4953
    %v5182 = vpack.c.b16 %v4958, %v4954
    %v5183 = vpack.c.b16 %v4963, %v4959
    %v5184 = vpack.c.b16 %v4964, %v4960
    %v5185 = vpack.c.b16 %v4965, %v4961
    %v5186 = vpack.c.b16 %v4966, %v4962
    %v5187 = vpack.c.b16 %v4971, %v4967
    %v5188 = vpack.c.b16 %v4972, %v4968
    %v5189 = vpack.c.b16 %v4973, %v4969
    %v5190 = vpack.c.b16 %v4974, %v4970
    %v5191 = vpack.c.b16 %v4979, %v4975
    %v5192 = vpack.c.b16 %v4980, %v4976
    %v5193 = vpack.c.b16 %v4981, %v4977
    %v5194 = vpack.c.b16 %v4982, %v4978
    %v5195 = vpack.c.b16 %v4987, %v4983
    %v5196 = vpack.c.b16 %v4988, %v4984
    %v5197 = vpack.c.b16 %v4989, %v4985
    %v5198 = vpack.c.b16 %v4990, %v4986
    %v5199 = vpack.c.b16 %v4995, %v4991
    %v5200 = vpack.c.b16 %v4996, %v4992
    %v5201 = vpack.c.b16 %v4997, %v4993
    %v5202 = vpack.c.b16 %v4998, %v4994
    %v5203 = vpack.c.b16 %v5003, %v4999
    %v5204 = vpack.c.b16 %v5004, %v5000
    %v5205 = vpack.c.b16 %v5005, %v5001
    %v5206 = vpack.c.b16 %v5006, %v5002
    %v5207 = vpack.c.b16 %v5011, %v5007
    %v5208 = vpack.c.b16 %v5012, %v5008
    %v5209 = vpack.c.b16 %v5013, %v5009
    %v5210 = vpack.c.b16 %v5014, %v5010
    %v5211 = vpack.c.b16 %v5019, %v5015
    %v5212 = vpack.c.b16 %v5020, %v5016
    %v5213 = vpack.c.b16 %v5021, %v5017
    %v5214 = vpack.c.b16 %v5022, %v5018
    %v5215 = vpack.c.b16 %v5027, %v5023
    %v5216 = vpack.c.b16 %v5028, %v5024
    %v5217 = vpack.c.b16 %v5029, %v5025
    %v5218 = vpack.c.b16 %v5030, %v5026
    %v5219 = vpack.c.b16 %v5035, %v5031
    %v5220 = vpack.c.b16 %v5036, %v5032
    %v5221 = vpack.c.b16 %v5037, %v5033
    %v5222 = vpack.c.b16 %v5038, %v5034
    %v5223 = vpack.c.b16 %v5043, %v5039
    %v5224 = vpack.c.b16 %v5044, %v5040
    %v5225 = vpack.c.b16 %v5045, %v5041
    %v5226 = vpack.c.b16 %v5046, %v5042
    %v5227 = vpack.c.b16 %v5051, %v5047
    %v5228 = vpack.c.b16 %v5052, %v5048
    %v5229 = vpack.c.b16 %v5053, %v5049
    %v5230 = vpack.c.b16 %v5054, %v5050
    %v5231 = vpack.c.b16 %v5059, %v5055
    %v5232 = vpack.c.b16 %v5060, %v5056
    %v5233 = vpack.c.b16 %v5061, %v5057
    %v5234 = vpack.c.b16 %v5062, %v5058
    %v5235 = vpack.c.b16 %v5067, %v5063
    %v5236 = vpack.c.b16 %v5068, %v5064
    %v5237 = vpack.c.b16 %v5069, %v5065
    %v5238 = vpack.c.b16 %v5070, %v5066
    %v5239 = vpack.c.b16 %v5075, %v5071
    %v5240 = vpack.c.b16 %v5076, %v5072
    %v5241 = vpack.c.b16 %v5077, %v5073
    %v5242 = vpack.c.b16 %v5078, %v5074
    %v5243 = vpack.c.b16 %v5083, %v5079
    %v5244 = vpack.c.b16 %v5084, %v5080
    %v5245 = vpack.c.b16 %v5085, %v5081
    %v5246 = vpack.c.b16 %v5086, %v5082
    %v5247 = vpack.c.b16 %v5091, %v5087
    %v5248 = vpack.c.b16 %v5092, %v5088
    %v5249 = vpack.c.b16 %v5093, %v5089
    %v5250 = vpack.c.b16 %v5094, %v5090
    %v5251 = vpack.c.b16 %v5099, %v5095
    %v5252 = vpack.c.b16 %v5100, %v5096
    %v5253 = vpack.c.b16 %v5101, %v5097
    %v5254 = vpack.c.b16 %v5102, %v5098
    %v5255 = vpack.c.b16 %v5107, %v5103
    %v5256 = vpack.c.b16 %v5108, %v5104
    %v5257 = vpack.c.b16 %v5109, %v5105
    %v5258 = vpack.c.b16 %v5110, %v5106
    %v5259 = vpack.c.b16 %v5115, %v5111
    %v5260 = vpack.c.b16 %v5116, %v5112
    %v5261 = vpack.c.b16 %v5117, %v5113
    %v5262 = vpack.c.b16 %v5118, %v5114
    %v5263 = vpack.c.b16 %v5123, %v5119
    %v5264 = vpack.c.b16 %v5124, %v5120
    %v5265 = vpack.c.b16 %v5125, %v5121
    %v5266 = vpack.c.b16 %v5126, %v5122
    %v5267 = vpack.c.b16 %v5131, %v5127
    %v5268 = vpack.c.b16 %v5132, %v5128
    %v5269 = vpack.c.b16 %v5133, %v5129
    %v5270 = vpack.c.b16 %v5134, %v5130
    %v5271 = vpack.c.b16 %v5139, %v5135
    %v5272 = vpack.c.b16 %v5140, %v5136
    %v5273 = vpack.c.b16 %v5141, %v5137
    %v5274 = vpack.c.b16 %v5142, %v5138
    %v5275 = vpack.c.b16 %v5147, %v5143
    %v5276 = vpack.c.b16 %v5148, %v5144
    %v5277 = vpack.c.b16 %v5149, %v5145
    %v5278 = vpack.c.b16 %v5150, %v5146
    %5407 = vmatpush.bf16.msra.mxu0 %v5179
    %5408 = vmatpush.bf16.msra.mxu0 %v5175
    %5409 = vmatpush.bf16.msra.mxu0 %v5171
    %5410 = vmatpush.bf16.msra.mxu0 %v5167
    %5411 = vmatpush.bf16.msra.mxu0 %v5163
    %5412 = vmatpush.bf16.msra.mxu0 %v5159
    %5413 = vmatpush.bf16.msra.mxu0 %v5155
    %5414 = vmatpush.bf16.msra.mxu0 %v5151
    %5415 = vmatmul.bf16.gmra.mxu0 %v4631
    %v5416 = vpop.f32.mrf.mxu0
    %v5417 = vadd.f32 %v4763, %v5416
    %v5418 = vpop.f32.mrf.mxu0
    %v5419 = vadd.f32 %v4763, %v5418
    %5420 = vdwg.mxu0
    %5421 = vmatpush.bf16.msra.mxu0 %v5211
    %5422 = vmatpush.bf16.msra.mxu0 %v5207
    %5423 = vmatpush.bf16.msra.mxu0 %v5203
    %5424 = vmatpush.bf16.msra.mxu0 %v5199
    %5425 = vmatpush.bf16.msra.mxu0 %v5195
    %5426 = vmatpush.bf16.msra.mxu0 %v5191
    %5427 = vmatpush.bf16.msra.mxu0 %v5187
    %5428 = vmatpush.bf16.msra.mxu0 %v5183
    %5429 = vmatmul.bf16.gmra.mxu0 %v4632
    %v5430 = vpop.f32.mrf.mxu0
    %v5431 = vadd.f32 %v5417, %v5430
    %v5432 = vpop.f32.mrf.mxu0
    %v5433 = vadd.f32 %v5419, %v5432
    %5434 = vdwg.mxu0
    %5435 = vmatpush.bf16.msra.mxu0 %v5243
    %5436 = vmatpush.bf16.msra.mxu0 %v5239
    %5437 = vmatpush.bf16.msra.mxu0 %v5235
    %5438 = vmatpush.bf16.msra.mxu0 %v5231
    %5439 = vmatpush.bf16.msra.mxu0 %v5227
    %5440 = vmatpush.bf16.msra.mxu0 %v5223
    %5441 = vmatpush.bf16.msra.mxu0 %v5219
    %5442 = vmatpush.bf16.msra.mxu0 %v5215
    %5443 = vmatmul.bf16.gmra.mxu0 %v4633
    %v5444 = vpop.f32.mrf.mxu0
    %v5445 = vadd.f32 %v5431, %v5444
    %v5446 = vpop.f32.mrf.mxu0
    %v5447 = vadd.f32 %v5433, %v5446
    %5448 = vdwg.mxu0
    %5449 = vmatpush.bf16.msra.mxu0 %v5275
    %5450 = vmatpush.bf16.msra.mxu0 %v5271
    %5451 = vmatpush.bf16.msra.mxu0 %v5267
    %5452 = vmatpush.bf16.msra.mxu0 %v5263
    %5453 = vmatpush.bf16.msra.mxu0 %v5259
    %5454 = vmatpush.bf16.msra.mxu0 %v5255
    %5455 = vmatpush.bf16.msra.mxu0 %v5251
    %5456 = vmatpush.bf16.msra.mxu0 %v5247
    %5457 = vmatmul.bf16.gmra.mxu0 %v4634
    %v5458 = vpop.f32.mrf.mxu0
    %v5459 = vadd.f32 %v5445, %v5458
    %v5460 = vpop.f32.mrf.mxu0
    %v5461 = vadd.f32 %v5447, %v5460
    %5462 = vdwg.mxu0
    %5463 = vmatpush.bf16.msra.mxu0 %v5180
    %5464 = vmatpush.bf16.msra.mxu0 %v5176
    %5465 = vmatpush.bf16.msra.mxu0 %v5172
    %5466 = vmatpush.bf16.msra.mxu0 %v5168
    %5467 = vmatpush.bf16.msra.mxu0 %v5164
    %5468 = vmatpush.bf16.msra.mxu0 %v5160
    %5469 = vmatpush.bf16.msra.mxu0 %v5156
    %5470 = vmatpush.bf16.msra.mxu0 %v5152
    %5471 = vmatmul.bf16.gmra.mxu0 %v4631
    %v5472 = vpop.f32.mrf.mxu0
    %v5473 = vadd.f32 %v4764, %v5472
    %v5474 = vpop.f32.mrf.mxu0
    %v5475 = vadd.f32 %v4764, %v5474
    %5476 = vdwg.mxu0
    %5477 = vmatpush.bf16.msra.mxu0 %v5212
    %5478 = vmatpush.bf16.msra.mxu0 %v5208
    %5479 = vmatpush.bf16.msra.mxu0 %v5204
    %5480 = vmatpush.bf16.msra.mxu0 %v5200
    %5481 = vmatpush.bf16.msra.mxu0 %v5196
    %5482 = vmatpush.bf16.msra.mxu0 %v5192
    %5483 = vmatpush.bf16.msra.mxu0 %v5188
    %5484 = vmatpush.bf16.msra.mxu0 %v5184
    %5485 = vmatmul.bf16.gmra.mxu0 %v4632
    %v5486 = vpop.f32.mrf.mxu0
    %v5487 = vadd.f32 %v5473, %v5486
    %v5488 = vpop.f32.mrf.mxu0
    %v5489 = vadd.f32 %v5475, %v5488
    %5490 = vdwg.mxu0
    %5491 = vmatpush.bf16.msra.mxu0 %v5244
    %5492 = vmatpush.bf16.msra.mxu0 %v5240
    %5493 = vmatpush.bf16.msra.mxu0 %v5236
    %5494 = vmatpush.bf16.msra.mxu0 %v5232
    %5495 = vmatpush.bf16.msra.mxu0 %v5228
    %5496 = vmatpush.bf16.msra.mxu0 %v5224
    %5497 = vmatpush.bf16.msra.mxu0 %v5220
    %5498 = vmatpush.bf16.msra.mxu0 %v5216
    %5499 = vmatmul.bf16.gmra.mxu0 %v4633
    %v5500 = vpop.f32.mrf.mxu0
    %v5501 = vadd.f32 %v5487, %v5500
    %v5502 = vpop.f32.mrf.mxu0
    %v5503 = vadd.f32 %v5489, %v5502
    %5504 = vdwg.mxu0
    %5505 = vmatpush.bf16.msra.mxu0 %v5276
    %5506 = vmatpush.bf16.msra.mxu0 %v5272
    %5507 = vmatpush.bf16.msra.mxu0 %v5268
    %5508 = vmatpush.bf16.msra.mxu0 %v5264
    %5509 = vmatpush.bf16.msra.mxu0 %v5260
    %5510 = vmatpush.bf16.msra.mxu0 %v5256
    %5511 = vmatpush.bf16.msra.mxu0 %v5252
    %5512 = vmatpush.bf16.msra.mxu0 %v5248
    %5513 = vmatmul.bf16.gmra.mxu0 %v4634
    %v5514 = vpop.f32.mrf.mxu0
    %v5515 = vadd.f32 %v5501, %v5514
    %v5516 = vpop.f32.mrf.mxu0
    %v5517 = vadd.f32 %v5503, %v5516
    %5518 = vdwg.mxu0
    %5519 = vmatpush.bf16.msra.mxu0 %v5181
    %5520 = vmatpush.bf16.msra.mxu0 %v5177
    %5521 = vmatpush.bf16.msra.mxu0 %v5173
    %5522 = vmatpush.bf16.msra.mxu0 %v5169
    %5523 = vmatpush.bf16.msra.mxu0 %v5165
    %5524 = vmatpush.bf16.msra.mxu0 %v5161
    %5525 = vmatpush.bf16.msra.mxu0 %v5157
    %5526 = vmatpush.bf16.msra.mxu0 %v5153
    %5527 = vmatmul.bf16.gmra.mxu0 %v4631
    %v5528 = vpop.f32.mrf.mxu0
    %v5529 = vadd.f32 %v4765, %v5528
    %v5530 = vpop.f32.mrf.mxu0
    %v5531 = vadd.f32 %v4765, %v5530
    %5532 = vdwg.mxu0
    %5533 = vmatpush.bf16.msra.mxu0 %v5213
    %5534 = vmatpush.bf16.msra.mxu0 %v5209
    %5535 = vmatpush.bf16.msra.mxu0 %v5205
    %5536 = vmatpush.bf16.msra.mxu0 %v5201
    %5537 = vmatpush.bf16.msra.mxu0 %v5197
    %5538 = vmatpush.bf16.msra.mxu0 %v5193
    %5539 = vmatpush.bf16.msra.mxu0 %v5189
    %5540 = vmatpush.bf16.msra.mxu0 %v5185
    %5541 = vmatmul.bf16.gmra.mxu0 %v4632
    %v5542 = vpop.f32.mrf.mxu0
    %v5543 = vadd.f32 %v5529, %v5542
    %v5544 = vpop.f32.mrf.mxu0
    %v5545 = vadd.f32 %v5531, %v5544
    %5546 = vdwg.mxu0
    %5547 = vmatpush.bf16.msra.mxu0 %v5245
    %5548 = vmatpush.bf16.msra.mxu0 %v5241
    %5549 = vmatpush.bf16.msra.mxu0 %v5237
    %5550 = vmatpush.bf16.msra.mxu0 %v5233
    %5551 = vmatpush.bf16.msra.mxu0 %v5229
    %5552 = vmatpush.bf16.msra.mxu0 %v5225
    %5553 = vmatpush.bf16.msra.mxu0 %v5221
    %5554 = vmatpush.bf16.msra.mxu0 %v5217
    %5555 = vmatmul.bf16.gmra.mxu0 %v4633
    %v5556 = vpop.f32.mrf.mxu0
    %v5557 = vadd.f32 %v5543, %v5556
    %v5558 = vpop.f32.mrf.mxu0
    %v5559 = vadd.f32 %v5545, %v5558
    %5560 = vdwg.mxu0
    %5561 = vmatpush.bf16.msra.mxu0 %v5277
    %5562 = vmatpush.bf16.msra.mxu0 %v5273
    %5563 = vmatpush.bf16.msra.mxu0 %v5269
    %5564 = vmatpush.bf16.msra.mxu0 %v5265
    %5565 = vmatpush.bf16.msra.mxu0 %v5261
    %5566 = vmatpush.bf16.msra.mxu0 %v5257
    %5567 = vmatpush.bf16.msra.mxu0 %v5253
    %5568 = vmatpush.bf16.msra.mxu0 %v5249
    %5569 = vmatmul.bf16.gmra.mxu0 %v4634
    %v5570 = vpop.f32.mrf.mxu0
    %v5571 = vadd.f32 %v5557, %v5570
    %v5572 = vpop.f32.mrf.mxu0
    %v5573 = vadd.f32 %v5559, %v5572
    %5574 = vdwg.mxu0
    %5575 = vmatpush.bf16.msra.mxu0 %v5182
    %5576 = vmatpush.bf16.msra.mxu0 %v5178
    %5577 = vmatpush.bf16.msra.mxu0 %v5174
    %5578 = vmatpush.bf16.msra.mxu0 %v5170
    %5579 = vmatpush.bf16.msra.mxu0 %v5166
    %5580 = vmatpush.bf16.msra.mxu0 %v5162
    %5581 = vmatpush.bf16.msra.mxu0 %v5158
    %5582 = vmatpush.bf16.msra.mxu0 %v5154
    %5583 = vmatmul.bf16.gmra.mxu0 %v4631
    %v5584 = vpop.f32.mrf.mxu0
    %v5585 = vadd.f32 %v4766, %v5584
    %v5586 = vpop.f32.mrf.mxu0
    %v5587 = vadd.f32 %v4766, %v5586
    %5588 = vdwg.mxu0
    %5589 = vmatpush.bf16.msra.mxu0 %v5214
    %5590 = vmatpush.bf16.msra.mxu0 %v5210
    %5591 = vmatpush.bf16.msra.mxu0 %v5206
    %5592 = vmatpush.bf16.msra.mxu0 %v5202
    %5593 = vmatpush.bf16.msra.mxu0 %v5198
    %5594 = vmatpush.bf16.msra.mxu0 %v5194
    %5595 = vmatpush.bf16.msra.mxu0 %v5190
    %5596 = vmatpush.bf16.msra.mxu0 %v5186
    %5597 = vmatmul.bf16.gmra.mxu0 %v4632
    %v5598 = vpop.f32.mrf.mxu0
    %v5599 = vadd.f32 %v5585, %v5598
    %v5600 = vpop.f32.mrf.mxu0
    %v5601 = vadd.f32 %v5587, %v5600
    %5602 = vdwg.mxu0
    %5603 = vmatpush.bf16.msra.mxu0 %v5246
    %5604 = vmatpush.bf16.msra.mxu0 %v5242
    %5605 = vmatpush.bf16.msra.mxu0 %v5238
    %5606 = vmatpush.bf16.msra.mxu0 %v5234
    %5607 = vmatpush.bf16.msra.mxu0 %v5230
    %5608 = vmatpush.bf16.msra.mxu0 %v5226
    %5609 = vmatpush.bf16.msra.mxu0 %v5222
    %5610 = vmatpush.bf16.msra.mxu0 %v5218
    %5611 = vmatmul.bf16.gmra.mxu0 %v4633
    %v5612 = vpop.f32.mrf.mxu0
    %v5613 = vadd.f32 %v5599, %v5612
    %v5614 = vpop.f32.mrf.mxu0
    %v5615 = vadd.f32 %v5601, %v5614
    %5616 = vdwg.mxu0
    %5617 = vmatpush.bf16.msra.mxu0 %v5278
    %5618 = vmatpush.bf16.msra.mxu0 %v5274
    %5619 = vmatpush.bf16.msra.mxu0 %v5270
    %5620 = vmatpush.bf16.msra.mxu0 %v5266
    %5621 = vmatpush.bf16.msra.mxu0 %v5262
    %5622 = vmatpush.bf16.msra.mxu0 %v5258
    %5623 = vmatpush.bf16.msra.mxu0 %v5254
    %5624 = vmatpush.bf16.msra.mxu0 %v5250
    %5625 = vmatmul.bf16.gmra.mxu0 %v4634
    %v5626 = vpop.f32.mrf.mxu0
    %v5627 = vadd.f32 %v5613, %v5626
    %v5628 = vpop.f32.mrf.mxu0
    %v5629 = vadd.f32 %v5615, %v5628
    %5630 = vdwg.mxu0
    %5631 = vmatpush.msra.mxu0 %v57
    %5632 = vmatpush.msra.mxu0 %v56
    %5633 = vmatpush.msra.mxu0 %v55
    %5634 = vmatpush.msra.mxu0 %v54
    %5635 = vmatpush.msra.mxu0 %v53
    %5636 = vmatpush.msra.mxu0 %v52
    %5637 = vmatpush.msra.mxu0 %v51
    %5638 = vmatpush.msra.mxu0 %v50
    %5639 = vmatpush.msra.mxu0 %v49
    %5640 = vmatpush.msra.mxu0 %v48
    %5641 = vmatpush.msra.mxu0 %v47
    %5642 = vmatpush.msra.mxu0 %v46
    %5643 = vmatpush.msra.mxu0 %v45
    %5644 = vmatpush.msra.mxu0 %v44
    %5645 = vmatpush.msra.mxu0 %v43
    %5646 = vmatpush.msra.mxu0 %v42
    %5647 = vmatmul.f32.gmra.mxu0 %v5459
    %v5648 = vpop.f32.mrf.mxu0
    %v5649 = vadd.f32 0.0, %v5648
    %5650 = vmatmul.f32.gmra.mxu0 %v5461
    %v5651 = vpop.f32.mrf.mxu0
    %v5652 = vadd.f32 0.0, %v5651
    %5653 = vdwg.mxu0
    %5654 = vmatpush.msra.mxu0 %v73
    %5655 = vmatpush.msra.mxu0 %v72
    %5656 = vmatpush.msra.mxu0 %v71
    %5657 = vmatpush.msra.mxu0 %v70
    %5658 = vmatpush.msra.mxu0 %v69
    %5659 = vmatpush.msra.mxu0 %v68
    %5660 = vmatpush.msra.mxu0 %v67
    %5661 = vmatpush.msra.mxu0 %v66
    %5662 = vmatpush.msra.mxu0 %v65
    %5663 = vmatpush.msra.mxu0 %v64
    %5664 = vmatpush.msra.mxu0 %v63
    %5665 = vmatpush.msra.mxu0 %v62
    %5666 = vmatpush.msra.mxu0 %v61
    %5667 = vmatpush.msra.mxu0 %v60
    %5668 = vmatpush.msra.mxu0 %v59
    %5669 = vmatpush.msra.mxu0 %v58
    %5670 = vmatmul.f32.gmra.mxu0 %v5515
    %v5671 = vpop.f32.mrf.mxu0
    %v5672 = vadd.f32 %v5649, %v5671
    %5673 = vmatmul.f32.gmra.mxu0 %v5517
    %v5674 = vpop.f32.mrf.mxu0
    %v5675 = vadd.f32 %v5652, %v5674
    %5676 = vdwg.mxu0
    %5677 = vmatpush.msra.mxu0 %v89
    %5678 = vmatpush.msra.mxu0 %v88
    %5679 = vmatpush.msra.mxu0 %v87
    %5680 = vmatpush.msra.mxu0 %v86
    %5681 = vmatpush.msra.mxu0 %v85
    %5682 = vmatpush.msra.mxu0 %v84
    %5683 = vmatpush.msra.mxu0 %v83
    %5684 = vmatpush.msra.mxu0 %v82
    %5685 = vmatpush.msra.mxu0 %v81
    %5686 = vmatpush.msra.mxu0 %v80
    %5687 = vmatpush.msra.mxu0 %v79
    %5688 = vmatpush.msra.mxu0 %v78
    %5689 = vmatpush.msra.mxu0 %v77
    %5690 = vmatpush.msra.mxu0 %v76
    %5691 = vmatpush.msra.mxu0 %v75
    %5692 = vmatpush.msra.mxu0 %v74
    %5693 = vmatmul.f32.gmra.mxu0 %v5571
    %v5694 = vpop.f32.mrf.mxu0
    %v5695 = vadd.f32 %v5672, %v5694
    %5696 = vmatmul.f32.gmra.mxu0 %v5573
    %v5697 = vpop.f32.mrf.mxu0
    %v5698 = vadd.f32 %v5675, %v5697
    %5699 = vdwg.mxu0
    %5700 = vmatpush.msra.mxu0 %v105
    %5701 = vmatpush.msra.mxu0 %v104
    %5702 = vmatpush.msra.mxu0 %v103
    %5703 = vmatpush.msra.mxu0 %v102
    %5704 = vmatpush.msra.mxu0 %v101
    %5705 = vmatpush.msra.mxu0 %v100
    %5706 = vmatpush.msra.mxu0 %v99
    %5707 = vmatpush.msra.mxu0 %v98
    %5708 = vmatpush.msra.mxu0 %v97
    %5709 = vmatpush.msra.mxu0 %v96
    %5710 = vmatpush.msra.mxu0 %v95
    %5711 = vmatpush.msra.mxu0 %v94
    %5712 = vmatpush.msra.mxu0 %v93
    %5713 = vmatpush.msra.mxu0 %v92
    %5714 = vmatpush.msra.mxu0 %v91
    %5715 = vmatpush.msra.mxu0 %v90
    %5716 = vmatmul.f32.gmra.mxu0 %v5627
    %v5717 = vpop.f32.mrf.mxu0
    %v5718 = vadd.f32 %v5695, %v5717
    %5719 = vmatmul.f32.gmra.mxu0 %v5629
    %v5720 = vpop.f32.mrf.mxu0
    %v5721 = vadd.f32 %v5698, %v5720
    %5722 = vdwg.mxu0
    %v5723 = vmul.f32 %v5718, 0.015625
    %v5724 = vmul.f32 %v5721, 0.015625
    %v5726 = vsel %vm2220, %v5723, 0
    %v5729 = vsel %vm2220, %v5724, 0
    %5731 = vmatpush.msra.mxu0 0.0
    %5732 = vmatpush.msra.mxu0 0.0
    %5733 = vmatpush.msra.mxu0 0.0
    %5734 = vmatpush.msra.mxu0 0.0
    %5735 = vmatpush.msra.mxu0 0.0
    %5736 = vmatpush.msra.mxu0 0.0
    %5737 = vmatpush.msra.mxu0 0.0
    %5738 = vmatpush.msra.mxu0 0.0
    %5739 = vmatpush.msra.mxu0 0.0
    %5740 = vmatpush.msra.mxu0 0.0
    %5741 = vmatpush.msra.mxu0 0.0
    %5742 = vmatpush.msra.mxu0 0.0
    %5743 = vmatpush.msra.mxu0 0.0
    %5744 = vmatpush.msra.mxu0 0.0
    %5745 = vmatpush.msra.mxu0 0.0
    %5746 = vmatpush.msra.mxu0 %v106
    %5747 = vmatmul.f32.gmra.mxu0 %v5726
    %v5748 = vpop.f32.mrf.mxu0
    %v5749 = vadd.f32 0.0, %v5748
    %5750 = vmatmul.f32.gmra.mxu0 %v5729
    %v5751 = vpop.f32.mrf.mxu0
    %v5752 = vadd.f32 0.0, %v5751
    %5753 = vdwg.mxu0
    %5754 = vmatpush.msra.mxu0 0.0
    %5755 = vmatpush.msra.mxu0 0.0
    %5756 = vmatpush.msra.mxu0 0.0
    %5757 = vmatpush.msra.mxu0 0.0
    %5758 = vmatpush.msra.mxu0 0.0
    %5759 = vmatpush.msra.mxu0 0.0
    %5760 = vmatpush.msra.mxu0 0.0
    %5761 = vmatpush.msra.mxu0 0.0
    %5762 = vmatpush.msra.mxu0 0.0
    %5763 = vmatpush.msra.mxu0 0.0
    %5764 = vmatpush.msra.mxu0 0.0
    %5765 = vmatpush.msra.mxu0 0.0
    %5766 = vmatpush.msra.mxu0 0.0
    %5767 = vmatpush.msra.mxu0 0.0
    %5768 = vmatpush.msra.mxu0 0.0
    %5769 = vmatpush.msra.mxu0 %v107
    %5770 = vmatmul.f32.gmra.mxu0 %v5726
    %v5771 = vpop.f32.mrf.mxu0
    %v5772 = vadd.f32 0.0, %v5771
    %5773 = vmatmul.f32.gmra.mxu0 %v5729
    %v5774 = vpop.f32.mrf.mxu0
    %v5775 = vadd.f32 0.0, %v5774
    %5776 = vdwg.mxu0
    %5777 = vmatpush.msra.mxu0 0.0
    %5778 = vmatpush.msra.mxu0 0.0
    %5779 = vmatpush.msra.mxu0 0.0
    %5780 = vmatpush.msra.mxu0 0.0
    %5781 = vmatpush.msra.mxu0 0.0
    %5782 = vmatpush.msra.mxu0 0.0
    %5783 = vmatpush.msra.mxu0 0.0
    %5784 = vmatpush.msra.mxu0 0.0
    %5785 = vmatpush.msra.mxu0 0.0
    %5786 = vmatpush.msra.mxu0 0.0
    %5787 = vmatpush.msra.mxu0 0.0
    %5788 = vmatpush.msra.mxu0 0.0
    %5789 = vmatpush.msra.mxu0 0.0
    %5790 = vmatpush.msra.mxu0 0.0
    %5791 = vmatpush.msra.mxu0 0.0
    %5792 = vmatpush.msra.mxu0 %v108
    %5793 = vmatmul.f32.gmra.mxu0 %v5726
    %v5794 = vpop.f32.mrf.mxu0
    %v5795 = vadd.f32 0.0, %v5794
    %5796 = vmatmul.f32.gmra.mxu0 %v5729
    %v5797 = vpop.f32.mrf.mxu0
    %v5798 = vadd.f32 0.0, %v5797
    %5799 = vdwg.mxu0
    %5800 = vmatpush.msra.mxu0 0.0
    %5801 = vmatpush.msra.mxu0 0.0
    %5802 = vmatpush.msra.mxu0 0.0
    %5803 = vmatpush.msra.mxu0 0.0
    %5804 = vmatpush.msra.mxu0 0.0
    %5805 = vmatpush.msra.mxu0 0.0
    %5806 = vmatpush.msra.mxu0 0.0
    %5807 = vmatpush.msra.mxu0 0.0
    %5808 = vmatpush.msra.mxu0 0.0
    %5809 = vmatpush.msra.mxu0 0.0
    %5810 = vmatpush.msra.mxu0 0.0
    %5811 = vmatpush.msra.mxu0 0.0
    %5812 = vmatpush.msra.mxu0 0.0
    %5813 = vmatpush.msra.mxu0 0.0
    %5814 = vmatpush.msra.mxu0 0.0
    %5815 = vmatpush.msra.mxu0 %v109
    %5816 = vmatmul.f32.gmra.mxu0 %v5726
    %v5817 = vpop.f32.mrf.mxu0
    %v5818 = vadd.f32 0.0, %v5817
    %5819 = vmatmul.f32.gmra.mxu0 %v5729
    %v5820 = vpop.f32.mrf.mxu0
    %v5821 = vadd.f32 0.0, %v5820
    %5822 = vdwg.mxu0
    %v5823 = vsub.f32 %v5459, %v5749
    %v5824 = vsub.f32 %v5515, %v5772
    %v5825 = vsub.f32 %v5571, %v5795
    %v5826 = vsub.f32 %v5627, %v5818
    %v5827 = vsub.f32 %v5461, %v5752
    %v5828 = vsub.f32 %v5517, %v5775
    %v5829 = vsub.f32 %v5573, %v5798
    %v5830 = vsub.f32 %v5629, %v5821
    %v5831 = vmul.f32 %v5823, %v5823
    %v5832 = vmul.f32 %v5824, %v5824
    %v5833 = vmul.f32 %v5825, %v5825
    %v5834 = vmul.f32 %v5826, %v5826
    %v5835 = vmul.f32 %v5827, %v5827
    %v5836 = vmul.f32 %v5828, %v5828
    %v5837 = vmul.f32 %v5829, %v5829
    %v5838 = vmul.f32 %v5830, %v5830
    %5839 = vmatpush.msra.mxu0 %v57
    %5840 = vmatpush.msra.mxu0 %v56
    %5841 = vmatpush.msra.mxu0 %v55
    %5842 = vmatpush.msra.mxu0 %v54
    %5843 = vmatpush.msra.mxu0 %v53
    %5844 = vmatpush.msra.mxu0 %v52
    %5845 = vmatpush.msra.mxu0 %v51
    %5846 = vmatpush.msra.mxu0 %v50
    %5847 = vmatpush.msra.mxu0 %v49
    %5848 = vmatpush.msra.mxu0 %v48
    %5849 = vmatpush.msra.mxu0 %v47
    %5850 = vmatpush.msra.mxu0 %v46
    %5851 = vmatpush.msra.mxu0 %v45
    %5852 = vmatpush.msra.mxu0 %v44
    %5853 = vmatpush.msra.mxu0 %v43
    %5854 = vmatpush.msra.mxu0 %v42
    %5855 = vmatmul.f32.gmra.mxu0 %v5831
    %v5856 = vpop.f32.mrf.mxu0
    %v5857 = vadd.f32 0.0, %v5856
    %5858 = vmatmul.f32.gmra.mxu0 %v5835
    %v5859 = vpop.f32.mrf.mxu0
    %v5860 = vadd.f32 0.0, %v5859
    %5861 = vdwg.mxu0
    %5862 = vmatpush.msra.mxu0 %v73
    %5863 = vmatpush.msra.mxu0 %v72
    %5864 = vmatpush.msra.mxu0 %v71
    %5865 = vmatpush.msra.mxu0 %v70
    %5866 = vmatpush.msra.mxu0 %v69
    %5867 = vmatpush.msra.mxu0 %v68
    %5868 = vmatpush.msra.mxu0 %v67
    %5869 = vmatpush.msra.mxu0 %v66
    %5870 = vmatpush.msra.mxu0 %v65
    %5871 = vmatpush.msra.mxu0 %v64
    %5872 = vmatpush.msra.mxu0 %v63
    %5873 = vmatpush.msra.mxu0 %v62
    %5874 = vmatpush.msra.mxu0 %v61
    %5875 = vmatpush.msra.mxu0 %v60
    %5876 = vmatpush.msra.mxu0 %v59
    %5877 = vmatpush.msra.mxu0 %v58
    %5878 = vmatmul.f32.gmra.mxu0 %v5832
    %v5879 = vpop.f32.mrf.mxu0
    %v5880 = vadd.f32 %v5857, %v5879
    %5881 = vmatmul.f32.gmra.mxu0 %v5836
    %v5882 = vpop.f32.mrf.mxu0
    %v5883 = vadd.f32 %v5860, %v5882
    %5884 = vdwg.mxu0
    %5885 = vmatpush.msra.mxu0 %v89
    %5886 = vmatpush.msra.mxu0 %v88
    %5887 = vmatpush.msra.mxu0 %v87
    %5888 = vmatpush.msra.mxu0 %v86
    %5889 = vmatpush.msra.mxu0 %v85
    %5890 = vmatpush.msra.mxu0 %v84
    %5891 = vmatpush.msra.mxu0 %v83
    %5892 = vmatpush.msra.mxu0 %v82
    %5893 = vmatpush.msra.mxu0 %v81
    %5894 = vmatpush.msra.mxu0 %v80
    %5895 = vmatpush.msra.mxu0 %v79
    %5896 = vmatpush.msra.mxu0 %v78
    %5897 = vmatpush.msra.mxu0 %v77
    %5898 = vmatpush.msra.mxu0 %v76
    %5899 = vmatpush.msra.mxu0 %v75
    %5900 = vmatpush.msra.mxu0 %v74
    %5901 = vmatmul.f32.gmra.mxu0 %v5833
    %v5902 = vpop.f32.mrf.mxu0
    %v5903 = vadd.f32 %v5880, %v5902
    %5904 = vmatmul.f32.gmra.mxu0 %v5837
    %v5905 = vpop.f32.mrf.mxu0
    %v5906 = vadd.f32 %v5883, %v5905
    %5907 = vdwg.mxu0
    %5908 = vmatpush.msra.mxu0 %v105
    %5909 = vmatpush.msra.mxu0 %v104
    %5910 = vmatpush.msra.mxu0 %v103
    %5911 = vmatpush.msra.mxu0 %v102
    %5912 = vmatpush.msra.mxu0 %v101
    %5913 = vmatpush.msra.mxu0 %v100
    %5914 = vmatpush.msra.mxu0 %v99
    %5915 = vmatpush.msra.mxu0 %v98
    %5916 = vmatpush.msra.mxu0 %v97
    %5917 = vmatpush.msra.mxu0 %v96
    %5918 = vmatpush.msra.mxu0 %v95
    %5919 = vmatpush.msra.mxu0 %v94
    %5920 = vmatpush.msra.mxu0 %v93
    %5921 = vmatpush.msra.mxu0 %v92
    %5922 = vmatpush.msra.mxu0 %v91
    %5923 = vmatpush.msra.mxu0 %v90
    %5924 = vmatmul.f32.gmra.mxu0 %v5834
    %v5925 = vpop.f32.mrf.mxu0
    %v5926 = vadd.f32 %v5903, %v5925
    %5927 = vmatmul.f32.gmra.mxu0 %v5838
    %v5928 = vpop.f32.mrf.mxu0
    %v5929 = vadd.f32 %v5906, %v5928
    %5930 = vdwg.mxu0
    %v5931 = vmul.f32 %v5926, 0.015625
    %v5932 = vmul.f32 %v5929, 0.015625
    %v5934 = vsel %vm2220, %v5931, 0
    %v5937 = vsel %vm2220, %v5932, 0
    %5939 = vmatpush.msra.mxu0 0.0
    %5940 = vmatpush.msra.mxu0 0.0
    %5941 = vmatpush.msra.mxu0 0.0
    %5942 = vmatpush.msra.mxu0 0.0
    %5943 = vmatpush.msra.mxu0 0.0
    %5944 = vmatpush.msra.mxu0 0.0
    %5945 = vmatpush.msra.mxu0 0.0
    %5946 = vmatpush.msra.mxu0 0.0
    %5947 = vmatpush.msra.mxu0 0.0
    %5948 = vmatpush.msra.mxu0 0.0
    %5949 = vmatpush.msra.mxu0 0.0
    %5950 = vmatpush.msra.mxu0 0.0
    %5951 = vmatpush.msra.mxu0 0.0
    %5952 = vmatpush.msra.mxu0 0.0
    %5953 = vmatpush.msra.mxu0 0.0
    %5954 = vmatpush.msra.mxu0 %v106
    %5955 = vmatmul.f32.gmra.mxu0 %v5934
    %v5956 = vpop.f32.mrf.mxu0
    %v5957 = vadd.f32 1e-05, %v5956
    %5958 = vmatmul.f32.gmra.mxu0 %v5937
    %v5959 = vpop.f32.mrf.mxu0
    %v5960 = vadd.f32 1e-05, %v5959
    %5961 = vdwg.mxu0
    %5962 = vmatpush.msra.mxu0 0.0
    %5963 = vmatpush.msra.mxu0 0.0
    %5964 = vmatpush.msra.mxu0 0.0
    %5965 = vmatpush.msra.mxu0 0.0
    %5966 = vmatpush.msra.mxu0 0.0
    %5967 = vmatpush.msra.mxu0 0.0
    %5968 = vmatpush.msra.mxu0 0.0
    %5969 = vmatpush.msra.mxu0 0.0
    %5970 = vmatpush.msra.mxu0 0.0
    %5971 = vmatpush.msra.mxu0 0.0
    %5972 = vmatpush.msra.mxu0 0.0
    %5973 = vmatpush.msra.mxu0 0.0
    %5974 = vmatpush.msra.mxu0 0.0
    %5975 = vmatpush.msra.mxu0 0.0
    %5976 = vmatpush.msra.mxu0 0.0
    %5977 = vmatpush.msra.mxu0 %v107
    %5978 = vmatmul.f32.gmra.mxu0 %v5934
    %v5979 = vpop.f32.mrf.mxu0
    %v5980 = vadd.f32 1e-05, %v5979
    %5981 = vmatmul.f32.gmra.mxu0 %v5937
    %v5982 = vpop.f32.mrf.mxu0
    %v5983 = vadd.f32 1e-05, %v5982
    %5984 = vdwg.mxu0
    %5985 = vmatpush.msra.mxu0 0.0
    %5986 = vmatpush.msra.mxu0 0.0
    %5987 = vmatpush.msra.mxu0 0.0
    %5988 = vmatpush.msra.mxu0 0.0
    %5989 = vmatpush.msra.mxu0 0.0
    %5990 = vmatpush.msra.mxu0 0.0
    %5991 = vmatpush.msra.mxu0 0.0
    %5992 = vmatpush.msra.mxu0 0.0
    %5993 = vmatpush.msra.mxu0 0.0
    %5994 = vmatpush.msra.mxu0 0.0
    %5995 = vmatpush.msra.mxu0 0.0
    %5996 = vmatpush.msra.mxu0 0.0
    %5997 = vmatpush.msra.mxu0 0.0
    %5998 = vmatpush.msra.mxu0 0.0
    %5999 = vmatpush.msra.mxu0 0.0
    %6000 = vmatpush.msra.mxu0 %v108
    %6001 = vmatmul.f32.gmra.mxu0 %v5934
    %v6002 = vpop.f32.mrf.mxu0
    %v6003 = vadd.f32 1e-05, %v6002
    %6004 = vmatmul.f32.gmra.mxu0 %v5937
    %v6005 = vpop.f32.mrf.mxu0
    %v6006 = vadd.f32 1e-05, %v6005
    %6007 = vdwg.mxu0
    %6008 = vmatpush.msra.mxu0 0.0
    %6009 = vmatpush.msra.mxu0 0.0
    %6010 = vmatpush.msra.mxu0 0.0
    %6011 = vmatpush.msra.mxu0 0.0
    %6012 = vmatpush.msra.mxu0 0.0
    %6013 = vmatpush.msra.mxu0 0.0
    %6014 = vmatpush.msra.mxu0 0.0
    %6015 = vmatpush.msra.mxu0 0.0
    %6016 = vmatpush.msra.mxu0 0.0
    %6017 = vmatpush.msra.mxu0 0.0
    %6018 = vmatpush.msra.mxu0 0.0
    %6019 = vmatpush.msra.mxu0 0.0
    %6020 = vmatpush.msra.mxu0 0.0
    %6021 = vmatpush.msra.mxu0 0.0
    %6022 = vmatpush.msra.mxu0 0.0
    %6023 = vmatpush.msra.mxu0 %v109
    %6024 = vmatmul.f32.gmra.mxu0 %v5934
    %v6025 = vpop.f32.mrf.mxu0
    %v6026 = vadd.f32 1e-05, %v6025
    %6027 = vmatmul.f32.gmra.mxu0 %v5937
    %v6028 = vpop.f32.mrf.mxu0
    %v6029 = vadd.f32 1e-05, %v6028
    %6030 = vdwg.mxu0
    %v6031 = vrsqrt.pop %v5957
    %v6032 = vmul.f32 %v6031, %v5957
    %v6033 = vmul.f32 %v6032, %v6031
    %v6034 = vmul.f32 0.5, %v6033
    %v6035 = vsub.f32 1.5, %v6034
    %v6036 = vmul.f32 %v6031, %v6035
    %vm6037 = vweird.f32 %v5957
    %vm6038 = vweird.f32 %v6031
    %vm6039 = vmor %vm6037, %vm6038
    %v6040 = vsel %vm6039, %v6031, %v6036
    %v6041 = vrsqrt.pop %v5980
    %v6042 = vmul.f32 %v6041, %v5980
    %v6043 = vmul.f32 %v6042, %v6041
    %v6044 = vmul.f32 0.5, %v6043
    %v6045 = vsub.f32 1.5, %v6044
    %v6046 = vmul.f32 %v6041, %v6045
    %vm6047 = vweird.f32 %v5980
    %vm6048 = vweird.f32 %v6041
    %vm6049 = vmor %vm6047, %vm6048
    %v6050 = vsel %vm6049, %v6041, %v6046
    %v6051 = vrsqrt.pop %v6003
    %v6052 = vmul.f32 %v6051, %v6003
    %v6053 = vmul.f32 %v6052, %v6051
    %v6054 = vmul.f32 0.5, %v6053
    %v6055 = vsub.f32 1.5, %v6054
    %v6056 = vmul.f32 %v6051, %v6055
    %vm6057 = vweird.f32 %v6003
    %vm6058 = vweird.f32 %v6051
    %vm6059 = vmor %vm6057, %vm6058
    %v6060 = vsel %vm6059, %v6051, %v6056
    %v6061 = vrsqrt.pop %v6026
    %v6062 = vmul.f32 %v6061, %v6026
    %v6063 = vmul.f32 %v6062, %v6061
    %v6064 = vmul.f32 0.5, %v6063
    %v6065 = vsub.f32 1.5, %v6064
    %v6066 = vmul.f32 %v6061, %v6065
    %vm6067 = vweird.f32 %v6026
    %vm6068 = vweird.f32 %v6061
    %vm6069 = vmor %vm6067, %vm6068
    %v6070 = vsel %vm6069, %v6061, %v6066
    %v6071 = vrsqrt.pop %v5960
    %v6072 = vmul.f32 %v6071, %v5960
    %v6073 = vmul.f32 %v6072, %v6071
    %v6074 = vmul.f32 0.5, %v6073
    %v6075 = vsub.f32 1.5, %v6074
    %v6076 = vmul.f32 %v6071, %v6075
    %vm6077 = vweird.f32 %v5960
    %vm6078 = vweird.f32 %v6071
    %vm6079 = vmor %vm6077, %vm6078
    %v6080 = vsel %vm6079, %v6071, %v6076
    %v6081 = vrsqrt.pop %v5983
    %v6082 = vmul.f32 %v6081, %v5983
    %v6083 = vmul.f32 %v6082, %v6081
    %v6084 = vmul.f32 0.5, %v6083
    %v6085 = vsub.f32 1.5, %v6084
    %v6086 = vmul.f32 %v6081, %v6085
    %vm6087 = vweird.f32 %v5983
    %vm6088 = vweird.f32 %v6081
    %vm6089 = vmor %vm6087, %vm6088
    %v6090 = vsel %vm6089, %v6081, %v6086
    %v6091 = vrsqrt.pop %v6006
    %v6092 = vmul.f32 %v6091, %v6006
    %v6093 = vmul.f32 %v6092, %v6091
    %v6094 = vmul.f32 0.5, %v6093
    %v6095 = vsub.f32 1.5, %v6094
    %v6096 = vmul.f32 %v6091, %v6095
    %vm6097 = vweird.f32 %v6006
    %vm6098 = vweird.f32 %v6091
    %vm6099 = vmor %vm6097, %vm6098
    %v6100 = vsel %vm6099, %v6091, %v6096
    %v6101 = vrsqrt.pop %v6029
    %v6102 = vmul.f32 %v6101, %v6029
    %v6103 = vmul.f32 %v6102, %v6101
    %v6104 = vmul.f32 0.5, %v6103
    %v6105 = vsub.f32 1.5, %v6104
    %v6106 = vmul.f32 %v6101, %v6105
    %vm6107 = vweird.f32 %v6029
    %vm6108 = vweird.f32 %v6101
    %vm6109 = vmor %vm6107, %vm6108
    %v6110 = vsel %vm6109, %v6101, %v6106
    %v6111 = vmul.f32 %v5823, %v6040
    %v6112 = vmul.f32 %v5824, %v6050
    %v6113 = vmul.f32 %v5825, %v6060
    %v6114 = vmul.f32 %v5826, %v6070
    %v6115 = vmul.f32 %v5827, %v6080
    %v6116 = vmul.f32 %v5828, %v6090
    %v6117 = vmul.f32 %v5829, %v6100
    %v6118 = vmul.f32 %v5830, %v6110
    %vm6119 = vcmp.ge.f32.partialorder %v6111, 0.0
    %vm6120 = vcmp.ge.f32.partialorder %v6112, 0.0
    %vm6121 = vcmp.ge.f32.partialorder %v6113, 0.0
    %vm6122 = vcmp.ge.f32.partialorder %v6114, 0.0
    %vm6123 = vcmp.ge.f32.partialorder %v6115, 0.0
    %vm6124 = vcmp.ge.f32.partialorder %v6116, 0.0
    %vm6125 = vcmp.ge.f32.partialorder %v6117, 0.0
    %vm6126 = vcmp.ge.f32.partialorder %v6118, 0.0
    %v6127 = vperm.slane %v110, 4
    %v6128 = vperm.slane %v111, 4
    %v6129 = vperm.slane %v112, 4
    %v6130 = vperm.slane %v113, 4
    %v6131 = vmul.f32 %v6127, %v6111
    %v6132 = vmul.f32 %v6128, %v6112
    %v6133 = vmul.f32 %v6129, %v6113
    %v6134 = vmul.f32 %v6130, %v6114
    %v6135 = vmul.f32 %v6127, %v6115
    %v6136 = vmul.f32 %v6128, %v6116
    %v6137 = vmul.f32 %v6129, %v6117
    %v6138 = vmul.f32 %v6130, %v6118
    %v6139 = vsel %vm6119, %v6111, %v6131
    %v6140 = vsel %vm6120, %v6112, %v6132
    %v6141 = vsel %vm6121, %v6113, %v6133
    %v6142 = vsel %vm6122, %v6114, %v6134
    %v6143 = vsel %vm6123, %v6115, %v6135
    %v6144 = vsel %vm6124, %v6116, %v6136
    %v6145 = vsel %vm6125, %v6117, %v6137
    %v6146 = vsel %vm6126, %v6118, %v6138
    %v6147 = vadd.f32 %v6139, %v4291
    %v6148 = vadd.f32 %v6140, %v4403
    %v6149 = vadd.f32 %v6141, %v4515
    %v6150 = vadd.f32 %v6142, %v4627
    %v6151 = vadd.f32 %v6143, %v4293
    %v6152 = vadd.f32 %v6144, %v4405
    %v6153 = vadd.f32 %v6145, %v4517
    %v6154 = vadd.f32 %v6146, %v4629
    %6155 = vst [vmem:[%s7] sm:$0xff] %v6147
    %6156 = vst [vmem:[%s7 + $0x8] sm:$0xff] %v6148
    %6157 = vst [vmem:[%s7 + $0x10] sm:$0xff] %v6149
    %6158 = vst [vmem:[%s7 + $0x18] sm:$0xff] %v6150
    %6159 = vst [vmem:[%s7 + $0x20] sm:$0xff] %v6151
    %6160 = vst [vmem:[%s7 + $0x28] sm:$0xff] %v6152
    %6161 = vst [vmem:[%s7 + $0x30] sm:$0xff] %v6153
    %6162 = vst [vmem:[%s7 + $0x38] sm:$0xff] %v6154
    // Predicated region
    $region34: #{_lambda_.3} parent=1 // pred_check
      _
    $region35: #{_lambda_.3} parent=1 // pred_check_branch
      %6164 = sbr.rel (0) target = $region37
    $region36: #{_lambda_.3} parent=1 // pred_region
      _
    $region37: #{_lambda_.3} parent=1 // pred_fallthru
      _
    // Predicated region
    $region38: #{_lambda_.3} parent=1 // pred_check
      _
    $region39: #{_lambda_.3} parent=1 // pred_check_branch
      %6166 = sbr.rel (0) target = $region41
    $region40: #{_lambda_.3} parent=1 // pred_region
      _
    $region41: #{_lambda_.3} parent=1 // pred_fallthru
      _
    %6167 = vsyncpa [#allocation3], 1

</llo_original>
